<compile_context>
chip_gen: v7x
topology: tpu7x:2x2x1
jax: 0.10.0
libtpu: 0.0.40
codegen_flags: <defaults>
</compile_context>

<pallas_src>
import jax
import jax.numpy as jnp
import numpy as np
from jax.experimental import pallas as pl
from jax.experimental.pallas import tpu as pltpu

_BN_EPS = 1e-5
_LANE = 128


def _round_up(x, m):
    return (x + m - 1) // m * m


def _tpu_generation():
    try:
        kind = jax.devices()[0].device_kind.lower()
    except Exception:
        return 0
    for g in (7, 6, 5, 4):
        if "v%d" % g in kind:
            return g
    return 0


_GEN = _tpu_generation()
if _GEN >= 7:                      # v7x: 64 MiB physical VMEM, 2 TensorCores
    _VMEM_LIMIT = 28 * 2**20
elif _GEN in (5, 6):               # v5e / v6e: 128 MiB physical VMEM
    _VMEM_LIMIT = 64 * 2**20
else:
    _VMEM_LIMIT = 32 * 2**20
_M_TARGET = 128 if _GEN in (4, 5) else 256        # MXU rows 128 vs 256
_COUT_TILE_PREF = 128 if _GEN in (4, 5) else 256


# ----------------------------------------------------------------------------
# Pallas kernels
# ----------------------------------------------------------------------------
def _make_conv_kernel(taps, mb):
    """Conv as tap-accumulation matmul + masked BN partial stats.

    planes_ref: (PQ, B_tile*RPP2, Cin_pad)  bf16 flat parity planes
    w_ref     : (T, Cin_pad, Ct)            bf16 weights for this Cout tile
    mask_ref  : (mb, 1)                     f32 validity mask (junk -> 0)
    y_ref     : (1, mb, Ct)                 bf16 pre-BN conv output
    stats_ref : (1, 2, Ct)                  f32 per-channel [sum, sum_sq]
    """
    def kernel(planes_ref, w_ref, mask_ref, y_ref, stats_ref):
        pi0, off0 = taps[0]
        acc = jnp.dot(planes_ref[pi0, off0:off0 + mb, :], w_ref[0],
                      preferred_element_type=jnp.float32)
        for t in range(1, len(taps)):
            pi, off = taps[t]
            acc = acc + jnp.dot(planes_ref[pi, off:off + mb, :], w_ref[t],
                                preferred_element_type=jnp.float32)
        y_ref[0] = acc.astype(y_ref.dtype)
        am = acc * mask_ref[...]
        s = jnp.sum(am, axis=0, keepdims=True)
        ss = jnp.sum(am * acc, axis=0, keepdims=True)
        stats_ref[0] = jnp.concatenate([s, ss], axis=0)
    return kernel


def _bn_relu_kernel(y_ref, scale_ref, shift_ref, o_ref):
    """Elementwise y*scale + shift -> ReLU (f32 math, bf16 lane-dense out)."""
    y = y_ref[...].astype(jnp.float32)
    o_ref[...] = jnp.maximum(y * scale_ref[...] + shift_ref[...],
                             0.0).astype(o_ref.dtype)


def _make_pool_kernel(taps, mb):
    """3x3/s2 max-pool as a 9-tap running maximum over flat-offset loads."""
    def kernel(planes_ref, o_ref):
        pi0, off0 = taps[0]
        m = planes_ref[pi0, off0:off0 + mb, :]
        for pi, off in taps[1:]:
            m = jnp.maximum(m, planes_ref[pi, off:off + mb, :])
        o_ref[0] = m
    return kernel


# ----------------------------------------------------------------------------
# Layout / tiling helpers
# ----------------------------------------------------------------------------
def _build_flat_planes(x_nhwc, ksize, stride, pad, pad_value=0.0):
    """Pad + (stride 2) space-to-depth split, flattened so that every tap of
    the conv / pool is a single contiguous flat row-offset load.

    Returns (planes, taps, geom):
      planes: (PQ, N*RPP2, C), PQ = 1 (stride 1) or 4 (stride 2 parity planes)
      taps  : [(plane_index, flat_row_offset)] in row-major (ky, kx) order
      geom  : dict(ho, wo, wpl, rpp2, m_flat, pq)
    """
    n, h, w, c = x_nhwc.shape
    ho = (h + 2 * pad - ksize) // stride + 1
    wo = (w + 2 * pad - ksize) // stride + 1
    xp = jnp.pad(x_nhwc, ((0, 0), (pad, pad), (pad, pad), (0, 0)),
                 constant_values=pad_value)
    hp, wp = h + 2 * pad, w + 2 * pad
    if stride == 1:
        pq, hpl, wpl = 1, hp, wp
        planes = xp[:, None]                                  # (N,1,Hp,Wp,C)
        taps = [(0, ky * wpl + kx)
                for ky in range(ksize) for kx in range(ksize)]
    elif stride == 2:
        hp2, wp2 = _round_up(hp, 2), _round_up(wp, 2)
        if (hp2, wp2) != (hp, wp):
            xp = jnp.pad(xp, ((0, 0), (0, hp2 - hp), (0, wp2 - wp), (0, 0)),
                         constant_values=pad_value)
        pq, hpl, wpl = 4, hp2 // 2, wp2 // 2
        xp = xp.reshape(n, hpl, 2, wpl, 2, c)
        planes = jnp.transpose(xp, (0, 2, 4, 1, 3, 5)).reshape(
            n, 4, hpl, wpl, c)
        taps = [(2 * (ky % 2) + (kx % 2), (ky // 2) * wpl + (kx // 2))
                for ky in range(ksize) for kx in range(ksize)]
    else:
        raise NotImplementedError("stride must be 1 or 2")

    rpp = hpl * wpl
    m_flat = (ho - 1) * wpl + wo                 # flat matmul M for one image
    off_max = max(off for _, off in taps)
    rpp2 = _round_up(max(rpp, off_max + _round_up(m_flat, 8)), 8)

    planes = planes.reshape(n, pq, rpp, c)
    if rpp2 != rpp:
        planes = jnp.pad(planes, ((0, 0), (0, 0), (0, rpp2 - rpp), (0, 0)),
                         constant_values=pad_value)
    planes = jnp.transpose(planes, (1, 0, 2, 3)).reshape(pq, n * rpp2, c)
    geom = dict(ho=ho, wo=wo, wpl=wpl, rpp2=rpp2, m_flat=m_flat, pq=pq)
    return planes, taps, geom


def _prep_weights(w_oihw, cin_pad, cout_pad):
    """(Cout,Cin,kh,kw) torch layout -> (kh*kw, Cin_pad, Cout_pad) bf16."""
    cout, cin, kh, kw = w_oihw.shape
    w = jnp.transpose(w_oihw, (2, 3, 1, 0)).reshape(kh * kw, cin, cout)
    w = jnp.pad(w, ((0, 0), (0, cin_pad - cin), (0, cout_pad - cout)))
    return w.astype(jnp.bfloat16)


def _valid_mask(mb, b_tile, rpp2, m_flat, wpl, ho, wo):
    """Static f32 mask over the flat matmul rows: 1 for real output pixels."""
    p = np.arange(mb)
    q = p % rpp2
    valid = ((p < (b_tile - 1) * rpp2 + m_flat)
             & ((q // wpl) < ho) & ((q % wpl) < wo))
    return jnp.asarray(valid.astype(np.float32).reshape(mb, 1))


def _pick_row_tile(total, cap=256):
    cap = min(cap, total)
    t = cap - cap % 8
    while t >= 8:
        if total % t == 0:
            return t
        t -= 8
    return total


def _pick_b_tile(n, pq, rpp2, m_flat, cin_pad, cout_tile, t, vmem_budget):
    """Batch several images per grid step to raise matmul M (v6e/v7x)."""
    m1 = _round_up(m_flat, 8)
    best = 1
    for d in range(1, n + 1):
        if n % d:
            continue
        mb = (d - 1) * rpp2 + m1
        vmem = (2 * pq * d * rpp2 * cin_pad * 2      # double-buffered planes
                + 2 * t * cin_pad * cout_tile * 2    # double-buffered weights
                + 2 * mb * cout_tile * 2             # bf16 y tile
                + mb * cout_tile * 4)                # f32 accumulator
        if vmem > vmem_budget:
            break
        best = d
        if mb >= _M_TARGET:
            break
    return best


def _extract_nhwc(y, b_tile, rpp2, ho, wo, wpl):
    """(n_bt, mb, C) flat-with-junk -> (n_bt*b_tile, ho, wo, C)."""
    n_bt, mb, c = y.shape
    full = b_tile * rpp2
    if mb < full:
        y = jnp.pad(y, ((0, 0), (0, full - mb), (0, 0)))
    y = y.reshape(n_bt * b_tile, rpp2, c)[:, :ho * wpl, :]
    return y.reshape(n_bt * b_tile, ho, wpl, c)[:, :, :wo, :]


# ----------------------------------------------------------------------------
# pallas_call wrappers
# ----------------------------------------------------------------------------
def _conv_pallas(planes, w_taps, mask, taps, b_tile, rpp2, mb, cout_tile):
    pq, nrows, cin_pad = planes.shape
    t, _, cout_pad = w_taps.shape
    n_bt = nrows // (b_tile * rpp2)
    n_ct = cout_pad // cout_tile

    flops = 2 * n_bt * mb * t * cin_pad * cout_pad
    bytes_accessed = int(planes.size * 2 * n_ct + w_taps.size * 2 * n_bt
                         + n_bt * mb * cout_pad * 2 + n_bt * 2 * cout_pad * 4)

    return pl.pallas_call(
        _make_conv_kernel(taps, mb),
        grid=(n_bt, n_ct),
        in_specs=[
            pl.BlockSpec((pq, b_tile * rpp2, cin_pad), lambda i, j: (0, i, 0)),
            pl.BlockSpec((t, cin_pad, cout_tile), lambda i, j: (0, 0, j)),
            pl.BlockSpec((mb, 1), lambda i, j: (0, 0)),
        ],
        out_specs=[
            pl.BlockSpec((1, mb, cout_tile), lambda i, j: (i, 0, j)),
            pl.BlockSpec((1, 2, cout_tile), lambda i, j: (i, 0, j)),
        ],
        out_shape=[
            jax.ShapeDtypeStruct((n_bt, mb, cout_pad), jnp.bfloat16),
            jax.ShapeDtypeStruct((n_bt, 2, cout_pad), jnp.float32),
        ],
        compiler_params=pltpu.CompilerParams(
            dimension_semantics=("parallel", "parallel"),
            vmem_limit_bytes=_VMEM_LIMIT),
        cost_estimate=pl.CostEstimate(
            flops=flops, transcendentals=0, bytes_accessed=bytes_accessed),
    )(planes, w_taps, mask)


def _bn_relu_apply(y, scale, shift):
    """Row-tiled elementwise BN-apply + ReLU (bf16 in / bf16 out)."""
    n_bt, mb, cpad = y.shape
    total = n_bt * mb
    rt = _pick_row_tile(total)
    yf = y.reshape(total, cpad)
    out = pl.pallas_call(
        _bn_relu_kernel,
        grid=(total // rt,),
        in_specs=[
            pl.BlockSpec((rt, cpad), lambda i: (i, 0)),
            pl.BlockSpec((1, cpad), lambda i: (0, 0)),
            pl.BlockSpec((1, cpad), lambda i: (0, 0)),
        ],
        out_specs=pl.BlockSpec((rt, cpad), lambda i: (i, 0)),
        out_shape=jax.ShapeDtypeStruct((total, cpad), jnp.bfloat16),
        compiler_params=pltpu.CompilerParams(
            dimension_semantics=("parallel",),
            vmem_limit_bytes=_VMEM_LIMIT),
    )(yf, scale, shift)
    return out.reshape(n_bt, mb, cpad)


def _conv_bn_relu(x_nhwc, param_list, ksize, stride, pad):
    """One or more BasicConv2d sharing the same input/geometry, fused on Cout.

    Returns ([act_i of shape (N, Ho, Wo, Cout_pad_i) bf16], ho, wo)."""
    n, h, w, cin = x_nhwc.shape
    cin_pad = _round_up(cin, _LANE)
    x = x_nhwc.astype(jnp.bfloat16)          # cast before pad / space-to-depth
    if cin != cin_pad:
        x = jnp.pad(x, ((0, 0), (0, 0), (0, 0), (0, cin_pad - cin)))
    planes, taps, geom = _build_flat_planes(x, ksize, stride, pad)
    ho, wo, wpl = geom["ho"], geom["wo"], geom["wpl"]
    rpp2, m_flat, pq = geom["rpp2"], geom["m_flat"], geom["pq"]
    t = ksize * ksize

    couts = [p[0].shape[0] for p in param_list]
    cout_pads = [_round_up(c, _LANE) for c in couts]
    cout_total = sum(cout_pads)

    w_taps = jnp.concatenate(
        [_prep_weights(p[0], cin_pad, cp)
         for p, cp in zip(param_list, cout_pads)], axis=-1)
    gamma = jnp.concatenate(
        [jnp.pad(p[2], (0, cp - c))
         for p, c, cp in zip(param_list, couts, cout_pads)])
    beta = jnp.concatenate(
        [jnp.pad(p[3], (0, cp - c))
         for p, c, cp in zip(param_list, couts, cout_pads)])
    # Conv bias p[1] is intentionally unused: training-mode BN subtracts the
    # batch mean right after the conv, which cancels the bias exactly.

    w_bytes = t * cin_pad * cout_total * 2
    if w_bytes <= (4 << 20):
        cout_tile = cout_total                 # weights fully VMEM-resident
    elif cout_total % _COUT_TILE_PREF == 0:
        cout_tile = _COUT_TILE_PREF
    else:
        cout_tile = _LANE

    b_tile = _pick_b_tile(n, pq, rpp2, m_flat, cin_pad, cout_tile, t,
                          vmem_budget=_VMEM_LIMIT // 2)
    mb = (b_tile - 1) * rpp2 + _round_up(m_flat, 8)
    mask = _valid_mask(mb, b_tile, rpp2, m_flat, wpl, ho, wo)

    y, stats = _conv_pallas(planes, w_taps, mask, taps, b_tile, rpp2, mb,
                            cout_tile)

    # BN(train) scale/shift from per-block partial sums (tiny XLA reduce).
    count = float(n * ho * wo)
    tot = jnp.sum(stats, axis=0)                       # (2, Cout_total)
    mean = tot[0] / count
    var = jnp.maximum(tot[1] / count - mean * mean, 0.0)
    inv = jax.lax.rsqrt(var + _BN_EPS)
    scale = (gamma * inv).reshape(1, cout_total).astype(jnp.float32)
    shift = (beta - mean * gamma * inv).reshape(1, cout_total).astype(
        jnp.float32)

    act = _bn_relu_apply(y, scale, shift)              # (n_bt, mb, Cout_total)
    act = _extract_nhwc(act, b_tile, rpp2, ho, wo, wpl)

    outs, off = [], 0
    for cp in cout_pads:
        outs.append(act[..., off:off + cp])
        off += cp
    return outs, ho, wo


def _maxpool_3x3_s2_p1(x_nhwc):
    n, h, w, c = x_nhwc.shape
    cpad = _round_up(c, _LANE)
    x = x_nhwc.astype(jnp.bfloat16)
    if c != cpad:
        x = jnp.pad(x, ((0, 0), (0, 0), (0, 0), (0, cpad - c)))
    planes, taps, geom = _build_flat_planes(x, 3, 2, 1,
                                            pad_value=float("-inf"))
    ho, wo, wpl = geom["ho"], geom["wo"], geom["wpl"]
    rpp2, m_flat, pq = geom["rpp2"], geom["m_flat"], geom["pq"]
    mb = _round_up(m_flat, 8)
    out = pl.pallas_call(
        _make_pool_kernel(taps, mb),
        grid=(n,),
        in_specs=[pl.BlockSpec((pq, rpp2, cpad), lambda i: (0, i, 0))],
        out_specs=pl.BlockSpec((1, mb, cpad), lambda i: (i, 0, 0)),
        out_shape=jax.ShapeDtypeStruct((n, mb, cpad), jnp.bfloat16),
        compiler_params=pltpu.CompilerParams(
            dimension_semantics=("parallel",),
            vmem_limit_bytes=_VMEM_LIMIT),
    )(planes)
    out = _extract_nhwc(out, 1, rpp2, ho, wo, wpl)
    return out[..., :c].astype(jnp.float32)


# ----------------------------------------------------------------------------
# Parameters & forward pass
# ----------------------------------------------------------------------------
def _init_basic_conv_params(key, cin, cout, ksize):
    k_w, k_b, k_g, k_be = jax.random.split(key, 4)
    w = 0.1 * jax.random.normal(k_w, (cout, cin, ksize, ksize), jnp.float32)
    b = 0.05 * jax.random.normal(k_b, (cout,), jnp.float32)
    gamma = 1.0 + 0.1 * jax.random.normal(k_g, (cout,), jnp.float32)
    beta = 0.1 * jax.random.normal(k_be, (cout,), jnp.float32)
    return (w, b, gamma, beta)


def init_inception_v2b_params(key, in_channels, ch1x1, ch3x3red, ch3x3,
                              ch3x3redx2, ch3x3x2, pool_proj):
    # ch1x1 / pool_proj appear in the signature but are unused by the module.
    del ch1x1, pool_proj
    ks = jax.random.split(key, 5)
    return {
        "b1_conv1": _init_basic_conv_params(ks[0], in_channels, ch3x3red, 1),
        "b1_conv2": _init_basic_conv_params(ks[1], ch3x3red, ch3x3, 3),
        "b2_conv1": _init_basic_conv_params(ks[2], in_channels, ch3x3redx2, 1),
        "b2_conv2": _init_basic_conv_params(ks[3], ch3x3redx2, ch3x3x2, 3),
        "b2_conv3": _init_basic_conv_params(ks[4], ch3x3x2, ch3x3x2, 3),
    }


@jax.jit
def inception_v2b_forward(x_nchw, params):
    """Forward pass matching InceptionV2B.forward.  x_nchw: (N, Cin, H, W)."""
    x = jnp.transpose(x_nchw, (0, 2, 3, 1)).astype(jnp.bfloat16)   # NHWC bf16

    # Stage 1: the two 1x1 reduction convs share x -> fused into one matmul.
    (r1, r2), _, _ = _conv_bn_relu(
        x, [params["b1_conv1"], params["b2_conv1"]], ksize=1, stride=1, pad=0)

    # branch1: 3x3 conv stride 2 pad 1
    (b1,), _, _ = _conv_bn_relu(r1, [params["b1_conv2"]], 3, 2, 1)
    # branch2: 3x3 conv (s1 p1), then 3x3 conv (s2 p1)
    (b2a,), _, _ = _conv_bn_relu(r2, [params["b2_conv2"]], 3, 1, 1)
    (b2,), _, _ = _conv_bn_relu(b2a, [params["b2_conv3"]], 3, 2, 1)

    # branch3: MaxPool2d(kernel=3, stride=2, padding=1)
    b3 = _maxpool_3x3_s2_p1(x)

    ch3x3 = params["b1_conv2"][0].shape[0]
    ch3x3x2 = params["b2_conv3"][0].shape[0]
    out = jnp.concatenate([
        b1[..., :ch3x3].astype(jnp.float32),
        b2[..., :ch3x3x2].astype(jnp.float32),
        b3,
    ], axis=-1)
    return jnp.transpose(out, (0, 3, 1, 2))        # back to NCHW


# ----------------------------------------------------------------------------
# Pure-JAX reference (for correctness check)
# ----------------------------------------------------------------------------
def _ref_basic_conv2d(x_nchw, params, stride, pad):
    w, b, gamma, beta = params
    y = jax.lax.conv_general_dilated(
        x_nchw, w, (stride, stride), [(pad, pad), (pad, pad)],
        dimension_numbers=("NCHW", "OIHW", "NCHW"))
    y = y + b[None, :, None, None]
    mean = jnp.mean(y, axis=(0, 2, 3), keepdims=True)
    var = jnp.mean((y - mean) ** 2, axis=(0, 2, 3), keepdims=True)
    yn = (y - mean) / jnp.sqrt(var + _BN_EPS)
    return jnp.maximum(
        yn * gamma[None, :, None, None] + beta[None, :, None, None], 0.0)


def _ref_forward(x_nchw, params):
    b1 = _ref_basic_conv2d(x_nchw, params["b1_conv1"], 1, 0)
    b1 = _ref_basic_conv2d(b1, params["b1_conv2"], 2, 1)
    b2 = _ref_basic_conv2d(x_nchw, params["b2_conv1"], 1, 0)
    b2 = _ref_basic_conv2d(b2, params["b2_conv2"], 1, 1)
    b2 = _ref_basic_conv2d(b2, params["b2_conv3"], 2, 1)
    b3 = jax.lax.reduce_window(
        x_nchw, -jnp.inf, jax.lax.max,
        window_dimensions=(1, 1, 3, 3), window_strides=(1, 1, 2, 2),
        padding=[(0, 0), (0, 0), (1, 1), (1, 1)])
    return jnp.concatenate([b1, b2, b3], axis=1)


# ----------------------------------------------------------------------------
if __name__ == "__main__":
    key = jax.random.PRNGKey(0)
    k_x, k_p = jax.random.split(key)

    # Small, module-consistent shapes.
    N, Cin, H, W = 2, 4, 16, 16
    ch1x1, ch3x3red, ch3x3 = 4, 6, 8
    ch3x3redx2, ch3x3x2, pool_proj = 6, 8, 4

    x = jax.random.normal(k_x, (N, Cin, H, W), jnp.float32)
    params = init_inception_v2b_params(
        k_p, Cin, ch1x1, ch3x3red, ch3x3, ch3x3redx2, ch3x3x2, pool_proj)

    out = inception_v2b_forward(x, params)
    out = jax.block_until_ready(out)

    expected_channels = ch3x3 + ch3x3x2 + Cin
    assert out.shape == (N, expected_channels, H // 2, W // 2), out.shape

    # bf16 activations/weights (intentional, perf) vs f32 ref -> loose tol.
    ref = jax.block_until_ready(_ref_forward(x, params))
    np.testing.assert_allclose(np.asarray(out), np.asarray(ref),
                               rtol=5e-2, atol=5e-2)

    print("KERNEL_OK")
</pallas_src>

<mosaic_0001>
module attributes {stable_mosaic.version = 11 : i64} {
  func.func @kernel(%arg0: i32, %arg1: memref<4x88x128xbf16, #tpu.memory_space<vmem>>, %arg2: memref<1x72x128xbf16, #tpu.memory_space<vmem>>) attributes {dimension_semantics = [#tpu.dimension_semantics<parallel>], iteration_bounds = array<i64: 2>, scalar_prefetch = 0 : i64, scratch_operands = 0 : i64, tpu.core_type = #tpu.core_type<tc>, window_params = [{transform_indices = @transform_0, window_bounds = array<i64: 4, 88, 128>}, {transform_indices = @transform_1, window_bounds = array<i64: 1, 72, 128>}]} {
    %c0 = arith.constant 0 : index
    %c0_0 = arith.constant 0 : index
    %c0_1 = arith.constant 0 : index
    %0 = vector.load %arg1[%c0, %c0_0, %c0_1] : memref<4x88x128xbf16, #tpu.memory_space<vmem>>, vector<1x72x128xbf16>
    %1 = vector.shape_cast %0 : vector<1x72x128xbf16> to vector<72x128xbf16>
    %c1 = arith.constant 1 : index
    %c0_2 = arith.constant 0 : index
    %c0_3 = arith.constant 0 : index
    %2 = vector.load %arg1[%c1, %c0_2, %c0_3] : memref<4x88x128xbf16, #tpu.memory_space<vmem>>, vector<1x72x128xbf16>
    %3 = vector.shape_cast %2 : vector<1x72x128xbf16> to vector<72x128xbf16>
    %4 = arith.maximumf %1, %3 : vector<72x128xbf16>
    %c0_4 = arith.constant 0 : index
    %c1_5 = arith.constant 1 : index
    %c0_6 = arith.constant 0 : index
    %5 = vector.load %arg1[%c0_4, %c1_5, %c0_6] : memref<4x88x128xbf16, #tpu.memory_space<vmem>>, vector<1x72x128xbf16>
    %6 = vector.shape_cast %5 : vector<1x72x128xbf16> to vector<72x128xbf16>
    %7 = arith.maximumf %4, %6 : vector<72x128xbf16>
    %c2 = arith.constant 2 : index
    %c0_7 = arith.constant 0 : index
    %c0_8 = arith.constant 0 : index
    %8 = vector.load %arg1[%c2, %c0_7, %c0_8] : memref<4x88x128xbf16, #tpu.memory_space<vmem>>, vector<1x72x128xbf16>
    %9 = vector.shape_cast %8 : vector<1x72x128xbf16> to vector<72x128xbf16>
    %10 = arith.maximumf %7, %9 : vector<72x128xbf16>
    %c3 = arith.constant 3 : index
    %c0_9 = arith.constant 0 : index
    %c0_10 = arith.constant 0 : index
    %11 = vector.load %arg1[%c3, %c0_9, %c0_10] : memref<4x88x128xbf16, #tpu.memory_space<vmem>>, vector<1x72x128xbf16>
    %12 = vector.shape_cast %11 : vector<1x72x128xbf16> to vector<72x128xbf16>
    %13 = arith.maximumf %10, %12 : vector<72x128xbf16>
    %c2_11 = arith.constant 2 : index
    %c1_12 = arith.constant 1 : index
    %c0_13 = arith.constant 0 : index
    %14 = vector.load %arg1[%c2_11, %c1_12, %c0_13] : memref<4x88x128xbf16, #tpu.memory_space<vmem>>, vector<1x72x128xbf16>
    %15 = vector.shape_cast %14 : vector<1x72x128xbf16> to vector<72x128xbf16>
    %16 = arith.maximumf %13, %15 : vector<72x128xbf16>
    %c0_14 = arith.constant 0 : index
    %c9 = arith.constant 9 : index
    %c0_15 = arith.constant 0 : index
    %17 = vector.load %arg1[%c0_14, %c9, %c0_15] : memref<4x88x128xbf16, #tpu.memory_space<vmem>>, vector<1x72x128xbf16>
    %18 = vector.shape_cast %17 : vector<1x72x128xbf16> to vector<72x128xbf16>
    %19 = arith.maximumf %16, %18 : vector<72x128xbf16>
    %c1_16 = arith.constant 1 : index
    %c9_17 = arith.constant 9 : index
    %c0_18 = arith.constant 0 : index
    %20 = vector.load %arg1[%c1_16, %c9_17, %c0_18] : memref<4x88x128xbf16, #tpu.memory_space<vmem>>, vector<1x72x128xbf16>
    %21 = vector.shape_cast %20 : vector<1x72x128xbf16> to vector<72x128xbf16>
    %22 = arith.maximumf %19, %21 : vector<72x128xbf16>
    %c0_19 = arith.constant 0 : index
    %c10 = arith.constant 10 : index
    %c0_20 = arith.constant 0 : index
    %23 = vector.load %arg1[%c0_19, %c10, %c0_20] : memref<4x88x128xbf16, #tpu.memory_space<vmem>>, vector<1x72x128xbf16>
    %24 = vector.shape_cast %23 : vector<1x72x128xbf16> to vector<72x128xbf16>
    %25 = arith.maximumf %22, %24 : vector<72x128xbf16>
    %c0_21 = arith.constant 0 : index
    %c0_22 = arith.constant 0 : index
    %c0_23 = arith.constant 0 : index
    %26 = vector.load %arg2[%c0_21, %c0_22, %c0_23] : memref<1x72x128xbf16, #tpu.memory_space<vmem>>, vector<1x72x128xbf16>
    %27 = vector.shape_cast %26 : vector<1x72x128xbf16> to vector<72x128xbf16>
    %28 = vector.shape_cast %25 : vector<72x128xbf16> to vector<1x72x128xbf16>
    tpu.vector_store %arg2[%c0_21, %c0_22, %c0_23], %28 {strides = array<i32>} : memref<1x72x128xbf16, #tpu.memory_space<vmem>>, vector<1x72x128xbf16>,
    return
  }
  func.func @transform_0(%arg0: i32) -> (i32, i32, i32) {
    %c0_i32 = arith.constant 0 : i32
    %c0_i32_0 = arith.constant 0 : i32
    %c0_i32_1 = arith.constant 0 : i32
    return %c0_i32, %arg0, %c0_i32_0 : i32, i32, i32
  }
  func.func @transform_1(%arg0: i32) -> (i32, i32, i32) {
    %c0_i32 = arith.constant 0 : i32
    %c0_i32_0 = arith.constant 0 : i32
    %c0_i32_1 = arith.constant 0 : i32
    return %arg0, %c0_i32, %c0_i32_0 : i32, i32, i32
  }
}

module attributes {stable_mosaic.version = 11 : i64} {
  func.func @kernel(%arg0: i32, %arg1: i32, %arg2: memref<1x256x128xbf16, #tpu.memory_space<vmem>>, %arg3: memref<1x128x256xbf16, #tpu.memory_space<vmem>>, %arg4: memref<256x1xf32, #tpu.memory_space<vmem>>, %arg5: memref<1x256x256xbf16, #tpu.memory_space<vmem>>, %arg6: memref<1x2x256xf32, #tpu.memory_space<vmem>>) attributes {dimension_semantics = [#tpu.dimension_semantics<parallel>, #tpu.dimension_semantics<parallel>], iteration_bounds = array<i64: 2, 1>, scalar_prefetch = 0 : i64, scratch_operands = 0 : i64, tpu.core_type = #tpu.core_type<tc>, window_params = [{transform_indices = @transform_0, window_bounds = array<i64: 1, 256, 128>}, {transform_indices = @transform_1, window_bounds = array<i64: 1, 128, 256>}, {pipeline_mode = #tpu.pipeline_mode<synchronous>, transform_indices = @transform_2, window_bounds = array<i64: 256, 1>}, {transform_indices = @transform_3, window_bounds = array<i64: 1, 256, 256>}, {transform_indices = @transform_4, window_bounds = array<i64: 1, 2, 256>}]} {
    %c0 = arith.constant 0 : index
    %c0_0 = arith.constant 0 : index
    %c0_1 = arith.constant 0 : index
    %0 = vector.load %arg2[%c0, %c0_0, %c0_1] : memref<1x256x128xbf16, #tpu.memory_space<vmem>>, vector<1x256x128xbf16>
    %1 = vector.shape_cast %0 : vector<1x256x128xbf16> to vector<256x128xbf16>
    %c0_2 = arith.constant 0 : index
    %c0_3 = arith.constant 0 : index
    %c0_4 = arith.constant 0 : index
    %2 = vector.load %arg3[%c0_2, %c0_3, %c0_4] : memref<1x128x256xbf16, #tpu.memory_space<vmem>>, vector<1x128x256xbf16>
    %3 = vector.shape_cast %2 : vector<1x128x256xbf16> to vector<128x256xbf16>
    %cst = arith.constant dense<0.000000e+00> : vector<256x256xf32>
    %4 = tpu.matmul %1, %3, %cst {dimension_numbers = #tpu.dot_dimension_numbers<[1], [0], [0], [1], [0, 0, 1, 1], [], []>} : vector<256x128xbf16>, vector<128x256xbf16>, vector<256x256xf32> -> vector<256x256xf32>
    %5 = arith.truncf %4 : vector<256x256xf32> to vector<256x256xbf16>
    %c0_5 = arith.constant 0 : index
    %c0_6 = arith.constant 0 : index
    %c0_7 = arith.constant 0 : index
    %6 = vector.load %arg5[%c0_5, %c0_6, %c0_7] : memref<1x256x256xbf16, #tpu.memory_space<vmem>>, vector<1x256x256xbf16>
    %7 = vector.shape_cast %6 : vector<1x256x256xbf16> to vector<256x256xbf16>
    %8 = vector.shape_cast %5 : vector<256x256xbf16> to vector<1x256x256xbf16>
    tpu.vector_store %arg5[%c0_5, %c0_6, %c0_7], %8 {strides = array<i32>} : memref<1x256x256xbf16, #tpu.memory_space<vmem>>, vector<1x256x256xbf16>,
    %c0_8 = arith.constant 0 : index
    %c0_9 = arith.constant 0 : index
    %9 = vector.load %arg4[%c0_8, %c0_9] : memref<256x1xf32, #tpu.memory_space<vmem>>, vector<256x1xf32>
    %10 = vector.broadcast %9 : vector<256x1xf32> to vector<256x256xf32>
    %11 = arith.mulf %4, %10 : vector<256x256xf32>
    %cst_10 = arith.constant dense<0.000000e+00> : vector<256xf32>
    %12 = vector.multi_reduction <add>, %11, %cst_10 [0] : vector<256x256xf32> to vector<256xf32>
    %13 = vector.shape_cast %12 : vector<256xf32> to vector<1x256xf32>
    %14 = arith.mulf %11, %4 : vector<256x256xf32>
    %cst_11 = arith.constant dense<0.000000e+00> : vector<256xf32>
    %15 = vector.multi_reduction <add>, %14, %cst_11 [0] : vector<256x256xf32> to vector<256xf32>
    %16 = vector.shape_cast %15 : vector<256xf32> to vector<1x256xf32>
    %17 = tpu.concatenate %13, %16 in 0 : vector<1x256xf32>, vector<1x256xf32> -> vector<2x256xf32>
    %c0_12 = arith.constant 0 : index
    %c0_13 = arith.constant 0 : index
    %c0_14 = arith.constant 0 : index
    %18 = vector.load %arg6[%c0_12, %c0_13, %c0_14] : memref<1x2x256xf32, #tpu.memory_space<vmem>>, vector<1x2x256xf32>
    %19 = vector.shape_cast %18 : vector<1x2x256xf32> to vector<2x256xf32>
    %20 = vector.shape_cast %17 : vector<2x256xf32> to vector<1x2x256xf32>
    tpu.vector_store %arg6[%c0_12, %c0_13, %c0_14], %20 {strides = array<i32>} : memref<1x2x256xf32, #tpu.memory_space<vmem>>, vector<1x2x256xf32>,
    return
  }
  func.func @transform_0(%arg0: i32, %arg1: i32) -> (i32, i32, i32) {
    %c0_i32 = arith.constant 0 : i32
    %c0_i32_0 = arith.constant 0 : i32
    %c0_i32_1 = arith.constant 0 : i32
    return %c0_i32, %arg0, %c0_i32_0 : i32, i32, i32
  }
  func.func @transform_1(%arg0: i32, %arg1: i32) -> (i32, i32, i32) {
    %c0_i32 = arith.constant 0 : i32
    %c0_i32_0 = arith.constant 0 : i32
    %c0_i32_1 = arith.constant 0 : i32
    return %c0_i32, %c0_i32_0, %arg1 : i32, i32, i32
  }
  func.func @transform_2(%arg0: i32, %arg1: i32) -> (i32, i32) {
    %c0_i32 = arith.constant 0 : i32
    %c0_i32_0 = arith.constant 0 : i32
    %c0_i32_1 = arith.constant 0 : i32
    return %c0_i32, %c0_i32_0 : i32, i32
  }
  func.func @transform_3(%arg0: i32, %arg1: i32) -> (i32, i32, i32) {
    %c0_i32 = arith.constant 0 : i32
    %c0_i32_0 = arith.constant 0 : i32
    return %arg0, %c0_i32, %arg1 : i32, i32, i32
  }
  func.func @transform_4(%arg0: i32, %arg1: i32) -> (i32, i32, i32) {
    %c0_i32 = arith.constant 0 : i32
    %c0_i32_0 = arith.constant 0 : i32
    return %arg0, %c0_i32, %arg1 : i32, i32, i32
  }
}

module attributes {stable_mosaic.version = 11 : i64} {
  func.func @_bn_relu_kernel(%arg0: i32, %arg1: memref<256x256xbf16, #tpu.memory_space<vmem>>, %arg2: memref<1x256xf32, #tpu.memory_space<vmem>>, %arg3: memref<1x256xf32, #tpu.memory_space<vmem>>, %arg4: memref<256x256xbf16, #tpu.memory_space<vmem>>) attributes {dimension_semantics = [#tpu.dimension_semantics<parallel>], iteration_bounds = array<i64: 2>, scalar_prefetch = 0 : i64, scratch_operands = 0 : i64, tpu.core_type = #tpu.core_type<tc>, window_params = [{transform_indices = @transform_0, window_bounds = array<i64: 256, 256>}, {pipeline_mode = #tpu.pipeline_mode<synchronous>, transform_indices = @transform_1, window_bounds = array<i64: 1, 256>}, {pipeline_mode = #tpu.pipeline_mode<synchronous>, transform_indices = @transform_2, window_bounds = array<i64: 1, 256>}, {transform_indices = @transform_3, window_bounds = array<i64: 256, 256>}]} {
    %c0 = arith.constant 0 : index
    %c0_0 = arith.constant 0 : index
    %0 = vector.load %arg1[%c0, %c0_0] : memref<256x256xbf16, #tpu.memory_space<vmem>>, vector<256x256xbf16>
    %1 = arith.extf %0 : vector<256x256xbf16> to vector<256x256xf32>
    %c0_1 = arith.constant 0 : index
    %c0_2 = arith.constant 0 : index
    %2 = vector.load %arg2[%c0_1, %c0_2] : memref<1x256xf32, #tpu.memory_space<vmem>>, vector<1x256xf32>
    %3 = vector.broadcast %2 : vector<1x256xf32> to vector<256x256xf32>
    %4 = arith.mulf %1, %3 : vector<256x256xf32>
    %c0_3 = arith.constant 0 : index
    %c0_4 = arith.constant 0 : index
    %5 = vector.load %arg3[%c0_3, %c0_4] : memref<1x256xf32, #tpu.memory_space<vmem>>, vector<1x256xf32>
    %6 = vector.broadcast %5 : vector<1x256xf32> to vector<256x256xf32>
    %7 = arith.addf %4, %6 : vector<256x256xf32>
    %cst = arith.constant 0.000000e+00 : f32
    %8 = vector.broadcast %cst : f32 to vector<256x256xf32>
    %9 = arith.maximumf %7, %8 : vector<256x256xf32>
    %10 = arith.truncf %9 : vector<256x256xf32> to vector<256x256xbf16>
    %c0_5 = arith.constant 0 : index
    %c0_6 = arith.constant 0 : index
    %11 = vector.load %arg4[%c0_5, %c0_6] : memref<256x256xbf16, #tpu.memory_space<vmem>>, vector<256x256xbf16>
    tpu.vector_store %arg4[%c0_5, %c0_6], %10 {strides = array<i32>} : memref<256x256xbf16, #tpu.memory_space<vmem>>, vector<256x256xbf16>,
    return
  }
  func.func @transform_0(%arg0: i32) -> (i32, i32) {
    %c0_i32 = arith.constant 0 : i32
    %c0_i32_0 = arith.constant 0 : i32
    return %arg0, %c0_i32 : i32, i32
  }
  func.func @transform_1(%arg0: i32) -> (i32, i32) {
    %c0_i32 = arith.constant 0 : i32
    %c0_i32_0 = arith.constant 0 : i32
    %c0_i32_1 = arith.constant 0 : i32
    return %c0_i32, %c0_i32_0 : i32, i32
  }
  func.func @transform_2(%arg0: i32) -> (i32, i32) {
    %c0_i32 = arith.constant 0 : i32
    %c0_i32_0 = arith.constant 0 : i32
    %c0_i32_1 = arith.constant 0 : i32
    return %c0_i32, %c0_i32_0 : i32, i32
  }
  func.func @transform_3(%arg0: i32) -> (i32, i32) {
    %c0_i32 = arith.constant 0 : i32
    %c0_i32_0 = arith.constant 0 : i32
    return %arg0, %c0_i32 : i32, i32
  }
}

module attributes {stable_mosaic.version = 11 : i64} {
  func.func @kernel(%arg0: i32, %arg1: i32, %arg2: memref<1x328x128xbf16, #tpu.memory_space<vmem>>, %arg3: memref<9x128x128xbf16, #tpu.memory_space<vmem>>, %arg4: memref<288x1xf32, #tpu.memory_space<vmem>>, %arg5: memref<1x288x128xbf16, #tpu.memory_space<vmem>>, %arg6: memref<1x2x128xf32, #tpu.memory_space<vmem>>) attributes {dimension_semantics = [#tpu.dimension_semantics<parallel>, #tpu.dimension_semantics<parallel>], iteration_bounds = array<i64: 2, 1>, scalar_prefetch = 0 : i64, scratch_operands = 0 : i64, tpu.core_type = #tpu.core_type<tc>, window_params = [{transform_indices = @transform_0, window_bounds = array<i64: 1, 328, 128>}, {transform_indices = @transform_1, window_bounds = array<i64: 9, 128, 128>}, {pipeline_mode = #tpu.pipeline_mode<synchronous>, transform_indices = @transform_2, window_bounds = array<i64: 288, 1>}, {transform_indices = @transform_3, window_bounds = array<i64: 1, 288, 128>}, {transform_indices = @transform_4, window_bounds = array<i64: 1, 2, 128>}]} {
    %c0 = arith.constant 0 : index
    %c0_0 = arith.constant 0 : index
    %c0_1 = arith.constant 0 : index
    %0 = vector.load %arg2[%c0, %c0_0, %c0_1] : memref<1x328x128xbf16, #tpu.memory_space<vmem>>, vector<1x288x128xbf16>
    %1 = vector.shape_cast %0 : vector<1x288x128xbf16> to vector<288x128xbf16>
    %c0_2 = arith.constant 0 : index
    %c0_3 = arith.constant 0 : index
    %c0_4 = arith.constant 0 : index
    %2 = vector.load %arg3[%c0_2, %c0_3, %c0_4] : memref<9x128x128xbf16, #tpu.memory_space<vmem>>, vector<1x128x128xbf16>
    %3 = vector.shape_cast %2 : vector<1x128x128xbf16> to vector<128x128xbf16>
    %cst = arith.constant dense<0.000000e+00> : vector<288x128xf32>
    %4 = tpu.matmul %1, %3, %cst {dimension_numbers = #tpu.dot_dimension_numbers<[1], [0], [0], [1], [0, 0, 1, 1], [], []>} : vector<288x128xbf16>, vector<128x128xbf16>, vector<288x128xf32> -> vector<288x128xf32>
    %c0_5 = arith.constant 0 : index
    %c1 = arith.constant 1 : index
    %c0_6 = arith.constant 0 : index
    %5 = vector.load %arg2[%c0_5, %c1, %c0_6] : memref<1x328x128xbf16, #tpu.memory_space<vmem>>, vector<1x288x128xbf16>
    %6 = vector.shape_cast %5 : vector<1x288x128xbf16> to vector<288x128xbf16>
    %c1_7 = arith.constant 1 : index
    %c0_8 = arith.constant 0 : index
    %c0_9 = arith.constant 0 : index
    %7 = vector.load %arg3[%c1_7, %c0_8, %c0_9] : memref<9x128x128xbf16, #tpu.memory_space<vmem>>, vector<1x128x128xbf16>
    %8 = vector.shape_cast %7 : vector<1x128x128xbf16> to vector<128x128xbf16>
    %cst_10 = arith.constant dense<0.000000e+00> : vector<288x128xf32>
    %9 = tpu.matmul %6, %8, %cst_10 {dimension_numbers = #tpu.dot_dimension_numbers<[1], [0], [0], [1], [0, 0, 1, 1], [], []>} : vector<288x128xbf16>, vector<128x128xbf16>, vector<288x128xf32> -> vector<288x128xf32>
    %10 = arith.addf %4, %9 : vector<288x128xf32>
    %c0_11 = arith.constant 0 : index
    %c2 = arith.constant 2 : index
    %c0_12 = arith.constant 0 : index
    %11 = vector.load %arg2[%c0_11, %c2, %c0_12] : memref<1x328x128xbf16, #tpu.memory_space<vmem>>, vector<1x288x128xbf16>
    %12 = vector.shape_cast %11 : vector<1x288x128xbf16> to vector<288x128xbf16>
    %c2_13 = arith.constant 2 : index
    %c0_14 = arith.constant 0 : index
    %c0_15 = arith.constant 0 : index
    %13 = vector.load %arg3[%c2_13, %c0_14, %c0_15] : memref<9x128x128xbf16, #tpu.memory_space<vmem>>, vector<1x128x128xbf16>
    %14 = vector.shape_cast %13 : vector<1x128x128xbf16> to vector<128x128xbf16>
    %cst_16 = arith.constant dense<0.000000e+00> : vector<288x128xf32>
    %15 = tpu.matmul %12, %14, %cst_16 {dimension_numbers = #tpu.dot_dimension_numbers<[1], [0], [0], [1], [0, 0, 1, 1], [], []>} : vector<288x128xbf16>, vector<128x128xbf16>, vector<288x128xf32> -> vector<288x128xf32>
    %16 = arith.addf %10, %15 : vector<288x128xf32>
    %c0_17 = arith.constant 0 : index
    %c18 = arith.constant 18 : index
    %c0_18 = arith.constant 0 : index
    %17 = vector.load %arg2[%c0_17, %c18, %c0_18] : memref<1x328x128xbf16, #tpu.memory_space<vmem>>, vector<1x288x128xbf16>
    %18 = vector.shape_cast %17 : vector<1x288x128xbf16> to vector<288x128xbf16>
    %c3 = arith.constant 3 : index
    %c0_19 = arith.constant 0 : index
    %c0_20 = arith.constant 0 : index
    %19 = vector.load %arg3[%c3, %c0_19, %c0_20] : memref<9x128x128xbf16, #tpu.memory_space<vmem>>, vector<1x128x128xbf16>
    %20 = vector.shape_cast %19 : vector<1x128x128xbf16> to vector<128x128xbf16>
    %cst_21 = arith.constant dense<0.000000e+00> : vector<288x128xf32>
    %21 = tpu.matmul %18, %20, %cst_21 {dimension_numbers = #tpu.dot_dimension_numbers<[1], [0], [0], [1], [0, 0, 1, 1], [], []>} : vector<288x128xbf16>, vector<128x128xbf16>, vector<288x128xf32> -> vector<288x128xf32>
    %22 = arith.addf %16, %21 : vector<288x128xf32>
    %c0_22 = arith.constant 0 : index
    %c19 = arith.constant 19 : index
    %c0_23 = arith.constant 0 : index
    %23 = vector.load %arg2[%c0_22, %c19, %c0_23] : memref<1x328x128xbf16, #tpu.memory_space<vmem>>, vector<1x288x128xbf16>
    %24 = vector.shape_cast %23 : vector<1x288x128xbf16> to vector<288x128xbf16>
    %c4 = arith.constant 4 : index
    %c0_24 = arith.constant 0 : index
    %c0_25 = arith.constant 0 : index
    %25 = vector.load %arg3[%c4, %c0_24, %c0_25] : memref<9x128x128xbf16, #tpu.memory_space<vmem>>, vector<1x128x128xbf16>
    %26 = vector.shape_cast %25 : vector<1x128x128xbf16> to vector<128x128xbf16>
    %cst_26 = arith.constant dense<0.000000e+00> : vector<288x128xf32>
    %27 = tpu.matmul %24, %26, %cst_26 {dimension_numbers = #tpu.dot_dimension_numbers<[1], [0], [0], [1], [0, 0, 1, 1], [], []>} : vector<288x128xbf16>, vector<128x128xbf16>, vector<288x128xf32> -> vector<288x128xf32>
    %28 = arith.addf %22, %27 : vector<288x128xf32>
    %c0_27 = arith.constant 0 : index
    %c20 = arith.constant 20 : index
    %c0_28 = arith.constant 0 : index
    %29 = vector.load %arg2[%c0_27, %c20, %c0_28] : memref<1x328x128xbf16, #tpu.memory_space<vmem>>, vector<1x288x128xbf16>
    %30 = vector.shape_cast %29 : vector<1x288x128xbf16> to vector<288x128xbf16>
    %c5 = arith.constant 5 : index
    %c0_29 = arith.constant 0 : index
    %c0_30 = arith.constant 0 : index
    %31 = vector.load %arg3[%c5, %c0_29, %c0_30] : memref<9x128x128xbf16, #tpu.memory_space<vmem>>, vector<1x128x128xbf16>
    %32 = vector.shape_cast %31 : vector<1x128x128xbf16> to vector<128x128xbf16>
    %cst_31 = arith.constant dense<0.000000e+00> : vector<288x128xf32>
    %33 = tpu.matmul %30, %32, %cst_31 {dimension_numbers = #tpu.dot_dimension_numbers<[1], [0], [0], [1], [0, 0, 1, 1], [], []>} : vector<288x128xbf16>, vector<128x128xbf16>, vector<288x128xf32> -> vector<288x128xf32>
    %34 = arith.addf %28, %33 : vector<288x128xf32>
    %c0_32 = arith.constant 0 : index
    %c36 = arith.constant 36 : index
    %c0_33 = arith.constant 0 : index
    %35 = vector.load %arg2[%c0_32, %c36, %c0_33] : memref<1x328x128xbf16, #tpu.memory_space<vmem>>, vector<1x288x128xbf16>
    %36 = vector.shape_cast %35 : vector<1x288x128xbf16> to vector<288x128xbf16>
    %c6 = arith.constant 6 : index
    %c0_34 = arith.constant 0 : index
    %c0_35 = arith.constant 0 : index
    %37 = vector.load %arg3[%c6, %c0_34, %c0_35] : memref<9x128x128xbf16, #tpu.memory_space<vmem>>, vector<1x128x128xbf16>
    %38 = vector.shape_cast %37 : vector<1x128x128xbf16> to vector<128x128xbf16>
    %cst_36 = arith.constant dense<0.000000e+00> : vector<288x128xf32>
    %39 = tpu.matmul %36, %38, %cst_36 {dimension_numbers = #tpu.dot_dimension_numbers<[1], [0], [0], [1], [0, 0, 1, 1], [], []>} : vector<288x128xbf16>, vector<128x128xbf16>, vector<288x128xf32> -> vector<288x128xf32>
    %40 = arith.addf %34, %39 : vector<288x128xf32>
    %c0_37 = arith.constant 0 : index
    %c37 = arith.constant 37 : index
    %c0_38 = arith.constant 0 : index
    %41 = vector.load %arg2[%c0_37, %c37, %c0_38] : memref<1x328x128xbf16, #tpu.memory_space<vmem>>, vector<1x288x128xbf16>
    %42 = vector.shape_cast %41 : vector<1x288x128xbf16> to vector<288x128xbf16>
    %c7 = arith.constant 7 : index
    %c0_39 = arith.constant 0 : index
    %c0_40 = arith.constant 0 : index
    %43 = vector.load %arg3[%c7, %c0_39, %c0_40] : memref<9x128x128xbf16, #tpu.memory_space<vmem>>, vector<1x128x128xbf16>
    %44 = vector.shape_cast %43 : vector<1x128x128xbf16> to vector<128x128xbf16>
    %cst_41 = arith.constant dense<0.000000e+00> : vector<288x128xf32>
    %45 = tpu.matmul %42, %44, %cst_41 {dimension_numbers = #tpu.dot_dimension_numbers<[1], [0], [0], [1], [0, 0, 1, 1], [], []>} : vector<288x128xbf16>, vector<128x128xbf16>, vector<288x128xf32> -> vector<288x128xf32>
    %46 = arith.addf %40, %45 : vector<288x128xf32>
    %c0_42 = arith.constant 0 : index
    %c38 = arith.constant 38 : index
    %c0_43 = arith.constant 0 : index
    %47 = vector.load %arg2[%c0_42, %c38, %c0_43] : memref<1x328x128xbf16, #tpu.memory_space<vmem>>, vector<1x288x128xbf16>
    %48 = vector.shape_cast %47 : vector<1x288x128xbf16> to vector<288x128xbf16>
    %c8 = arith.constant 8 : index
    %c0_44 = arith.constant 0 : index
    %c0_45 = arith.constant 0 : index
    %49 = vector.load %arg3[%c8, %c0_44, %c0_45] : memref<9x128x128xbf16, #tpu.memory_space<vmem>>, vector<1x128x128xbf16>
    %50 = vector.shape_cast %49 : vector<1x128x128xbf16> to vector<128x128xbf16>
    %cst_46 = arith.constant dense<0.000000e+00> : vector<288x128xf32>
    %51 = tpu.matmul %48, %50, %cst_46 {dimension_numbers = #tpu.dot_dimension_numbers<[1], [0], [0], [1], [0, 0, 1, 1], [], []>} : vector<288x128xbf16>, vector<128x128xbf16>, vector<288x128xf32> -> vector<288x128xf32>
    %52 = arith.addf %46, %51 : vector<288x128xf32>
    %53 = arith.truncf %52 : vector<288x128xf32> to vector<288x128xbf16>
    %c0_47 = arith.constant 0 : index
    %c0_48 = arith.constant 0 : index
    %c0_49 = arith.constant 0 : index
    %54 = vector.load %arg5[%c0_47, %c0_48, %c0_49] : memref<1x288x128xbf16, #tpu.memory_space<vmem>>, vector<1x288x128xbf16>
    %55 = vector.shape_cast %54 : vector<1x288x128xbf16> to vector<288x128xbf16>
    %56 = vector.shape_cast %53 : vector<288x128xbf16> to vector<1x288x128xbf16>
    tpu.vector_store %arg5[%c0_47, %c0_48, %c0_49], %56 {strides = array<i32>} : memref<1x288x128xbf16, #tpu.memory_space<vmem>>, vector<1x288x128xbf16>,
    %c0_50 = arith.constant 0 : index
    %c0_51 = arith.constant 0 : index
    %57 = vector.load %arg4[%c0_50, %c0_51] : memref<288x1xf32, #tpu.memory_space<vmem>>, vector<288x1xf32>
    %58 = vector.broadcast %57 : vector<288x1xf32> to vector<288x128xf32>
    %59 = arith.mulf %52, %58 : vector<288x128xf32>
    %cst_52 = arith.constant dense<0.000000e+00> : vector<128xf32>
    %60 = vector.multi_reduction <add>, %59, %cst_52 [0] : vector<288x128xf32> to vector<128xf32>
    %61 = vector.shape_cast %60 : vector<128xf32> to vector<1x128xf32>
    %62 = arith.mulf %59, %52 : vector<288x128xf32>
    %cst_53 = arith.constant dense<0.000000e+00> : vector<128xf32>
    %63 = vector.multi_reduction <add>, %62, %cst_53 [0] : vector<288x128xf32> to vector<128xf32>
    %64 = vector.shape_cast %63 : vector<128xf32> to vector<1x128xf32>
    %65 = tpu.concatenate %61, %64 in 0 : vector<1x128xf32>, vector<1x128xf32> -> vector<2x128xf32>
    %c0_54 = arith.constant 0 : index
    %c0_55 = arith.constant 0 : index
    %c0_56 = arith.constant 0 : index
    %66 = vector.load %arg6[%c0_54, %c0_55, %c0_56] : memref<1x2x128xf32, #tpu.memory_space<vmem>>, vector<1x2x128xf32>
    %67 = vector.shape_cast %66 : vector<1x2x128xf32> to vector<2x128xf32>
    %68 = vector.shape_cast %65 : vector<2x128xf32> to vector<1x2x128xf32>
    tpu.vector_store %arg6[%c0_54, %c0_55, %c0_56], %68 {strides = array<i32>} : memref<1x2x128xf32, #tpu.memory_space<vmem>>, vector<1x2x128xf32>,
    return
  }
  func.func @transform_0(%arg0: i32, %arg1: i32) -> (i32, i32, i32) {
    %c0_i32 = arith.constant 0 : i32
    %c0_i32_0 = arith.constant 0 : i32
    %c0_i32_1 = arith.constant 0 : i32
    return %c0_i32, %arg0, %c0_i32_0 : i32, i32, i32
  }
  func.func @transform_1(%arg0: i32, %arg1: i32) -> (i32, i32, i32) {
    %c0_i32 = arith.constant 0 : i32
    %c0_i32_0 = arith.constant 0 : i32
    %c0_i32_1 = arith.constant 0 : i32
    return %c0_i32, %c0_i32_0, %arg1 : i32, i32, i32
  }
  func.func @transform_2(%arg0: i32, %arg1: i32) -> (i32, i32) {
    %c0_i32 = arith.constant 0 : i32
    %c0_i32_0 = arith.constant 0 : i32
    %c0_i32_1 = arith.constant 0 : i32
    return %c0_i32, %c0_i32_0 : i32, i32
  }
  func.func @transform_3(%arg0: i32, %arg1: i32) -> (i32, i32, i32) {
    %c0_i32 = arith.constant 0 : i32
    %c0_i32_0 = arith.constant 0 : i32
    return %arg0, %c0_i32, %arg1 : i32, i32, i32
  }
  func.func @transform_4(%arg0: i32, %arg1: i32) -> (i32, i32, i32) {
    %c0_i32 = arith.constant 0 : i32
    %c0_i32_0 = arith.constant 0 : i32
    return %arg0, %c0_i32, %arg1 : i32, i32, i32
  }
}

module attributes {stable_mosaic.version = 11 : i64} {
  func.func @_bn_relu_kernel(%arg0: i32, %arg1: memref<192x128xbf16, #tpu.memory_space<vmem>>, %arg2: memref<1x128xf32, #tpu.memory_space<vmem>>, %arg3: memref<1x128xf32, #tpu.memory_space<vmem>>, %arg4: memref<192x128xbf16, #tpu.memory_space<vmem>>) attributes {dimension_semantics = [#tpu.dimension_semantics<parallel>], iteration_bounds = array<i64: 3>, scalar_prefetch = 0 : i64, scratch_operands = 0 : i64, tpu.core_type = #tpu.core_type<tc>, window_params = [{transform_indices = @transform_0, window_bounds = array<i64: 192, 128>}, {pipeline_mode = #tpu.pipeline_mode<synchronous>, transform_indices = @transform_1, window_bounds = array<i64: 1, 128>}, {pipeline_mode = #tpu.pipeline_mode<synchronous>, transform_indices = @transform_2, window_bounds = array<i64: 1, 128>}, {transform_indices = @transform_3, window_bounds = array<i64: 192, 128>}]} {
    %c0 = arith.constant 0 : index
    %c0_0 = arith.constant 0 : index
    %0 = vector.load %arg1[%c0, %c0_0] : memref<192x128xbf16, #tpu.memory_space<vmem>>, vector<192x128xbf16>
    %1 = arith.extf %0 : vector<192x128xbf16> to vector<192x128xf32>
    %c0_1 = arith.constant 0 : index
    %c0_2 = arith.constant 0 : index
    %2 = vector.load %arg2[%c0_1, %c0_2] : memref<1x128xf32, #tpu.memory_space<vmem>>, vector<1x128xf32>
    %3 = vector.broadcast %2 : vector<1x128xf32> to vector<192x128xf32>
    %4 = arith.mulf %1, %3 : vector<192x128xf32>
    %c0_3 = arith.constant 0 : index
    %c0_4 = arith.constant 0 : index
    %5 = vector.load %arg3[%c0_3, %c0_4] : memref<1x128xf32, #tpu.memory_space<vmem>>, vector<1x128xf32>
    %6 = vector.broadcast %5 : vector<1x128xf32> to vector<192x128xf32>
    %7 = arith.addf %4, %6 : vector<192x128xf32>
    %cst = arith.constant 0.000000e+00 : f32
    %8 = vector.broadcast %cst : f32 to vector<192x128xf32>
    %9 = arith.maximumf %7, %8 : vector<192x128xf32>
    %10 = arith.truncf %9 : vector<192x128xf32> to vector<192x128xbf16>
    %c0_5 = arith.constant 0 : index
    %c0_6 = arith.constant 0 : index
    %11 = vector.load %arg4[%c0_5, %c0_6] : memref<192x128xbf16, #tpu.memory_space<vmem>>, vector<192x128xbf16>
    tpu.vector_store %arg4[%c0_5, %c0_6], %10 {strides = array<i32>} : memref<192x128xbf16, #tpu.memory_space<vmem>>, vector<192x128xbf16>,
    return
  }
  func.func @transform_0(%arg0: i32) -> (i32, i32) {
    %c0_i32 = arith.constant 0 : i32
    %c0_i32_0 = arith.constant 0 : i32
    return %arg0, %c0_i32 : i32, i32
  }
  func.func @transform_1(%arg0: i32) -> (i32, i32) {
    %c0_i32 = arith.constant 0 : i32
    %c0_i32_0 = arith.constant 0 : i32
    %c0_i32_1 = arith.constant 0 : i32
    return %c0_i32, %c0_i32_0 : i32, i32
  }
  func.func @transform_2(%arg0: i32) -> (i32, i32) {
    %c0_i32 = arith.constant 0 : i32
    %c0_i32_0 = arith.constant 0 : i32
    %c0_i32_1 = arith.constant 0 : i32
    return %c0_i32, %c0_i32_0 : i32, i32
  }
  func.func @transform_3(%arg0: i32) -> (i32, i32) {
    %c0_i32 = arith.constant 0 : i32
    %c0_i32_0 = arith.constant 0 : i32
    return %arg0, %c0_i32 : i32, i32
  }
}

module attributes {stable_mosaic.version = 11 : i64} {
  func.func @kernel(%arg0: i32, %arg1: i32, %arg2: memref<4x176x128xbf16, #tpu.memory_space<vmem>>, %arg3: memref<9x128x128xbf16, #tpu.memory_space<vmem>>, %arg4: memref<160x1xf32, #tpu.memory_space<vmem>>, %arg5: memref<1x160x128xbf16, #tpu.memory_space<vmem>>, %arg6: memref<1x2x128xf32, #tpu.memory_space<vmem>>) attributes {dimension_semantics = [#tpu.dimension_semantics<parallel>, #tpu.dimension_semantics<parallel>], iteration_bounds = array<i64: 1, 1>, scalar_prefetch = 0 : i64, scratch_operands = 0 : i64, tpu.core_type = #tpu.core_type<tc>, window_params = [{transform_indices = @transform_0, window_bounds = array<i64: 4, 176, 128>}, {transform_indices = @transform_1, window_bounds = array<i64: 9, 128, 128>}, {pipeline_mode = #tpu.pipeline_mode<synchronous>, transform_indices = @transform_2, window_bounds = array<i64: 160, 1>}, {transform_indices = @transform_3, window_bounds = array<i64: 1, 160, 128>}, {transform_indices = @transform_4, window_bounds = array<i64: 1, 2, 128>}]} {
    %c0 = arith.constant 0 : index
    %c0_0 = arith.constant 0 : index
    %c0_1 = arith.constant 0 : index
    %0 = vector.load %arg2[%c0, %c0_0, %c0_1] : memref<4x176x128xbf16, #tpu.memory_space<vmem>>, vector<1x160x128xbf16>
    %1 = vector.shape_cast %0 : vector<1x160x128xbf16> to vector<160x128xbf16>
    %c0_2 = arith.constant 0 : index
    %c0_3 = arith.constant 0 : index
    %c0_4 = arith.constant 0 : index
    %2 = vector.load %arg3[%c0_2, %c0_3, %c0_4] : memref<9x128x128xbf16, #tpu.memory_space<vmem>>, vector<1x128x128xbf16>
    %3 = vector.shape_cast %2 : vector<1x128x128xbf16> to vector<128x128xbf16>
    %cst = arith.constant dense<0.000000e+00> : vector<160x128xf32>
    %4 = tpu.matmul %1, %3, %cst {dimension_numbers = #tpu.dot_dimension_numbers<[1], [0], [0], [1], [0, 0, 1, 1], [], []>} : vector<160x128xbf16>, vector<128x128xbf16>, vector<160x128xf32> -> vector<160x128xf32>
    %c1 = arith.constant 1 : index
    %c0_5 = arith.constant 0 : index
    %c0_6 = arith.constant 0 : index
    %5 = vector.load %arg2[%c1, %c0_5, %c0_6] : memref<4x176x128xbf16, #tpu.memory_space<vmem>>, vector<1x160x128xbf16>
    %6 = vector.shape_cast %5 : vector<1x160x128xbf16> to vector<160x128xbf16>
    %c1_7 = arith.constant 1 : index
    %c0_8 = arith.constant 0 : index
    %c0_9 = arith.constant 0 : index
    %7 = vector.load %arg3[%c1_7, %c0_8, %c0_9] : memref<9x128x128xbf16, #tpu.memory_space<vmem>>, vector<1x128x128xbf16>
    %8 = vector.shape_cast %7 : vector<1x128x128xbf16> to vector<128x128xbf16>
    %cst_10 = arith.constant dense<0.000000e+00> : vector<160x128xf32>
    %9 = tpu.matmul %6, %8, %cst_10 {dimension_numbers = #tpu.dot_dimension_numbers<[1], [0], [0], [1], [0, 0, 1, 1], [], []>} : vector<160x128xbf16>, vector<128x128xbf16>, vector<160x128xf32> -> vector<160x128xf32>
    %10 = arith.addf %4, %9 : vector<160x128xf32>
    %c0_11 = arith.constant 0 : index
    %c1_12 = arith.constant 1 : index
    %c0_13 = arith.constant 0 : index
    %11 = vector.load %arg2[%c0_11, %c1_12, %c0_13] : memref<4x176x128xbf16, #tpu.memory_space<vmem>>, vector<1x160x128xbf16>
    %12 = vector.shape_cast %11 : vector<1x160x128xbf16> to vector<160x128xbf16>
    %c2 = arith.constant 2 : index
    %c0_14 = arith.constant 0 : index
    %c0_15 = arith.constant 0 : index
    %13 = vector.load %arg3[%c2, %c0_14, %c0_15] : memref<9x128x128xbf16, #tpu.memory_space<vmem>>, vector<1x128x128xbf16>
    %14 = vector.shape_cast %13 : vector<1x128x128xbf16> to vector<128x128xbf16>
    %cst_16 = arith.constant dense<0.000000e+00> : vector<160x128xf32>
    %15 = tpu.matmul %12, %14, %cst_16 {dimension_numbers = #tpu.dot_dimension_numbers<[1], [0], [0], [1], [0, 0, 1, 1], [], []>} : vector<160x128xbf16>, vector<128x128xbf16>, vector<160x128xf32> -> vector<160x128xf32>
    %16 = arith.addf %10, %15 : vector<160x128xf32>
    %c2_17 = arith.constant 2 : index
    %c0_18 = arith.constant 0 : index
    %c0_19 = arith.constant 0 : index
    %17 = vector.load %arg2[%c2_17, %c0_18, %c0_19] : memref<4x176x128xbf16, #tpu.memory_space<vmem>>, vector<1x160x128xbf16>
    %18 = vector.shape_cast %17 : vector<1x160x128xbf16> to vector<160x128xbf16>
    %c3 = arith.constant 3 : index
    %c0_20 = arith.constant 0 : index
    %c0_21 = arith.constant 0 : index
    %19 = vector.load %arg3[%c3, %c0_20, %c0_21] : memref<9x128x128xbf16, #tpu.memory_space<vmem>>, vector<1x128x128xbf16>
    %20 = vector.shape_cast %19 : vector<1x128x128xbf16> to vector<128x128xbf16>
    %cst_22 = arith.constant dense<0.000000e+00> : vector<160x128xf32>
    %21 = tpu.matmul %18, %20, %cst_22 {dimension_numbers = #tpu.dot_dimension_numbers<[1], [0], [0], [1], [0, 0, 1, 1], [], []>} : vector<160x128xbf16>, vector<128x128xbf16>, vector<160x128xf32> -> vector<160x128xf32>
    %22 = arith.addf %16, %21 : vector<160x128xf32>
    %c3_23 = arith.constant 3 : index
    %c0_24 = arith.constant 0 : index
    %c0_25 = arith.constant 0 : index
    %23 = vector.load %arg2[%c3_23, %c0_24, %c0_25] : memref<4x176x128xbf16, #tpu.memory_space<vmem>>, vector<1x160x128xbf16>
    %24 = vector.shape_cast %23 : vector<1x160x128xbf16> to vector<160x128xbf16>
    %c4 = arith.constant 4 : index
    %c0_26 = arith.constant 0 : index
    %c0_27 = arith.constant 0 : index
    %25 = vector.load %arg3[%c4, %c0_26, %c0_27] : memref<9x128x128xbf16, #tpu.memory_space<vmem>>, vector<1x128x128xbf16>
    %26 = vector.shape_cast %25 : vector<1x128x128xbf16> to vector<128x128xbf16>
    %cst_28 = arith.constant dense<0.000000e+00> : vector<160x128xf32>
    %27 = tpu.matmul %24, %26, %cst_28 {dimension_numbers = #tpu.dot_dimension_numbers<[1], [0], [0], [1], [0, 0, 1, 1], [], []>} : vector<160x128xbf16>, vector<128x128xbf16>, vector<160x128xf32> -> vector<160x128xf32>
    %28 = arith.addf %22, %27 : vector<160x128xf32>
    %c2_29 = arith.constant 2 : index
    %c1_30 = arith.constant 1 : index
    %c0_31 = arith.constant 0 : index
    %29 = vector.load %arg2[%c2_29, %c1_30, %c0_31] : memref<4x176x128xbf16, #tpu.memory_space<vmem>>, vector<1x160x128xbf16>
    %30 = vector.shape_cast %29 : vector<1x160x128xbf16> to vector<160x128xbf16>
    %c5 = arith.constant 5 : index
    %c0_32 = arith.constant 0 : index
    %c0_33 = arith.constant 0 : index
    %31 = vector.load %arg3[%c5, %c0_32, %c0_33] : memref<9x128x128xbf16, #tpu.memory_space<vmem>>, vector<1x128x128xbf16>
    %32 = vector.shape_cast %31 : vector<1x128x128xbf16> to vector<128x128xbf16>
    %cst_34 = arith.constant dense<0.000000e+00> : vector<160x128xf32>
    %33 = tpu.matmul %30, %32, %cst_34 {dimension_numbers = #tpu.dot_dimension_numbers<[1], [0], [0], [1], [0, 0, 1, 1], [], []>} : vector<160x128xbf16>, vector<128x128xbf16>, vector<160x128xf32> -> vector<160x128xf32>
    %34 = arith.addf %28, %33 : vector<160x128xf32>
    %c0_35 = arith.constant 0 : index
    %c9 = arith.constant 9 : index
    %c0_36 = arith.constant 0 : index
    %35 = vector.load %arg2[%c0_35, %c9, %c0_36] : memref<4x176x128xbf16, #tpu.memory_space<vmem>>, vector<1x160x128xbf16>
    %36 = vector.shape_cast %35 : vector<1x160x128xbf16> to vector<160x128xbf16>
    %c6 = arith.constant 6 : index
    %c0_37 = arith.constant 0 : index
    %c0_38 = arith.constant 0 : index
    %37 = vector.load %arg3[%c6, %c0_37, %c0_38] : memref<9x128x128xbf16, #tpu.memory_space<vmem>>, vector<1x128x128xbf16>
    %38 = vector.shape_cast %37 : vector<1x128x128xbf16> to vector<128x128xbf16>
    %cst_39 = arith.constant dense<0.000000e+00> : vector<160x128xf32>
    %39 = tpu.matmul %36, %38, %cst_39 {dimension_numbers = #tpu.dot_dimension_numbers<[1], [0], [0], [1], [0, 0, 1, 1], [], []>} : vector<160x128xbf16>, vector<128x128xbf16>, vector<160x128xf32> -> vector<160x128xf32>
    %40 = arith.addf %34, %39 : vector<160x128xf32>
    %c1_40 = arith.constant 1 : index
    %c9_41 = arith.constant 9 : index
    %c0_42 = arith.constant 0 : index
    %41 = vector.load %arg2[%c1_40, %c9_41, %c0_42] : memref<4x176x128xbf16, #tpu.memory_space<vmem>>, vector<1x160x128xbf16>
    %42 = vector.shape_cast %41 : vector<1x160x128xbf16> to vector<160x128xbf16>
    %c7 = arith.constant 7 : index
    %c0_43 = arith.constant 0 : index
    %c0_44 = arith.constant 0 : index
    %43 = vector.load %arg3[%c7, %c0_43, %c0_44] : memref<9x128x128xbf16, #tpu.memory_space<vmem>>, vector<1x128x128xbf16>
    %44 = vector.shape_cast %43 : vector<1x128x128xbf16> to vector<128x128xbf16>
    %cst_45 = arith.constant dense<0.000000e+00> : vector<160x128xf32>
    %45 = tpu.matmul %42, %44, %cst_45 {dimension_numbers = #tpu.dot_dimension_numbers<[1], [0], [0], [1], [0, 0, 1, 1], [], []>} : vector<160x128xbf16>, vector<128x128xbf16>, vector<160x128xf32> -> vector<160x128xf32>
    %46 = arith.addf %40, %45 : vector<160x128xf32>
    %c0_46 = arith.constant 0 : index
    %c10 = arith.constant 10 : index
    %c0_47 = arith.constant 0 : index
    %47 = vector.load %arg2[%c0_46, %c10, %c0_47] : memref<4x176x128xbf16, #tpu.memory_space<vmem>>, vector<1x160x128xbf16>
    %48 = vector.shape_cast %47 : vector<1x160x128xbf16> to vector<160x128xbf16>
    %c8 = arith.constant 8 : index
    %c0_48 = arith.constant 0 : index
    %c0_49 = arith.constant 0 : index
    %49 = vector.load %arg3[%c8, %c0_48, %c0_49] : memref<9x128x128xbf16, #tpu.memory_space<vmem>>, vector<1x128x128xbf16>
    %50 = vector.shape_cast %49 : vector<1x128x128xbf16> to vector<128x128xbf16>
    %cst_50 = arith.constant dense<0.000000e+00> : vector<160x128xf32>
    %51 = tpu.matmul %48, %50, %cst_50 {dimension_numbers = #tpu.dot_dimension_numbers<[1], [0], [0], [1], [0, 0, 1, 1], [], []>} : vector<160x128xbf16>, vector<128x128xbf16>, vector<160x128xf32> -> vector<160x128xf32>
    %52 = arith.addf %46, %51 : vector<160x128xf32>
    %53 = arith.truncf %52 : vector<160x128xf32> to vector<160x128xbf16>
    %c0_51 = arith.constant 0 : index
    %c0_52 = arith.constant 0 : index
    %c0_53 = arith.constant 0 : index
    %54 = vector.load %arg5[%c0_51, %c0_52, %c0_53] : memref<1x160x128xbf16, #tpu.memory_space<vmem>>, vector<1x160x128xbf16>
    %55 = vector.shape_cast %54 : vector<1x160x128xbf16> to vector<160x128xbf16>
    %56 = vector.shape_cast %53 : vector<160x128xbf16> to vector<1x160x128xbf16>
    tpu.vector_store %arg5[%c0_51, %c0_52, %c0_53], %56 {strides = array<i32>} : memref<1x160x128xbf16, #tpu.memory_space<vmem>>, vector<1x160x128xbf16>,
    %c0_54 = arith.constant 0 : index
    %c0_55 = arith.constant 0 : index
    %57 = vector.load %arg4[%c0_54, %c0_55] : memref<160x1xf32, #tpu.memory_space<vmem>>, vector<160x1xf32>
    %58 = vector.broadcast %57 : vector<160x1xf32> to vector<160x128xf32>
    %59 = arith.mulf %52, %58 : vector<160x128xf32>
    %cst_56 = arith.constant dense<0.000000e+00> : vector<128xf32>
    %60 = vector.multi_reduction <add>, %59, %cst_56 [0] : vector<160x128xf32> to vector<128xf32>
    %61 = vector.shape_cast %60 : vector<128xf32> to vector<1x128xf32>
    %62 = arith.mulf %59, %52 : vector<160x128xf32>
    %cst_57 = arith.constant dense<0.000000e+00> : vector<128xf32>
    %63 = vector.multi_reduction <add>, %62, %cst_57 [0] : vector<160x128xf32> to vector<128xf32>
    %64 = vector.shape_cast %63 : vector<128xf32> to vector<1x128xf32>
    %65 = tpu.concatenate %61, %64 in 0 : vector<1x128xf32>, vector<1x128xf32> -> vector<2x128xf32>
    %c0_58 = arith.constant 0 : index
    %c0_59 = arith.constant 0 : index
    %c0_60 = arith.constant 0 : index
    %66 = vector.load %arg6[%c0_58, %c0_59, %c0_60] : memref<1x2x128xf32, #tpu.memory_space<vmem>>, vector<1x2x128xf32>
    %67 = vector.shape_cast %66 : vector<1x2x128xf32> to vector<2x128xf32>
    %68 = vector.shape_cast %65 : vector<2x128xf32> to vector<1x2x128xf32>
    tpu.vector_store %arg6[%c0_58, %c0_59, %c0_60], %68 {strides = array<i32>} : memref<1x2x128xf32, #tpu.memory_space<vmem>>, vector<1x2x128xf32>,
    return
  }
  func.func @transform_0(%arg0: i32, %arg1: i32) -> (i32, i32, i32) {
    %c0_i32 = arith.constant 0 : i32
    %c0_i32_0 = arith.constant 0 : i32
    %c0_i32_1 = arith.constant 0 : i32
    return %c0_i32, %arg0, %c0_i32_0 : i32, i32, i32
  }
  func.func @transform_1(%arg0: i32, %arg1: i32) -> (i32, i32, i32) {
    %c0_i32 = arith.constant 0 : i32
    %c0_i32_0 = arith.constant 0 : i32
    %c0_i32_1 = arith.constant 0 : i32
    return %c0_i32, %c0_i32_0, %arg1 : i32, i32, i32
  }
  func.func @transform_2(%arg0: i32, %arg1: i32) -> (i32, i32) {
    %c0_i32 = arith.constant 0 : i32
    %c0_i32_0 = arith.constant 0 : i32
    %c0_i32_1 = arith.constant 0 : i32
    return %c0_i32, %c0_i32_0 : i32, i32
  }
  func.func @transform_3(%arg0: i32, %arg1: i32) -> (i32, i32, i32) {
    %c0_i32 = arith.constant 0 : i32
    %c0_i32_0 = arith.constant 0 : i32
    return %arg0, %c0_i32, %arg1 : i32, i32, i32
  }
  func.func @transform_4(%arg0: i32, %arg1: i32) -> (i32, i32, i32) {
    %c0_i32 = arith.constant 0 : i32
    %c0_i32_0 = arith.constant 0 : i32
    return %arg0, %c0_i32, %arg1 : i32, i32, i32
  }
}

module attributes {stable_mosaic.version = 11 : i64} {
  func.func @_bn_relu_kernel(%arg0: i32, %arg1: memref<160x128xbf16, #tpu.memory_space<vmem>>, %arg2: memref<1x128xf32, #tpu.memory_space<vmem>>, %arg3: memref<1x128xf32, #tpu.memory_space<vmem>>, %arg4: memref<160x128xbf16, #tpu.memory_space<vmem>>) attributes {dimension_semantics = [#tpu.dimension_semantics<parallel>], iteration_bounds = array<i64: 1>, scalar_prefetch = 0 : i64, scratch_operands = 0 : i64, tpu.core_type = #tpu.core_type<tc>, window_params = [{transform_indices = @transform_0, window_bounds = array<i64: 160, 128>}, {pipeline_mode = #tpu.pipeline_mode<synchronous>, transform_indices = @transform_1, window_bounds = array<i64: 1, 128>}, {pipeline_mode = #tpu.pipeline_mode<synchronous>, transform_indices = @transform_2, window_bounds = array<i64: 1, 128>}, {transform_indices = @transform_3, window_bounds = array<i64: 160, 128>}]} {
    %c0 = arith.constant 0 : index
    %c0_0 = arith.constant 0 : index
    %0 = vector.load %arg1[%c0, %c0_0] : memref<160x128xbf16, #tpu.memory_space<vmem>>, vector<160x128xbf16>
    %1 = arith.extf %0 : vector<160x128xbf16> to vector<160x128xf32>
    %c0_1 = arith.constant 0 : index
    %c0_2 = arith.constant 0 : index
    %2 = vector.load %arg2[%c0_1, %c0_2] : memref<1x128xf32, #tpu.memory_space<vmem>>, vector<1x128xf32>
    %3 = vector.broadcast %2 : vector<1x128xf32> to vector<160x128xf32>
    %4 = arith.mulf %1, %3 : vector<160x128xf32>
    %c0_3 = arith.constant 0 : index
    %c0_4 = arith.constant 0 : index
    %5 = vector.load %arg3[%c0_3, %c0_4] : memref<1x128xf32, #tpu.memory_space<vmem>>, vector<1x128xf32>
    %6 = vector.broadcast %5 : vector<1x128xf32> to vector<160x128xf32>
    %7 = arith.addf %4, %6 : vector<160x128xf32>
    %cst = arith.constant 0.000000e+00 : f32
    %8 = vector.broadcast %cst : f32 to vector<160x128xf32>
    %9 = arith.maximumf %7, %8 : vector<160x128xf32>
    %10 = arith.truncf %9 : vector<160x128xf32> to vector<160x128xbf16>
    %c0_5 = arith.constant 0 : index
    %c0_6 = arith.constant 0 : index
    %11 = vector.load %arg4[%c0_5, %c0_6] : memref<160x128xbf16, #tpu.memory_space<vmem>>, vector<160x128xbf16>
    tpu.vector_store %arg4[%c0_5, %c0_6], %10 {strides = array<i32>} : memref<160x128xbf16, #tpu.memory_space<vmem>>, vector<160x128xbf16>,
    return
  }
  func.func @transform_0(%arg0: i32) -> (i32, i32) {
    %c0_i32 = arith.constant 0 : i32
    %c0_i32_0 = arith.constant 0 : i32
    return %arg0, %c0_i32 : i32, i32
  }
  func.func @transform_1(%arg0: i32) -> (i32, i32) {
    %c0_i32 = arith.constant 0 : i32
    %c0_i32_0 = arith.constant 0 : i32
    %c0_i32_1 = arith.constant 0 : i32
    return %c0_i32, %c0_i32_0 : i32, i32
  }
  func.func @transform_2(%arg0: i32) -> (i32, i32) {
    %c0_i32 = arith.constant 0 : i32
    %c0_i32_0 = arith.constant 0 : i32
    %c0_i32_1 = arith.constant 0 : i32
    return %c0_i32, %c0_i32_0 : i32, i32
  }
  func.func @transform_3(%arg0: i32) -> (i32, i32) {
    %c0_i32 = arith.constant 0 : i32
    %c0_i32_0 = arith.constant 0 : i32
    return %arg0, %c0_i32 : i32, i32
  }
}

</mosaic_0001>

<llo_original>
// kernel: inception_v2b_forward.17
$region0: #{inception_v2b_forward.17}
  #allocation0 [shape = 'u32[]', space=smem, size = 0x4, offset = 0x4, fixed_abs, tag = 'smem constant byte address 0x4 - core index']
  #allocation1 [shape = 'u32[144,128]{1,0:T(1,128)}', space=vmem, size = 0x12000, scoped, tag = 'internal scratch']
  %s0 = inlined_call_operand.vmem [shape: bf16[4,176,128], index: 0, kind: input, shape index: {}]
  %s1 = inlined_call_operand.vmem [shape: bf16[2,72,128], index: 1, kind: output, shape index: {}]
  %s2 = sld [smem:[#allocation0]]
  $region78: #{inception_v2b_forward.17} parent=0
    _
  %s4 = ssub.s32 1, %s2
  %s5 = scalar_select 0, %s4, %s2
  $region1: #{inception_v2b_forward.17} parent=0
    #allocation2 [shape = 'u8[180224]{0}', space=vmem, size = 0x2c000, scoped, tag = 'input window, operand 0']
    loop: start=0, step=1, limit=4
    $region2: #{inception_v2b_forward.17} parent=1 // loop_pre_header
      _
    $region3: #{inception_v2b_forward.17} parent=1 // loop_header
      %s7 = sphi 0, %s11
      %p8 = scmp.ge.s32.totalorder %s7, 4
      %s17 = sphi 0, %s19
      %s20 = sphi 0, %s17
      %s21 = sphi 0, %s20
      %s37 = sphi 0, %s21
      %s43 = sphi 0, %s45
      %s46 = sphi 0, %s43
      %s47 = sphi 0, %s46
      %s63 = sphi 0, %s47
    $region4: #{inception_v2b_forward.17} parent=1 // loop_header_branch
      %10 = sbr.rel (%p8) target = $region8
    $region5: #{inception_v2b_forward.17} parent=1 // loop_body
      %s12 = ssub.s32 %s7, 1
      %s13 = ssub.s32 %s7, 2
      %s14 = sadd.s32 %s7, 1
      %s15 = ssub.s32 %s7, %s14
      %p16 = scmp.eq.s32.totalorder %s15, 0
      %s18 = sadd.s32 %s17, 1
      %s19 = scalar_select %p16, %s17, %s18
      %p22 = pneg %p16
      %p23 = scmp.eq.s32.totalorder %s7, 1
      %p24 = por %p22, %p23
      %p25 = scmp.ne.s32.totalorder %s17, %s20
      %p26 = scmp.eq.s32.totalorder %s7, 0
      %p27 = por %p25, %p26
      %p28 = scmp.ne.s32.totalorder %s17, %s20
      %p29 = scmp.eq.s32.totalorder %s12, 1
      %p30 = por %p28, %p29
      %p31 = scmp.ne.s32.totalorder %s20, %s21
      %p32 = scmp.eq.s32.totalorder %s12, 0
      %p33 = por %p31, %p32
      %p34 = scmp.ne.s32.totalorder %s20, %s21
      %p35 = scmp.eq.s32.totalorder %s13, 1
      %p36 = por %p34, %p35
      %p38 = scmp.ne.s32.totalorder %s21, %s37
      %p39 = scmp.eq.s32.totalorder %s13, 0
      %p40 = por %p38, %p39
      %s41 = ssub.s32 %s7, %s14
      %p42 = scmp.eq.s32.totalorder %s41, 0
      %s44 = sadd.s32 %s43, 1
      %s45 = scalar_select %p42, %s43, %s44
      %p48 = pneg %p42
      %p49 = scmp.eq.s32.totalorder %s7, 1
      %p50 = por %p48, %p49
      %p51 = scmp.ne.s32.totalorder %s43, %s46
      %p52 = scmp.eq.s32.totalorder %s7, 0
      %p53 = por %p51, %p52
      %p54 = scmp.ne.s32.totalorder %s43, %s46
      %p55 = scmp.eq.s32.totalorder %s12, 1
      %p56 = por %p54, %p55
      %p57 = scmp.ne.s32.totalorder %s46, %s47
      %p58 = scmp.eq.s32.totalorder %s12, 0
      %p59 = por %p57, %p58
      %p60 = scmp.ne.s32.totalorder %s46, %s47
      %p61 = scmp.eq.s32.totalorder %s13, 1
      %p62 = por %p60, %p61
      %p64 = scmp.ne.s32.totalorder %s47, %s63
      %p65 = scmp.eq.s32.totalorder %s13, 0
      %p66 = por %p64, %p65
      %p67 = scmp.le.s32.totalorder 1, %s7
      %p68 = scmp.lt.s32.totalorder %s7, 3
      %p69 = pnand %p67, %p68
      %p70 = pneg %p69
      // Predicated region
      $region9: #{inception_v2b_forward.17} parent=5 // pred_check
        _
      $region10: #{inception_v2b_forward.17} parent=5 // pred_check_branch
        %72 = sbr.rel (%p69) target = $region12
      $region11: #{inception_v2b_forward.17} parent=5 // pred_region
        %s73 = ssub.s32 %s7, 1
      $region12: #{inception_v2b_forward.17} parent=5 // pred_fallthru
        _
      %p74 = scmp.lt.s32.totalorder %s7, 2
      // Predicated region
      $region13: #{inception_v2b_forward.17} parent=5 // pred_check
        %p75 = pneg %p74
      $region14: #{inception_v2b_forward.17} parent=5 // pred_check_branch
        %77 = sbr.rel (%p75) target = $region16
      $region15: #{inception_v2b_forward.17} parent=5 // pred_region
        // Predicated region
        $region17: #{inception_v2b_forward.17} parent=15 // pred_check
          %p78 = pneg %p27
        $region18: #{inception_v2b_forward.17} parent=15 // pred_check_branch
          %80 = sbr.rel (%p78) target = $region20
        $region19: #{inception_v2b_forward.17} parent=15 // pred_region
          %s81 = sand.u32 %s17, 1
          %s82 = sand.u32 %s17, 1
          %s83 = smul.addr %s82, 176
          %s84 = scalar_lea.vmem [#allocation2], %s83
          %s85 = smul.u32 11, %s7
          %s86 = smul.addr %s85, 4
          %s87 = scalar_lea.vmem %s0, %s86
          // Predicated region
          $region21: #{inception_v2b_forward.17} parent=19 // pred_check
            _
          $region22: #{inception_v2b_forward.17} parent=19 // pred_check_branch
            %89 = sbr.rel (0) target = $region24
          $region23: #{inception_v2b_forward.17} parent=19 // pred_region
            // Predicated region
            $region25: #{inception_v2b_forward.17} parent=23 // pred_check
              _
            $region26: #{inception_v2b_forward.17} parent=23 // pred_check_branch
              %91 = sbr.rel target = $region28
            $region27: #{inception_v2b_forward.17} parent=23 // pred_region
              // Predicated region
              $region40: #{inception_v2b_forward.17} parent=27 // pred_check
                _
              $region41: #{inception_v2b_forward.17} parent=27 // pred_check_branch
                %192 = sbr.rel (0) target = $region43
              $region42: #{inception_v2b_forward.17} parent=27 // pred_region
                loop: start=0, step=1, limit=1
                $region44: #{inception_v2b_forward.17} parent=42 // loop_pre_header
                  _
                $region45: #{inception_v2b_forward.17} parent=42 // loop_header
                  %s194 = sphi 0, %s198
                  %p195 = scmp.ge.s32.totalorder %s194, 1
                  %s199 = sphi %s87, %s87
                  %s200 = sphi %s84, %s84
                $region46: #{inception_v2b_forward.17} parent=42 // loop_header_branch
                  %197 = sbr.rel (%p195) target = $region50
                $region47: #{inception_v2b_forward.17} parent=42 // loop_body
                  _
                $region48: #{inception_v2b_forward.17} parent=42 // loop_footer
                  %s198 = sadd.s32 1, %s194
                $region49: #{inception_v2b_forward.17} parent=42 // loop_footer_branch
                  %193 = sbr.rel target = $region45
                $region50: #{inception_v2b_forward.17} parent=42 // loop_exit
                  _
                loop: start=0, step=1, limit=1
                $region51: #{inception_v2b_forward.17} parent=42 // loop_pre_header
                  _
                $region52: #{inception_v2b_forward.17} parent=42 // loop_header
                  %s203 = sphi 0, %s207
                  %p204 = scmp.ge.s32.totalorder %s203, 1
                  %s208 = sphi %s87, %s87
                  %s209 = sphi %s84, %s84
                $region53: #{inception_v2b_forward.17} parent=42 // loop_header_branch
                  %206 = sbr.rel (%p204) target = $region57
                $region54: #{inception_v2b_forward.17} parent=42 // loop_body
                  %v210 = vld [vmem:[%s208] sm:$0xf]
                  %211 = vst [vmem:[%s209] sm:$0xf] %v210
                  %v212 = vld [vmem:[%s208 + $0x4] sm:$0xf]
                  %213 = vst [vmem:[%s209 + $0x4] sm:$0xf] %v212
                  %v214 = vld [vmem:[%s208 + $0x8] sm:$0xf]
                  %215 = vst [vmem:[%s209 + $0x8] sm:$0xf] %v214
                  %v216 = vld [vmem:[%s208 + $0xc] sm:$0xf]
                  %217 = vst [vmem:[%s209 + $0xc] sm:$0xf] %v216
                  %v218 = vld [vmem:[%s208 + $0x10] sm:$0xf]
                  %219 = vst [vmem:[%s209 + $0x10] sm:$0xf] %v218
                  %v220 = vld [vmem:[%s208 + $0x14] sm:$0xf]
                  %221 = vst [vmem:[%s209 + $0x14] sm:$0xf] %v220
                  %v222 = vld [vmem:[%s208 + $0x18] sm:$0xf]
                  %223 = vst [vmem:[%s209 + $0x18] sm:$0xf] %v222
                  %v224 = vld [vmem:[%s208 + $0x1c] sm:$0xf]
                  %225 = vst [vmem:[%s209 + $0x1c] sm:$0xf] %v224
                  %v226 = vld [vmem:[%s208 + $0x20] sm:$0xf]
                  %227 = vst [vmem:[%s209 + $0x20] sm:$0xf] %v226
                  %v228 = vld [vmem:[%s208 + $0x24] sm:$0xf]
                  %229 = vst [vmem:[%s209 + $0x24] sm:$0xf] %v228
                  %v230 = vld [vmem:[%s208 + $0x28] sm:$0xf]
                  %231 = vst [vmem:[%s209 + $0x28] sm:$0xf] %v230
                  %v232 = vld [vmem:[%s208 + $0x58] sm:$0xf]
                  %233 = vst [vmem:[%s209 + $0x2c] sm:$0xf] %v232
                  %v234 = vld [vmem:[%s208 + $0x5c] sm:$0xf]
                  %235 = vst [vmem:[%s209 + $0x30] sm:$0xf] %v234
                  %v236 = vld [vmem:[%s208 + $0x60] sm:$0xf]
                  %237 = vst [vmem:[%s209 + $0x34] sm:$0xf] %v236
                  %v238 = vld [vmem:[%s208 + $0x64] sm:$0xf]
                  %239 = vst [vmem:[%s209 + $0x38] sm:$0xf] %v238
                  %v240 = vld [vmem:[%s208 + $0x68] sm:$0xf]
                  %241 = vst [vmem:[%s209 + $0x3c] sm:$0xf] %v240
                  %v242 = vld [vmem:[%s208 + $0x6c] sm:$0xf]
                  %243 = vst [vmem:[%s209 + $0x40] sm:$0xf] %v242
                  %v244 = vld [vmem:[%s208 + $0x70] sm:$0xf]
                  %245 = vst [vmem:[%s209 + $0x44] sm:$0xf] %v244
                  %v246 = vld [vmem:[%s208 + $0x74] sm:$0xf]
                  %247 = vst [vmem:[%s209 + $0x48] sm:$0xf] %v246
                  %v248 = vld [vmem:[%s208 + $0x78] sm:$0xf]
                  %249 = vst [vmem:[%s209 + $0x4c] sm:$0xf] %v248
                  %v250 = vld [vmem:[%s208 + $0x7c] sm:$0xf]
                  %251 = vst [vmem:[%s209 + $0x50] sm:$0xf] %v250
                  %v252 = vld [vmem:[%s208 + $0x80] sm:$0xf]
                  %253 = vst [vmem:[%s209 + $0x54] sm:$0xf] %v252
                  %v254 = vld [vmem:[%s208 + $0xb0] sm:$0xf]
                  %255 = vst [vmem:[%s209 + $0x58] sm:$0xf] %v254
                  %v256 = vld [vmem:[%s208 + $0xb4] sm:$0xf]
                  %257 = vst [vmem:[%s209 + $0x5c] sm:$0xf] %v256
                  %v258 = vld [vmem:[%s208 + $0xb8] sm:$0xf]
                  %259 = vst [vmem:[%s209 + $0x60] sm:$0xf] %v258
                  %v260 = vld [vmem:[%s208 + $0xbc] sm:$0xf]
                  %261 = vst [vmem:[%s209 + $0x64] sm:$0xf] %v260
                  %v262 = vld [vmem:[%s208 + $0xc0] sm:$0xf]
                  %263 = vst [vmem:[%s209 + $0x68] sm:$0xf] %v262
                  %v264 = vld [vmem:[%s208 + $0xc4] sm:$0xf]
                  %265 = vst [vmem:[%s209 + $0x6c] sm:$0xf] %v264
                  %v266 = vld [vmem:[%s208 + $0xc8] sm:$0xf]
                  %267 = vst [vmem:[%s209 + $0x70] sm:$0xf] %v266
                  %v268 = vld [vmem:[%s208 + $0xcc] sm:$0xf]
                  %269 = vst [vmem:[%s209 + $0x74] sm:$0xf] %v268
                  %v270 = vld [vmem:[%s208 + $0xd0] sm:$0xf]
                  %271 = vst [vmem:[%s209 + $0x78] sm:$0xf] %v270
                  %v272 = vld [vmem:[%s208 + $0xd4] sm:$0xf]
                  %273 = vst [vmem:[%s209 + $0x7c] sm:$0xf] %v272
                  %v274 = vld [vmem:[%s208 + $0xd8] sm:$0xf]
                  %275 = vst [vmem:[%s209 + $0x80] sm:$0xf] %v274
                  %v276 = vld [vmem:[%s208 + $0x108] sm:$0xf]
                  %277 = vst [vmem:[%s209 + $0x84] sm:$0xf] %v276
                  %v278 = vld [vmem:[%s208 + $0x10c] sm:$0xf]
                  %279 = vst [vmem:[%s209 + $0x88] sm:$0xf] %v278
                  %v280 = vld [vmem:[%s208 + $0x110] sm:$0xf]
                  %281 = vst [vmem:[%s209 + $0x8c] sm:$0xf] %v280
                  %v282 = vld [vmem:[%s208 + $0x114] sm:$0xf]
                  %283 = vst [vmem:[%s209 + $0x90] sm:$0xf] %v282
                  %v284 = vld [vmem:[%s208 + $0x118] sm:$0xf]
                  %285 = vst [vmem:[%s209 + $0x94] sm:$0xf] %v284
                  %v286 = vld [vmem:[%s208 + $0x11c] sm:$0xf]
                  %287 = vst [vmem:[%s209 + $0x98] sm:$0xf] %v286
                  %v288 = vld [vmem:[%s208 + $0x120] sm:$0xf]
                  %289 = vst [vmem:[%s209 + $0x9c] sm:$0xf] %v288
                  %v290 = vld [vmem:[%s208 + $0x124] sm:$0xf]
                  %291 = vst [vmem:[%s209 + $0xa0] sm:$0xf] %v290
                  %v292 = vld [vmem:[%s208 + $0x128] sm:$0xf]
                  %293 = vst [vmem:[%s209 + $0xa4] sm:$0xf] %v292
                  %v294 = vld [vmem:[%s208 + $0x12c] sm:$0xf]
                  %295 = vst [vmem:[%s209 + $0xa8] sm:$0xf] %v294
                  %v296 = vld [vmem:[%s208 + $0x130] sm:$0xf]
                  %297 = vst [vmem:[%s209 + $0xac] sm:$0xf] %v296
                $region55: #{inception_v2b_forward.17} parent=42 // loop_footer
                  %s207 = sadd.s32 1, %s203
                $region56: #{inception_v2b_forward.17} parent=42 // loop_footer_branch
                  %202 = sbr.rel target = $region52
                $region57: #{inception_v2b_forward.17} parent=42 // loop_exit
                  _
              $region43: #{inception_v2b_forward.17} parent=27 // pred_fallthru
                _
            $region28: #{inception_v2b_forward.17} parent=23 // pred_fallthru
              _
            // Predicated region
            $region29: #{inception_v2b_forward.17} parent=23 // pred_check
              _
            $region30: #{inception_v2b_forward.17} parent=23 // pred_check_branch
              %93 = sbr.rel (0) target = $region32
            $region31: #{inception_v2b_forward.17} parent=23 // pred_region
              loop: start=0, step=1, limit=1
              $region33: #{inception_v2b_forward.17} parent=31 // loop_pre_header
                _
              $region34: #{inception_v2b_forward.17} parent=31 // loop_header
                %s96 = sphi 0, %s100
                %p97 = scmp.ge.s32.totalorder %s96, 1
                %s101 = sphi %s87, %s87
                %s102 = sphi %s84, %s84
              $region35: #{inception_v2b_forward.17} parent=31 // loop_header_branch
                %99 = sbr.rel (%p97) target = $region39
              $region36: #{inception_v2b_forward.17} parent=31 // loop_body
                %v103 = vld [vmem:[%s101] sm:$0xf]
                %104 = vst [vmem:[%s102] sm:$0xf] %v103
                %v105 = vld [vmem:[%s101 + $0x4] sm:$0xf]
                %106 = vst [vmem:[%s102 + $0x4] sm:$0xf] %v105
                %v107 = vld [vmem:[%s101 + $0x8] sm:$0xf]
                %108 = vst [vmem:[%s102 + $0x8] sm:$0xf] %v107
                %v109 = vld [vmem:[%s101 + $0xc] sm:$0xf]
                %110 = vst [vmem:[%s102 + $0xc] sm:$0xf] %v109
                %v111 = vld [vmem:[%s101 + $0x10] sm:$0xf]
                %112 = vst [vmem:[%s102 + $0x10] sm:$0xf] %v111
                %v113 = vld [vmem:[%s101 + $0x14] sm:$0xf]
                %114 = vst [vmem:[%s102 + $0x14] sm:$0xf] %v113
                %v115 = vld [vmem:[%s101 + $0x18] sm:$0xf]
                %116 = vst [vmem:[%s102 + $0x18] sm:$0xf] %v115
                %v117 = vld [vmem:[%s101 + $0x1c] sm:$0xf]
                %118 = vst [vmem:[%s102 + $0x1c] sm:$0xf] %v117
                %v119 = vld [vmem:[%s101 + $0x20] sm:$0xf]
                %120 = vst [vmem:[%s102 + $0x20] sm:$0xf] %v119
                %v121 = vld [vmem:[%s101 + $0x24] sm:$0xf]
                %122 = vst [vmem:[%s102 + $0x24] sm:$0xf] %v121
                %v123 = vld [vmem:[%s101 + $0x28] sm:$0xf]
                %124 = vst [vmem:[%s102 + $0x28] sm:$0xf] %v123
                %v125 = vld [vmem:[%s101 + $0x58] sm:$0xf]
                %126 = vst [vmem:[%s102 + $0x2c] sm:$0xf] %v125
                %v127 = vld [vmem:[%s101 + $0x5c] sm:$0xf]
                %128 = vst [vmem:[%s102 + $0x30] sm:$0xf] %v127
                %v129 = vld [vmem:[%s101 + $0x60] sm:$0xf]
                %130 = vst [vmem:[%s102 + $0x34] sm:$0xf] %v129
                %v131 = vld [vmem:[%s101 + $0x64] sm:$0xf]
                %132 = vst [vmem:[%s102 + $0x38] sm:$0xf] %v131
                %v133 = vld [vmem:[%s101 + $0x68] sm:$0xf]
                %134 = vst [vmem:[%s102 + $0x3c] sm:$0xf] %v133
                %v135 = vld [vmem:[%s101 + $0x6c] sm:$0xf]
                %136 = vst [vmem:[%s102 + $0x40] sm:$0xf] %v135
                %v137 = vld [vmem:[%s101 + $0x70] sm:$0xf]
                %138 = vst [vmem:[%s102 + $0x44] sm:$0xf] %v137
                %v139 = vld [vmem:[%s101 + $0x74] sm:$0xf]
                %140 = vst [vmem:[%s102 + $0x48] sm:$0xf] %v139
                %v141 = vld [vmem:[%s101 + $0x78] sm:$0xf]
                %142 = vst [vmem:[%s102 + $0x4c] sm:$0xf] %v141
                %v143 = vld [vmem:[%s101 + $0x7c] sm:$0xf]
                %144 = vst [vmem:[%s102 + $0x50] sm:$0xf] %v143
                %v145 = vld [vmem:[%s101 + $0x80] sm:$0xf]
                %146 = vst [vmem:[%s102 + $0x54] sm:$0xf] %v145
                %v147 = vld [vmem:[%s101 + $0xb0] sm:$0xf]
                %148 = vst [vmem:[%s102 + $0x58] sm:$0xf] %v147
                %v149 = vld [vmem:[%s101 + $0xb4] sm:$0xf]
                %150 = vst [vmem:[%s102 + $0x5c] sm:$0xf] %v149
                %v151 = vld [vmem:[%s101 + $0xb8] sm:$0xf]
                %152 = vst [vmem:[%s102 + $0x60] sm:$0xf] %v151
                %v153 = vld [vmem:[%s101 + $0xbc] sm:$0xf]
                %154 = vst [vmem:[%s102 + $0x64] sm:$0xf] %v153
                %v155 = vld [vmem:[%s101 + $0xc0] sm:$0xf]
                %156 = vst [vmem:[%s102 + $0x68] sm:$0xf] %v155
                %v157 = vld [vmem:[%s101 + $0xc4] sm:$0xf]
                %158 = vst [vmem:[%s102 + $0x6c] sm:$0xf] %v157
                %v159 = vld [vmem:[%s101 + $0xc8] sm:$0xf]
                %160 = vst [vmem:[%s102 + $0x70] sm:$0xf] %v159
                %v161 = vld [vmem:[%s101 + $0xcc] sm:$0xf]
                %162 = vst [vmem:[%s102 + $0x74] sm:$0xf] %v161
                %v163 = vld [vmem:[%s101 + $0xd0] sm:$0xf]
                %164 = vst [vmem:[%s102 + $0x78] sm:$0xf] %v163
                %v165 = vld [vmem:[%s101 + $0xd4] sm:$0xf]
                %166 = vst [vmem:[%s102 + $0x7c] sm:$0xf] %v165
                %v167 = vld [vmem:[%s101 + $0xd8] sm:$0xf]
                %168 = vst [vmem:[%s102 + $0x80] sm:$0xf] %v167
                %v169 = vld [vmem:[%s101 + $0x108] sm:$0xf]
                %170 = vst [vmem:[%s102 + $0x84] sm:$0xf] %v169
                %v171 = vld [vmem:[%s101 + $0x10c] sm:$0xf]
                %172 = vst [vmem:[%s102 + $0x88] sm:$0xf] %v171
                %v173 = vld [vmem:[%s101 + $0x110] sm:$0xf]
                %174 = vst [vmem:[%s102 + $0x8c] sm:$0xf] %v173
                %v175 = vld [vmem:[%s101 + $0x114] sm:$0xf]
                %176 = vst [vmem:[%s102 + $0x90] sm:$0xf] %v175
                %v177 = vld [vmem:[%s101 + $0x118] sm:$0xf]
                %178 = vst [vmem:[%s102 + $0x94] sm:$0xf] %v177
                %v179 = vld [vmem:[%s101 + $0x11c] sm:$0xf]
                %180 = vst [vmem:[%s102 + $0x98] sm:$0xf] %v179
                %v181 = vld [vmem:[%s101 + $0x120] sm:$0xf]
                %182 = vst [vmem:[%s102 + $0x9c] sm:$0xf] %v181
                %v183 = vld [vmem:[%s101 + $0x124] sm:$0xf]
                %184 = vst [vmem:[%s102 + $0xa0] sm:$0xf] %v183
                %v185 = vld [vmem:[%s101 + $0x128] sm:$0xf]
                %186 = vst [vmem:[%s102 + $0xa4] sm:$0xf] %v185
                %v187 = vld [vmem:[%s101 + $0x12c] sm:$0xf]
                %188 = vst [vmem:[%s102 + $0xa8] sm:$0xf] %v187
                %v189 = vld [vmem:[%s101 + $0x130] sm:$0xf]
                %190 = vst [vmem:[%s102 + $0xac] sm:$0xf] %v189
              $region37: #{inception_v2b_forward.17} parent=31 // loop_footer
                %s100 = sadd.s32 1, %s96
              $region38: #{inception_v2b_forward.17} parent=31 // loop_footer_branch
                %95 = sbr.rel target = $region34
              $region39: #{inception_v2b_forward.17} parent=31 // loop_exit
                _
            $region32: #{inception_v2b_forward.17} parent=23 // pred_fallthru
              _
          $region24: #{inception_v2b_forward.17} parent=19 // pred_fallthru
            _
          %298 = vnop
        $region20: #{inception_v2b_forward.17} parent=15 // pred_fallthru
          _
      $region16: #{inception_v2b_forward.17} parent=5 // pred_fallthru
        _
      %p299 = scmp.le.s32.totalorder 1, %s7
      %p300 = scmp.lt.s32.totalorder %s7, 3
      %p301 = pnand %p299, %p300
      %p302 = pneg %p301
      // Predicated region
      $region58: #{inception_v2b_forward.17} parent=5 // pred_check
        _
      $region59: #{inception_v2b_forward.17} parent=5 // pred_check_branch
        %304 = sbr.rel (%p301) target = $region61
      $region60: #{inception_v2b_forward.17} parent=5 // pred_region
        %s305 = ssub.s32 %s7, 1
        %s306 = sand.u32 %s20, 1
        %s307 = sand.u32 %s20, 1
        %s308 = smul.addr %s307, 176
        %s309 = scalar_lea.vmem [#allocation2], %s308
        // Predicated region
        $region62: #{inception_v2b_forward.17} parent=60 // pred_check
          %p310 = pneg %p33
        $region63: #{inception_v2b_forward.17} parent=60 // pred_check_branch
          %312 = sbr.rel (%p310) target = $region65
        $region64: #{inception_v2b_forward.17} parent=60 // pred_region
          _
        $region65: #{inception_v2b_forward.17} parent=60 // pred_fallthru
          _
        %s313 = sand.u32 %s20, 1
        %s314 = sand.u32 %s20, 1
        %s315 = smul.addr %s314, 176
        %s316 = scalar_lea.vmem [#allocation2], %s315
        %p317 = pneg %p33
        %p318 = pneg %p30
        %p319 = pneg %p59
        %p320 = pneg %p56
        %p321 = scmp.lt.s32.totalorder %s12, 1
        %s322 = scalar_select %p321, %s12, 1
        %s323 = smul.addr %s322, 9
        %s324 = smul.addr %s323, 4
        %s325 = scalar_lea.vmem %s1, %s324
        %s326 = smul.u32 11, %s12
        %p327 = scmp.lt.s32.totalorder %s12, 1
        %s328 = scalar_select %p327, %s12, 1
        %s329 = smul.addr %s328, 9
        %s330 = smul.addr %s329, 4
        %s331 = scalar_lea.vmem %s1, %s330
        %v332 = vld [vmem:[%s309] sm:$0xf]
        %v333 = vld [vmem:[%s309 + $0x4] sm:$0xf]
        %v334 = vld [vmem:[%s309 + $0x8] sm:$0xf]
        %v335 = vld [vmem:[%s309 + $0xc] sm:$0xf]
        %v336 = vld [vmem:[%s309 + $0x10] sm:$0xf]
        %v337 = vld [vmem:[%s309 + $0x14] sm:$0xf]
        %v338 = vld [vmem:[%s309 + $0x18] sm:$0xf]
        %v339 = vld [vmem:[%s309 + $0x1c] sm:$0xf]
        %v340 = vld [vmem:[%s309 + $0x20] sm:$0xf]
        %s341 = scalar_lea.vmem %s309, 44 [#allocation2]
        %v342 = vld [vmem:[%s341] sm:$0xf]
        %v343 = vld [vmem:[%s341 + $0x4] sm:$0xf]
        %v344 = vld [vmem:[%s341 + $0x8] sm:$0xf]
        %v345 = vld [vmem:[%s341 + $0xc] sm:$0xf]
        %v346 = vld [vmem:[%s341 + $0x10] sm:$0xf]
        %v347 = vld [vmem:[%s341 + $0x14] sm:$0xf]
        %v348 = vld [vmem:[%s341 + $0x18] sm:$0xf]
        %v349 = vld [vmem:[%s341 + $0x1c] sm:$0xf]
        %v350 = vld [vmem:[%s341 + $0x20] sm:$0xf]
        %v351 = vmax.bf16 %v332, %v342
        %v352 = vmax.bf16 %v333, %v343
        %v353 = vmax.bf16 %v334, %v344
        %v354 = vmax.bf16 %v335, %v345
        %v355 = vmax.bf16 %v336, %v346
        %v356 = vmax.bf16 %v337, %v347
        %v357 = vmax.bf16 %v338, %v348
        %v358 = vmax.bf16 %v339, %v349
        %v359 = vmax.bf16 %v340, %v350
        %v360 = vld [vmem:[%s309 + $0x24] sm:$0x1]
        %vm361 = vsmask.f32 3328
        %vm362 = vsmask.f32 7440
        %vm363 = vmor %vm361, %vm362
        %v365 = vshrl.u32 %v332, 16
        %v367 = vrot.slane %v365, 4
        %v368 = vshll.u32 %v332, 16
        %v370 = vrot.slane %v368, 5
        %v371 = vor.u32 %v367, %v370
        %v372 = vrot.slane %v371, 4
        %v374 = vshll.u32 %v333, 16
        %v376 = vrot.slane %v374, 5
        %v377 = vsel %vm363, %v372, %v376
        %v378 = vshrl.u32 %v333, 16
        %v380 = vrot.slane %v378, 4
        %v381 = vor.u32 %v380, %v376
        %v382 = vrot.slane %v381, 4
        %v384 = vshll.u32 %v334, 16
        %v386 = vrot.slane %v384, 5
        %v387 = vsel %vm363, %v382, %v386
        %v388 = vshrl.u32 %v334, 16
        %v390 = vrot.slane %v388, 4
        %v391 = vor.u32 %v390, %v386
        %v392 = vrot.slane %v391, 4
        %v394 = vshll.u32 %v335, 16
        %v396 = vrot.slane %v394, 5
        %v397 = vsel %vm363, %v392, %v396
        %v398 = vshrl.u32 %v335, 16
        %v400 = vrot.slane %v398, 4
        %v401 = vor.u32 %v400, %v396
        %v402 = vrot.slane %v401, 4
        %v404 = vshll.u32 %v336, 16
        %v406 = vrot.slane %v404, 5
        %v407 = vsel %vm363, %v402, %v406
        %v408 = vshrl.u32 %v336, 16
        %v410 = vrot.slane %v408, 4
        %v411 = vor.u32 %v410, %v406
        %v412 = vrot.slane %v411, 4
        %v414 = vshll.u32 %v337, 16
        %v416 = vrot.slane %v414, 5
        %v417 = vsel %vm363, %v412, %v416
        %v418 = vshrl.u32 %v337, 16
        %v420 = vrot.slane %v418, 4
        %v421 = vor.u32 %v420, %v416
        %v422 = vrot.slane %v421, 4
        %v424 = vshll.u32 %v338, 16
        %v426 = vrot.slane %v424, 5
        %v427 = vsel %vm363, %v422, %v426
        %v428 = vshrl.u32 %v338, 16
        %v430 = vrot.slane %v428, 4
        %v431 = vor.u32 %v430, %v426
        %v432 = vrot.slane %v431, 4
        %v434 = vshll.u32 %v339, 16
        %v436 = vrot.slane %v434, 5
        %v437 = vsel %vm363, %v432, %v436
        %v438 = vshrl.u32 %v339, 16
        %v440 = vrot.slane %v438, 4
        %v441 = vor.u32 %v440, %v436
        %v442 = vrot.slane %v441, 4
        %v444 = vshll.u32 %v340, 16
        %v446 = vrot.slane %v444, 5
        %v447 = vsel %vm363, %v442, %v446
        %v448 = vshrl.u32 %v340, 16
        %v450 = vrot.slane %v448, 4
        %v451 = vor.u32 %v450, %v446
        %v452 = vrot.slane %v451, 4
        %v454 = vshll.u32 %v360, 16
        %v456 = vrot.slane %v454, 5
        %v457 = vsel %vm363, %v452, %v456
        %v467 = vmax.bf16 %v351, %v377
        %v468 = vmax.bf16 %v352, %v387
        %v469 = vmax.bf16 %v353, %v397
        %v470 = vmax.bf16 %v354, %v407
        %v471 = vmax.bf16 %v355, %v417
        %v472 = vmax.bf16 %v356, %v427
        %v473 = vmax.bf16 %v357, %v437
        %v474 = vmax.bf16 %v358, %v447
        %v475 = vmax.bf16 %v359, %v457
        %s476 = scalar_lea.vmem %s309, 88 [#allocation2]
        %v477 = vld [vmem:[%s476] sm:$0xf]
        %v478 = vld [vmem:[%s476 + $0x4] sm:$0xf]
        %v479 = vld [vmem:[%s476 + $0x8] sm:$0xf]
        %v480 = vld [vmem:[%s476 + $0xc] sm:$0xf]
        %v481 = vld [vmem:[%s476 + $0x10] sm:$0xf]
        %v482 = vld [vmem:[%s476 + $0x14] sm:$0xf]
        %v483 = vld [vmem:[%s476 + $0x18] sm:$0xf]
        %v484 = vld [vmem:[%s476 + $0x1c] sm:$0xf]
        %v485 = vld [vmem:[%s476 + $0x20] sm:$0xf]
        %v486 = vmax.bf16 %v467, %v477
        %v487 = vmax.bf16 %v468, %v478
        %v488 = vmax.bf16 %v469, %v479
        %v489 = vmax.bf16 %v470, %v480
        %v490 = vmax.bf16 %v471, %v481
        %v491 = vmax.bf16 %v472, %v482
        %v492 = vmax.bf16 %v473, %v483
        %v493 = vmax.bf16 %v474, %v484
        %v494 = vmax.bf16 %v475, %v485
        %s495 = scalar_lea.vmem %s309, 132 [#allocation2]
        %v496 = vld [vmem:[%s495] sm:$0xf]
        %v497 = vld [vmem:[%s495 + $0x4] sm:$0xf]
        %v498 = vld [vmem:[%s495 + $0x8] sm:$0xf]
        %v499 = vld [vmem:[%s495 + $0xc] sm:$0xf]
        %v500 = vld [vmem:[%s495 + $0x10] sm:$0xf]
        %v501 = vld [vmem:[%s495 + $0x14] sm:$0xf]
        %v502 = vld [vmem:[%s495 + $0x18] sm:$0xf]
        %v503 = vld [vmem:[%s495 + $0x1c] sm:$0xf]
        %v504 = vld [vmem:[%s495 + $0x20] sm:$0xf]
        %v505 = vmax.bf16 %v486, %v496
        %v506 = vmax.bf16 %v487, %v497
        %v507 = vmax.bf16 %v488, %v498
        %v508 = vmax.bf16 %v489, %v499
        %v509 = vmax.bf16 %v490, %v500
        %v510 = vmax.bf16 %v491, %v501
        %v511 = vmax.bf16 %v492, %v502
        %v512 = vmax.bf16 %v493, %v503
        %v513 = vmax.bf16 %v494, %v504
        %v514 = vld [vmem:[%s476 + $0x24] sm:$0x1]
        %v516 = vshrl.u32 %v477, 16
        %v518 = vrot.slane %v516, 4
        %v519 = vshll.u32 %v477, 16
        %v521 = vrot.slane %v519, 5
        %v522 = vor.u32 %v518, %v521
        %v523 = vrot.slane %v522, 4
        %v525 = vshll.u32 %v478, 16
        %v527 = vrot.slane %v525, 5
        %v528 = vsel %vm363, %v523, %v527
        %v529 = vshrl.u32 %v478, 16
        %v531 = vrot.slane %v529, 4
        %v532 = vor.u32 %v531, %v527
        %v533 = vrot.slane %v532, 4
        %v535 = vshll.u32 %v479, 16
        %v537 = vrot.slane %v535, 5
        %v538 = vsel %vm363, %v533, %v537
        %v539 = vshrl.u32 %v479, 16
        %v541 = vrot.slane %v539, 4
        %v542 = vor.u32 %v541, %v537
        %v543 = vrot.slane %v542, 4
        %v545 = vshll.u32 %v480, 16
        %v547 = vrot.slane %v545, 5
        %v548 = vsel %vm363, %v543, %v547
        %v549 = vshrl.u32 %v480, 16
        %v551 = vrot.slane %v549, 4
        %v552 = vor.u32 %v551, %v547
        %v553 = vrot.slane %v552, 4
        %v555 = vshll.u32 %v481, 16
        %v557 = vrot.slane %v555, 5
        %v558 = vsel %vm363, %v553, %v557
        %v559 = vshrl.u32 %v481, 16
        %v561 = vrot.slane %v559, 4
        %v562 = vor.u32 %v561, %v557
        %v563 = vrot.slane %v562, 4
        %v565 = vshll.u32 %v482, 16
        %v567 = vrot.slane %v565, 5
        %v568 = vsel %vm363, %v563, %v567
        %v569 = vshrl.u32 %v482, 16
        %v571 = vrot.slane %v569, 4
        %v572 = vor.u32 %v571, %v567
        %v573 = vrot.slane %v572, 4
        %v575 = vshll.u32 %v483, 16
        %v577 = vrot.slane %v575, 5
        %v578 = vsel %vm363, %v573, %v577
        %v579 = vshrl.u32 %v483, 16
        %v581 = vrot.slane %v579, 4
        %v582 = vor.u32 %v581, %v577
        %v583 = vrot.slane %v582, 4
        %v585 = vshll.u32 %v484, 16
        %v587 = vrot.slane %v585, 5
        %v588 = vsel %vm363, %v583, %v587
        %v589 = vshrl.u32 %v484, 16
        %v591 = vrot.slane %v589, 4
        %v592 = vor.u32 %v591, %v587
        %v593 = vrot.slane %v592, 4
        %v595 = vshll.u32 %v485, 16
        %v597 = vrot.slane %v595, 5
        %v598 = vsel %vm363, %v593, %v597
        %v599 = vshrl.u32 %v485, 16
        %v601 = vrot.slane %v599, 4
        %v602 = vor.u32 %v601, %v597
        %v603 = vrot.slane %v602, 4
        %v605 = vshll.u32 %v514, 16
        %v607 = vrot.slane %v605, 5
        %v608 = vsel %vm363, %v603, %v607
        %v618 = vmax.bf16 %v505, %v528
        %v619 = vmax.bf16 %v506, %v538
        %v620 = vmax.bf16 %v507, %v548
        %v621 = vmax.bf16 %v508, %v558
        %v622 = vmax.bf16 %v509, %v568
        %v623 = vmax.bf16 %v510, %v578
        %v624 = vmax.bf16 %v511, %v588
        %v625 = vmax.bf16 %v512, %v598
        %v626 = vmax.bf16 %v513, %v608
        %v627 = vld [vmem:[%s309 + $0x24] sm:$0xf]
        %v628 = vld [vmem:[%s309 + $0x28] sm:$0x1]
        %v630 = vshll.u32 %v627, 16
        %v632 = vrot.slane %v630, 5
        %v633 = vsel %vm363, %v452, %v632
        %v634 = vshrl.u32 %v627, 16
        %v636 = vrot.slane %v634, 4
        %v637 = vor.u32 %v636, %v632
        %v638 = vrot.slane %v637, 4
        %v640 = vshll.u32 %v628, 16
        %v642 = vrot.slane %v640, 5
        %v643 = vsel %vm363, %v638, %v642
        %v646 = vmax.bf16 %v618, %v387
        %v647 = vmax.bf16 %v619, %v397
        %v648 = vmax.bf16 %v620, %v407
        %v649 = vmax.bf16 %v621, %v417
        %v650 = vmax.bf16 %v622, %v427
        %v651 = vmax.bf16 %v623, %v437
        %v652 = vmax.bf16 %v624, %v447
        %v653 = vmax.bf16 %v625, %v633
        %v654 = vmax.bf16 %v626, %v643
        %v655 = vld [vmem:[%s341 + $0x24] sm:$0xf]
        %v656 = vld [vmem:[%s341 + $0x28] sm:$0x1]
        %v658 = vshrl.u32 %v343, 16
        %v660 = vrot.slane %v658, 4
        %v661 = vshll.u32 %v343, 16
        %v663 = vrot.slane %v661, 5
        %v664 = vor.u32 %v660, %v663
        %v665 = vrot.slane %v664, 4
        %v667 = vshll.u32 %v344, 16
        %v669 = vrot.slane %v667, 5
        %v670 = vsel %vm363, %v665, %v669
        %v671 = vshrl.u32 %v344, 16
        %v673 = vrot.slane %v671, 4
        %v674 = vor.u32 %v673, %v669
        %v675 = vrot.slane %v674, 4
        %v677 = vshll.u32 %v345, 16
        %v679 = vrot.slane %v677, 5
        %v680 = vsel %vm363, %v675, %v679
        %v681 = vshrl.u32 %v345, 16
        %v683 = vrot.slane %v681, 4
        %v684 = vor.u32 %v683, %v679
        %v685 = vrot.slane %v684, 4
        %v687 = vshll.u32 %v346, 16
        %v689 = vrot.slane %v687, 5
        %v690 = vsel %vm363, %v685, %v689
        %v691 = vshrl.u32 %v346, 16
        %v693 = vrot.slane %v691, 4
        %v694 = vor.u32 %v693, %v689
        %v695 = vrot.slane %v694, 4
        %v697 = vshll.u32 %v347, 16
        %v699 = vrot.slane %v697, 5
        %v700 = vsel %vm363, %v695, %v699
        %v701 = vshrl.u32 %v347, 16
        %v703 = vrot.slane %v701, 4
        %v704 = vor.u32 %v703, %v699
        %v705 = vrot.slane %v704, 4
        %v707 = vshll.u32 %v348, 16
        %v709 = vrot.slane %v707, 5
        %v710 = vsel %vm363, %v705, %v709
        %v711 = vshrl.u32 %v348, 16
        %v713 = vrot.slane %v711, 4
        %v714 = vor.u32 %v713, %v709
        %v715 = vrot.slane %v714, 4
        %v717 = vshll.u32 %v349, 16
        %v719 = vrot.slane %v717, 5
        %v720 = vsel %vm363, %v715, %v719
        %v721 = vshrl.u32 %v349, 16
        %v723 = vrot.slane %v721, 4
        %v724 = vor.u32 %v723, %v719
        %v725 = vrot.slane %v724, 4
        %v727 = vshll.u32 %v350, 16
        %v729 = vrot.slane %v727, 5
        %v730 = vsel %vm363, %v725, %v729
        %v731 = vshrl.u32 %v350, 16
        %v733 = vrot.slane %v731, 4
        %v734 = vor.u32 %v733, %v729
        %v735 = vrot.slane %v734, 4
        %v737 = vshll.u32 %v655, 16
        %v739 = vrot.slane %v737, 5
        %v740 = vsel %vm363, %v735, %v739
        %v741 = vshrl.u32 %v655, 16
        %v743 = vrot.slane %v741, 4
        %v744 = vor.u32 %v743, %v739
        %v745 = vrot.slane %v744, 4
        %v747 = vshll.u32 %v656, 16
        %v749 = vrot.slane %v747, 5
        %v750 = vsel %vm363, %v745, %v749
        %v760 = vmax.bf16 %v646, %v670
        %v761 = vmax.bf16 %v647, %v680
        %v762 = vmax.bf16 %v648, %v690
        %v763 = vmax.bf16 %v649, %v700
        %v764 = vmax.bf16 %v650, %v710
        %v765 = vmax.bf16 %v651, %v720
        %v766 = vmax.bf16 %v652, %v730
        %v767 = vmax.bf16 %v653, %v740
        %v768 = vmax.bf16 %v654, %v750
        %v769 = vld [vmem:[%s309 + $0x4] sm:$0xe]
        %vm780 = vcmask 1042432
        %vm781 = vcmask 1046532
        %vm782 = vmor %vm780, %vm781
        %v783 = vrot.slane %v769, 5
        %v784 = vrot.slane %v783, 4
        %v785 = vrot.slane %v334, 5
        %v786 = vsel %vm782, %v784, %v785
        %v787 = vrot.slane %v785, 4
        %v788 = vrot.slane %v335, 5
        %v789 = vsel %vm782, %v787, %v788
        %v790 = vrot.slane %v788, 4
        %v791 = vrot.slane %v336, 5
        %v792 = vsel %vm782, %v790, %v791
        %v793 = vrot.slane %v791, 4
        %v794 = vrot.slane %v337, 5
        %v795 = vsel %vm782, %v793, %v794
        %v796 = vrot.slane %v794, 4
        %v797 = vrot.slane %v338, 5
        %v798 = vsel %vm782, %v796, %v797
        %v799 = vrot.slane %v797, 4
        %v800 = vrot.slane %v339, 5
        %v801 = vsel %vm782, %v799, %v800
        %v802 = vrot.slane %v800, 4
        %v803 = vrot.slane %v340, 5
        %v804 = vsel %vm782, %v802, %v803
        %v805 = vrot.slane %v803, 4
        %v806 = vrot.slane %v627, 5
        %v807 = vsel %vm782, %v805, %v806
        %v808 = vrot.slane %v806, 4
        %v809 = vrot.slane %v628, 5
        %v810 = vsel %vm782, %v808, %v809
        %v820 = vmax.bf16 %v760, %v786
        %v821 = vmax.bf16 %v761, %v789
        %v822 = vmax.bf16 %v762, %v792
        %v823 = vmax.bf16 %v763, %v795
        %v824 = vmax.bf16 %v764, %v798
        %v825 = vmax.bf16 %v765, %v801
        %v826 = vmax.bf16 %v766, %v804
        %v827 = vmax.bf16 %v767, %v807
        %v828 = vmax.bf16 %v768, %v810
        %829 = vst [vmem:[%s331] sm:$0xf] %v820
        %830 = vst [vmem:[%s331 + $0x4] sm:$0xf] %v821
        %831 = vst [vmem:[%s331 + $0x8] sm:$0xf] %v822
        %832 = vst [vmem:[%s331 + $0xc] sm:$0xf] %v823
        %833 = vst [vmem:[%s331 + $0x10] sm:$0xf] %v824
        %834 = vst [vmem:[%s331 + $0x14] sm:$0xf] %v825
        %835 = vst [vmem:[%s331 + $0x18] sm:$0xf] %v826
        %836 = vst [vmem:[%s331 + $0x1c] sm:$0xf] %v827
        %837 = vst [vmem:[%s331 + $0x20] sm:$0xf] %v828
        %p838 = scmp.lt.s32.totalorder %s12, 1
        %s839 = scalar_select %p838, %s12, 1
        %s840 = smul.addr %s839, 9
        %s841 = smul.addr %s840, 4
        %s842 = scalar_lea.vmem %s1, %s841
        // Predicated region
        $region66: #{inception_v2b_forward.17} parent=60 // pred_check
          %p843 = pneg %p56
        $region67: #{inception_v2b_forward.17} parent=60 // pred_check_branch
          %845 = sbr.rel (%p843) target = $region69
        $region68: #{inception_v2b_forward.17} parent=60 // pred_region
          _
        $region69: #{inception_v2b_forward.17} parent=60 // pred_fallthru
          _
      $region61: #{inception_v2b_forward.17} parent=5 // pred_fallthru
        _
      %p846 = scmp.le.s32.totalorder 2, %s7
      // Predicated region
      $region70: #{inception_v2b_forward.17} parent=5 // pred_check
        %p847 = pneg %p846
      $region71: #{inception_v2b_forward.17} parent=5 // pred_check_branch
        %849 = sbr.rel (%p847) target = $region73
      $region72: #{inception_v2b_forward.17} parent=5 // pred_region
        %s850 = ssub.s32 %s7, 2
        // Predicated region
        $region74: #{inception_v2b_forward.17} parent=72 // pred_check
          %p851 = pneg %p62
        $region75: #{inception_v2b_forward.17} parent=72 // pred_check_branch
          %853 = sbr.rel (%p851) target = $region77
        $region76: #{inception_v2b_forward.17} parent=72 // pred_region
          %p854 = scmp.lt.s32.totalorder %s13, 1
          %s855 = scalar_select %p854, %s13, 1
          %s856 = smul.addr %s855, 9
          %s857 = smul.addr %s856, 4
          %s858 = scalar_lea.vmem %s1, %s857
        $region77: #{inception_v2b_forward.17} parent=72 // pred_fallthru
          _
      $region73: #{inception_v2b_forward.17} parent=5 // pred_fallthru
        _
    $region6: #{inception_v2b_forward.17} parent=1 // loop_footer
      %s11 = sadd.s32 1, %s7
    $region7: #{inception_v2b_forward.17} parent=1 // loop_footer_branch
      %6 = sbr.rel target = $region3
    $region8: #{inception_v2b_forward.17} parent=1 // loop_exit
      _

// kernel: inception_v2b_forward.9
$region0: #{inception_v2b_forward.9}
  #allocation0 [shape = 'u32[]', space=smem, size = 0x4, offset = 0x4, fixed_abs, tag = 'smem constant byte address 0x4 - core index']
  #allocation1 [shape = 'u32[144,128]{1,0:T(1,128)}', space=vmem, size = 0x12000, scoped, tag = 'internal scratch']
  %s0 = inlined_call_operand.vmem [shape: bf16[1,512,128], index: 0, kind: input, shape index: {}]
  %s1 = inlined_call_operand.vmem [shape: bf16[1,128,256], index: 1, kind: input, shape index: {}]
  %s2 = inlined_call_operand.vmem [shape: f32[256,1], index: 2, kind: input, shape index: {}]
  %s3 = inlined_call_operand.vmem [shape: bf16[2,256,256], index: 3, kind: output, shape index: {0}]
  %s4 = inlined_call_operand.vmem [shape: f32[2,2,256], index: 4, kind: output, shape index: {1}]
  %5 = xla_tuple %s3, %s4
  %s6 = sld [smem:[#allocation0]]
  $region53: #{inception_v2b_forward.9} parent=0
    _
  %s8 = ssub.s32 1, %s6
  %s9 = scalar_select 0, %s8, %s6
  loop: start=0, step=1, limit=4
  $region2: #{inception_v2b_forward.9} parent=0 // loop_pre_header
    _
  $region3: #{inception_v2b_forward.9} parent=0 // loop_header
    %s11 = sphi 0, %s15
    %p12 = scmp.ge.s32.totalorder %s11, 4
    %s18 = sphi 0, %s30
    %s19 = sphi 0, %s26
    %s20 = sphi 0, %s18
    %s21 = sphi 0, %s19
    %s22 = sphi 0, %s20
    %s23 = sphi 0, %s21
    %s33 = sphi 0, %s35
    %s36 = sphi 0, %s33
    %s37 = sphi 0, %s36
    %s53 = sphi 0, %s37
    %s59 = sphi 0, %s61
    %s62 = sphi 0, %s59
    %s63 = sphi 0, %s62
    %s79 = sphi 0, %s63
    %s83 = sphi 0, %s83
    %s85 = sphi 0, %s83
    %s86 = sphi 0, %s85
    %s100 = sphi 0, %s86
    %s108 = sphi 0, %s110
    %s111 = sphi 0, %s108
    %s112 = sphi 0, %s111
    %s128 = sphi 0, %s112
    %s136 = sphi 0, %s138
    %s139 = sphi 0, %s136
    %s140 = sphi 0, %s139
    %s156 = sphi 0, %s140
  $region4: #{inception_v2b_forward.9} parent=0 // loop_header_branch
    %14 = sbr.rel (%p12) target = $region8
  $region5: #{inception_v2b_forward.9} parent=0 // loop_body
    %s16 = ssub.s32 %s11, 1
    %s17 = ssub.s32 %s11, 2
    %s24 = sadd.s32 1, %s19
    %p25 = scmp.ge.s32.totalorder %s24, 1
    %s26 = scalar_select %p25, 0, %s24
    %s27 = sadd.s32 1, %s18
    %s28 = scalar_select %p25, %s27, %s18
    %p29 = scmp.ge.s32.totalorder %s28, 2
    %s30 = scalar_select %p29, 0, %s28
    %s31 = ssub.s32 %s18, %s30
    %p32 = scmp.eq.s32.totalorder %s31, 0
    %s34 = sadd.s32 %s33, 1
    %s35 = scalar_select %p32, %s33, %s34
    %p38 = pneg %p32
    %p39 = scmp.eq.s32.totalorder %s11, 1
    %p40 = por %p38, %p39
    %p41 = scmp.ne.s32.totalorder %s33, %s36
    %p42 = scmp.eq.s32.totalorder %s11, 0
    %p43 = por %p41, %p42
    %p44 = scmp.ne.s32.totalorder %s33, %s36
    %p45 = scmp.eq.s32.totalorder %s16, 1
    %p46 = por %p44, %p45
    %p47 = scmp.ne.s32.totalorder %s36, %s37
    %p48 = scmp.eq.s32.totalorder %s16, 0
    %p49 = por %p47, %p48
    %p50 = scmp.ne.s32.totalorder %s36, %s37
    %p51 = scmp.eq.s32.totalorder %s17, 1
    %p52 = por %p50, %p51
    %p54 = scmp.ne.s32.totalorder %s37, %s53
    %p55 = scmp.eq.s32.totalorder %s17, 0
    %p56 = por %p54, %p55
    %s57 = ssub.s32 %s19, %s26
    %p58 = scmp.eq.s32.totalorder %s57, 0
    %s60 = sadd.s32 %s59, 1
    %s61 = scalar_select %p58, %s59, %s60
    %p64 = pneg %p58
    %p65 = scmp.eq.s32.totalorder %s11, 1
    %p66 = por %p64, %p65
    %p67 = scmp.ne.s32.totalorder %s59, %s62
    %p68 = scmp.eq.s32.totalorder %s11, 0
    %p69 = por %p67, %p68
    %p70 = scmp.ne.s32.totalorder %s59, %s62
    %p71 = scmp.eq.s32.totalorder %s16, 1
    %p72 = por %p70, %p71
    %p73 = scmp.ne.s32.totalorder %s62, %s63
    %p74 = scmp.eq.s32.totalorder %s16, 0
    %p75 = por %p73, %p74
    %p76 = scmp.ne.s32.totalorder %s62, %s63
    %p77 = scmp.eq.s32.totalorder %s17, 1
    %p78 = por %p76, %p77
    %p80 = scmp.ne.s32.totalorder %s63, %s79
    %p81 = scmp.eq.s32.totalorder %s17, 0
    %p82 = por %p80, %p81
    %s84 = sadd.s32 %s83, 1
    %p87 = scmp.eq.s32.totalorder %s11, 1
    %p88 = scmp.ne.s32.totalorder %s83, %s85
    %p89 = scmp.eq.s32.totalorder %s11, 0
    %p90 = por %p88, %p89
    %p91 = scmp.ne.s32.totalorder %s83, %s85
    %p92 = scmp.eq.s32.totalorder %s16, 1
    %p93 = por %p91, %p92
    %p94 = scmp.ne.s32.totalorder %s85, %s86
    %p95 = scmp.eq.s32.totalorder %s16, 0
    %p96 = por %p94, %p95
    %p97 = scmp.ne.s32.totalorder %s85, %s86
    %p98 = scmp.eq.s32.totalorder %s17, 1
    %p99 = por %p97, %p98
    %p101 = scmp.ne.s32.totalorder %s86, %s100
    %p102 = scmp.eq.s32.totalorder %s17, 0
    %p103 = por %p101, %p102
    %s104 = ssub.s32 %s18, %s30
    %s105 = ssub.s32 %s19, %s26
    %s106 = sor.u32 %s104, %s105
    %p107 = scmp.eq.s32.totalorder %s106, 0
    %s109 = sadd.s32 %s108, 1
    %s110 = scalar_select %p107, %s108, %s109
    %p113 = pneg %p107
    %p114 = scmp.eq.s32.totalorder %s11, 1
    %p115 = por %p113, %p114
    %p116 = scmp.ne.s32.totalorder %s108, %s111
    %p117 = scmp.eq.s32.totalorder %s11, 0
    %p118 = por %p116, %p117
    %p119 = scmp.ne.s32.totalorder %s108, %s111
    %p120 = scmp.eq.s32.totalorder %s16, 1
    %p121 = por %p119, %p120
    %p122 = scmp.ne.s32.totalorder %s111, %s112
    %p123 = scmp.eq.s32.totalorder %s16, 0
    %p124 = por %p122, %p123
    %p125 = scmp.ne.s32.totalorder %s111, %s112
    %p126 = scmp.eq.s32.totalorder %s17, 1
    %p127 = por %p125, %p126
    %p129 = scmp.ne.s32.totalorder %s112, %s128
    %p130 = scmp.eq.s32.totalorder %s17, 0
    %p131 = por %p129, %p130
    %s132 = ssub.s32 %s18, %s30
    %s133 = ssub.s32 %s19, %s26
    %s134 = sor.u32 %s132, %s133
    %p135 = scmp.eq.s32.totalorder %s134, 0
    %s137 = sadd.s32 %s136, 1
    %s138 = scalar_select %p135, %s136, %s137
    %p141 = pneg %p135
    %p142 = scmp.eq.s32.totalorder %s11, 1
    %p143 = por %p141, %p142
    %p144 = scmp.ne.s32.totalorder %s136, %s139
    %p145 = scmp.eq.s32.totalorder %s11, 0
    %p146 = por %p144, %p145
    %p147 = scmp.ne.s32.totalorder %s136, %s139
    %p148 = scmp.eq.s32.totalorder %s16, 1
    %p149 = por %p147, %p148
    %p150 = scmp.ne.s32.totalorder %s139, %s140
    %p151 = scmp.eq.s32.totalorder %s16, 0
    %p152 = por %p150, %p151
    %p153 = scmp.ne.s32.totalorder %s139, %s140
    %p154 = scmp.eq.s32.totalorder %s17, 1
    %p155 = por %p153, %p154
    %p157 = scmp.ne.s32.totalorder %s140, %s156
    %p158 = scmp.eq.s32.totalorder %s17, 0
    %p159 = por %p157, %p158
    %p160 = scmp.le.s32.totalorder 1, %s11
    %p161 = scmp.lt.s32.totalorder %s11, 3
    %p162 = pnand %p160, %p161
    %p163 = pneg %p162
    // Predicated region
    $region9: #{inception_v2b_forward.9} parent=5 // pred_check
      _
    $region10: #{inception_v2b_forward.9} parent=5 // pred_check_branch
      %165 = sbr.rel (%p162) target = $region12
    $region11: #{inception_v2b_forward.9} parent=5 // pred_region
      %s166 = ssub.s32 %s11, 1
      // Predicated region
      $region13: #{inception_v2b_forward.9} parent=11 // pred_check
        %p167 = pneg %p75
      $region14: #{inception_v2b_forward.9} parent=11 // pred_check_branch
        %169 = sbr.rel (%p167) target = $region16
      $region15: #{inception_v2b_forward.9} parent=11 // pred_region
        %s170 = smul.u32 2, %s21
        %p171 = scmp.lt.s32.totalorder %s170, 1
        %s172 = scalar_select %p171, %s170, 1
        %s173 = smul.addr %s172, 4
        %s174 = scalar_lea.vmem %s1, %s173
        %s175 = smul.u32 2, %s21
      $region16: #{inception_v2b_forward.9} parent=11 // pred_fallthru
        _
      // Predicated region
      $region17: #{inception_v2b_forward.9} parent=11 // pred_check
        %p176 = pneg %p96
      $region18: #{inception_v2b_forward.9} parent=11 // pred_check_branch
        %178 = sbr.rel (%p176) target = $region20
      $region19: #{inception_v2b_forward.9} parent=11 // pred_region
        _
      $region20: #{inception_v2b_forward.9} parent=11 // pred_fallthru
        _
    $region12: #{inception_v2b_forward.9} parent=5 // pred_fallthru
      _
    %p179 = scmp.lt.s32.totalorder %s11, 2
    // Predicated region
    $region21: #{inception_v2b_forward.9} parent=5 // pred_check
      %p180 = pneg %p179
    $region22: #{inception_v2b_forward.9} parent=5 // pred_check_branch
      %182 = sbr.rel (%p180) target = $region24
    $region23: #{inception_v2b_forward.9} parent=5 // pred_region
      // Predicated region
      $region25: #{inception_v2b_forward.9} parent=23 // pred_check
        %p183 = pneg %p43
      $region26: #{inception_v2b_forward.9} parent=23 // pred_check_branch
        %185 = sbr.rel (%p183) target = $region28
      $region27: #{inception_v2b_forward.9} parent=23 // pred_region
        %s186 = smul.u32 32, %s18
        %p187 = scmp.lt.s32.totalorder %s186, 63
        %s188 = scalar_select %p187, %s186, 63
        %s189 = smul.addr %s188, 4
        %s190 = scalar_lea.vmem %s0, %s189
        %s191 = smul.u32 32, %s18
      $region28: #{inception_v2b_forward.9} parent=23 // pred_fallthru
        _
    $region24: #{inception_v2b_forward.9} parent=5 // pred_fallthru
      _
    %p192 = scmp.le.s32.totalorder 1, %s11
    %p193 = scmp.lt.s32.totalorder %s11, 3
    %p194 = pnand %p192, %p193
    %p195 = pneg %p194
    // Predicated region
    $region29: #{inception_v2b_forward.9} parent=5 // pred_check
      _
    $region30: #{inception_v2b_forward.9} parent=5 // pred_check_branch
      %197 = sbr.rel (%p194) target = $region32
    $region31: #{inception_v2b_forward.9} parent=5 // pred_region
      %s198 = ssub.s32 %s11, 1
      %s199 = smul.u32 32, %s20
      %p200 = scmp.lt.s32.totalorder %s199, 63
      %s201 = scalar_select %p200, %s199, 63
      %s202 = smul.addr %s201, 4
      %s203 = scalar_lea.vmem %s0, %s202
      %p204 = pneg %p49
      %p205 = pneg %p46
      %s206 = smul.u32 2, %s21
      %p207 = scmp.lt.s32.totalorder %s206, 1
      %s208 = scalar_select %p207, %s206, 1
      %s209 = smul.addr %s208, 4
      %s210 = scalar_lea.vmem %s1, %s209
      %p211 = pneg %p75
      %p212 = pneg %p72
      %p213 = pneg %p96
      %p214 = pneg %p93
      %p215 = pneg %p124
      %p216 = pneg %p121
      %s217 = smul.u32 2, %s21
      %p218 = scmp.lt.s32.totalorder %s20, 1
      %s219 = scalar_select %p218, %s20, 1
      %p220 = scmp.lt.s32.totalorder %s217, 1
      %s221 = scalar_select %p220, %s217, 1
      %s222 = smul.addr %s219, 64
      %s223 = sadd.s32 %s221, %s222
      %s224 = smul.addr %s223, 4
      %s225 = scalar_lea.vmem %s3, %s224
      %p226 = pneg %p152
      %p227 = pneg %p149
      %s228 = smul.u32 2, %s21
      %p229 = scmp.lt.s32.totalorder %s20, 1
      %s230 = scalar_select %p229, %s20, 1
      %p231 = scmp.lt.s32.totalorder %s228, 1
      %s232 = scalar_select %p231, %s228, 1
      %s233 = smul.addr %s230, 2
      %s234 = sadd.s32 %s232, %s233
      %s235 = smul.addr %s234, 2
      %s236 = scalar_lea.vmem %s4, %s235
      %s237 = smul.u32 32, %s20
      %p238 = scmp.lt.s32.totalorder %s237, 63
      %s239 = scalar_select %p238, %s237, 63
      %s240 = smul.addr %s239, 4
      %s241 = scalar_lea.vmem %s0, %s240
      %s242 = smul.u32 32, %s20
      %s243 = smul.u32 2, %s21
      %p244 = scmp.lt.s32.totalorder %s243, 1
      %s245 = scalar_select %p244, %s243, 1
      %s246 = smul.addr %s245, 4
      %s247 = scalar_lea.vmem %s1, %s246
      %s248 = smul.u32 2, %s21
      %s249 = smul.u32 2, %s21
      %p250 = scmp.lt.s32.totalorder %s20, 1
      %s251 = scalar_select %p250, %s20, 1
      %p252 = scmp.lt.s32.totalorder %s249, 1
      %s253 = scalar_select %p252, %s249, 1
      %s254 = smul.addr %s251, 64
      %s255 = sadd.s32 %s253, %s254
      %s256 = smul.addr %s255, 4
      %s257 = scalar_lea.vmem %s3, %s256
      %s258 = smul.u32 2, %s21
      %s259 = smul.u32 2, %s21
      %p260 = scmp.lt.s32.totalorder %s20, 1
      %s261 = scalar_select %p260, %s20, 1
      %p262 = scmp.lt.s32.totalorder %s259, 1
      %s263 = scalar_select %p262, %s259, 1
      %s264 = smul.addr %s261, 2
      %s265 = sadd.s32 %s263, %s264
      %s266 = smul.addr %s265, 2
      %s267 = scalar_lea.vmem %s4, %s266
      %s268 = smul.u32 2, %s21
      %v270 = vld [vmem:[%s241] sm:$0xf]
      %v271 = vld [vmem:[%s241 + $0x4] sm:$0xf]
      %v272 = vld [vmem:[%s241 + $0x8] sm:$0xf]
      %v273 = vld [vmem:[%s241 + $0xc] sm:$0xf]
      %v274 = vld [vmem:[%s241 + $0x10] sm:$0xf]
      %v275 = vld [vmem:[%s241 + $0x14] sm:$0xf]
      %v276 = vld [vmem:[%s241 + $0x18] sm:$0xf]
      %v277 = vld [vmem:[%s241 + $0x1c] sm:$0xf]
      %v278 = vld [vmem:[%s241 + $0x20] sm:$0xf]
      %v279 = vld [vmem:[%s241 + $0x24] sm:$0xf]
      %v280 = vld [vmem:[%s241 + $0x28] sm:$0xf]
      %v281 = vld [vmem:[%s241 + $0x2c] sm:$0xf]
      %v282 = vld [vmem:[%s241 + $0x30] sm:$0xf]
      %v283 = vld [vmem:[%s241 + $0x34] sm:$0xf]
      %v284 = vld [vmem:[%s241 + $0x38] sm:$0xf]
      %v285 = vld [vmem:[%s241 + $0x3c] sm:$0xf]
      %v286 = vld [vmem:[%s241 + $0x40] sm:$0xf]
      %v287 = vld [vmem:[%s241 + $0x44] sm:$0xf]
      %v288 = vld [vmem:[%s241 + $0x48] sm:$0xf]
      %v289 = vld [vmem:[%s241 + $0x4c] sm:$0xf]
      %v290 = vld [vmem:[%s241 + $0x50] sm:$0xf]
      %v291 = vld [vmem:[%s241 + $0x54] sm:$0xf]
      %v292 = vld [vmem:[%s241 + $0x58] sm:$0xf]
      %v293 = vld [vmem:[%s241 + $0x5c] sm:$0xf]
      %v294 = vld [vmem:[%s241 + $0x60] sm:$0xf]
      %v295 = vld [vmem:[%s241 + $0x64] sm:$0xf]
      %v296 = vld [vmem:[%s241 + $0x68] sm:$0xf]
      %v297 = vld [vmem:[%s241 + $0x6c] sm:$0xf]
      %v298 = vld [vmem:[%s241 + $0x70] sm:$0xf]
      %v299 = vld [vmem:[%s241 + $0x74] sm:$0xf]
      %v300 = vld [vmem:[%s241 + $0x78] sm:$0xf]
      %v301 = vld [vmem:[%s241 + $0x7c] sm:$0xf]
      %v302 = vld [vmem:[%s247] sm:$0xff]
      %v303 = vld [vmem:[%s247 + $0x8] sm:$0xff]
      %v304 = vld [vmem:[%s247 + $0x10] sm:$0xff]
      %v305 = vld [vmem:[%s247 + $0x18] sm:$0xff]
      %v306 = vld [vmem:[%s247 + $0x20] sm:$0xff]
      %v307 = vld [vmem:[%s247 + $0x28] sm:$0xff]
      %v308 = vld [vmem:[%s247 + $0x30] sm:$0xff]
      %v309 = vld [vmem:[%s247 + $0x38] sm:$0xff]
      %v310 = vld [vmem:[%s247 + $0x40] sm:$0xff]
      %v311 = vld [vmem:[%s247 + $0x48] sm:$0xff]
      %v312 = vld [vmem:[%s247 + $0x50] sm:$0xff]
      %v313 = vld [vmem:[%s247 + $0x58] sm:$0xff]
      %v314 = vld [vmem:[%s247 + $0x60] sm:$0xff]
      %v315 = vld [vmem:[%s247 + $0x68] sm:$0xff]
      %v316 = vld [vmem:[%s247 + $0x70] sm:$0xff]
      %v317 = vld [vmem:[%s247 + $0x78] sm:$0xff]
      %v350 = vunpack.c.l.b16 %v270
      %v351 = vunpack.c.l.b16 %v271
      %v352 = vunpack.c.l.b16 %v272
      %v353 = vunpack.c.l.b16 %v273
      %v354 = vunpack.c.l.b16 %v274
      %v355 = vunpack.c.l.b16 %v275
      %v356 = vunpack.c.l.b16 %v276
      %v357 = vunpack.c.l.b16 %v277
      %v358 = vunpack.c.l.b16 %v278
      %v359 = vunpack.c.l.b16 %v279
      %v360 = vunpack.c.l.b16 %v280
      %v361 = vunpack.c.l.b16 %v281
      %v362 = vunpack.c.l.b16 %v282
      %v363 = vunpack.c.l.b16 %v283
      %v364 = vunpack.c.l.b16 %v284
      %v365 = vunpack.c.l.b16 %v285
      %v366 = vunpack.c.l.b16 %v286
      %v367 = vunpack.c.l.b16 %v287
      %v368 = vunpack.c.l.b16 %v288
      %v369 = vunpack.c.l.b16 %v289
      %v370 = vunpack.c.l.b16 %v290
      %v371 = vunpack.c.l.b16 %v291
      %v372 = vunpack.c.l.b16 %v292
      %v373 = vunpack.c.l.b16 %v293
      %v374 = vunpack.c.l.b16 %v294
      %v375 = vunpack.c.l.b16 %v295
      %v376 = vunpack.c.l.b16 %v296
      %v377 = vunpack.c.l.b16 %v297
      %v378 = vunpack.c.l.b16 %v298
      %v379 = vunpack.c.l.b16 %v299
      %v380 = vunpack.c.l.b16 %v300
      %v381 = vunpack.c.l.b16 %v301
      %v382 = vpack.c.b16 %v351, %v350
      %v383 = vpack.c.b16 %v353, %v352
      %v384 = vpack.c.b16 %v355, %v354
      %v385 = vpack.c.b16 %v357, %v356
      %v386 = vpack.c.b16 %v359, %v358
      %v387 = vpack.c.b16 %v361, %v360
      %v388 = vpack.c.b16 %v363, %v362
      %v389 = vpack.c.b16 %v365, %v364
      %v390 = vpack.c.b16 %v367, %v366
      %v391 = vpack.c.b16 %v369, %v368
      %v392 = vpack.c.b16 %v371, %v370
      %v393 = vpack.c.b16 %v373, %v372
      %v394 = vpack.c.b16 %v375, %v374
      %v395 = vpack.c.b16 %v377, %v376
      %v396 = vpack.c.b16 %v379, %v378
      %v397 = vpack.c.b16 %v381, %v380
      %v430 = vunpack.c.l.b16 %v302
      %v431 = vunpack.c.h.b16 %v302
      %v432 = vunpack.c.l.b16 %v303
      %v433 = vunpack.c.h.b16 %v303
      %v434 = vunpack.c.l.b16 %v304
      %v435 = vunpack.c.h.b16 %v304
      %v436 = vunpack.c.l.b16 %v305
      %v437 = vunpack.c.h.b16 %v305
      %v438 = vunpack.c.l.b16 %v306
      %v439 = vunpack.c.h.b16 %v306
      %v440 = vunpack.c.l.b16 %v307
      %v441 = vunpack.c.h.b16 %v307
      %v442 = vunpack.c.l.b16 %v308
      %v443 = vunpack.c.h.b16 %v308
      %v444 = vunpack.c.l.b16 %v309
      %v445 = vunpack.c.h.b16 %v309
      %v446 = vunpack.c.l.b16 %v310
      %v447 = vunpack.c.h.b16 %v310
      %v448 = vunpack.c.l.b16 %v311
      %v449 = vunpack.c.h.b16 %v311
      %v450 = vunpack.c.l.b16 %v312
      %v451 = vunpack.c.h.b16 %v312
      %v452 = vunpack.c.l.b16 %v313
      %v453 = vunpack.c.h.b16 %v313
      %v454 = vunpack.c.l.b16 %v314
      %v455 = vunpack.c.h.b16 %v314
      %v456 = vunpack.c.l.b16 %v315
      %v457 = vunpack.c.h.b16 %v315
      %v458 = vunpack.c.l.b16 %v316
      %v459 = vunpack.c.h.b16 %v316
      %v460 = vunpack.c.l.b16 %v317
      %v461 = vunpack.c.h.b16 %v317
      %v462 = vpack.c.b16 %v432, %v430
      %v463 = vpack.c.b16 %v433, %v431
      %v464 = vpack.c.b16 %v436, %v434
      %v465 = vpack.c.b16 %v437, %v435
      %v466 = vpack.c.b16 %v440, %v438
      %v467 = vpack.c.b16 %v441, %v439
      %v468 = vpack.c.b16 %v444, %v442
      %v469 = vpack.c.b16 %v445, %v443
      %v470 = vpack.c.b16 %v448, %v446
      %v471 = vpack.c.b16 %v449, %v447
      %v472 = vpack.c.b16 %v452, %v450
      %v473 = vpack.c.b16 %v453, %v451
      %v474 = vpack.c.b16 %v456, %v454
      %v475 = vpack.c.b16 %v457, %v455
      %v476 = vpack.c.b16 %v460, %v458
      %v477 = vpack.c.b16 %v461, %v459
      %494 = vmatprep.subr.bf16.mxu0 %v463
      %495 = vmatpush1.bf16.msra.mxu0 %v462
      %496 = vmatprep.subr.bf16.mxu0 %v465
      %497 = vmatpush1.bf16.msra.mxu0 %v464
      %498 = vmatprep.subr.bf16.mxu0 %v467
      %499 = vmatpush1.bf16.msra.mxu0 %v466
      %500 = vmatprep.subr.bf16.mxu0 %v469
      %501 = vmatpush1.bf16.msra.mxu0 %v468
      %502 = vmatprep.subr.bf16.mxu0 %v471
      %503 = vmatpush1.bf16.msra.mxu0 %v470
      %504 = vmatprep.subr.bf16.mxu0 %v473
      %505 = vmatpush1.bf16.msra.mxu0 %v472
      %506 = vmatprep.subr.bf16.mxu0 %v475
      %507 = vmatpush1.bf16.msra.mxu0 %v474
      %508 = vmatprep.subr.bf16.mxu0 %v477
      %509 = vmatpush1.bf16.msra.mxu0 %v476
      %510 = vmatprep.subr.bf16.mxu0 0
      %511 = vmatpush1.bf16.msra.mxu0 0
      %512 = vmatprep.subr.bf16.mxu0 0
      %513 = vmatpush1.bf16.msra.mxu0 0
      %514 = vmatprep.subr.bf16.mxu0 0
      %515 = vmatpush1.bf16.msra.mxu0 0
      %516 = vmatprep.subr.bf16.mxu0 0
      %517 = vmatpush1.bf16.msra.mxu0 0
      %518 = vmatprep.subr.bf16.mxu0 0
      %519 = vmatpush1.bf16.msra.mxu0 0
      %520 = vmatprep.subr.bf16.mxu0 0
      %521 = vmatpush1.bf16.msra.mxu0 0
      %522 = vmatprep.subr.bf16.mxu0 0
      %523 = vmatpush1.bf16.msra.mxu0 0
      %524 = vmatprep.subr.bf16.mxu0 0
      %525 = vmatpush1.bf16.msra.mxu0 0
      %526 = vmatprep.mubr.bf16.mxu0 0
      %527 = vmatmul.mubr.bf16.gmra.mrb[0].mxu0 %v382
      %v528 = vpop.f32.mrb[0].mxu0
      %v529 = vadd.f32 0.0, %v528
      %v530 = vpop.f32.mrb[0].mxu0
      %v531 = vadd.f32 0.0, %v530
      %v532 = vpop.f32.mrb[0].mxu0
      %v533 = vadd.f32 0.0, %v532
      %v534 = vpop.f32.mrb[0].mxu0
      %v535 = vadd.f32 0.0, %v534
      %536 = vmatprep.mubr.bf16.mxu0 0
      %537 = vmatmul.mubr.bf16.gmra.mrb[0].mxu0 %v383
      %v538 = vpop.f32.mrb[0].mxu0
      %v539 = vadd.f32 0.0, %v538
      %v540 = vpop.f32.mrb[0].mxu0
      %v541 = vadd.f32 0.0, %v540
      %v542 = vpop.f32.mrb[0].mxu0
      %v543 = vadd.f32 0.0, %v542
      %v544 = vpop.f32.mrb[0].mxu0
      %v545 = vadd.f32 0.0, %v544
      %546 = vmatprep.mubr.bf16.mxu0 0
      %547 = vmatmul.mubr.bf16.gmra.mrb[0].mxu0 %v384
      %v548 = vpop.f32.mrb[0].mxu0
      %v549 = vadd.f32 0.0, %v548
      %v550 = vpop.f32.mrb[0].mxu0
      %v551 = vadd.f32 0.0, %v550
      %v552 = vpop.f32.mrb[0].mxu0
      %v553 = vadd.f32 0.0, %v552
      %v554 = vpop.f32.mrb[0].mxu0
      %v555 = vadd.f32 0.0, %v554
      %556 = vmatprep.mubr.bf16.mxu0 0
      %557 = vmatmul.mubr.bf16.gmra.mrb[0].mxu0 %v385
      %v558 = vpop.f32.mrb[0].mxu0
      %v559 = vadd.f32 0.0, %v558
      %v560 = vpop.f32.mrb[0].mxu0
      %v561 = vadd.f32 0.0, %v560
      %v562 = vpop.f32.mrb[0].mxu0
      %v563 = vadd.f32 0.0, %v562
      %v564 = vpop.f32.mrb[0].mxu0
      %v565 = vadd.f32 0.0, %v564
      %566 = vmatprep.mubr.bf16.mxu0 0
      %567 = vmatmul.mubr.bf16.gmra.mrb[0].mxu0 %v386
      %v568 = vpop.f32.mrb[0].mxu0
      %v569 = vadd.f32 0.0, %v568
      %v570 = vpop.f32.mrb[0].mxu0
      %v571 = vadd.f32 0.0, %v570
      %v572 = vpop.f32.mrb[0].mxu0
      %v573 = vadd.f32 0.0, %v572
      %v574 = vpop.f32.mrb[0].mxu0
      %v575 = vadd.f32 0.0, %v574
      %576 = vmatprep.mubr.bf16.mxu0 0
      %577 = vmatmul.mubr.bf16.gmra.mrb[0].mxu0 %v387
      %v578 = vpop.f32.mrb[0].mxu0
      %v579 = vadd.f32 0.0, %v578
      %v580 = vpop.f32.mrb[0].mxu0
      %v581 = vadd.f32 0.0, %v580
      %v582 = vpop.f32.mrb[0].mxu0
      %v583 = vadd.f32 0.0, %v582
      %v584 = vpop.f32.mrb[0].mxu0
      %v585 = vadd.f32 0.0, %v584
      %586 = vmatprep.mubr.bf16.mxu0 0
      %587 = vmatmul.mubr.bf16.gmra.mrb[0].mxu0 %v388
      %v588 = vpop.f32.mrb[0].mxu0
      %v589 = vadd.f32 0.0, %v588
      %v590 = vpop.f32.mrb[0].mxu0
      %v591 = vadd.f32 0.0, %v590
      %v592 = vpop.f32.mrb[0].mxu0
      %v593 = vadd.f32 0.0, %v592
      %v594 = vpop.f32.mrb[0].mxu0
      %v595 = vadd.f32 0.0, %v594
      %596 = vmatprep.mubr.bf16.mxu0 0
      %597 = vmatmul.mubr.bf16.gmra.mrb[0].mxu0 %v389
      %v598 = vpop.f32.mrb[0].mxu0
      %v599 = vadd.f32 0.0, %v598
      %v600 = vpop.f32.mrb[0].mxu0
      %v601 = vadd.f32 0.0, %v600
      %v602 = vpop.f32.mrb[0].mxu0
      %v603 = vadd.f32 0.0, %v602
      %v604 = vpop.f32.mrb[0].mxu0
      %v605 = vadd.f32 0.0, %v604
      %606 = vmatprep.mubr.bf16.mxu0 0
      %607 = vmatmul.mubr.bf16.gmra.mrb[0].mxu0 %v390
      %v608 = vpop.f32.mrb[0].mxu0
      %v609 = vadd.f32 0.0, %v608
      %v610 = vpop.f32.mrb[0].mxu0
      %v611 = vadd.f32 0.0, %v610
      %v612 = vpop.f32.mrb[0].mxu0
      %v613 = vadd.f32 0.0, %v612
      %v614 = vpop.f32.mrb[0].mxu0
      %v615 = vadd.f32 0.0, %v614
      %616 = vmatprep.mubr.bf16.mxu0 0
      %617 = vmatmul.mubr.bf16.gmra.mrb[0].mxu0 %v391
      %v618 = vpop.f32.mrb[0].mxu0
      %v619 = vadd.f32 0.0, %v618
      %v620 = vpop.f32.mrb[0].mxu0
      %v621 = vadd.f32 0.0, %v620
      %v622 = vpop.f32.mrb[0].mxu0
      %v623 = vadd.f32 0.0, %v622
      %v624 = vpop.f32.mrb[0].mxu0
      %v625 = vadd.f32 0.0, %v624
      %626 = vmatprep.mubr.bf16.mxu0 0
      %627 = vmatmul.mubr.bf16.gmra.mrb[0].mxu0 %v392
      %v628 = vpop.f32.mrb[0].mxu0
      %v629 = vadd.f32 0.0, %v628
      %v630 = vpop.f32.mrb[0].mxu0
      %v631 = vadd.f32 0.0, %v630
      %v632 = vpop.f32.mrb[0].mxu0
      %v633 = vadd.f32 0.0, %v632
      %v634 = vpop.f32.mrb[0].mxu0
      %v635 = vadd.f32 0.0, %v634
      %636 = vmatprep.mubr.bf16.mxu0 0
      %637 = vmatmul.mubr.bf16.gmra.mrb[0].mxu0 %v393
      %v638 = vpop.f32.mrb[0].mxu0
      %v639 = vadd.f32 0.0, %v638
      %v640 = vpop.f32.mrb[0].mxu0
      %v641 = vadd.f32 0.0, %v640
      %v642 = vpop.f32.mrb[0].mxu0
      %v643 = vadd.f32 0.0, %v642
      %v644 = vpop.f32.mrb[0].mxu0
      %v645 = vadd.f32 0.0, %v644
      %646 = vmatprep.mubr.bf16.mxu0 0
      %647 = vmatmul.mubr.bf16.gmra.mrb[0].mxu0 %v394
      %v648 = vpop.f32.mrb[0].mxu0
      %v649 = vadd.f32 0.0, %v648
      %v650 = vpop.f32.mrb[0].mxu0
      %v651 = vadd.f32 0.0, %v650
      %v652 = vpop.f32.mrb[0].mxu0
      %v653 = vadd.f32 0.0, %v652
      %v654 = vpop.f32.mrb[0].mxu0
      %v655 = vadd.f32 0.0, %v654
      %656 = vmatprep.mubr.bf16.mxu0 0
      %657 = vmatmul.mubr.bf16.gmra.mrb[0].mxu0 %v395
      %v658 = vpop.f32.mrb[0].mxu0
      %v659 = vadd.f32 0.0, %v658
      %v660 = vpop.f32.mrb[0].mxu0
      %v661 = vadd.f32 0.0, %v660
      %v662 = vpop.f32.mrb[0].mxu0
      %v663 = vadd.f32 0.0, %v662
      %v664 = vpop.f32.mrb[0].mxu0
      %v665 = vadd.f32 0.0, %v664
      %666 = vmatprep.mubr.bf16.mxu0 0
      %667 = vmatmul.mubr.bf16.gmra.mrb[0].mxu0 %v396
      %v668 = vpop.f32.mrb[0].mxu0
      %v669 = vadd.f32 0.0, %v668
      %v670 = vpop.f32.mrb[0].mxu0
      %v671 = vadd.f32 0.0, %v670
      %v672 = vpop.f32.mrb[0].mxu0
      %v673 = vadd.f32 0.0, %v672
      %v674 = vpop.f32.mrb[0].mxu0
      %v675 = vadd.f32 0.0, %v674
      %676 = vmatprep.mubr.bf16.mxu0 0
      %677 = vmatmul.mubr.bf16.gmra.mrb[0].mxu0 %v397
      %v678 = vpop.f32.mrb[0].mxu0
      %v679 = vadd.f32 0.0, %v678
      %v680 = vpop.f32.mrb[0].mxu0
      %v681 = vadd.f32 0.0, %v680
      %v682 = vpop.f32.mrb[0].mxu0
      %v683 = vadd.f32 0.0, %v682
      %v684 = vpop.f32.mrb[0].mxu0
      %v685 = vadd.f32 0.0, %v684
      %686 = vdwg.mxu0
      %v687 = vpack.c.bf16 %v533, %v529
      %v688 = vpack.c.bf16 %v535, %v531
      %v689 = vpack.c.bf16 %v543, %v539
      %v690 = vpack.c.bf16 %v545, %v541
      %v691 = vpack.c.bf16 %v553, %v549
      %v692 = vpack.c.bf16 %v555, %v551
      %v693 = vpack.c.bf16 %v563, %v559
      %v694 = vpack.c.bf16 %v565, %v561
      %v695 = vpack.c.bf16 %v573, %v569
      %v696 = vpack.c.bf16 %v575, %v571
      %v697 = vpack.c.bf16 %v583, %v579
      %v698 = vpack.c.bf16 %v585, %v581
      %v699 = vpack.c.bf16 %v593, %v589
      %v700 = vpack.c.bf16 %v595, %v591
      %v701 = vpack.c.bf16 %v603, %v599
      %v702 = vpack.c.bf16 %v605, %v601
      %v703 = vpack.c.bf16 %v613, %v609
      %v704 = vpack.c.bf16 %v615, %v611
      %v705 = vpack.c.bf16 %v623, %v619
      %v706 = vpack.c.bf16 %v625, %v621
      %v707 = vpack.c.bf16 %v633, %v629
      %v708 = vpack.c.bf16 %v635, %v631
      %v709 = vpack.c.bf16 %v643, %v639
      %v710 = vpack.c.bf16 %v645, %v641
      %v711 = vpack.c.bf16 %v653, %v649
      %v712 = vpack.c.bf16 %v655, %v651
      %v713 = vpack.c.bf16 %v663, %v659
      %v714 = vpack.c.bf16 %v665, %v661
      %v715 = vpack.c.bf16 %v673, %v669
      %v716 = vpack.c.bf16 %v675, %v671
      %v717 = vpack.c.bf16 %v683, %v679
      %v718 = vpack.c.bf16 %v685, %v681
      %v751 = vunpack.c.l.b16 %v687
      %v752 = vunpack.c.l.b16 %v688
      %v753 = vunpack.c.h.b16 %v687
      %v754 = vunpack.c.h.b16 %v688
      %v755 = vunpack.c.l.b16 %v689
      %v756 = vunpack.c.l.b16 %v690
      %v757 = vunpack.c.h.b16 %v689
      %v758 = vunpack.c.h.b16 %v690
      %v759 = vunpack.c.l.b16 %v691
      %v760 = vunpack.c.l.b16 %v692
      %v761 = vunpack.c.h.b16 %v691
      %v762 = vunpack.c.h.b16 %v692
      %v763 = vunpack.c.l.b16 %v693
      %v764 = vunpack.c.l.b16 %v694
      %v765 = vunpack.c.h.b16 %v693
      %v766 = vunpack.c.h.b16 %v694
      %v767 = vunpack.c.l.b16 %v695
      %v768 = vunpack.c.l.b16 %v696
      %v769 = vunpack.c.h.b16 %v695
      %v770 = vunpack.c.h.b16 %v696
      %v771 = vunpack.c.l.b16 %v697
      %v772 = vunpack.c.l.b16 %v698
      %v773 = vunpack.c.h.b16 %v697
      %v774 = vunpack.c.h.b16 %v698
      %v775 = vunpack.c.l.b16 %v699
      %v776 = vunpack.c.l.b16 %v700
      %v777 = vunpack.c.h.b16 %v699
      %v778 = vunpack.c.h.b16 %v700
      %v779 = vunpack.c.l.b16 %v701
      %v780 = vunpack.c.l.b16 %v702
      %v781 = vunpack.c.h.b16 %v701
      %v782 = vunpack.c.h.b16 %v702
      %v783 = vunpack.c.l.b16 %v703
      %v784 = vunpack.c.l.b16 %v704
      %v785 = vunpack.c.h.b16 %v703
      %v786 = vunpack.c.h.b16 %v704
      %v787 = vunpack.c.l.b16 %v705
      %v788 = vunpack.c.l.b16 %v706
      %v789 = vunpack.c.h.b16 %v705
      %v790 = vunpack.c.h.b16 %v706
      %v791 = vunpack.c.l.b16 %v707
      %v792 = vunpack.c.l.b16 %v708
      %v793 = vunpack.c.h.b16 %v707
      %v794 = vunpack.c.h.b16 %v708
      %v795 = vunpack.c.l.b16 %v709
      %v796 = vunpack.c.l.b16 %v710
      %v797 = vunpack.c.h.b16 %v709
      %v798 = vunpack.c.h.b16 %v710
      %v799 = vunpack.c.l.b16 %v711
      %v800 = vunpack.c.l.b16 %v712
      %v801 = vunpack.c.h.b16 %v711
      %v802 = vunpack.c.h.b16 %v712
      %v803 = vunpack.c.l.b16 %v713
      %v804 = vunpack.c.l.b16 %v714
      %v805 = vunpack.c.h.b16 %v713
      %v806 = vunpack.c.h.b16 %v714
      %v807 = vunpack.c.l.b16 %v715
      %v808 = vunpack.c.l.b16 %v716
      %v809 = vunpack.c.h.b16 %v715
      %v810 = vunpack.c.h.b16 %v716
      %v811 = vunpack.c.l.b16 %v717
      %v812 = vunpack.c.l.b16 %v718
      %v813 = vunpack.c.h.b16 %v717
      %v814 = vunpack.c.h.b16 %v718
      %v815 = vpack.c.b16 %v752, %v751
      %v816 = vpack.c.b16 %v754, %v753
      %v817 = vpack.c.b16 %v756, %v755
      %v818 = vpack.c.b16 %v758, %v757
      %v819 = vpack.c.b16 %v760, %v759
      %v820 = vpack.c.b16 %v762, %v761
      %v821 = vpack.c.b16 %v764, %v763
      %v822 = vpack.c.b16 %v766, %v765
      %v823 = vpack.c.b16 %v768, %v767
      %v824 = vpack.c.b16 %v770, %v769
      %v825 = vpack.c.b16 %v772, %v771
      %v826 = vpack.c.b16 %v774, %v773
      %v827 = vpack.c.b16 %v776, %v775
      %v828 = vpack.c.b16 %v778, %v777
      %v829 = vpack.c.b16 %v780, %v779
      %v830 = vpack.c.b16 %v782, %v781
      %v831 = vpack.c.b16 %v784, %v783
      %v832 = vpack.c.b16 %v786, %v785
      %v833 = vpack.c.b16 %v788, %v787
      %v834 = vpack.c.b16 %v790, %v789
      %v835 = vpack.c.b16 %v792, %v791
      %v836 = vpack.c.b16 %v794, %v793
      %v837 = vpack.c.b16 %v796, %v795
      %v838 = vpack.c.b16 %v798, %v797
      %v839 = vpack.c.b16 %v800, %v799
      %v840 = vpack.c.b16 %v802, %v801
      %v841 = vpack.c.b16 %v804, %v803
      %v842 = vpack.c.b16 %v806, %v805
      %v843 = vpack.c.b16 %v808, %v807
      %v844 = vpack.c.b16 %v810, %v809
      %v845 = vpack.c.b16 %v812, %v811
      %v846 = vpack.c.b16 %v814, %v813
      %879 = vst [vmem:[%s257] sm:$0xff] %v815
      %880 = vst [vmem:[%s257 + $0x8] sm:$0xff] %v816
      %881 = vst [vmem:[%s257 + $0x10] sm:$0xff] %v817
      %882 = vst [vmem:[%s257 + $0x18] sm:$0xff] %v818
      %883 = vst [vmem:[%s257 + $0x20] sm:$0xff] %v819
      %884 = vst [vmem:[%s257 + $0x28] sm:$0xff] %v820
      %885 = vst [vmem:[%s257 + $0x30] sm:$0xff] %v821
      %886 = vst [vmem:[%s257 + $0x38] sm:$0xff] %v822
      %887 = vst [vmem:[%s257 + $0x40] sm:$0xff] %v823
      %888 = vst [vmem:[%s257 + $0x48] sm:$0xff] %v824
      %889 = vst [vmem:[%s257 + $0x50] sm:$0xff] %v825
      %890 = vst [vmem:[%s257 + $0x58] sm:$0xff] %v826
      %891 = vst [vmem:[%s257 + $0x60] sm:$0xff] %v827
      %892 = vst [vmem:[%s257 + $0x68] sm:$0xff] %v828
      %893 = vst [vmem:[%s257 + $0x70] sm:$0xff] %v829
      %894 = vst [vmem:[%s257 + $0x78] sm:$0xff] %v830
      %895 = vst [vmem:[%s257 + $0x80] sm:$0xff] %v831
      %896 = vst [vmem:[%s257 + $0x88] sm:$0xff] %v832
      %897 = vst [vmem:[%s257 + $0x90] sm:$0xff] %v833
      %898 = vst [vmem:[%s257 + $0x98] sm:$0xff] %v834
      %899 = vst [vmem:[%s257 + $0xa0] sm:$0xff] %v835
      %900 = vst [vmem:[%s257 + $0xa8] sm:$0xff] %v836
      %901 = vst [vmem:[%s257 + $0xb0] sm:$0xff] %v837
      %902 = vst [vmem:[%s257 + $0xb8] sm:$0xff] %v838
      %903 = vst [vmem:[%s257 + $0xc0] sm:$0xff] %v839
      %904 = vst [vmem:[%s257 + $0xc8] sm:$0xff] %v840
      %905 = vst [vmem:[%s257 + $0xd0] sm:$0xff] %v841
      %906 = vst [vmem:[%s257 + $0xd8] sm:$0xff] %v842
      %907 = vst [vmem:[%s257 + $0xe0] sm:$0xff] %v843
      %908 = vst [vmem:[%s257 + $0xe8] sm:$0xff] %v844
      %909 = vst [vmem:[%s257 + $0xf0] sm:$0xff] %v845
      %910 = vst [vmem:[%s257 + $0xf8] sm:$0xff] %v846
      %v911 = vld [vmem:[%s2] sm:$0xff]
      %v912 = vld [vmem:[%s2 + $0x8] sm:$0xff]
      %v913 = vld [vmem:[%s2 + $0x10] sm:$0xff]
      %v914 = vld [vmem:[%s2 + $0x18] sm:$0xff]
      %v915 = vld [vmem:[%s2 + $0x20] sm:$0xff]
      %v916 = vld [vmem:[%s2 + $0x28] sm:$0xff]
      %v917 = vld [vmem:[%s2 + $0x30] sm:$0xff]
      %v918 = vld [vmem:[%s2 + $0x38] sm:$0xff]
      %v919 = vld [vmem:[%s2 + $0x40] sm:$0xff]
      %v920 = vld [vmem:[%s2 + $0x48] sm:$0xff]
      %v921 = vld [vmem:[%s2 + $0x50] sm:$0xff]
      %v922 = vld [vmem:[%s2 + $0x58] sm:$0xff]
      %v923 = vld [vmem:[%s2 + $0x60] sm:$0xff]
      %v924 = vld [vmem:[%s2 + $0x68] sm:$0xff]
      %v925 = vld [vmem:[%s2 + $0x70] sm:$0xff]
      %v926 = vld [vmem:[%s2 + $0x78] sm:$0xff]
      %v927 = vld [vmem:[%s2 + $0x80] sm:$0xff]
      %v928 = vld [vmem:[%s2 + $0x88] sm:$0xff]
      %v929 = vld [vmem:[%s2 + $0x90] sm:$0xff]
      %v930 = vld [vmem:[%s2 + $0x98] sm:$0xff]
      %v931 = vld [vmem:[%s2 + $0xa0] sm:$0xff]
      %v932 = vld [vmem:[%s2 + $0xa8] sm:$0xff]
      %v933 = vld [vmem:[%s2 + $0xb0] sm:$0xff]
      %v934 = vld [vmem:[%s2 + $0xb8] sm:$0xff]
      %v935 = vld [vmem:[%s2 + $0xc0] sm:$0xff]
      %v936 = vld [vmem:[%s2 + $0xc8] sm:$0xff]
      %v937 = vld [vmem:[%s2 + $0xd0] sm:$0xff]
      %v938 = vld [vmem:[%s2 + $0xd8] sm:$0xff]
      %v939 = vld [vmem:[%s2 + $0xe0] sm:$0xff]
      %v940 = vld [vmem:[%s2 + $0xe8] sm:$0xff]
      %v941 = vld [vmem:[%s2 + $0xf0] sm:$0xff]
      %v942 = vld [vmem:[%s2 + $0xf8] sm:$0xff]
      %944 = vset.pattern.permute.xlu0 0
      %945 = vperm.xlu0 %944, %v911
      %v946 = vpop.permute.xlu0 %945
      %949 = vset.pattern.permute.xlu0 0
      %950 = vperm.xlu0 %949, %v912
      %v951 = vpop.permute.xlu0 %950
      %954 = vset.pattern.permute.xlu0 0
      %955 = vperm.xlu0 %954, %v913
      %v956 = vpop.permute.xlu0 %955
      %959 = vset.pattern.permute.xlu0 0
      %960 = vperm.xlu0 %959, %v914
      %v961 = vpop.permute.xlu0 %960
      %964 = vset.pattern.permute.xlu0 0
      %965 = vperm.xlu0 %964, %v915
      %v966 = vpop.permute.xlu0 %965
      %969 = vset.pattern.permute.xlu0 0
      %970 = vperm.xlu0 %969, %v916
      %v971 = vpop.permute.xlu0 %970
      %974 = vset.pattern.permute.xlu0 0
      %975 = vperm.xlu0 %974, %v917
      %v976 = vpop.permute.xlu0 %975
      %979 = vset.pattern.permute.xlu0 0
      %980 = vperm.xlu0 %979, %v918
      %v981 = vpop.permute.xlu0 %980
      %984 = vset.pattern.permute.xlu0 0
      %985 = vperm.xlu0 %984, %v919
      %v986 = vpop.permute.xlu0 %985
      %989 = vset.pattern.permute.xlu0 0
      %990 = vperm.xlu0 %989, %v920
      %v991 = vpop.permute.xlu0 %990
      %994 = vset.pattern.permute.xlu0 0
      %995 = vperm.xlu0 %994, %v921
      %v996 = vpop.permute.xlu0 %995
      %999 = vset.pattern.permute.xlu0 0
      %1000 = vperm.xlu0 %999, %v922
      %v1001 = vpop.permute.xlu0 %1000
      %1004 = vset.pattern.permute.xlu0 0
      %1005 = vperm.xlu0 %1004, %v923
      %v1006 = vpop.permute.xlu0 %1005
      %1009 = vset.pattern.permute.xlu0 0
      %1010 = vperm.xlu0 %1009, %v924
      %v1011 = vpop.permute.xlu0 %1010
      %1014 = vset.pattern.permute.xlu0 0
      %1015 = vperm.xlu0 %1014, %v925
      %v1016 = vpop.permute.xlu0 %1015
      %1019 = vset.pattern.permute.xlu0 0
      %1020 = vperm.xlu0 %1019, %v926
      %v1021 = vpop.permute.xlu0 %1020
      %1024 = vset.pattern.permute.xlu0 0
      %1025 = vperm.xlu0 %1024, %v927
      %v1026 = vpop.permute.xlu0 %1025
      %1029 = vset.pattern.permute.xlu0 0
      %1030 = vperm.xlu0 %1029, %v928
      %v1031 = vpop.permute.xlu0 %1030
      %1034 = vset.pattern.permute.xlu0 0
      %1035 = vperm.xlu0 %1034, %v929
      %v1036 = vpop.permute.xlu0 %1035
      %1039 = vset.pattern.permute.xlu0 0
      %1040 = vperm.xlu0 %1039, %v930
      %v1041 = vpop.permute.xlu0 %1040
      %1044 = vset.pattern.permute.xlu0 0
      %1045 = vperm.xlu0 %1044, %v931
      %v1046 = vpop.permute.xlu0 %1045
      %1049 = vset.pattern.permute.xlu0 0
      %1050 = vperm.xlu0 %1049, %v932
      %v1051 = vpop.permute.xlu0 %1050
      %1054 = vset.pattern.permute.xlu0 0
      %1055 = vperm.xlu0 %1054, %v933
      %v1056 = vpop.permute.xlu0 %1055
      %1059 = vset.pattern.permute.xlu0 0
      %1060 = vperm.xlu0 %1059, %v934
      %v1061 = vpop.permute.xlu0 %1060
      %1064 = vset.pattern.permute.xlu0 0
      %1065 = vperm.xlu0 %1064, %v935
      %v1066 = vpop.permute.xlu0 %1065
      %1069 = vset.pattern.permute.xlu0 0
      %1070 = vperm.xlu0 %1069, %v936
      %v1071 = vpop.permute.xlu0 %1070
      %1074 = vset.pattern.permute.xlu0 0
      %1075 = vperm.xlu0 %1074, %v937
      %v1076 = vpop.permute.xlu0 %1075
      %1079 = vset.pattern.permute.xlu0 0
      %1080 = vperm.xlu0 %1079, %v938
      %v1081 = vpop.permute.xlu0 %1080
      %1084 = vset.pattern.permute.xlu0 0
      %1085 = vperm.xlu0 %1084, %v939
      %v1086 = vpop.permute.xlu0 %1085
      %1089 = vset.pattern.permute.xlu0 0
      %1090 = vperm.xlu0 %1089, %v940
      %v1091 = vpop.permute.xlu0 %1090
      %1094 = vset.pattern.permute.xlu0 0
      %1095 = vperm.xlu0 %1094, %v941
      %v1096 = vpop.permute.xlu0 %1095
      %1099 = vset.pattern.permute.xlu0 0
      %1100 = vperm.xlu0 %1099, %v942
      %v1101 = vpop.permute.xlu0 %1100
      %v1103 = vmul.f32 %v529, %v946
      %v1104 = vmul.f32 %v531, %v946
      %v1105 = vmul.f32 %v533, %v951
      %v1106 = vmul.f32 %v535, %v951
      %v1107 = vmul.f32 %v539, %v956
      %v1108 = vmul.f32 %v541, %v956
      %v1109 = vmul.f32 %v543, %v961
      %v1110 = vmul.f32 %v545, %v961
      %v1111 = vmul.f32 %v549, %v966
      %v1112 = vmul.f32 %v551, %v966
      %v1113 = vmul.f32 %v553, %v971
      %v1114 = vmul.f32 %v555, %v971
      %v1115 = vmul.f32 %v559, %v976
      %v1116 = vmul.f32 %v561, %v976
      %v1117 = vmul.f32 %v563, %v981
      %v1118 = vmul.f32 %v565, %v981
      %v1119 = vmul.f32 %v569, %v986
      %v1120 = vmul.f32 %v571, %v986
      %v1121 = vmul.f32 %v573, %v991
      %v1122 = vmul.f32 %v575, %v991
      %v1123 = vmul.f32 %v579, %v996
      %v1124 = vmul.f32 %v581, %v996
      %v1125 = vmul.f32 %v583, %v1001
      %v1126 = vmul.f32 %v585, %v1001
      %v1127 = vmul.f32 %v589, %v1006
      %v1128 = vmul.f32 %v591, %v1006
      %v1129 = vmul.f32 %v593, %v1011
      %v1130 = vmul.f32 %v595, %v1011
      %v1131 = vmul.f32 %v599, %v1016
      %v1132 = vmul.f32 %v601, %v1016
      %v1133 = vmul.f32 %v603, %v1021
      %v1134 = vmul.f32 %v605, %v1021
      %v1135 = vmul.f32 %v609, %v1026
      %v1136 = vmul.f32 %v611, %v1026
      %v1137 = vmul.f32 %v613, %v1031
      %v1138 = vmul.f32 %v615, %v1031
      %v1139 = vmul.f32 %v619, %v1036
      %v1140 = vmul.f32 %v621, %v1036
      %v1141 = vmul.f32 %v623, %v1041
      %v1142 = vmul.f32 %v625, %v1041
      %v1143 = vmul.f32 %v629, %v1046
      %v1144 = vmul.f32 %v631, %v1046
      %v1145 = vmul.f32 %v633, %v1051
      %v1146 = vmul.f32 %v635, %v1051
      %v1147 = vmul.f32 %v639, %v1056
      %v1148 = vmul.f32 %v641, %v1056
      %v1149 = vmul.f32 %v643, %v1061
      %v1150 = vmul.f32 %v645, %v1061
      %v1151 = vmul.f32 %v649, %v1066
      %v1152 = vmul.f32 %v651, %v1066
      %v1153 = vmul.f32 %v653, %v1071
      %v1154 = vmul.f32 %v655, %v1071
      %v1155 = vmul.f32 %v659, %v1076
      %v1156 = vmul.f32 %v661, %v1076
      %v1157 = vmul.f32 %v663, %v1081
      %v1158 = vmul.f32 %v665, %v1081
      %v1159 = vmul.f32 %v669, %v1086
      %v1160 = vmul.f32 %v671, %v1086
      %v1161 = vmul.f32 %v673, %v1091
      %v1162 = vmul.f32 %v675, %v1091
      %v1163 = vmul.f32 %v679, %v1096
      %v1164 = vmul.f32 %v681, %v1096
      %v1165 = vmul.f32 %v683, %v1101
      %v1166 = vmul.f32 %v685, %v1101
      %v1167 = vadd.f32 %v1103, %v1105
      %v1168 = vadd.f32 %v1167, %v1107
      %v1169 = vadd.f32 %v1168, %v1109
      %v1170 = vadd.f32 %v1169, %v1111
      %v1171 = vadd.f32 %v1170, %v1113
      %v1172 = vadd.f32 %v1171, %v1115
      %v1173 = vadd.f32 %v1172, %v1117
      %v1174 = vadd.f32 %v1173, %v1119
      %v1175 = vadd.f32 %v1174, %v1121
      %v1176 = vadd.f32 %v1175, %v1123
      %v1177 = vadd.f32 %v1176, %v1125
      %v1178 = vadd.f32 %v1177, %v1127
      %v1179 = vadd.f32 %v1178, %v1129
      %v1180 = vadd.f32 %v1179, %v1131
      %v1181 = vadd.f32 %v1180, %v1133
      %v1182 = vadd.f32 %v1181, %v1135
      %v1183 = vadd.f32 %v1182, %v1137
      %v1184 = vadd.f32 %v1183, %v1139
      %v1185 = vadd.f32 %v1184, %v1141
      %v1186 = vadd.f32 %v1185, %v1143
      %v1187 = vadd.f32 %v1186, %v1145
      %v1188 = vadd.f32 %v1187, %v1147
      %v1189 = vadd.f32 %v1188, %v1149
      %v1190 = vadd.f32 %v1189, %v1151
      %v1191 = vadd.f32 %v1190, %v1153
      %v1192 = vadd.f32 %v1191, %v1155
      %v1193 = vadd.f32 %v1192, %v1157
      %v1194 = vadd.f32 %v1193, %v1159
      %v1195 = vadd.f32 %v1194, %v1161
      %v1196 = vadd.f32 %v1195, %v1163
      %v1197 = vadd.f32 %v1196, %v1165
      %v1198 = vrot.slane %v1197, 4
      %v1199 = vadd.f32 %v1197, %v1198
      %v1200 = vrot.slane %v1199, 2
      %v1201 = vadd.f32 %v1199, %v1200
      %v1202 = vrot.slane %v1201, 1
      %v1203 = vadd.f32 %v1201, %v1202
      %v1204 = vadd.f32 %v1104, %v1106
      %v1205 = vadd.f32 %v1204, %v1108
      %v1206 = vadd.f32 %v1205, %v1110
      %v1207 = vadd.f32 %v1206, %v1112
      %v1208 = vadd.f32 %v1207, %v1114
      %v1209 = vadd.f32 %v1208, %v1116
      %v1210 = vadd.f32 %v1209, %v1118
      %v1211 = vadd.f32 %v1210, %v1120
      %v1212 = vadd.f32 %v1211, %v1122
      %v1213 = vadd.f32 %v1212, %v1124
      %v1214 = vadd.f32 %v1213, %v1126
      %v1215 = vadd.f32 %v1214, %v1128
      %v1216 = vadd.f32 %v1215, %v1130
      %v1217 = vadd.f32 %v1216, %v1132
      %v1218 = vadd.f32 %v1217, %v1134
      %v1219 = vadd.f32 %v1218, %v1136
      %v1220 = vadd.f32 %v1219, %v1138
      %v1221 = vadd.f32 %v1220, %v1140
      %v1222 = vadd.f32 %v1221, %v1142
      %v1223 = vadd.f32 %v1222, %v1144
      %v1224 = vadd.f32 %v1223, %v1146
      %v1225 = vadd.f32 %v1224, %v1148
      %v1226 = vadd.f32 %v1225, %v1150
      %v1227 = vadd.f32 %v1226, %v1152
      %v1228 = vadd.f32 %v1227, %v1154
      %v1229 = vadd.f32 %v1228, %v1156
      %v1230 = vadd.f32 %v1229, %v1158
      %v1231 = vadd.f32 %v1230, %v1160
      %v1232 = vadd.f32 %v1231, %v1162
      %v1233 = vadd.f32 %v1232, %v1164
      %v1234 = vadd.f32 %v1233, %v1166
      %v1235 = vrot.slane %v1234, 4
      %v1236 = vadd.f32 %v1234, %v1235
      %v1237 = vrot.slane %v1236, 2
      %v1238 = vadd.f32 %v1236, %v1237
      %v1239 = vrot.slane %v1238, 1
      %v1240 = vadd.f32 %v1238, %v1239
      %v1241 = vmul.f32 %v1103, %v529
      %v1242 = vmul.f32 %v1104, %v531
      %v1243 = vmul.f32 %v1105, %v533
      %v1244 = vmul.f32 %v1106, %v535
      %v1245 = vmul.f32 %v1107, %v539
      %v1246 = vmul.f32 %v1108, %v541
      %v1247 = vmul.f32 %v1109, %v543
      %v1248 = vmul.f32 %v1110, %v545
      %v1249 = vmul.f32 %v1111, %v549
      %v1250 = vmul.f32 %v1112, %v551
      %v1251 = vmul.f32 %v1113, %v553
      %v1252 = vmul.f32 %v1114, %v555
      %v1253 = vmul.f32 %v1115, %v559
      %v1254 = vmul.f32 %v1116, %v561
      %v1255 = vmul.f32 %v1117, %v563
      %v1256 = vmul.f32 %v1118, %v565
      %v1257 = vmul.f32 %v1119, %v569
      %v1258 = vmul.f32 %v1120, %v571
      %v1259 = vmul.f32 %v1121, %v573
      %v1260 = vmul.f32 %v1122, %v575
      %v1261 = vmul.f32 %v1123, %v579
      %v1262 = vmul.f32 %v1124, %v581
      %v1263 = vmul.f32 %v1125, %v583
      %v1264 = vmul.f32 %v1126, %v585
      %v1265 = vmul.f32 %v1127, %v589
      %v1266 = vmul.f32 %v1128, %v591
      %v1267 = vmul.f32 %v1129, %v593
      %v1268 = vmul.f32 %v1130, %v595
      %v1269 = vmul.f32 %v1131, %v599
      %v1270 = vmul.f32 %v1132, %v601
      %v1271 = vmul.f32 %v1133, %v603
      %v1272 = vmul.f32 %v1134, %v605
      %v1273 = vmul.f32 %v1135, %v609
      %v1274 = vmul.f32 %v1136, %v611
      %v1275 = vmul.f32 %v1137, %v613
      %v1276 = vmul.f32 %v1138, %v615
      %v1277 = vmul.f32 %v1139, %v619
      %v1278 = vmul.f32 %v1140, %v621
      %v1279 = vmul.f32 %v1141, %v623
      %v1280 = vmul.f32 %v1142, %v625
      %v1281 = vmul.f32 %v1143, %v629
      %v1282 = vmul.f32 %v1144, %v631
      %v1283 = vmul.f32 %v1145, %v633
      %v1284 = vmul.f32 %v1146, %v635
      %v1285 = vmul.f32 %v1147, %v639
      %v1286 = vmul.f32 %v1148, %v641
      %v1287 = vmul.f32 %v1149, %v643
      %v1288 = vmul.f32 %v1150, %v645
      %v1289 = vmul.f32 %v1151, %v649
      %v1290 = vmul.f32 %v1152, %v651
      %v1291 = vmul.f32 %v1153, %v653
      %v1292 = vmul.f32 %v1154, %v655
      %v1293 = vmul.f32 %v1155, %v659
      %v1294 = vmul.f32 %v1156, %v661
      %v1295 = vmul.f32 %v1157, %v663
      %v1296 = vmul.f32 %v1158, %v665
      %v1297 = vmul.f32 %v1159, %v669
      %v1298 = vmul.f32 %v1160, %v671
      %v1299 = vmul.f32 %v1161, %v673
      %v1300 = vmul.f32 %v1162, %v675
      %v1301 = vmul.f32 %v1163, %v679
      %v1302 = vmul.f32 %v1164, %v681
      %v1303 = vmul.f32 %v1165, %v683
      %v1304 = vmul.f32 %v1166, %v685
      %v1305 = vadd.f32 %v1241, %v1243
      %v1306 = vadd.f32 %v1305, %v1245
      %v1307 = vadd.f32 %v1306, %v1247
      %v1308 = vadd.f32 %v1307, %v1249
      %v1309 = vadd.f32 %v1308, %v1251
      %v1310 = vadd.f32 %v1309, %v1253
      %v1311 = vadd.f32 %v1310, %v1255
      %v1312 = vadd.f32 %v1311, %v1257
      %v1313 = vadd.f32 %v1312, %v1259
      %v1314 = vadd.f32 %v1313, %v1261
      %v1315 = vadd.f32 %v1314, %v1263
      %v1316 = vadd.f32 %v1315, %v1265
      %v1317 = vadd.f32 %v1316, %v1267
      %v1318 = vadd.f32 %v1317, %v1269
      %v1319 = vadd.f32 %v1318, %v1271
      %v1320 = vadd.f32 %v1319, %v1273
      %v1321 = vadd.f32 %v1320, %v1275
      %v1322 = vadd.f32 %v1321, %v1277
      %v1323 = vadd.f32 %v1322, %v1279
      %v1324 = vadd.f32 %v1323, %v1281
      %v1325 = vadd.f32 %v1324, %v1283
      %v1326 = vadd.f32 %v1325, %v1285
      %v1327 = vadd.f32 %v1326, %v1287
      %v1328 = vadd.f32 %v1327, %v1289
      %v1329 = vadd.f32 %v1328, %v1291
      %v1330 = vadd.f32 %v1329, %v1293
      %v1331 = vadd.f32 %v1330, %v1295
      %v1332 = vadd.f32 %v1331, %v1297
      %v1333 = vadd.f32 %v1332, %v1299
      %v1334 = vadd.f32 %v1333, %v1301
      %v1335 = vadd.f32 %v1334, %v1303
      %v1336 = vrot.slane %v1335, 4
      %v1337 = vadd.f32 %v1335, %v1336
      %v1338 = vrot.slane %v1337, 2
      %v1339 = vadd.f32 %v1337, %v1338
      %v1340 = vrot.slane %v1339, 1
      %v1341 = vadd.f32 %v1339, %v1340
      %v1342 = vadd.f32 %v1242, %v1244
      %v1343 = vadd.f32 %v1342, %v1246
      %v1344 = vadd.f32 %v1343, %v1248
      %v1345 = vadd.f32 %v1344, %v1250
      %v1346 = vadd.f32 %v1345, %v1252
      %v1347 = vadd.f32 %v1346, %v1254
      %v1348 = vadd.f32 %v1347, %v1256
      %v1349 = vadd.f32 %v1348, %v1258
      %v1350 = vadd.f32 %v1349, %v1260
      %v1351 = vadd.f32 %v1350, %v1262
      %v1352 = vadd.f32 %v1351, %v1264
      %v1353 = vadd.f32 %v1352, %v1266
      %v1354 = vadd.f32 %v1353, %v1268
      %v1355 = vadd.f32 %v1354, %v1270
      %v1356 = vadd.f32 %v1355, %v1272
      %v1357 = vadd.f32 %v1356, %v1274
      %v1358 = vadd.f32 %v1357, %v1276
      %v1359 = vadd.f32 %v1358, %v1278
      %v1360 = vadd.f32 %v1359, %v1280
      %v1361 = vadd.f32 %v1360, %v1282
      %v1362 = vadd.f32 %v1361, %v1284
      %v1363 = vadd.f32 %v1362, %v1286
      %v1364 = vadd.f32 %v1363, %v1288
      %v1365 = vadd.f32 %v1364, %v1290
      %v1366 = vadd.f32 %v1365, %v1292
      %v1367 = vadd.f32 %v1366, %v1294
      %v1368 = vadd.f32 %v1367, %v1296
      %v1369 = vadd.f32 %v1368, %v1298
      %v1370 = vadd.f32 %v1369, %v1300
      %v1371 = vadd.f32 %v1370, %v1302
      %v1372 = vadd.f32 %v1371, %v1304
      %v1373 = vrot.slane %v1372, 4
      %v1374 = vadd.f32 %v1372, %v1373
      %v1375 = vrot.slane %v1374, 2
      %v1376 = vadd.f32 %v1374, %v1375
      %v1377 = vrot.slane %v1376, 1
      %v1378 = vadd.f32 %v1376, %v1377
      %vm1379 = vcmask 1040384
      %v1380 = vsel %vm1379, %v1203, %v1341
      %v1381 = vsel %vm1379, %v1240, %v1378
      %v1384 = vcombine.low %v1380, %v1381
      %v1386 = vunpack.c.l.s4 1983009808
      %v1387 = vunpack.c.0.s8 %v1386
      %v1388 = vlaneseq
      %v1389 = vshrl.u32 %v1388, 7
      %v1390 = vsub.s32 %v1387, %v1389
      %v1391 = vrot.slane %v1384, %v1390
      %1393 = vst [vmem:[%s267] sm:$0xf] %v1391
      %s1394 = smul.u32 2, %s21
      %p1395 = scmp.lt.s32.totalorder %s20, 1
      %s1396 = scalar_select %p1395, %s20, 1
      %p1397 = scmp.lt.s32.totalorder %s1394, 1
      %s1398 = scalar_select %p1397, %s1394, 1
      %s1399 = smul.addr %s1396, 64
      %s1400 = sadd.s32 %s1398, %s1399
      %s1401 = smul.addr %s1400, 4
      %s1402 = scalar_lea.vmem %s3, %s1401
      %s1403 = smul.u32 2, %s21
      %p1404 = scmp.lt.s32.totalorder %s20, 1
      %s1405 = scalar_select %p1404, %s20, 1
      %p1406 = scmp.lt.s32.totalorder %s1403, 1
      %s1407 = scalar_select %p1406, %s1403, 1
      %s1408 = smul.addr %s1405, 2
      %s1409 = sadd.s32 %s1407, %s1408
      %s1410 = smul.addr %s1409, 2
      %s1411 = scalar_lea.vmem %s4, %s1410
      // Predicated region
      $region33: #{inception_v2b_forward.9} parent=31 // pred_check
        %p1412 = pneg %p121
      $region34: #{inception_v2b_forward.9} parent=31 // pred_check_branch
        %1414 = sbr.rel (%p1412) target = $region36
      $region35: #{inception_v2b_forward.9} parent=31 // pred_region
        %s1415 = smul.u32 2, %s21
      $region36: #{inception_v2b_forward.9} parent=31 // pred_fallthru
        _
      // Predicated region
      $region37: #{inception_v2b_forward.9} parent=31 // pred_check
        %p1416 = pneg %p149
      $region38: #{inception_v2b_forward.9} parent=31 // pred_check_branch
        %1418 = sbr.rel (%p1416) target = $region40
      $region39: #{inception_v2b_forward.9} parent=31 // pred_region
        %s1419 = smul.u32 2, %s21
      $region40: #{inception_v2b_forward.9} parent=31 // pred_fallthru
        _
    $region32: #{inception_v2b_forward.9} parent=5 // pred_fallthru
      _
    %p1420 = scmp.le.s32.totalorder 2, %s11
    // Predicated region
    $region41: #{inception_v2b_forward.9} parent=5 // pred_check
      %p1421 = pneg %p1420
    $region42: #{inception_v2b_forward.9} parent=5 // pred_check_branch
      %1423 = sbr.rel (%p1421) target = $region44
    $region43: #{inception_v2b_forward.9} parent=5 // pred_region
      %s1424 = ssub.s32 %s11, 2
      // Predicated region
      $region45: #{inception_v2b_forward.9} parent=43 // pred_check
        %p1425 = pneg %p127
      $region46: #{inception_v2b_forward.9} parent=43 // pred_check_branch
        %1427 = sbr.rel (%p1425) target = $region48
      $region47: #{inception_v2b_forward.9} parent=43 // pred_region
        %s1428 = smul.u32 2, %s23
        %p1429 = scmp.lt.s32.totalorder %s22, 1
        %s1430 = scalar_select %p1429, %s22, 1
        %p1431 = scmp.lt.s32.totalorder %s1428, 1
        %s1432 = scalar_select %p1431, %s1428, 1
        %s1433 = smul.addr %s1430, 64
        %s1434 = sadd.s32 %s1432, %s1433
        %s1435 = smul.addr %s1434, 4
        %s1436 = scalar_lea.vmem %s3, %s1435
      $region48: #{inception_v2b_forward.9} parent=43 // pred_fallthru
        _
      // Predicated region
      $region49: #{inception_v2b_forward.9} parent=43 // pred_check
        %p1437 = pneg %p155
      $region50: #{inception_v2b_forward.9} parent=43 // pred_check_branch
        %1439 = sbr.rel (%p1437) target = $region52
      $region51: #{inception_v2b_forward.9} parent=43 // pred_region
        %s1440 = smul.u32 2, %s23
        %p1441 = scmp.lt.s32.totalorder %s22, 1
        %s1442 = scalar_select %p1441, %s22, 1
        %p1443 = scmp.lt.s32.totalorder %s1440, 1
        %s1444 = scalar_select %p1443, %s1440, 1
        %s1445 = smul.addr %s1442, 2
        %s1446 = sadd.s32 %s1444, %s1445
        %s1447 = smul.addr %s1446, 2
        %s1448 = scalar_lea.vmem %s4, %s1447
      $region52: #{inception_v2b_forward.9} parent=43 // pred_fallthru
        _
    $region44: #{inception_v2b_forward.9} parent=5 // pred_fallthru
      _
  $region6: #{inception_v2b_forward.9} parent=0 // loop_footer
    %s15 = sadd.s32 1, %s11
  $region7: #{inception_v2b_forward.9} parent=0 // loop_footer_branch
    %10 = sbr.rel target = $region3
  $region8: #{inception_v2b_forward.9} parent=0 // loop_exit
    _

// kernel: inception_v2b_forward.10
$region0: #{inception_v2b_forward.10}
  #allocation0 [shape = 'u32[]', space=smem, size = 0x4, offset = 0x4, fixed_abs, tag = 'smem constant byte address 0x4 - core index']
  #allocation1 [shape = 'u32[144,128]{1,0:T(1,128)}', space=vmem, size = 0x12000, scoped, tag = 'internal scratch']
  %s0 = inlined_call_operand.vmem [shape: bf16[512,256], index: 0, kind: input, shape index: {}]
  %s1 = inlined_call_operand.vmem [shape: f32[1,256], index: 1, kind: input, shape index: {}]
  %s2 = inlined_call_operand.vmem [shape: f32[1,256], index: 2, kind: input, shape index: {}]
  %s3 = inlined_call_operand.vmem [shape: bf16[512,256], index: 3, kind: output, shape index: {}]
  %s4 = sld [smem:[#allocation0]]
  $region45: #{inception_v2b_forward.10} parent=0
    _
  %s6 = ssub.s32 1, %s4
  %s7 = scalar_select 0, %s6, %s4
  loop: start=0, step=1, limit=4
  $region2: #{inception_v2b_forward.10} parent=0 // loop_pre_header
    _
  $region3: #{inception_v2b_forward.10} parent=0 // loop_header
    %s9 = sphi 0, %s13
    %p10 = scmp.ge.s32.totalorder %s9, 4
    %s19 = sphi 0, %s21
    %s22 = sphi 0, %s19
    %s23 = sphi 0, %s22
    %s39 = sphi 0, %s23
    %s43 = sphi 0, %s43
    %s45 = sphi 0, %s43
    %s46 = sphi 0, %s45
    %s60 = sphi 0, %s46
    %s64 = sphi 0, %s64
    %s66 = sphi 0, %s64
    %s67 = sphi 0, %s66
    %s81 = sphi 0, %s67
    %s87 = sphi 0, %s89
    %s90 = sphi 0, %s87
    %s91 = sphi 0, %s90
    %s107 = sphi 0, %s91
  $region4: #{inception_v2b_forward.10} parent=0 // loop_header_branch
    %12 = sbr.rel (%p10) target = $region8
  $region5: #{inception_v2b_forward.10} parent=0 // loop_body
    %s14 = ssub.s32 %s9, 1
    %s15 = ssub.s32 %s9, 2
    %s16 = sadd.s32 %s9, 1
    %s17 = ssub.s32 %s9, %s16
    %p18 = scmp.eq.s32.totalorder %s17, 0
    %s20 = sadd.s32 %s19, 1
    %s21 = scalar_select %p18, %s19, %s20
    %p24 = pneg %p18
    %p25 = scmp.eq.s32.totalorder %s9, 1
    %p26 = por %p24, %p25
    %p27 = scmp.ne.s32.totalorder %s19, %s22
    %p28 = scmp.eq.s32.totalorder %s9, 0
    %p29 = por %p27, %p28
    %p30 = scmp.ne.s32.totalorder %s19, %s22
    %p31 = scmp.eq.s32.totalorder %s14, 1
    %p32 = por %p30, %p31
    %p33 = scmp.ne.s32.totalorder %s22, %s23
    %p34 = scmp.eq.s32.totalorder %s14, 0
    %p35 = por %p33, %p34
    %p36 = scmp.ne.s32.totalorder %s22, %s23
    %p37 = scmp.eq.s32.totalorder %s15, 1
    %p38 = por %p36, %p37
    %p40 = scmp.ne.s32.totalorder %s23, %s39
    %p41 = scmp.eq.s32.totalorder %s15, 0
    %p42 = por %p40, %p41
    %s44 = sadd.s32 %s43, 1
    %p47 = scmp.eq.s32.totalorder %s9, 1
    %p48 = scmp.ne.s32.totalorder %s43, %s45
    %p49 = scmp.eq.s32.totalorder %s9, 0
    %p50 = por %p48, %p49
    %p51 = scmp.ne.s32.totalorder %s43, %s45
    %p52 = scmp.eq.s32.totalorder %s14, 1
    %p53 = por %p51, %p52
    %p54 = scmp.ne.s32.totalorder %s45, %s46
    %p55 = scmp.eq.s32.totalorder %s14, 0
    %p56 = por %p54, %p55
    %p57 = scmp.ne.s32.totalorder %s45, %s46
    %p58 = scmp.eq.s32.totalorder %s15, 1
    %p59 = por %p57, %p58
    %p61 = scmp.ne.s32.totalorder %s46, %s60
    %p62 = scmp.eq.s32.totalorder %s15, 0
    %p63 = por %p61, %p62
    %s65 = sadd.s32 %s64, 1
    %p68 = scmp.eq.s32.totalorder %s9, 1
    %p69 = scmp.ne.s32.totalorder %s64, %s66
    %p70 = scmp.eq.s32.totalorder %s9, 0
    %p71 = por %p69, %p70
    %p72 = scmp.ne.s32.totalorder %s64, %s66
    %p73 = scmp.eq.s32.totalorder %s14, 1
    %p74 = por %p72, %p73
    %p75 = scmp.ne.s32.totalorder %s66, %s67
    %p76 = scmp.eq.s32.totalorder %s14, 0
    %p77 = por %p75, %p76
    %p78 = scmp.ne.s32.totalorder %s66, %s67
    %p79 = scmp.eq.s32.totalorder %s15, 1
    %p80 = por %p78, %p79
    %p82 = scmp.ne.s32.totalorder %s67, %s81
    %p83 = scmp.eq.s32.totalorder %s15, 0
    %p84 = por %p82, %p83
    %s85 = ssub.s32 %s9, %s16
    %p86 = scmp.eq.s32.totalorder %s85, 0
    %s88 = sadd.s32 %s87, 1
    %s89 = scalar_select %p86, %s87, %s88
    %p92 = pneg %p86
    %p93 = scmp.eq.s32.totalorder %s9, 1
    %p94 = por %p92, %p93
    %p95 = scmp.ne.s32.totalorder %s87, %s90
    %p96 = scmp.eq.s32.totalorder %s9, 0
    %p97 = por %p95, %p96
    %p98 = scmp.ne.s32.totalorder %s87, %s90
    %p99 = scmp.eq.s32.totalorder %s14, 1
    %p100 = por %p98, %p99
    %p101 = scmp.ne.s32.totalorder %s90, %s91
    %p102 = scmp.eq.s32.totalorder %s14, 0
    %p103 = por %p101, %p102
    %p104 = scmp.ne.s32.totalorder %s90, %s91
    %p105 = scmp.eq.s32.totalorder %s15, 1
    %p106 = por %p104, %p105
    %p108 = scmp.ne.s32.totalorder %s91, %s107
    %p109 = scmp.eq.s32.totalorder %s15, 0
    %p110 = por %p108, %p109
    %p111 = scmp.le.s32.totalorder 1, %s9
    %p112 = scmp.lt.s32.totalorder %s9, 3
    %p113 = pnand %p111, %p112
    %p114 = pneg %p113
    // Predicated region
    $region9: #{inception_v2b_forward.10} parent=5 // pred_check
      _
    $region10: #{inception_v2b_forward.10} parent=5 // pred_check_branch
      %116 = sbr.rel (%p113) target = $region12
    $region11: #{inception_v2b_forward.10} parent=5 // pred_region
      %s117 = ssub.s32 %s9, 1
      // Predicated region
      $region13: #{inception_v2b_forward.10} parent=11 // pred_check
        %p118 = pneg %p56
      $region14: #{inception_v2b_forward.10} parent=11 // pred_check_branch
        %120 = sbr.rel (%p118) target = $region16
      $region15: #{inception_v2b_forward.10} parent=11 // pred_region
        _
      $region16: #{inception_v2b_forward.10} parent=11 // pred_fallthru
        _
      // Predicated region
      $region17: #{inception_v2b_forward.10} parent=11 // pred_check
        %p121 = pneg %p77
      $region18: #{inception_v2b_forward.10} parent=11 // pred_check_branch
        %123 = sbr.rel (%p121) target = $region20
      $region19: #{inception_v2b_forward.10} parent=11 // pred_region
        _
      $region20: #{inception_v2b_forward.10} parent=11 // pred_fallthru
        _
    $region12: #{inception_v2b_forward.10} parent=5 // pred_fallthru
      _
    %p124 = scmp.lt.s32.totalorder %s9, 2
    // Predicated region
    $region21: #{inception_v2b_forward.10} parent=5 // pred_check
      %p125 = pneg %p124
    $region22: #{inception_v2b_forward.10} parent=5 // pred_check_branch
      %127 = sbr.rel (%p125) target = $region24
    $region23: #{inception_v2b_forward.10} parent=5 // pred_region
      // Predicated region
      $region25: #{inception_v2b_forward.10} parent=23 // pred_check
        %p128 = pneg %p29
      $region26: #{inception_v2b_forward.10} parent=23 // pred_check_branch
        %130 = sbr.rel (%p128) target = $region28
      $region27: #{inception_v2b_forward.10} parent=23 // pred_region
        %s131 = smul.u32 32, %s9
        %p132 = scmp.lt.s32.totalorder %s131, 63
        %s133 = scalar_select %p132, %s131, 63
        %s134 = smul.addr %s133, 2
        %s135 = smul.addr %s134, 4
        %s136 = scalar_lea.vmem %s0, %s135
        %s137 = smul.u32 32, %s9
      $region28: #{inception_v2b_forward.10} parent=23 // pred_fallthru
        _
    $region24: #{inception_v2b_forward.10} parent=5 // pred_fallthru
      _
    %p138 = scmp.le.s32.totalorder 1, %s9
    %p139 = scmp.lt.s32.totalorder %s9, 3
    %p140 = pnand %p138, %p139
    %p141 = pneg %p140
    // Predicated region
    $region29: #{inception_v2b_forward.10} parent=5 // pred_check
      _
    $region30: #{inception_v2b_forward.10} parent=5 // pred_check_branch
      %143 = sbr.rel (%p140) target = $region32
    $region31: #{inception_v2b_forward.10} parent=5 // pred_region
      %s144 = ssub.s32 %s9, 1
      %s145 = smul.u32 32, %s14
      %p146 = scmp.lt.s32.totalorder %s145, 63
      %s147 = scalar_select %p146, %s145, 63
      %s148 = smul.addr %s147, 2
      %s149 = smul.addr %s148, 4
      %s150 = scalar_lea.vmem %s0, %s149
      %p151 = pneg %p35
      %p152 = pneg %p32
      %p153 = pneg %p56
      %p154 = pneg %p53
      %p155 = pneg %p77
      %p156 = pneg %p74
      %p157 = pneg %p103
      %p158 = pneg %p100
      %s159 = smul.u32 32, %s14
      %p160 = scmp.lt.s32.totalorder %s159, 63
      %s161 = scalar_select %p160, %s159, 63
      %s162 = smul.addr %s161, 2
      %s163 = smul.addr %s162, 4
      %s164 = scalar_lea.vmem %s3, %s163
      %s165 = smul.u32 32, %s14
      %p166 = scmp.lt.s32.totalorder %s165, 63
      %s167 = scalar_select %p166, %s165, 63
      %s168 = smul.addr %s167, 2
      %s169 = smul.addr %s168, 4
      %s170 = scalar_lea.vmem %s0, %s169
      %s171 = smul.u32 32, %s14
      %s172 = smul.u32 32, %s14
      %p173 = scmp.lt.s32.totalorder %s172, 63
      %s174 = scalar_select %p173, %s172, 63
      %s175 = smul.addr %s174, 2
      %s176 = smul.addr %s175, 4
      %s177 = scalar_lea.vmem %s3, %s176
      %s178 = smul.u32 32, %s14
      %v179 = vld [vmem:[%s170] sm:$0xff]
      %v180 = vld [vmem:[%s170 + $0x8] sm:$0xff]
      %v181 = vld [vmem:[%s170 + $0x10] sm:$0xff]
      %v182 = vld [vmem:[%s170 + $0x18] sm:$0xff]
      %v183 = vld [vmem:[%s170 + $0x20] sm:$0xff]
      %v184 = vld [vmem:[%s170 + $0x28] sm:$0xff]
      %v185 = vld [vmem:[%s170 + $0x30] sm:$0xff]
      %v186 = vld [vmem:[%s170 + $0x38] sm:$0xff]
      %v187 = vld [vmem:[%s170 + $0x40] sm:$0xff]
      %v188 = vld [vmem:[%s170 + $0x48] sm:$0xff]
      %v189 = vld [vmem:[%s170 + $0x50] sm:$0xff]
      %v190 = vld [vmem:[%s170 + $0x58] sm:$0xff]
      %v191 = vld [vmem:[%s170 + $0x60] sm:$0xff]
      %v192 = vld [vmem:[%s170 + $0x68] sm:$0xff]
      %v193 = vld [vmem:[%s170 + $0x70] sm:$0xff]
      %v194 = vld [vmem:[%s170 + $0x78] sm:$0xff]
      %v195 = vld [vmem:[%s170 + $0x80] sm:$0xff]
      %v196 = vld [vmem:[%s170 + $0x88] sm:$0xff]
      %v197 = vld [vmem:[%s170 + $0x90] sm:$0xff]
      %v198 = vld [vmem:[%s170 + $0x98] sm:$0xff]
      %v199 = vld [vmem:[%s170 + $0xa0] sm:$0xff]
      %v200 = vld [vmem:[%s170 + $0xa8] sm:$0xff]
      %v201 = vld [vmem:[%s170 + $0xb0] sm:$0xff]
      %v202 = vld [vmem:[%s170 + $0xb8] sm:$0xff]
      %v203 = vld [vmem:[%s170 + $0xc0] sm:$0xff]
      %v204 = vld [vmem:[%s170 + $0xc8] sm:$0xff]
      %v205 = vld [vmem:[%s170 + $0xd0] sm:$0xff]
      %v206 = vld [vmem:[%s170 + $0xd8] sm:$0xff]
      %v207 = vld [vmem:[%s170 + $0xe0] sm:$0xff]
      %v208 = vld [vmem:[%s170 + $0xe8] sm:$0xff]
      %v209 = vld [vmem:[%s170 + $0xf0] sm:$0xff]
      %v210 = vld [vmem:[%s170 + $0xf8] sm:$0xff]
      %v211 = vunpack.c.l.bf16 %v179
      %v212 = vunpack.c.h.bf16 %v179
      %v213 = vunpack.c.l.bf16 %v180
      %v214 = vunpack.c.h.bf16 %v180
      %v215 = vunpack.c.l.bf16 %v181
      %v216 = vunpack.c.h.bf16 %v181
      %v217 = vunpack.c.l.bf16 %v182
      %v218 = vunpack.c.h.bf16 %v182
      %v219 = vunpack.c.l.bf16 %v183
      %v220 = vunpack.c.h.bf16 %v183
      %v221 = vunpack.c.l.bf16 %v184
      %v222 = vunpack.c.h.bf16 %v184
      %v223 = vunpack.c.l.bf16 %v185
      %v224 = vunpack.c.h.bf16 %v185
      %v225 = vunpack.c.l.bf16 %v186
      %v226 = vunpack.c.h.bf16 %v186
      %v227 = vunpack.c.l.bf16 %v187
      %v228 = vunpack.c.h.bf16 %v187
      %v229 = vunpack.c.l.bf16 %v188
      %v230 = vunpack.c.h.bf16 %v188
      %v231 = vunpack.c.l.bf16 %v189
      %v232 = vunpack.c.h.bf16 %v189
      %v233 = vunpack.c.l.bf16 %v190
      %v234 = vunpack.c.h.bf16 %v190
      %v235 = vunpack.c.l.bf16 %v191
      %v236 = vunpack.c.h.bf16 %v191
      %v237 = vunpack.c.l.bf16 %v192
      %v238 = vunpack.c.h.bf16 %v192
      %v239 = vunpack.c.l.bf16 %v193
      %v240 = vunpack.c.h.bf16 %v193
      %v241 = vunpack.c.l.bf16 %v194
      %v242 = vunpack.c.h.bf16 %v194
      %v243 = vunpack.c.l.bf16 %v195
      %v244 = vunpack.c.h.bf16 %v195
      %v245 = vunpack.c.l.bf16 %v196
      %v246 = vunpack.c.h.bf16 %v196
      %v247 = vunpack.c.l.bf16 %v197
      %v248 = vunpack.c.h.bf16 %v197
      %v249 = vunpack.c.l.bf16 %v198
      %v250 = vunpack.c.h.bf16 %v198
      %v251 = vunpack.c.l.bf16 %v199
      %v252 = vunpack.c.h.bf16 %v199
      %v253 = vunpack.c.l.bf16 %v200
      %v254 = vunpack.c.h.bf16 %v200
      %v255 = vunpack.c.l.bf16 %v201
      %v256 = vunpack.c.h.bf16 %v201
      %v257 = vunpack.c.l.bf16 %v202
      %v258 = vunpack.c.h.bf16 %v202
      %v259 = vunpack.c.l.bf16 %v203
      %v260 = vunpack.c.h.bf16 %v203
      %v261 = vunpack.c.l.bf16 %v204
      %v262 = vunpack.c.h.bf16 %v204
      %v263 = vunpack.c.l.bf16 %v205
      %v264 = vunpack.c.h.bf16 %v205
      %v265 = vunpack.c.l.bf16 %v206
      %v266 = vunpack.c.h.bf16 %v206
      %v267 = vunpack.c.l.bf16 %v207
      %v268 = vunpack.c.h.bf16 %v207
      %v269 = vunpack.c.l.bf16 %v208
      %v270 = vunpack.c.h.bf16 %v208
      %v271 = vunpack.c.l.bf16 %v209
      %v272 = vunpack.c.h.bf16 %v209
      %v273 = vunpack.c.l.bf16 %v210
      %v274 = vunpack.c.h.bf16 %v210
      %v275 = vld [vmem:[%s1] sm:$0x3]
      %v277 = vlaneseq
      %v278 = vshrl.u32 %v277, 7
      %v279 = vsub.s32 0, %v278
      %v280 = vrot.slane %v275, %v279
      %v281 = vlaneseq
      %v282 = vshrl.u32 %v281, 7
      %v283 = vsub.s32 1, %v282
      %v284 = vrot.slane %v275, %v283
      %v287 = vmul.f32 %v211, %v280
      %v288 = vmul.f32 %v212, %v284
      %v289 = vmul.f32 %v213, %v280
      %v290 = vmul.f32 %v214, %v284
      %v291 = vmul.f32 %v215, %v280
      %v292 = vmul.f32 %v216, %v284
      %v293 = vmul.f32 %v217, %v280
      %v294 = vmul.f32 %v218, %v284
      %v295 = vmul.f32 %v219, %v280
      %v296 = vmul.f32 %v220, %v284
      %v297 = vmul.f32 %v221, %v280
      %v298 = vmul.f32 %v222, %v284
      %v299 = vmul.f32 %v223, %v280
      %v300 = vmul.f32 %v224, %v284
      %v301 = vmul.f32 %v225, %v280
      %v302 = vmul.f32 %v226, %v284
      %v303 = vmul.f32 %v227, %v280
      %v304 = vmul.f32 %v228, %v284
      %v305 = vmul.f32 %v229, %v280
      %v306 = vmul.f32 %v230, %v284
      %v307 = vmul.f32 %v231, %v280
      %v308 = vmul.f32 %v232, %v284
      %v309 = vmul.f32 %v233, %v280
      %v310 = vmul.f32 %v234, %v284
      %v311 = vmul.f32 %v235, %v280
      %v312 = vmul.f32 %v236, %v284
      %v313 = vmul.f32 %v237, %v280
      %v314 = vmul.f32 %v238, %v284
      %v315 = vmul.f32 %v239, %v280
      %v316 = vmul.f32 %v240, %v284
      %v317 = vmul.f32 %v241, %v280
      %v318 = vmul.f32 %v242, %v284
      %v319 = vmul.f32 %v243, %v280
      %v320 = vmul.f32 %v244, %v284
      %v321 = vmul.f32 %v245, %v280
      %v322 = vmul.f32 %v246, %v284
      %v323 = vmul.f32 %v247, %v280
      %v324 = vmul.f32 %v248, %v284
      %v325 = vmul.f32 %v249, %v280
      %v326 = vmul.f32 %v250, %v284
      %v327 = vmul.f32 %v251, %v280
      %v328 = vmul.f32 %v252, %v284
      %v329 = vmul.f32 %v253, %v280
      %v330 = vmul.f32 %v254, %v284
      %v331 = vmul.f32 %v255, %v280
      %v332 = vmul.f32 %v256, %v284
      %v333 = vmul.f32 %v257, %v280
      %v334 = vmul.f32 %v258, %v284
      %v335 = vmul.f32 %v259, %v280
      %v336 = vmul.f32 %v260, %v284
      %v337 = vmul.f32 %v261, %v280
      %v338 = vmul.f32 %v262, %v284
      %v339 = vmul.f32 %v263, %v280
      %v340 = vmul.f32 %v264, %v284
      %v341 = vmul.f32 %v265, %v280
      %v342 = vmul.f32 %v266, %v284
      %v343 = vmul.f32 %v267, %v280
      %v344 = vmul.f32 %v268, %v284
      %v345 = vmul.f32 %v269, %v280
      %v346 = vmul.f32 %v270, %v284
      %v347 = vmul.f32 %v271, %v280
      %v348 = vmul.f32 %v272, %v284
      %v349 = vmul.f32 %v273, %v280
      %v350 = vmul.f32 %v274, %v284
      %v351 = vld [vmem:[%s2] sm:$0x3]
      %v353 = vlaneseq
      %v354 = vshrl.u32 %v353, 7
      %v355 = vsub.s32 0, %v354
      %v356 = vrot.slane %v351, %v355
      %v357 = vlaneseq
      %v358 = vshrl.u32 %v357, 7
      %v359 = vsub.s32 1, %v358
      %v360 = vrot.slane %v351, %v359
      %v363 = vadd.f32 %v287, %v356
      %v364 = vadd.f32 %v288, %v360
      %v365 = vadd.f32 %v289, %v356
      %v366 = vadd.f32 %v290, %v360
      %v367 = vadd.f32 %v291, %v356
      %v368 = vadd.f32 %v292, %v360
      %v369 = vadd.f32 %v293, %v356
      %v370 = vadd.f32 %v294, %v360
      %v371 = vadd.f32 %v295, %v356
      %v372 = vadd.f32 %v296, %v360
      %v373 = vadd.f32 %v297, %v356
      %v374 = vadd.f32 %v298, %v360
      %v375 = vadd.f32 %v299, %v356
      %v376 = vadd.f32 %v300, %v360
      %v377 = vadd.f32 %v301, %v356
      %v378 = vadd.f32 %v302, %v360
      %v379 = vadd.f32 %v303, %v356
      %v380 = vadd.f32 %v304, %v360
      %v381 = vadd.f32 %v305, %v356
      %v382 = vadd.f32 %v306, %v360
      %v383 = vadd.f32 %v307, %v356
      %v384 = vadd.f32 %v308, %v360
      %v385 = vadd.f32 %v309, %v356
      %v386 = vadd.f32 %v310, %v360
      %v387 = vadd.f32 %v311, %v356
      %v388 = vadd.f32 %v312, %v360
      %v389 = vadd.f32 %v313, %v356
      %v390 = vadd.f32 %v314, %v360
      %v391 = vadd.f32 %v315, %v356
      %v392 = vadd.f32 %v316, %v360
      %v393 = vadd.f32 %v317, %v356
      %v394 = vadd.f32 %v318, %v360
      %v395 = vadd.f32 %v319, %v356
      %v396 = vadd.f32 %v320, %v360
      %v397 = vadd.f32 %v321, %v356
      %v398 = vadd.f32 %v322, %v360
      %v399 = vadd.f32 %v323, %v356
      %v400 = vadd.f32 %v324, %v360
      %v401 = vadd.f32 %v325, %v356
      %v402 = vadd.f32 %v326, %v360
      %v403 = vadd.f32 %v327, %v356
      %v404 = vadd.f32 %v328, %v360
      %v405 = vadd.f32 %v329, %v356
      %v406 = vadd.f32 %v330, %v360
      %v407 = vadd.f32 %v331, %v356
      %v408 = vadd.f32 %v332, %v360
      %v409 = vadd.f32 %v333, %v356
      %v410 = vadd.f32 %v334, %v360
      %v411 = vadd.f32 %v335, %v356
      %v412 = vadd.f32 %v336, %v360
      %v413 = vadd.f32 %v337, %v356
      %v414 = vadd.f32 %v338, %v360
      %v415 = vadd.f32 %v339, %v356
      %v416 = vadd.f32 %v340, %v360
      %v417 = vadd.f32 %v341, %v356
      %v418 = vadd.f32 %v342, %v360
      %v419 = vadd.f32 %v343, %v356
      %v420 = vadd.f32 %v344, %v360
      %v421 = vadd.f32 %v345, %v356
      %v422 = vadd.f32 %v346, %v360
      %v423 = vadd.f32 %v347, %v356
      %v424 = vadd.f32 %v348, %v360
      %v425 = vadd.f32 %v349, %v356
      %v426 = vadd.f32 %v350, %v360
      %v427 = vmax.f32 %v363, 0.0
      %v428 = vmax.f32 %v364, 0.0
      %v429 = vmax.f32 %v365, 0.0
      %v430 = vmax.f32 %v366, 0.0
      %v431 = vmax.f32 %v367, 0.0
      %v432 = vmax.f32 %v368, 0.0
      %v433 = vmax.f32 %v369, 0.0
      %v434 = vmax.f32 %v370, 0.0
      %v435 = vmax.f32 %v371, 0.0
      %v436 = vmax.f32 %v372, 0.0
      %v437 = vmax.f32 %v373, 0.0
      %v438 = vmax.f32 %v374, 0.0
      %v439 = vmax.f32 %v375, 0.0
      %v440 = vmax.f32 %v376, 0.0
      %v441 = vmax.f32 %v377, 0.0
      %v442 = vmax.f32 %v378, 0.0
      %v443 = vmax.f32 %v379, 0.0
      %v444 = vmax.f32 %v380, 0.0
      %v445 = vmax.f32 %v381, 0.0
      %v446 = vmax.f32 %v382, 0.0
      %v447 = vmax.f32 %v383, 0.0
      %v448 = vmax.f32 %v384, 0.0
      %v449 = vmax.f32 %v385, 0.0
      %v450 = vmax.f32 %v386, 0.0
      %v451 = vmax.f32 %v387, 0.0
      %v452 = vmax.f32 %v388, 0.0
      %v453 = vmax.f32 %v389, 0.0
      %v454 = vmax.f32 %v390, 0.0
      %v455 = vmax.f32 %v391, 0.0
      %v456 = vmax.f32 %v392, 0.0
      %v457 = vmax.f32 %v393, 0.0
      %v458 = vmax.f32 %v394, 0.0
      %v459 = vmax.f32 %v395, 0.0
      %v460 = vmax.f32 %v396, 0.0
      %v461 = vmax.f32 %v397, 0.0
      %v462 = vmax.f32 %v398, 0.0
      %v463 = vmax.f32 %v399, 0.0
      %v464 = vmax.f32 %v400, 0.0
      %v465 = vmax.f32 %v401, 0.0
      %v466 = vmax.f32 %v402, 0.0
      %v467 = vmax.f32 %v403, 0.0
      %v468 = vmax.f32 %v404, 0.0
      %v469 = vmax.f32 %v405, 0.0
      %v470 = vmax.f32 %v406, 0.0
      %v471 = vmax.f32 %v407, 0.0
      %v472 = vmax.f32 %v408, 0.0
      %v473 = vmax.f32 %v409, 0.0
      %v474 = vmax.f32 %v410, 0.0
      %v475 = vmax.f32 %v411, 0.0
      %v476 = vmax.f32 %v412, 0.0
      %v477 = vmax.f32 %v413, 0.0
      %v478 = vmax.f32 %v414, 0.0
      %v479 = vmax.f32 %v415, 0.0
      %v480 = vmax.f32 %v416, 0.0
      %v481 = vmax.f32 %v417, 0.0
      %v482 = vmax.f32 %v418, 0.0
      %v483 = vmax.f32 %v419, 0.0
      %v484 = vmax.f32 %v420, 0.0
      %v485 = vmax.f32 %v421, 0.0
      %v486 = vmax.f32 %v422, 0.0
      %v487 = vmax.f32 %v423, 0.0
      %v488 = vmax.f32 %v424, 0.0
      %v489 = vmax.f32 %v425, 0.0
      %v490 = vmax.f32 %v426, 0.0
      %v491 = vpack.c.bf16 %v429, %v427
      %v492 = vpack.c.bf16 %v430, %v428
      %v493 = vpack.c.bf16 %v433, %v431
      %v494 = vpack.c.bf16 %v434, %v432
      %v495 = vpack.c.bf16 %v437, %v435
      %v496 = vpack.c.bf16 %v438, %v436
      %v497 = vpack.c.bf16 %v441, %v439
      %v498 = vpack.c.bf16 %v442, %v440
      %v499 = vpack.c.bf16 %v445, %v443
      %v500 = vpack.c.bf16 %v446, %v444
      %v501 = vpack.c.bf16 %v449, %v447
      %v502 = vpack.c.bf16 %v450, %v448
      %v503 = vpack.c.bf16 %v453, %v451
      %v504 = vpack.c.bf16 %v454, %v452
      %v505 = vpack.c.bf16 %v457, %v455
      %v506 = vpack.c.bf16 %v458, %v456
      %v507 = vpack.c.bf16 %v461, %v459
      %v508 = vpack.c.bf16 %v462, %v460
      %v509 = vpack.c.bf16 %v465, %v463
      %v510 = vpack.c.bf16 %v466, %v464
      %v511 = vpack.c.bf16 %v469, %v467
      %v512 = vpack.c.bf16 %v470, %v468
      %v513 = vpack.c.bf16 %v473, %v471
      %v514 = vpack.c.bf16 %v474, %v472
      %v515 = vpack.c.bf16 %v477, %v475
      %v516 = vpack.c.bf16 %v478, %v476
      %v517 = vpack.c.bf16 %v481, %v479
      %v518 = vpack.c.bf16 %v482, %v480
      %v519 = vpack.c.bf16 %v485, %v483
      %v520 = vpack.c.bf16 %v486, %v484
      %v521 = vpack.c.bf16 %v489, %v487
      %v522 = vpack.c.bf16 %v490, %v488
      %v555 = vunpack.c.l.b16 %v491
      %v556 = vunpack.c.l.b16 %v492
      %v557 = vunpack.c.h.b16 %v491
      %v558 = vunpack.c.h.b16 %v492
      %v559 = vunpack.c.l.b16 %v493
      %v560 = vunpack.c.l.b16 %v494
      %v561 = vunpack.c.h.b16 %v493
      %v562 = vunpack.c.h.b16 %v494
      %v563 = vunpack.c.l.b16 %v495
      %v564 = vunpack.c.l.b16 %v496
      %v565 = vunpack.c.h.b16 %v495
      %v566 = vunpack.c.h.b16 %v496
      %v567 = vunpack.c.l.b16 %v497
      %v568 = vunpack.c.l.b16 %v498
      %v569 = vunpack.c.h.b16 %v497
      %v570 = vunpack.c.h.b16 %v498
      %v571 = vunpack.c.l.b16 %v499
      %v572 = vunpack.c.l.b16 %v500
      %v573 = vunpack.c.h.b16 %v499
      %v574 = vunpack.c.h.b16 %v500
      %v575 = vunpack.c.l.b16 %v501
      %v576 = vunpack.c.l.b16 %v502
      %v577 = vunpack.c.h.b16 %v501
      %v578 = vunpack.c.h.b16 %v502
      %v579 = vunpack.c.l.b16 %v503
      %v580 = vunpack.c.l.b16 %v504
      %v581 = vunpack.c.h.b16 %v503
      %v582 = vunpack.c.h.b16 %v504
      %v583 = vunpack.c.l.b16 %v505
      %v584 = vunpack.c.l.b16 %v506
      %v585 = vunpack.c.h.b16 %v505
      %v586 = vunpack.c.h.b16 %v506
      %v587 = vunpack.c.l.b16 %v507
      %v588 = vunpack.c.l.b16 %v508
      %v589 = vunpack.c.h.b16 %v507
      %v590 = vunpack.c.h.b16 %v508
      %v591 = vunpack.c.l.b16 %v509
      %v592 = vunpack.c.l.b16 %v510
      %v593 = vunpack.c.h.b16 %v509
      %v594 = vunpack.c.h.b16 %v510
      %v595 = vunpack.c.l.b16 %v511
      %v596 = vunpack.c.l.b16 %v512
      %v597 = vunpack.c.h.b16 %v511
      %v598 = vunpack.c.h.b16 %v512
      %v599 = vunpack.c.l.b16 %v513
      %v600 = vunpack.c.l.b16 %v514
      %v601 = vunpack.c.h.b16 %v513
      %v602 = vunpack.c.h.b16 %v514
      %v603 = vunpack.c.l.b16 %v515
      %v604 = vunpack.c.l.b16 %v516
      %v605 = vunpack.c.h.b16 %v515
      %v606 = vunpack.c.h.b16 %v516
      %v607 = vunpack.c.l.b16 %v517
      %v608 = vunpack.c.l.b16 %v518
      %v609 = vunpack.c.h.b16 %v517
      %v610 = vunpack.c.h.b16 %v518
      %v611 = vunpack.c.l.b16 %v519
      %v612 = vunpack.c.l.b16 %v520
      %v613 = vunpack.c.h.b16 %v519
      %v614 = vunpack.c.h.b16 %v520
      %v615 = vunpack.c.l.b16 %v521
      %v616 = vunpack.c.l.b16 %v522
      %v617 = vunpack.c.h.b16 %v521
      %v618 = vunpack.c.h.b16 %v522
      %v619 = vpack.c.b16 %v556, %v555
      %v620 = vpack.c.b16 %v558, %v557
      %v621 = vpack.c.b16 %v560, %v559
      %v622 = vpack.c.b16 %v562, %v561
      %v623 = vpack.c.b16 %v564, %v563
      %v624 = vpack.c.b16 %v566, %v565
      %v625 = vpack.c.b16 %v568, %v567
      %v626 = vpack.c.b16 %v570, %v569
      %v627 = vpack.c.b16 %v572, %v571
      %v628 = vpack.c.b16 %v574, %v573
      %v629 = vpack.c.b16 %v576, %v575
      %v630 = vpack.c.b16 %v578, %v577
      %v631 = vpack.c.b16 %v580, %v579
      %v632 = vpack.c.b16 %v582, %v581
      %v633 = vpack.c.b16 %v584, %v583
      %v634 = vpack.c.b16 %v586, %v585
      %v635 = vpack.c.b16 %v588, %v587
      %v636 = vpack.c.b16 %v590, %v589
      %v637 = vpack.c.b16 %v592, %v591
      %v638 = vpack.c.b16 %v594, %v593
      %v639 = vpack.c.b16 %v596, %v595
      %v640 = vpack.c.b16 %v598, %v597
      %v641 = vpack.c.b16 %v600, %v599
      %v642 = vpack.c.b16 %v602, %v601
      %v643 = vpack.c.b16 %v604, %v603
      %v644 = vpack.c.b16 %v606, %v605
      %v645 = vpack.c.b16 %v608, %v607
      %v646 = vpack.c.b16 %v610, %v609
      %v647 = vpack.c.b16 %v612, %v611
      %v648 = vpack.c.b16 %v614, %v613
      %v649 = vpack.c.b16 %v616, %v615
      %v650 = vpack.c.b16 %v618, %v617
      %683 = vst [vmem:[%s177] sm:$0xff] %v619
      %684 = vst [vmem:[%s177 + $0x8] sm:$0xff] %v620
      %685 = vst [vmem:[%s177 + $0x10] sm:$0xff] %v621
      %686 = vst [vmem:[%s177 + $0x18] sm:$0xff] %v622
      %687 = vst [vmem:[%s177 + $0x20] sm:$0xff] %v623
      %688 = vst [vmem:[%s177 + $0x28] sm:$0xff] %v624
      %689 = vst [vmem:[%s177 + $0x30] sm:$0xff] %v625
      %690 = vst [vmem:[%s177 + $0x38] sm:$0xff] %v626
      %691 = vst [vmem:[%s177 + $0x40] sm:$0xff] %v627
      %692 = vst [vmem:[%s177 + $0x48] sm:$0xff] %v628
      %693 = vst [vmem:[%s177 + $0x50] sm:$0xff] %v629
      %694 = vst [vmem:[%s177 + $0x58] sm:$0xff] %v630
      %695 = vst [vmem:[%s177 + $0x60] sm:$0xff] %v631
      %696 = vst [vmem:[%s177 + $0x68] sm:$0xff] %v632
      %697 = vst [vmem:[%s177 + $0x70] sm:$0xff] %v633
      %698 = vst [vmem:[%s177 + $0x78] sm:$0xff] %v634
      %699 = vst [vmem:[%s177 + $0x80] sm:$0xff] %v635
      %700 = vst [vmem:[%s177 + $0x88] sm:$0xff] %v636
      %701 = vst [vmem:[%s177 + $0x90] sm:$0xff] %v637
      %702 = vst [vmem:[%s177 + $0x98] sm:$0xff] %v638
      %703 = vst [vmem:[%s177 + $0xa0] sm:$0xff] %v639
      %704 = vst [vmem:[%s177 + $0xa8] sm:$0xff] %v640
      %705 = vst [vmem:[%s177 + $0xb0] sm:$0xff] %v641
      %706 = vst [vmem:[%s177 + $0xb8] sm:$0xff] %v642
      %707 = vst [vmem:[%s177 + $0xc0] sm:$0xff] %v643
      %708 = vst [vmem:[%s177 + $0xc8] sm:$0xff] %v644
      %709 = vst [vmem:[%s177 + $0xd0] sm:$0xff] %v645
      %710 = vst [vmem:[%s177 + $0xd8] sm:$0xff] %v646
      %711 = vst [vmem:[%s177 + $0xe0] sm:$0xff] %v647
      %712 = vst [vmem:[%s177 + $0xe8] sm:$0xff] %v648
      %713 = vst [vmem:[%s177 + $0xf0] sm:$0xff] %v649
      %714 = vst [vmem:[%s177 + $0xf8] sm:$0xff] %v650
      %s715 = smul.u32 32, %s14
      %p716 = scmp.lt.s32.totalorder %s715, 63
      %s717 = scalar_select %p716, %s715, 63
      %s718 = smul.addr %s717, 2
      %s719 = smul.addr %s718, 4
      %s720 = scalar_lea.vmem %s3, %s719
      // Predicated region
      $region33: #{inception_v2b_forward.10} parent=31 // pred_check
        %p721 = pneg %p100
      $region34: #{inception_v2b_forward.10} parent=31 // pred_check_branch
        %723 = sbr.rel (%p721) target = $region36
      $region35: #{inception_v2b_forward.10} parent=31 // pred_region
        %s724 = smul.u32 32, %s14
      $region36: #{inception_v2b_forward.10} parent=31 // pred_fallthru
        _
    $region32: #{inception_v2b_forward.10} parent=5 // pred_fallthru
      _
    %p725 = scmp.le.s32.totalorder 2, %s9
    // Predicated region
    $region37: #{inception_v2b_forward.10} parent=5 // pred_check
      %p726 = pneg %p725
    $region38: #{inception_v2b_forward.10} parent=5 // pred_check_branch
      %728 = sbr.rel (%p726) target = $region40
    $region39: #{inception_v2b_forward.10} parent=5 // pred_region
      %s729 = ssub.s32 %s9, 2
      // Predicated region
      $region41: #{inception_v2b_forward.10} parent=39 // pred_check
        %p730 = pneg %p106
      $region42: #{inception_v2b_forward.10} parent=39 // pred_check_branch
        %732 = sbr.rel (%p730) target = $region44
      $region43: #{inception_v2b_forward.10} parent=39 // pred_region
        %s733 = smul.u32 32, %s15
        %p734 = scmp.lt.s32.totalorder %s733, 63
        %s735 = scalar_select %p734, %s733, 63
        %s736 = smul.addr %s735, 2
        %s737 = smul.addr %s736, 4
        %s738 = scalar_lea.vmem %s3, %s737
      $region44: #{inception_v2b_forward.10} parent=39 // pred_fallthru
        _
    $region40: #{inception_v2b_forward.10} parent=5 // pred_fallthru
      _
  $region6: #{inception_v2b_forward.10} parent=0 // loop_footer
    %s13 = sadd.s32 1, %s9
  $region7: #{inception_v2b_forward.10} parent=0 // loop_footer_branch
    %8 = sbr.rel target = $region3
  $region8: #{inception_v2b_forward.10} parent=0 // loop_exit
    _

// kernel: inception_v2b_forward.14
$region0: #{inception_v2b_forward.14}
  #allocation0 [shape = 'u32[]', space=smem, size = 0x4, offset = 0x4, fixed_abs, tag = 'smem constant byte address 0x4 - core index']
  #allocation1 [shape = 'u32[144,128]{1,0:T(1,128)}', space=vmem, size = 0x12000, scoped, tag = 'internal scratch']
  %s0 = inlined_call_operand.vmem [shape: bf16[576,128], index: 0, kind: input, shape index: {}]
  %s1 = inlined_call_operand.vmem [shape: f32[1,128], index: 1, kind: input, shape index: {}]
  %s2 = inlined_call_operand.vmem [shape: f32[1,128], index: 2, kind: input, shape index: {}]
  %s3 = inlined_call_operand.vmem [shape: bf16[576,128], index: 3, kind: output, shape index: {}]
  %s4 = sld [smem:[#allocation0]]
  $region45: #{inception_v2b_forward.14} parent=0
    _
  %s6 = ssub.s32 1, %s4
  %s7 = scalar_select 0, %s6, %s4
  loop: start=0, step=1, limit=5
  $region2: #{inception_v2b_forward.14} parent=0 // loop_pre_header
    _
  $region3: #{inception_v2b_forward.14} parent=0 // loop_header
    %s9 = sphi 0, %s13
    %p10 = scmp.ge.s32.totalorder %s9, 5
    %s19 = sphi 0, %s21
    %s22 = sphi 0, %s19
    %s23 = sphi 0, %s22
    %s39 = sphi 0, %s23
    %s43 = sphi 0, %s43
    %s45 = sphi 0, %s43
    %s46 = sphi 0, %s45
    %s60 = sphi 0, %s46
    %s64 = sphi 0, %s64
    %s66 = sphi 0, %s64
    %s67 = sphi 0, %s66
    %s81 = sphi 0, %s67
    %s87 = sphi 0, %s89
    %s90 = sphi 0, %s87
    %s91 = sphi 0, %s90
    %s107 = sphi 0, %s91
  $region4: #{inception_v2b_forward.14} parent=0 // loop_header_branch
    %12 = sbr.rel (%p10) target = $region8
  $region5: #{inception_v2b_forward.14} parent=0 // loop_body
    %s14 = ssub.s32 %s9, 1
    %s15 = ssub.s32 %s9, 2
    %s16 = sadd.s32 %s9, 1
    %s17 = ssub.s32 %s9, %s16
    %p18 = scmp.eq.s32.totalorder %s17, 0
    %s20 = sadd.s32 %s19, 1
    %s21 = scalar_select %p18, %s19, %s20
    %p24 = pneg %p18
    %p25 = scmp.eq.s32.totalorder %s9, 2
    %p26 = por %p24, %p25
    %p27 = scmp.ne.s32.totalorder %s19, %s22
    %p28 = scmp.eq.s32.totalorder %s9, 0
    %p29 = por %p27, %p28
    %p30 = scmp.ne.s32.totalorder %s19, %s22
    %p31 = scmp.eq.s32.totalorder %s14, 2
    %p32 = por %p30, %p31
    %p33 = scmp.ne.s32.totalorder %s22, %s23
    %p34 = scmp.eq.s32.totalorder %s14, 0
    %p35 = por %p33, %p34
    %p36 = scmp.ne.s32.totalorder %s22, %s23
    %p37 = scmp.eq.s32.totalorder %s15, 2
    %p38 = por %p36, %p37
    %p40 = scmp.ne.s32.totalorder %s23, %s39
    %p41 = scmp.eq.s32.totalorder %s15, 0
    %p42 = por %p40, %p41
    %s44 = sadd.s32 %s43, 1
    %p47 = scmp.eq.s32.totalorder %s9, 2
    %p48 = scmp.ne.s32.totalorder %s43, %s45
    %p49 = scmp.eq.s32.totalorder %s9, 0
    %p50 = por %p48, %p49
    %p51 = scmp.ne.s32.totalorder %s43, %s45
    %p52 = scmp.eq.s32.totalorder %s14, 2
    %p53 = por %p51, %p52
    %p54 = scmp.ne.s32.totalorder %s45, %s46
    %p55 = scmp.eq.s32.totalorder %s14, 0
    %p56 = por %p54, %p55
    %p57 = scmp.ne.s32.totalorder %s45, %s46
    %p58 = scmp.eq.s32.totalorder %s15, 2
    %p59 = por %p57, %p58
    %p61 = scmp.ne.s32.totalorder %s46, %s60
    %p62 = scmp.eq.s32.totalorder %s15, 0
    %p63 = por %p61, %p62
    %s65 = sadd.s32 %s64, 1
    %p68 = scmp.eq.s32.totalorder %s9, 2
    %p69 = scmp.ne.s32.totalorder %s64, %s66
    %p70 = scmp.eq.s32.totalorder %s9, 0
    %p71 = por %p69, %p70
    %p72 = scmp.ne.s32.totalorder %s64, %s66
    %p73 = scmp.eq.s32.totalorder %s14, 2
    %p74 = por %p72, %p73
    %p75 = scmp.ne.s32.totalorder %s66, %s67
    %p76 = scmp.eq.s32.totalorder %s14, 0
    %p77 = por %p75, %p76
    %p78 = scmp.ne.s32.totalorder %s66, %s67
    %p79 = scmp.eq.s32.totalorder %s15, 2
    %p80 = por %p78, %p79
    %p82 = scmp.ne.s32.totalorder %s67, %s81
    %p83 = scmp.eq.s32.totalorder %s15, 0
    %p84 = por %p82, %p83
    %s85 = ssub.s32 %s9, %s16
    %p86 = scmp.eq.s32.totalorder %s85, 0
    %s88 = sadd.s32 %s87, 1
    %s89 = scalar_select %p86, %s87, %s88
    %p92 = pneg %p86
    %p93 = scmp.eq.s32.totalorder %s9, 2
    %p94 = por %p92, %p93
    %p95 = scmp.ne.s32.totalorder %s87, %s90
    %p96 = scmp.eq.s32.totalorder %s9, 0
    %p97 = por %p95, %p96
    %p98 = scmp.ne.s32.totalorder %s87, %s90
    %p99 = scmp.eq.s32.totalorder %s14, 2
    %p100 = por %p98, %p99
    %p101 = scmp.ne.s32.totalorder %s90, %s91
    %p102 = scmp.eq.s32.totalorder %s14, 0
    %p103 = por %p101, %p102
    %p104 = scmp.ne.s32.totalorder %s90, %s91
    %p105 = scmp.eq.s32.totalorder %s15, 2
    %p106 = por %p104, %p105
    %p108 = scmp.ne.s32.totalorder %s91, %s107
    %p109 = scmp.eq.s32.totalorder %s15, 0
    %p110 = por %p108, %p109
    %p111 = scmp.le.s32.totalorder 1, %s9
    %p112 = scmp.lt.s32.totalorder %s9, 4
    %p113 = pnand %p111, %p112
    %p114 = pneg %p113
    // Predicated region
    $region9: #{inception_v2b_forward.14} parent=5 // pred_check
      _
    $region10: #{inception_v2b_forward.14} parent=5 // pred_check_branch
      %116 = sbr.rel (%p113) target = $region12
    $region11: #{inception_v2b_forward.14} parent=5 // pred_region
      %s117 = ssub.s32 %s9, 1
      // Predicated region
      $region13: #{inception_v2b_forward.14} parent=11 // pred_check
        %p118 = pneg %p56
      $region14: #{inception_v2b_forward.14} parent=11 // pred_check_branch
        %120 = sbr.rel (%p118) target = $region16
      $region15: #{inception_v2b_forward.14} parent=11 // pred_region
        _
      $region16: #{inception_v2b_forward.14} parent=11 // pred_fallthru
        _
      // Predicated region
      $region17: #{inception_v2b_forward.14} parent=11 // pred_check
        %p121 = pneg %p77
      $region18: #{inception_v2b_forward.14} parent=11 // pred_check_branch
        %123 = sbr.rel (%p121) target = $region20
      $region19: #{inception_v2b_forward.14} parent=11 // pred_region
        _
      $region20: #{inception_v2b_forward.14} parent=11 // pred_fallthru
        _
    $region12: #{inception_v2b_forward.14} parent=5 // pred_fallthru
      _
    %p124 = scmp.lt.s32.totalorder %s9, 3
    // Predicated region
    $region21: #{inception_v2b_forward.14} parent=5 // pred_check
      %p125 = pneg %p124
    $region22: #{inception_v2b_forward.14} parent=5 // pred_check_branch
      %127 = sbr.rel (%p125) target = $region24
    $region23: #{inception_v2b_forward.14} parent=5 // pred_region
      // Predicated region
      $region25: #{inception_v2b_forward.14} parent=23 // pred_check
        %p128 = pneg %p29
      $region26: #{inception_v2b_forward.14} parent=23 // pred_check_branch
        %130 = sbr.rel (%p128) target = $region28
      $region27: #{inception_v2b_forward.14} parent=23 // pred_region
        %s131 = smul.u32 24, %s9
        %p132 = scmp.lt.s32.totalorder %s131, 71
        %s133 = scalar_select %p132, %s131, 71
        %s134 = smul.addr %s133, 4
        %s135 = scalar_lea.vmem %s0, %s134
        %s136 = smul.u32 24, %s9
      $region28: #{inception_v2b_forward.14} parent=23 // pred_fallthru
        _
    $region24: #{inception_v2b_forward.14} parent=5 // pred_fallthru
      _
    %p137 = scmp.le.s32.totalorder 1, %s9
    %p138 = scmp.lt.s32.totalorder %s9, 4
    %p139 = pnand %p137, %p138
    %p140 = pneg %p139
    // Predicated region
    $region29: #{inception_v2b_forward.14} parent=5 // pred_check
      _
    $region30: #{inception_v2b_forward.14} parent=5 // pred_check_branch
      %142 = sbr.rel (%p139) target = $region32
    $region31: #{inception_v2b_forward.14} parent=5 // pred_region
      %s143 = ssub.s32 %s9, 1
      %s144 = smul.u32 24, %s14
      %p145 = scmp.lt.s32.totalorder %s144, 71
      %s146 = scalar_select %p145, %s144, 71
      %s147 = smul.addr %s146, 4
      %s148 = scalar_lea.vmem %s0, %s147
      %p149 = pneg %p35
      %p150 = pneg %p32
      %p151 = pneg %p56
      %p152 = pneg %p53
      %p153 = pneg %p77
      %p154 = pneg %p74
      %p155 = pneg %p103
      %p156 = pneg %p100
      %s157 = smul.u32 24, %s14
      %p158 = scmp.lt.s32.totalorder %s157, 71
      %s159 = scalar_select %p158, %s157, 71
      %s160 = smul.addr %s159, 4
      %s161 = scalar_lea.vmem %s3, %s160
      %s162 = smul.u32 24, %s14
      %p163 = scmp.lt.s32.totalorder %s162, 71
      %s164 = scalar_select %p163, %s162, 71
      %s165 = smul.addr %s164, 4
      %s166 = scalar_lea.vmem %s0, %s165
      %s167 = smul.u32 24, %s14
      %s168 = smul.u32 24, %s14
      %p169 = scmp.lt.s32.totalorder %s168, 71
      %s170 = scalar_select %p169, %s168, 71
      %s171 = smul.addr %s170, 4
      %s172 = scalar_lea.vmem %s3, %s171
      %s173 = smul.u32 24, %s14
      %v174 = vld [vmem:[%s166] sm:$0xf]
      %v175 = vld [vmem:[%s166 + $0x4] sm:$0xf]
      %v176 = vld [vmem:[%s166 + $0x8] sm:$0xf]
      %v177 = vld [vmem:[%s166 + $0xc] sm:$0xf]
      %v178 = vld [vmem:[%s166 + $0x10] sm:$0xf]
      %v179 = vld [vmem:[%s166 + $0x14] sm:$0xf]
      %v180 = vld [vmem:[%s166 + $0x18] sm:$0xf]
      %v181 = vld [vmem:[%s166 + $0x1c] sm:$0xf]
      %v182 = vld [vmem:[%s166 + $0x20] sm:$0xf]
      %v183 = vld [vmem:[%s166 + $0x24] sm:$0xf]
      %v184 = vld [vmem:[%s166 + $0x28] sm:$0xf]
      %v185 = vld [vmem:[%s166 + $0x2c] sm:$0xf]
      %v186 = vld [vmem:[%s166 + $0x30] sm:$0xf]
      %v187 = vld [vmem:[%s166 + $0x34] sm:$0xf]
      %v188 = vld [vmem:[%s166 + $0x38] sm:$0xf]
      %v189 = vld [vmem:[%s166 + $0x3c] sm:$0xf]
      %v190 = vld [vmem:[%s166 + $0x40] sm:$0xf]
      %v191 = vld [vmem:[%s166 + $0x44] sm:$0xf]
      %v192 = vld [vmem:[%s166 + $0x48] sm:$0xf]
      %v193 = vld [vmem:[%s166 + $0x4c] sm:$0xf]
      %v194 = vld [vmem:[%s166 + $0x50] sm:$0xf]
      %v195 = vld [vmem:[%s166 + $0x54] sm:$0xf]
      %v196 = vld [vmem:[%s166 + $0x58] sm:$0xf]
      %v197 = vld [vmem:[%s166 + $0x5c] sm:$0xf]
      %v198 = vunpack.c.l.bf16 %v174
      %v199 = vunpack.c.l.bf16 %v175
      %v200 = vunpack.c.l.bf16 %v176
      %v201 = vunpack.c.l.bf16 %v177
      %v202 = vunpack.c.l.bf16 %v178
      %v203 = vunpack.c.l.bf16 %v179
      %v204 = vunpack.c.l.bf16 %v180
      %v205 = vunpack.c.l.bf16 %v181
      %v206 = vunpack.c.l.bf16 %v182
      %v207 = vunpack.c.l.bf16 %v183
      %v208 = vunpack.c.l.bf16 %v184
      %v209 = vunpack.c.l.bf16 %v185
      %v210 = vunpack.c.l.bf16 %v186
      %v211 = vunpack.c.l.bf16 %v187
      %v212 = vunpack.c.l.bf16 %v188
      %v213 = vunpack.c.l.bf16 %v189
      %v214 = vunpack.c.l.bf16 %v190
      %v215 = vunpack.c.l.bf16 %v191
      %v216 = vunpack.c.l.bf16 %v192
      %v217 = vunpack.c.l.bf16 %v193
      %v218 = vunpack.c.l.bf16 %v194
      %v219 = vunpack.c.l.bf16 %v195
      %v220 = vunpack.c.l.bf16 %v196
      %v221 = vunpack.c.l.bf16 %v197
      %v222 = vld [vmem:[%s1] sm:$0x1]
      %v224 = vlaneseq
      %v225 = vshrl.u32 %v224, 7
      %v226 = vsub.s32 0, %v225
      %v227 = vrot.slane %v222, %v226
      %v229 = vmul.f32 %v198, %v227
      %v230 = vmul.f32 %v199, %v227
      %v231 = vmul.f32 %v200, %v227
      %v232 = vmul.f32 %v201, %v227
      %v233 = vmul.f32 %v202, %v227
      %v234 = vmul.f32 %v203, %v227
      %v235 = vmul.f32 %v204, %v227
      %v236 = vmul.f32 %v205, %v227
      %v237 = vmul.f32 %v206, %v227
      %v238 = vmul.f32 %v207, %v227
      %v239 = vmul.f32 %v208, %v227
      %v240 = vmul.f32 %v209, %v227
      %v241 = vmul.f32 %v210, %v227
      %v242 = vmul.f32 %v211, %v227
      %v243 = vmul.f32 %v212, %v227
      %v244 = vmul.f32 %v213, %v227
      %v245 = vmul.f32 %v214, %v227
      %v246 = vmul.f32 %v215, %v227
      %v247 = vmul.f32 %v216, %v227
      %v248 = vmul.f32 %v217, %v227
      %v249 = vmul.f32 %v218, %v227
      %v250 = vmul.f32 %v219, %v227
      %v251 = vmul.f32 %v220, %v227
      %v252 = vmul.f32 %v221, %v227
      %v253 = vld [vmem:[%s2] sm:$0x1]
      %v255 = vlaneseq
      %v256 = vshrl.u32 %v255, 7
      %v257 = vsub.s32 0, %v256
      %v258 = vrot.slane %v253, %v257
      %v260 = vadd.f32 %v229, %v258
      %v261 = vadd.f32 %v230, %v258
      %v262 = vadd.f32 %v231, %v258
      %v263 = vadd.f32 %v232, %v258
      %v264 = vadd.f32 %v233, %v258
      %v265 = vadd.f32 %v234, %v258
      %v266 = vadd.f32 %v235, %v258
      %v267 = vadd.f32 %v236, %v258
      %v268 = vadd.f32 %v237, %v258
      %v269 = vadd.f32 %v238, %v258
      %v270 = vadd.f32 %v239, %v258
      %v271 = vadd.f32 %v240, %v258
      %v272 = vadd.f32 %v241, %v258
      %v273 = vadd.f32 %v242, %v258
      %v274 = vadd.f32 %v243, %v258
      %v275 = vadd.f32 %v244, %v258
      %v276 = vadd.f32 %v245, %v258
      %v277 = vadd.f32 %v246, %v258
      %v278 = vadd.f32 %v247, %v258
      %v279 = vadd.f32 %v248, %v258
      %v280 = vadd.f32 %v249, %v258
      %v281 = vadd.f32 %v250, %v258
      %v282 = vadd.f32 %v251, %v258
      %v283 = vadd.f32 %v252, %v258
      %v284 = vmax.f32 %v260, 0.0
      %v285 = vmax.f32 %v261, 0.0
      %v286 = vmax.f32 %v262, 0.0
      %v287 = vmax.f32 %v263, 0.0
      %v288 = vmax.f32 %v264, 0.0
      %v289 = vmax.f32 %v265, 0.0
      %v290 = vmax.f32 %v266, 0.0
      %v291 = vmax.f32 %v267, 0.0
      %v292 = vmax.f32 %v268, 0.0
      %v293 = vmax.f32 %v269, 0.0
      %v294 = vmax.f32 %v270, 0.0
      %v295 = vmax.f32 %v271, 0.0
      %v296 = vmax.f32 %v272, 0.0
      %v297 = vmax.f32 %v273, 0.0
      %v298 = vmax.f32 %v274, 0.0
      %v299 = vmax.f32 %v275, 0.0
      %v300 = vmax.f32 %v276, 0.0
      %v301 = vmax.f32 %v277, 0.0
      %v302 = vmax.f32 %v278, 0.0
      %v303 = vmax.f32 %v279, 0.0
      %v304 = vmax.f32 %v280, 0.0
      %v305 = vmax.f32 %v281, 0.0
      %v306 = vmax.f32 %v282, 0.0
      %v307 = vmax.f32 %v283, 0.0
      %v308 = vpack.c.bf16 %v285, %v284
      %v309 = vpack.c.bf16 %v287, %v286
      %v310 = vpack.c.bf16 %v289, %v288
      %v311 = vpack.c.bf16 %v291, %v290
      %v312 = vpack.c.bf16 %v293, %v292
      %v313 = vpack.c.bf16 %v295, %v294
      %v314 = vpack.c.bf16 %v297, %v296
      %v315 = vpack.c.bf16 %v299, %v298
      %v316 = vpack.c.bf16 %v301, %v300
      %v317 = vpack.c.bf16 %v303, %v302
      %v318 = vpack.c.bf16 %v305, %v304
      %v319 = vpack.c.bf16 %v307, %v306
      %v332 = vunpack.c.l.b16 %v308
      %v333 = vunpack.c.h.b16 %v308
      %v334 = vunpack.c.l.b16 %v309
      %v335 = vunpack.c.h.b16 %v309
      %v336 = vunpack.c.l.b16 %v310
      %v337 = vunpack.c.h.b16 %v310
      %v338 = vunpack.c.l.b16 %v311
      %v339 = vunpack.c.h.b16 %v311
      %v340 = vunpack.c.l.b16 %v312
      %v341 = vunpack.c.h.b16 %v312
      %v342 = vunpack.c.l.b16 %v313
      %v343 = vunpack.c.h.b16 %v313
      %v344 = vunpack.c.l.b16 %v314
      %v345 = vunpack.c.h.b16 %v314
      %v346 = vunpack.c.l.b16 %v315
      %v347 = vunpack.c.h.b16 %v315
      %v348 = vunpack.c.l.b16 %v316
      %v349 = vunpack.c.h.b16 %v316
      %v350 = vunpack.c.l.b16 %v317
      %v351 = vunpack.c.h.b16 %v317
      %v352 = vunpack.c.l.b16 %v318
      %v353 = vunpack.c.h.b16 %v318
      %v354 = vunpack.c.l.b16 %v319
      %v355 = vunpack.c.h.b16 %v319
      %v356 = vpack.c.b16 %v332, %v332
      %v357 = vpack.c.b16 %v333, %v333
      %v358 = vpack.c.b16 %v334, %v334
      %v359 = vpack.c.b16 %v335, %v335
      %v360 = vpack.c.b16 %v336, %v336
      %v361 = vpack.c.b16 %v337, %v337
      %v362 = vpack.c.b16 %v338, %v338
      %v363 = vpack.c.b16 %v339, %v339
      %v364 = vpack.c.b16 %v340, %v340
      %v365 = vpack.c.b16 %v341, %v341
      %v366 = vpack.c.b16 %v342, %v342
      %v367 = vpack.c.b16 %v343, %v343
      %v368 = vpack.c.b16 %v344, %v344
      %v369 = vpack.c.b16 %v345, %v345
      %v370 = vpack.c.b16 %v346, %v346
      %v371 = vpack.c.b16 %v347, %v347
      %v372 = vpack.c.b16 %v348, %v348
      %v373 = vpack.c.b16 %v349, %v349
      %v374 = vpack.c.b16 %v350, %v350
      %v375 = vpack.c.b16 %v351, %v351
      %v376 = vpack.c.b16 %v352, %v352
      %v377 = vpack.c.b16 %v353, %v353
      %v378 = vpack.c.b16 %v354, %v354
      %v379 = vpack.c.b16 %v355, %v355
      %404 = vst [vmem:[%s172] sm:$0xf] %v356
      %405 = vst [vmem:[%s172 + $0x4] sm:$0xf] %v357
      %406 = vst [vmem:[%s172 + $0x8] sm:$0xf] %v358
      %407 = vst [vmem:[%s172 + $0xc] sm:$0xf] %v359
      %408 = vst [vmem:[%s172 + $0x10] sm:$0xf] %v360
      %409 = vst [vmem:[%s172 + $0x14] sm:$0xf] %v361
      %410 = vst [vmem:[%s172 + $0x18] sm:$0xf] %v362
      %411 = vst [vmem:[%s172 + $0x1c] sm:$0xf] %v363
      %412 = vst [vmem:[%s172 + $0x20] sm:$0xf] %v364
      %413 = vst [vmem:[%s172 + $0x24] sm:$0xf] %v365
      %414 = vst [vmem:[%s172 + $0x28] sm:$0xf] %v366
      %415 = vst [vmem:[%s172 + $0x2c] sm:$0xf] %v367
      %416 = vst [vmem:[%s172 + $0x30] sm:$0xf] %v368
      %417 = vst [vmem:[%s172 + $0x34] sm:$0xf] %v369
      %418 = vst [vmem:[%s172 + $0x38] sm:$0xf] %v370
      %419 = vst [vmem:[%s172 + $0x3c] sm:$0xf] %v371
      %420 = vst [vmem:[%s172 + $0x40] sm:$0xf] %v372
      %421 = vst [vmem:[%s172 + $0x44] sm:$0xf] %v373
      %422 = vst [vmem:[%s172 + $0x48] sm:$0xf] %v374
      %423 = vst [vmem:[%s172 + $0x4c] sm:$0xf] %v375
      %424 = vst [vmem:[%s172 + $0x50] sm:$0xf] %v376
      %425 = vst [vmem:[%s172 + $0x54] sm:$0xf] %v377
      %426 = vst [vmem:[%s172 + $0x58] sm:$0xf] %v378
      %427 = vst [vmem:[%s172 + $0x5c] sm:$0xf] %v379
      %s428 = smul.u32 24, %s14
      %p429 = scmp.lt.s32.totalorder %s428, 71
      %s430 = scalar_select %p429, %s428, 71
      %s431 = smul.addr %s430, 4
      %s432 = scalar_lea.vmem %s3, %s431
      // Predicated region
      $region33: #{inception_v2b_forward.14} parent=31 // pred_check
        %p433 = pneg %p100
      $region34: #{inception_v2b_forward.14} parent=31 // pred_check_branch
        %435 = sbr.rel (%p433) target = $region36
      $region35: #{inception_v2b_forward.14} parent=31 // pred_region
        %s436 = smul.u32 24, %s14
      $region36: #{inception_v2b_forward.14} parent=31 // pred_fallthru
        _
    $region32: #{inception_v2b_forward.14} parent=5 // pred_fallthru
      _
    %p437 = scmp.le.s32.totalorder 2, %s9
    // Predicated region
    $region37: #{inception_v2b_forward.14} parent=5 // pred_check
      %p438 = pneg %p437
    $region38: #{inception_v2b_forward.14} parent=5 // pred_check_branch
      %440 = sbr.rel (%p438) target = $region40
    $region39: #{inception_v2b_forward.14} parent=5 // pred_region
      %s441 = ssub.s32 %s9, 2
      // Predicated region
      $region41: #{inception_v2b_forward.14} parent=39 // pred_check
        %p442 = pneg %p106
      $region42: #{inception_v2b_forward.14} parent=39 // pred_check_branch
        %444 = sbr.rel (%p442) target = $region44
      $region43: #{inception_v2b_forward.14} parent=39 // pred_region
        %s445 = smul.u32 24, %s15
        %p446 = scmp.lt.s32.totalorder %s445, 71
        %s447 = scalar_select %p446, %s445, 71
        %s448 = smul.addr %s447, 4
        %s449 = scalar_lea.vmem %s3, %s448
      $region44: #{inception_v2b_forward.14} parent=39 // pred_fallthru
        _
    $region40: #{inception_v2b_forward.14} parent=5 // pred_fallthru
      _
  $region6: #{inception_v2b_forward.14} parent=0 // loop_footer
    %s13 = sadd.s32 1, %s9
  $region7: #{inception_v2b_forward.14} parent=0 // loop_footer_branch
    %8 = sbr.rel target = $region3
  $region8: #{inception_v2b_forward.14} parent=0 // loop_exit
    _

// kernel: inception_v2b_forward.13
$region0: #{inception_v2b_forward.13}
  #allocation0 [shape = 'u32[]', space=smem, size = 0x4, offset = 0x4, fixed_abs, tag = 'smem constant byte address 0x4 - core index']
  #allocation1 [shape = 'u32[144,128]{1,0:T(1,128)}', space=vmem, size = 0x12000, scoped, tag = 'internal scratch']
  %s0 = inlined_call_operand.vmem [shape: bf16[1,656,128], index: 0, kind: input, shape index: {}]
  %s1 = inlined_call_operand.vmem [shape: bf16[9,128,128], index: 1, kind: input, shape index: {}]
  %s2 = inlined_call_operand.vmem [shape: f32[288,1], index: 2, kind: input, shape index: {}]
  %s3 = inlined_call_operand.vmem [shape: bf16[2,288,128], index: 3, kind: output, shape index: {0}]
  %s4 = inlined_call_operand.vmem [shape: f32[2,2,128], index: 4, kind: output, shape index: {1}]
  %5 = xla_tuple %s3, %s4
  %s6 = sld [smem:[#allocation0]]
  $region53: #{inception_v2b_forward.13} parent=0
    _
  %s8 = ssub.s32 1, %s6
  %s9 = scalar_select 0, %s8, %s6
  loop: start=0, step=1, limit=4
  $region2: #{inception_v2b_forward.13} parent=0 // loop_pre_header
    _
  $region3: #{inception_v2b_forward.13} parent=0 // loop_header
    %s11 = sphi 0, %s15
    %p12 = scmp.ge.s32.totalorder %s11, 4
    %s18 = sphi 0, %s30
    %s19 = sphi 0, %s26
    %s20 = sphi 0, %s18
    %s21 = sphi 0, %s19
    %s22 = sphi 0, %s20
    %s23 = sphi 0, %s21
    %s33 = sphi 0, %s35
    %s36 = sphi 0, %s33
    %s37 = sphi 0, %s36
    %s53 = sphi 0, %s37
    %s59 = sphi 0, %s61
    %s62 = sphi 0, %s59
    %s63 = sphi 0, %s62
    %s79 = sphi 0, %s63
    %s83 = sphi 0, %s83
    %s85 = sphi 0, %s83
    %s86 = sphi 0, %s85
    %s100 = sphi 0, %s86
    %s108 = sphi 0, %s110
    %s111 = sphi 0, %s108
    %s112 = sphi 0, %s111
    %s128 = sphi 0, %s112
    %s136 = sphi 0, %s138
    %s139 = sphi 0, %s136
    %s140 = sphi 0, %s139
    %s156 = sphi 0, %s140
  $region4: #{inception_v2b_forward.13} parent=0 // loop_header_branch
    %14 = sbr.rel (%p12) target = $region8
  $region5: #{inception_v2b_forward.13} parent=0 // loop_body
    %s16 = ssub.s32 %s11, 1
    %s17 = ssub.s32 %s11, 2
    %s24 = sadd.s32 1, %s19
    %p25 = scmp.ge.s32.totalorder %s24, 1
    %s26 = scalar_select %p25, 0, %s24
    %s27 = sadd.s32 1, %s18
    %s28 = scalar_select %p25, %s27, %s18
    %p29 = scmp.ge.s32.totalorder %s28, 2
    %s30 = scalar_select %p29, 0, %s28
    %s31 = ssub.s32 %s18, %s30
    %p32 = scmp.eq.s32.totalorder %s31, 0
    %s34 = sadd.s32 %s33, 1
    %s35 = scalar_select %p32, %s33, %s34
    %p38 = pneg %p32
    %p39 = scmp.eq.s32.totalorder %s11, 1
    %p40 = por %p38, %p39
    %p41 = scmp.ne.s32.totalorder %s33, %s36
    %p42 = scmp.eq.s32.totalorder %s11, 0
    %p43 = por %p41, %p42
    %p44 = scmp.ne.s32.totalorder %s33, %s36
    %p45 = scmp.eq.s32.totalorder %s16, 1
    %p46 = por %p44, %p45
    %p47 = scmp.ne.s32.totalorder %s36, %s37
    %p48 = scmp.eq.s32.totalorder %s16, 0
    %p49 = por %p47, %p48
    %p50 = scmp.ne.s32.totalorder %s36, %s37
    %p51 = scmp.eq.s32.totalorder %s17, 1
    %p52 = por %p50, %p51
    %p54 = scmp.ne.s32.totalorder %s37, %s53
    %p55 = scmp.eq.s32.totalorder %s17, 0
    %p56 = por %p54, %p55
    %s57 = ssub.s32 %s19, %s26
    %p58 = scmp.eq.s32.totalorder %s57, 0
    %s60 = sadd.s32 %s59, 1
    %s61 = scalar_select %p58, %s59, %s60
    %p64 = pneg %p58
    %p65 = scmp.eq.s32.totalorder %s11, 1
    %p66 = por %p64, %p65
    %p67 = scmp.ne.s32.totalorder %s59, %s62
    %p68 = scmp.eq.s32.totalorder %s11, 0
    %p69 = por %p67, %p68
    %p70 = scmp.ne.s32.totalorder %s59, %s62
    %p71 = scmp.eq.s32.totalorder %s16, 1
    %p72 = por %p70, %p71
    %p73 = scmp.ne.s32.totalorder %s62, %s63
    %p74 = scmp.eq.s32.totalorder %s16, 0
    %p75 = por %p73, %p74
    %p76 = scmp.ne.s32.totalorder %s62, %s63
    %p77 = scmp.eq.s32.totalorder %s17, 1
    %p78 = por %p76, %p77
    %p80 = scmp.ne.s32.totalorder %s63, %s79
    %p81 = scmp.eq.s32.totalorder %s17, 0
    %p82 = por %p80, %p81
    %s84 = sadd.s32 %s83, 1
    %p87 = scmp.eq.s32.totalorder %s11, 1
    %p88 = scmp.ne.s32.totalorder %s83, %s85
    %p89 = scmp.eq.s32.totalorder %s11, 0
    %p90 = por %p88, %p89
    %p91 = scmp.ne.s32.totalorder %s83, %s85
    %p92 = scmp.eq.s32.totalorder %s16, 1
    %p93 = por %p91, %p92
    %p94 = scmp.ne.s32.totalorder %s85, %s86
    %p95 = scmp.eq.s32.totalorder %s16, 0
    %p96 = por %p94, %p95
    %p97 = scmp.ne.s32.totalorder %s85, %s86
    %p98 = scmp.eq.s32.totalorder %s17, 1
    %p99 = por %p97, %p98
    %p101 = scmp.ne.s32.totalorder %s86, %s100
    %p102 = scmp.eq.s32.totalorder %s17, 0
    %p103 = por %p101, %p102
    %s104 = ssub.s32 %s18, %s30
    %s105 = ssub.s32 %s19, %s26
    %s106 = sor.u32 %s104, %s105
    %p107 = scmp.eq.s32.totalorder %s106, 0
    %s109 = sadd.s32 %s108, 1
    %s110 = scalar_select %p107, %s108, %s109
    %p113 = pneg %p107
    %p114 = scmp.eq.s32.totalorder %s11, 1
    %p115 = por %p113, %p114
    %p116 = scmp.ne.s32.totalorder %s108, %s111
    %p117 = scmp.eq.s32.totalorder %s11, 0
    %p118 = por %p116, %p117
    %p119 = scmp.ne.s32.totalorder %s108, %s111
    %p120 = scmp.eq.s32.totalorder %s16, 1
    %p121 = por %p119, %p120
    %p122 = scmp.ne.s32.totalorder %s111, %s112
    %p123 = scmp.eq.s32.totalorder %s16, 0
    %p124 = por %p122, %p123
    %p125 = scmp.ne.s32.totalorder %s111, %s112
    %p126 = scmp.eq.s32.totalorder %s17, 1
    %p127 = por %p125, %p126
    %p129 = scmp.ne.s32.totalorder %s112, %s128
    %p130 = scmp.eq.s32.totalorder %s17, 0
    %p131 = por %p129, %p130
    %s132 = ssub.s32 %s18, %s30
    %s133 = ssub.s32 %s19, %s26
    %s134 = sor.u32 %s132, %s133
    %p135 = scmp.eq.s32.totalorder %s134, 0
    %s137 = sadd.s32 %s136, 1
    %s138 = scalar_select %p135, %s136, %s137
    %p141 = pneg %p135
    %p142 = scmp.eq.s32.totalorder %s11, 1
    %p143 = por %p141, %p142
    %p144 = scmp.ne.s32.totalorder %s136, %s139
    %p145 = scmp.eq.s32.totalorder %s11, 0
    %p146 = por %p144, %p145
    %p147 = scmp.ne.s32.totalorder %s136, %s139
    %p148 = scmp.eq.s32.totalorder %s16, 1
    %p149 = por %p147, %p148
    %p150 = scmp.ne.s32.totalorder %s139, %s140
    %p151 = scmp.eq.s32.totalorder %s16, 0
    %p152 = por %p150, %p151
    %p153 = scmp.ne.s32.totalorder %s139, %s140
    %p154 = scmp.eq.s32.totalorder %s17, 1
    %p155 = por %p153, %p154
    %p157 = scmp.ne.s32.totalorder %s140, %s156
    %p158 = scmp.eq.s32.totalorder %s17, 0
    %p159 = por %p157, %p158
    %p160 = scmp.le.s32.totalorder 1, %s11
    %p161 = scmp.lt.s32.totalorder %s11, 3
    %p162 = pnand %p160, %p161
    %p163 = pneg %p162
    // Predicated region
    $region9: #{inception_v2b_forward.13} parent=5 // pred_check
      _
    $region10: #{inception_v2b_forward.13} parent=5 // pred_check_branch
      %165 = sbr.rel (%p162) target = $region12
    $region11: #{inception_v2b_forward.13} parent=5 // pred_region
      %s166 = ssub.s32 %s11, 1
      // Predicated region
      $region13: #{inception_v2b_forward.13} parent=11 // pred_check
        %p167 = pneg %p75
      $region14: #{inception_v2b_forward.13} parent=11 // pred_check_branch
        %169 = sbr.rel (%p167) target = $region16
      $region15: #{inception_v2b_forward.13} parent=11 // pred_region
        %p170 = scmp.lt.s32.totalorder %s21, 0
        %s171 = scalar_select %p170, %s21, 0
        %s172 = smul.addr %s171, 4
        %s173 = scalar_lea.vmem %s1, %s172
      $region16: #{inception_v2b_forward.13} parent=11 // pred_fallthru
        _
      // Predicated region
      $region17: #{inception_v2b_forward.13} parent=11 // pred_check
        %p174 = pneg %p96
      $region18: #{inception_v2b_forward.13} parent=11 // pred_check_branch
        %176 = sbr.rel (%p174) target = $region20
      $region19: #{inception_v2b_forward.13} parent=11 // pred_region
        _
      $region20: #{inception_v2b_forward.13} parent=11 // pred_fallthru
        _
    $region12: #{inception_v2b_forward.13} parent=5 // pred_fallthru
      _
    %p177 = scmp.lt.s32.totalorder %s11, 2
    // Predicated region
    $region21: #{inception_v2b_forward.13} parent=5 // pred_check
      %p178 = pneg %p177
    $region22: #{inception_v2b_forward.13} parent=5 // pred_check_branch
      %180 = sbr.rel (%p178) target = $region24
    $region23: #{inception_v2b_forward.13} parent=5 // pred_region
      // Predicated region
      $region25: #{inception_v2b_forward.13} parent=23 // pred_check
        %p181 = pneg %p43
      $region26: #{inception_v2b_forward.13} parent=23 // pred_check_branch
        %183 = sbr.rel (%p181) target = $region28
      $region27: #{inception_v2b_forward.13} parent=23 // pred_region
        %s184 = smul.u32 41, %s18
        %p185 = scmp.lt.s32.totalorder %s184, 81
        %s186 = scalar_select %p185, %s184, 81
        %s187 = smul.addr %s186, 4
        %s188 = scalar_lea.vmem %s0, %s187
        %s189 = smul.u32 41, %s18
      $region28: #{inception_v2b_forward.13} parent=23 // pred_fallthru
        _
    $region24: #{inception_v2b_forward.13} parent=5 // pred_fallthru
      _
    %p190 = scmp.le.s32.totalorder 1, %s11
    %p191 = scmp.lt.s32.totalorder %s11, 3
    %p192 = pnand %p190, %p191
    %p193 = pneg %p192
    // Predicated region
    $region29: #{inception_v2b_forward.13} parent=5 // pred_check
      _
    $region30: #{inception_v2b_forward.13} parent=5 // pred_check_branch
      %195 = sbr.rel (%p192) target = $region32
    $region31: #{inception_v2b_forward.13} parent=5 // pred_region
      %s196 = ssub.s32 %s11, 1
      %s197 = smul.u32 41, %s20
      %p198 = scmp.lt.s32.totalorder %s197, 81
      %s199 = scalar_select %p198, %s197, 81
      %s200 = smul.addr %s199, 4
      %s201 = scalar_lea.vmem %s0, %s200
      %p202 = pneg %p49
      %p203 = pneg %p46
      %p204 = scmp.lt.s32.totalorder %s21, 0
      %s205 = scalar_select %p204, %s21, 0
      %s206 = smul.addr %s205, 4
      %s207 = scalar_lea.vmem %s1, %s206
      %p208 = pneg %p75
      %p209 = pneg %p72
      %p210 = pneg %p96
      %p211 = pneg %p93
      %p212 = pneg %p124
      %p213 = pneg %p121
      %p214 = scmp.lt.s32.totalorder %s20, 1
      %s215 = scalar_select %p214, %s20, 1
      %p216 = scmp.lt.s32.totalorder %s21, 0
      %s217 = scalar_select %p216, %s21, 0
      %s218 = smul.addr %s215, 36
      %s219 = sadd.s32 %s217, %s218
      %s220 = smul.addr %s219, 4
      %s221 = scalar_lea.vmem %s3, %s220
      %p222 = pneg %p152
      %p223 = pneg %p149
      %p224 = scmp.lt.s32.totalorder %s20, 1
      %s225 = scalar_select %p224, %s20, 1
      %p226 = scmp.lt.s32.totalorder %s21, 0
      %s227 = scalar_select %p226, %s21, 0
      %s228 = sadd.s32 %s227, %s225
      %s229 = smul.addr %s228, 2
      %s230 = scalar_lea.vmem %s4, %s229
      %s231 = smul.u32 41, %s20
      %p232 = scmp.lt.s32.totalorder %s231, 81
      %s233 = scalar_select %p232, %s231, 81
      %s234 = smul.addr %s233, 4
      %s235 = scalar_lea.vmem %s0, %s234
      %s236 = smul.u32 41, %s20
      %p237 = scmp.lt.s32.totalorder %s21, 0
      %s238 = scalar_select %p237, %s21, 0
      %s239 = smul.addr %s238, 4
      %s240 = scalar_lea.vmem %s1, %s239
      %p241 = scmp.lt.s32.totalorder %s20, 1
      %s242 = scalar_select %p241, %s20, 1
      %p243 = scmp.lt.s32.totalorder %s21, 0
      %s244 = scalar_select %p243, %s21, 0
      %s245 = smul.addr %s242, 36
      %s246 = sadd.s32 %s244, %s245
      %s247 = smul.addr %s246, 4
      %s248 = scalar_lea.vmem %s3, %s247
      %p249 = scmp.lt.s32.totalorder %s20, 1
      %s250 = scalar_select %p249, %s20, 1
      %p251 = scmp.lt.s32.totalorder %s21, 0
      %s252 = scalar_select %p251, %s21, 0
      %s253 = sadd.s32 %s252, %s250
      %s254 = smul.addr %s253, 2
      %s255 = scalar_lea.vmem %s4, %s254
      %v257 = vld [vmem:[%s235] sm:$0xf]
      %v258 = vld [vmem:[%s235 + $0x4] sm:$0xf]
      %v259 = vld [vmem:[%s235 + $0x8] sm:$0xf]
      %v260 = vld [vmem:[%s235 + $0xc] sm:$0xf]
      %v261 = vld [vmem:[%s235 + $0x10] sm:$0xf]
      %v262 = vld [vmem:[%s235 + $0x14] sm:$0xf]
      %v263 = vld [vmem:[%s235 + $0x18] sm:$0xf]
      %v264 = vld [vmem:[%s235 + $0x1c] sm:$0xf]
      %v265 = vld [vmem:[%s235 + $0x20] sm:$0xf]
      %v266 = vld [vmem:[%s235 + $0x24] sm:$0xf]
      %v267 = vld [vmem:[%s235 + $0x28] sm:$0xf]
      %v268 = vld [vmem:[%s235 + $0x2c] sm:$0xf]
      %v269 = vld [vmem:[%s235 + $0x30] sm:$0xf]
      %v270 = vld [vmem:[%s235 + $0x34] sm:$0xf]
      %v271 = vld [vmem:[%s235 + $0x38] sm:$0xf]
      %v272 = vld [vmem:[%s235 + $0x3c] sm:$0xf]
      %v273 = vld [vmem:[%s235 + $0x40] sm:$0xf]
      %v274 = vld [vmem:[%s235 + $0x44] sm:$0xf]
      %v275 = vld [vmem:[%s235 + $0x48] sm:$0xf]
      %v276 = vld [vmem:[%s235 + $0x4c] sm:$0xf]
      %v277 = vld [vmem:[%s235 + $0x50] sm:$0xf]
      %v278 = vld [vmem:[%s235 + $0x54] sm:$0xf]
      %v279 = vld [vmem:[%s235 + $0x58] sm:$0xf]
      %v280 = vld [vmem:[%s235 + $0x5c] sm:$0xf]
      %v281 = vld [vmem:[%s235 + $0x60] sm:$0xf]
      %v282 = vld [vmem:[%s235 + $0x64] sm:$0xf]
      %v283 = vld [vmem:[%s235 + $0x68] sm:$0xf]
      %v284 = vld [vmem:[%s235 + $0x6c] sm:$0xf]
      %v285 = vld [vmem:[%s235 + $0x70] sm:$0xf]
      %v286 = vld [vmem:[%s235 + $0x74] sm:$0xf]
      %v287 = vld [vmem:[%s235 + $0x78] sm:$0xf]
      %v288 = vld [vmem:[%s235 + $0x7c] sm:$0xf]
      %v289 = vld [vmem:[%s235 + $0x80] sm:$0xf]
      %v290 = vld [vmem:[%s235 + $0x84] sm:$0xf]
      %v291 = vld [vmem:[%s235 + $0x88] sm:$0xf]
      %v292 = vld [vmem:[%s235 + $0x8c] sm:$0xf]
      %v293 = vld [vmem:[%s240] sm:$0xf]
      %v294 = vld [vmem:[%s240 + $0x4] sm:$0xf]
      %v295 = vld [vmem:[%s240 + $0x8] sm:$0xf]
      %v296 = vld [vmem:[%s240 + $0xc] sm:$0xf]
      %v297 = vld [vmem:[%s240 + $0x10] sm:$0xf]
      %v298 = vld [vmem:[%s240 + $0x14] sm:$0xf]
      %v299 = vld [vmem:[%s240 + $0x18] sm:$0xf]
      %v300 = vld [vmem:[%s240 + $0x1c] sm:$0xf]
      %v301 = vld [vmem:[%s240 + $0x20] sm:$0xf]
      %v302 = vld [vmem:[%s240 + $0x24] sm:$0xf]
      %v303 = vld [vmem:[%s240 + $0x28] sm:$0xf]
      %v304 = vld [vmem:[%s240 + $0x2c] sm:$0xf]
      %v305 = vld [vmem:[%s240 + $0x30] sm:$0xf]
      %v306 = vld [vmem:[%s240 + $0x34] sm:$0xf]
      %v307 = vld [vmem:[%s240 + $0x38] sm:$0xf]
      %v308 = vld [vmem:[%s240 + $0x3c] sm:$0xf]
      %v309 = vld [vmem:[%s235 + $0x90] sm:$0x1]
      %s310 = scalar_lea.vmem %s240, 64
      %v311 = vld [vmem:[%s310] sm:$0xf]
      %v312 = vld [vmem:[%s310 + $0x4] sm:$0xf]
      %v313 = vld [vmem:[%s310 + $0x8] sm:$0xf]
      %v314 = vld [vmem:[%s310 + $0xc] sm:$0xf]
      %v315 = vld [vmem:[%s310 + $0x10] sm:$0xf]
      %v316 = vld [vmem:[%s310 + $0x14] sm:$0xf]
      %v317 = vld [vmem:[%s310 + $0x18] sm:$0xf]
      %v318 = vld [vmem:[%s310 + $0x1c] sm:$0xf]
      %v319 = vld [vmem:[%s310 + $0x20] sm:$0xf]
      %v320 = vld [vmem:[%s310 + $0x24] sm:$0xf]
      %v321 = vld [vmem:[%s310 + $0x28] sm:$0xf]
      %v322 = vld [vmem:[%s310 + $0x2c] sm:$0xf]
      %v323 = vld [vmem:[%s310 + $0x30] sm:$0xf]
      %v324 = vld [vmem:[%s310 + $0x34] sm:$0xf]
      %v325 = vld [vmem:[%s310 + $0x38] sm:$0xf]
      %v326 = vld [vmem:[%s310 + $0x3c] sm:$0xf]
      %v364 = vunpack.c.l.b16 %v257
      %v365 = vunpack.c.l.b16 %v258
      %v366 = vunpack.c.l.b16 %v259
      %v367 = vunpack.c.l.b16 %v260
      %v368 = vunpack.c.l.b16 %v261
      %v369 = vunpack.c.l.b16 %v262
      %v370 = vunpack.c.l.b16 %v263
      %v371 = vunpack.c.l.b16 %v264
      %v372 = vunpack.c.l.b16 %v265
      %v373 = vunpack.c.l.b16 %v266
      %v374 = vunpack.c.l.b16 %v267
      %v375 = vunpack.c.l.b16 %v268
      %v376 = vunpack.c.l.b16 %v269
      %v377 = vunpack.c.l.b16 %v270
      %v378 = vunpack.c.l.b16 %v271
      %v379 = vunpack.c.l.b16 %v272
      %v380 = vunpack.c.l.b16 %v273
      %v381 = vunpack.c.l.b16 %v274
      %v382 = vunpack.c.l.b16 %v275
      %v383 = vunpack.c.l.b16 %v276
      %v384 = vunpack.c.l.b16 %v277
      %v385 = vunpack.c.l.b16 %v278
      %v386 = vunpack.c.l.b16 %v279
      %v387 = vunpack.c.l.b16 %v280
      %v388 = vunpack.c.l.b16 %v281
      %v389 = vunpack.c.l.b16 %v282
      %v390 = vunpack.c.l.b16 %v283
      %v391 = vunpack.c.l.b16 %v284
      %v392 = vunpack.c.l.b16 %v285
      %v393 = vunpack.c.l.b16 %v286
      %v394 = vunpack.c.l.b16 %v287
      %v395 = vunpack.c.l.b16 %v288
      %v396 = vunpack.c.l.b16 %v289
      %v397 = vunpack.c.l.b16 %v290
      %v398 = vunpack.c.l.b16 %v291
      %v399 = vunpack.c.l.b16 %v292
      %v400 = vunpack.c.l.b16 %v309
      %v401 = vpack.c.b16 %v365, %v364
      %v402 = vpack.c.b16 %v367, %v366
      %v403 = vpack.c.b16 %v369, %v368
      %v404 = vpack.c.b16 %v371, %v370
      %v405 = vpack.c.b16 %v373, %v372
      %v406 = vpack.c.b16 %v375, %v374
      %v407 = vpack.c.b16 %v377, %v376
      %v408 = vpack.c.b16 %v379, %v378
      %v409 = vpack.c.b16 %v381, %v380
      %v410 = vpack.c.b16 %v383, %v382
      %v411 = vpack.c.b16 %v385, %v384
      %v412 = vpack.c.b16 %v387, %v386
      %v413 = vpack.c.b16 %v389, %v388
      %v414 = vpack.c.b16 %v391, %v390
      %v415 = vpack.c.b16 %v393, %v392
      %v416 = vpack.c.b16 %v395, %v394
      %v417 = vpack.c.b16 %v397, %v396
      %v418 = vpack.c.b16 %v399, %v398
      %v419 = vpack.c.b16 %v400, %v400
      %vm420 = vsmask.f32 7424
      %v422 = vshrl.u32 %v401, 16
      %v424 = vshll.u32 %v401, 16
      %v426 = vrot.slane %v424, 1
      %v427 = vor.u32 %v422, %v426
      %v429 = vshll.u32 %v402, 16
      %v431 = vrot.slane %v429, 1
      %v432 = vsel %vm420, %v427, %v431
      %v433 = vshrl.u32 %v402, 16
      %v435 = vor.u32 %v433, %v431
      %v437 = vshll.u32 %v403, 16
      %v439 = vrot.slane %v437, 1
      %v440 = vsel %vm420, %v435, %v439
      %v441 = vshrl.u32 %v403, 16
      %v443 = vor.u32 %v441, %v439
      %v445 = vshll.u32 %v404, 16
      %v447 = vrot.slane %v445, 1
      %v448 = vsel %vm420, %v443, %v447
      %v449 = vshrl.u32 %v404, 16
      %v451 = vor.u32 %v449, %v447
      %v453 = vshll.u32 %v405, 16
      %v455 = vrot.slane %v453, 1
      %v456 = vsel %vm420, %v451, %v455
      %v457 = vshrl.u32 %v405, 16
      %v459 = vor.u32 %v457, %v455
      %v461 = vshll.u32 %v406, 16
      %v463 = vrot.slane %v461, 1
      %v464 = vsel %vm420, %v459, %v463
      %v465 = vshrl.u32 %v406, 16
      %v467 = vor.u32 %v465, %v463
      %v469 = vshll.u32 %v407, 16
      %v471 = vrot.slane %v469, 1
      %v472 = vsel %vm420, %v467, %v471
      %v473 = vshrl.u32 %v407, 16
      %v475 = vor.u32 %v473, %v471
      %v477 = vshll.u32 %v408, 16
      %v479 = vrot.slane %v477, 1
      %v480 = vsel %vm420, %v475, %v479
      %v481 = vshrl.u32 %v408, 16
      %v483 = vor.u32 %v481, %v479
      %v485 = vshll.u32 %v409, 16
      %v487 = vrot.slane %v485, 1
      %v488 = vsel %vm420, %v483, %v487
      %v489 = vshrl.u32 %v409, 16
      %v491 = vor.u32 %v489, %v487
      %v493 = vshll.u32 %v410, 16
      %v495 = vrot.slane %v493, 1
      %v496 = vsel %vm420, %v491, %v495
      %v497 = vshrl.u32 %v410, 16
      %v499 = vor.u32 %v497, %v495
      %v501 = vshll.u32 %v411, 16
      %v503 = vrot.slane %v501, 1
      %v504 = vsel %vm420, %v499, %v503
      %v505 = vshrl.u32 %v411, 16
      %v507 = vor.u32 %v505, %v503
      %v509 = vshll.u32 %v412, 16
      %v511 = vrot.slane %v509, 1
      %v512 = vsel %vm420, %v507, %v511
      %v513 = vshrl.u32 %v412, 16
      %v515 = vor.u32 %v513, %v511
      %v517 = vshll.u32 %v413, 16
      %v519 = vrot.slane %v517, 1
      %v520 = vsel %vm420, %v515, %v519
      %v521 = vshrl.u32 %v413, 16
      %v523 = vor.u32 %v521, %v519
      %v525 = vshll.u32 %v414, 16
      %v527 = vrot.slane %v525, 1
      %v528 = vsel %vm420, %v523, %v527
      %v529 = vshrl.u32 %v414, 16
      %v531 = vor.u32 %v529, %v527
      %v533 = vshll.u32 %v415, 16
      %v535 = vrot.slane %v533, 1
      %v536 = vsel %vm420, %v531, %v535
      %v537 = vshrl.u32 %v415, 16
      %v539 = vor.u32 %v537, %v535
      %v541 = vshll.u32 %v416, 16
      %v543 = vrot.slane %v541, 1
      %v544 = vsel %vm420, %v539, %v543
      %v545 = vshrl.u32 %v416, 16
      %v547 = vor.u32 %v545, %v543
      %v549 = vshll.u32 %v417, 16
      %v551 = vrot.slane %v549, 1
      %v552 = vsel %vm420, %v547, %v551
      %v553 = vshrl.u32 %v417, 16
      %v555 = vor.u32 %v553, %v551
      %v557 = vshll.u32 %v418, 16
      %v559 = vrot.slane %v557, 1
      %v560 = vsel %vm420, %v555, %v559
      %v561 = vshrl.u32 %v418, 16
      %v563 = vor.u32 %v561, %v559
      %v565 = vshll.u32 %v419, 16
      %v567 = vrot.slane %v565, 1
      %v568 = vsel %vm420, %v563, %v567
      %v603 = vunpack.c.l.b16 %v311
      %v604 = vunpack.c.l.b16 %v312
      %v605 = vunpack.c.l.b16 %v313
      %v606 = vunpack.c.l.b16 %v314
      %v607 = vunpack.c.l.b16 %v315
      %v608 = vunpack.c.l.b16 %v316
      %v609 = vunpack.c.l.b16 %v317
      %v610 = vunpack.c.l.b16 %v318
      %v611 = vunpack.c.l.b16 %v319
      %v612 = vunpack.c.l.b16 %v320
      %v613 = vunpack.c.l.b16 %v321
      %v614 = vunpack.c.l.b16 %v322
      %v615 = vunpack.c.l.b16 %v323
      %v616 = vunpack.c.l.b16 %v324
      %v617 = vunpack.c.l.b16 %v325
      %v618 = vunpack.c.l.b16 %v326
      %v619 = vpack.c.b16 %v604, %v603
      %v620 = vpack.c.b16 %v606, %v605
      %v621 = vpack.c.b16 %v608, %v607
      %v622 = vpack.c.b16 %v610, %v609
      %v623 = vpack.c.b16 %v612, %v611
      %v624 = vpack.c.b16 %v614, %v613
      %v625 = vpack.c.b16 %v616, %v615
      %v626 = vpack.c.b16 %v618, %v617
      %635 = vmatprep.subr.bf16.mxu0 0
      %636 = vmatpush1.bf16.msra.mxu0 %v619
      %637 = vmatprep.subr.bf16.mxu0 0
      %638 = vmatpush1.bf16.msra.mxu0 %v620
      %639 = vmatprep.subr.bf16.mxu0 0
      %640 = vmatpush1.bf16.msra.mxu0 %v621
      %641 = vmatprep.subr.bf16.mxu0 0
      %642 = vmatpush1.bf16.msra.mxu0 %v622
      %643 = vmatprep.subr.bf16.mxu0 0
      %644 = vmatpush1.bf16.msra.mxu0 %v623
      %645 = vmatprep.subr.bf16.mxu0 0
      %646 = vmatpush1.bf16.msra.mxu0 %v624
      %647 = vmatprep.subr.bf16.mxu0 0
      %648 = vmatpush1.bf16.msra.mxu0 %v625
      %649 = vmatprep.subr.bf16.mxu0 0
      %650 = vmatpush1.bf16.msra.mxu0 %v626
      %651 = vmatprep.subr.bf16.mxu0 0
      %652 = vmatpush1.bf16.msra.mxu0 0
      %653 = vmatprep.subr.bf16.mxu0 0
      %654 = vmatpush1.bf16.msra.mxu0 0
      %655 = vmatprep.subr.bf16.mxu0 0
      %656 = vmatpush1.bf16.msra.mxu0 0
      %657 = vmatprep.subr.bf16.mxu0 0
      %658 = vmatpush1.bf16.msra.mxu0 0
      %659 = vmatprep.subr.bf16.mxu0 0
      %660 = vmatpush1.bf16.msra.mxu0 0
      %661 = vmatprep.subr.bf16.mxu0 0
      %662 = vmatpush1.bf16.msra.mxu0 0
      %663 = vmatprep.subr.bf16.mxu0 0
      %664 = vmatpush1.bf16.msra.mxu0 0
      %665 = vmatprep.subr.bf16.mxu0 0
      %666 = vmatpush1.bf16.msra.mxu0 0
      %667 = vmatprep.mubr.bf16.mxu0 0
      %668 = vmatmul.mubr.bf16.gmra.mrb[0].mxu0 %v432
      %v669 = vpop.f32.mrb[0].mxu0
      %v670 = vadd.f32 0.0, %v669
      %v671 = vpop.f32.mrb[0].mxu0
      %v672 = vpop.f32.mrb[0].mxu0
      %v673 = vadd.f32 0.0, %v672
      %v674 = vpop.f32.mrb[0].mxu0
      %675 = vmatprep.mubr.bf16.mxu0 0
      %676 = vmatmul.mubr.bf16.gmra.mrb[0].mxu0 %v440
      %v677 = vpop.f32.mrb[0].mxu0
      %v678 = vadd.f32 0.0, %v677
      %v679 = vpop.f32.mrb[0].mxu0
      %v680 = vpop.f32.mrb[0].mxu0
      %v681 = vadd.f32 0.0, %v680
      %v682 = vpop.f32.mrb[0].mxu0
      %683 = vmatprep.mubr.bf16.mxu0 0
      %684 = vmatmul.mubr.bf16.gmra.mrb[0].mxu0 %v448
      %v685 = vpop.f32.mrb[0].mxu0
      %v686 = vadd.f32 0.0, %v685
      %v687 = vpop.f32.mrb[0].mxu0
      %v688 = vpop.f32.mrb[0].mxu0
      %v689 = vadd.f32 0.0, %v688
      %v690 = vpop.f32.mrb[0].mxu0
      %691 = vmatprep.mubr.bf16.mxu0 0
      %692 = vmatmul.mubr.bf16.gmra.mrb[0].mxu0 %v456
      %v693 = vpop.f32.mrb[0].mxu0
      %v694 = vadd.f32 0.0, %v693
      %v695 = vpop.f32.mrb[0].mxu0
      %v696 = vpop.f32.mrb[0].mxu0
      %v697 = vadd.f32 0.0, %v696
      %v698 = vpop.f32.mrb[0].mxu0
      %699 = vmatprep.mubr.bf16.mxu0 0
      %700 = vmatmul.mubr.bf16.gmra.mrb[0].mxu0 %v464
      %v701 = vpop.f32.mrb[0].mxu0
      %v702 = vadd.f32 0.0, %v701
      %v703 = vpop.f32.mrb[0].mxu0
      %v704 = vpop.f32.mrb[0].mxu0
      %v705 = vadd.f32 0.0, %v704
      %v706 = vpop.f32.mrb[0].mxu0
      %707 = vmatprep.mubr.bf16.mxu0 0
      %708 = vmatmul.mubr.bf16.gmra.mrb[0].mxu0 %v472
      %v709 = vpop.f32.mrb[0].mxu0
      %v710 = vadd.f32 0.0, %v709
      %v711 = vpop.f32.mrb[0].mxu0
      %v712 = vpop.f32.mrb[0].mxu0
      %v713 = vadd.f32 0.0, %v712
      %v714 = vpop.f32.mrb[0].mxu0
      %715 = vmatprep.mubr.bf16.mxu0 0
      %716 = vmatmul.mubr.bf16.gmra.mrb[0].mxu0 %v480
      %v717 = vpop.f32.mrb[0].mxu0
      %v718 = vadd.f32 0.0, %v717
      %v719 = vpop.f32.mrb[0].mxu0
      %v720 = vpop.f32.mrb[0].mxu0
      %v721 = vadd.f32 0.0, %v720
      %v722 = vpop.f32.mrb[0].mxu0
      %723 = vmatprep.mubr.bf16.mxu0 0
      %724 = vmatmul.mubr.bf16.gmra.mrb[0].mxu0 %v488
      %v725 = vpop.f32.mrb[0].mxu0
      %v726 = vadd.f32 0.0, %v725
      %v727 = vpop.f32.mrb[0].mxu0
      %v728 = vpop.f32.mrb[0].mxu0
      %v729 = vadd.f32 0.0, %v728
      %v730 = vpop.f32.mrb[0].mxu0
      %731 = vmatprep.mubr.bf16.mxu0 0
      %732 = vmatmul.mubr.bf16.gmra.mrb[0].mxu0 %v496
      %v733 = vpop.f32.mrb[0].mxu0
      %v734 = vadd.f32 0.0, %v733
      %v735 = vpop.f32.mrb[0].mxu0
      %v736 = vpop.f32.mrb[0].mxu0
      %v737 = vadd.f32 0.0, %v736
      %v738 = vpop.f32.mrb[0].mxu0
      %739 = vmatprep.mubr.bf16.mxu0 0
      %740 = vmatmul.mubr.bf16.gmra.mrb[0].mxu0 %v504
      %v741 = vpop.f32.mrb[0].mxu0
      %v742 = vadd.f32 0.0, %v741
      %v743 = vpop.f32.mrb[0].mxu0
      %v744 = vpop.f32.mrb[0].mxu0
      %v745 = vadd.f32 0.0, %v744
      %v746 = vpop.f32.mrb[0].mxu0
      %747 = vmatprep.mubr.bf16.mxu0 0
      %748 = vmatmul.mubr.bf16.gmra.mrb[0].mxu0 %v512
      %v749 = vpop.f32.mrb[0].mxu0
      %v750 = vadd.f32 0.0, %v749
      %v751 = vpop.f32.mrb[0].mxu0
      %v752 = vpop.f32.mrb[0].mxu0
      %v753 = vadd.f32 0.0, %v752
      %v754 = vpop.f32.mrb[0].mxu0
      %755 = vmatprep.mubr.bf16.mxu0 0
      %756 = vmatmul.mubr.bf16.gmra.mrb[0].mxu0 %v520
      %v757 = vpop.f32.mrb[0].mxu0
      %v758 = vadd.f32 0.0, %v757
      %v759 = vpop.f32.mrb[0].mxu0
      %v760 = vpop.f32.mrb[0].mxu0
      %v761 = vadd.f32 0.0, %v760
      %v762 = vpop.f32.mrb[0].mxu0
      %763 = vmatprep.mubr.bf16.mxu0 0
      %764 = vmatmul.mubr.bf16.gmra.mrb[0].mxu0 %v528
      %v765 = vpop.f32.mrb[0].mxu0
      %v766 = vadd.f32 0.0, %v765
      %v767 = vpop.f32.mrb[0].mxu0
      %v768 = vpop.f32.mrb[0].mxu0
      %v769 = vadd.f32 0.0, %v768
      %v770 = vpop.f32.mrb[0].mxu0
      %771 = vmatprep.mubr.bf16.mxu0 0
      %772 = vmatmul.mubr.bf16.gmra.mrb[0].mxu0 %v536
      %v773 = vpop.f32.mrb[0].mxu0
      %v774 = vadd.f32 0.0, %v773
      %v775 = vpop.f32.mrb[0].mxu0
      %v776 = vpop.f32.mrb[0].mxu0
      %v777 = vadd.f32 0.0, %v776
      %v778 = vpop.f32.mrb[0].mxu0
      %779 = vmatprep.mubr.bf16.mxu0 0
      %780 = vmatmul.mubr.bf16.gmra.mrb[0].mxu0 %v544
      %v781 = vpop.f32.mrb[0].mxu0
      %v782 = vadd.f32 0.0, %v781
      %v783 = vpop.f32.mrb[0].mxu0
      %v784 = vpop.f32.mrb[0].mxu0
      %v785 = vadd.f32 0.0, %v784
      %v786 = vpop.f32.mrb[0].mxu0
      %787 = vmatprep.mubr.bf16.mxu0 0
      %788 = vmatmul.mubr.bf16.gmra.mrb[0].mxu0 %v552
      %v789 = vpop.f32.mrb[0].mxu0
      %v790 = vadd.f32 0.0, %v789
      %v791 = vpop.f32.mrb[0].mxu0
      %v792 = vpop.f32.mrb[0].mxu0
      %v793 = vadd.f32 0.0, %v792
      %v794 = vpop.f32.mrb[0].mxu0
      %795 = vmatprep.mubr.bf16.mxu0 0
      %796 = vmatmul.mubr.bf16.gmra.mrb[0].mxu0 %v560
      %v797 = vpop.f32.mrb[0].mxu0
      %v798 = vadd.f32 0.0, %v797
      %v799 = vpop.f32.mrb[0].mxu0
      %v800 = vpop.f32.mrb[0].mxu0
      %v801 = vadd.f32 0.0, %v800
      %v802 = vpop.f32.mrb[0].mxu0
      %803 = vmatprep.mubr.bf16.mxu0 0
      %804 = vmatmul.mubr.bf16.gmra.mrb[0].mxu0 %v568
      %v805 = vpop.f32.mrb[0].mxu0
      %v806 = vadd.f32 0.0, %v805
      %v807 = vpop.f32.mrb[0].mxu0
      %v808 = vpop.f32.mrb[0].mxu0
      %v809 = vadd.f32 0.0, %v808
      %v810 = vpop.f32.mrb[0].mxu0
      %811 = vdwg.mxu0
      %v846 = vunpack.c.l.b16 %v293
      %v847 = vunpack.c.l.b16 %v294
      %v848 = vunpack.c.l.b16 %v295
      %v849 = vunpack.c.l.b16 %v296
      %v850 = vunpack.c.l.b16 %v297
      %v851 = vunpack.c.l.b16 %v298
      %v852 = vunpack.c.l.b16 %v299
      %v853 = vunpack.c.l.b16 %v300
      %v854 = vunpack.c.l.b16 %v301
      %v855 = vunpack.c.l.b16 %v302
      %v856 = vunpack.c.l.b16 %v303
      %v857 = vunpack.c.l.b16 %v304
      %v858 = vunpack.c.l.b16 %v305
      %v859 = vunpack.c.l.b16 %v306
      %v860 = vunpack.c.l.b16 %v307
      %v861 = vunpack.c.l.b16 %v308
      %v862 = vpack.c.b16 %v847, %v846
      %v863 = vpack.c.b16 %v849, %v848
      %v864 = vpack.c.b16 %v851, %v850
      %v865 = vpack.c.b16 %v853, %v852
      %v866 = vpack.c.b16 %v855, %v854
      %v867 = vpack.c.b16 %v857, %v856
      %v868 = vpack.c.b16 %v859, %v858
      %v869 = vpack.c.b16 %v861, %v860
      %878 = vmatprep.subr.bf16.mxu0 0
      %879 = vmatpush1.bf16.msra.mxu0 %v862
      %880 = vmatprep.subr.bf16.mxu0 0
      %881 = vmatpush1.bf16.msra.mxu0 %v863
      %882 = vmatprep.subr.bf16.mxu0 0
      %883 = vmatpush1.bf16.msra.mxu0 %v864
      %884 = vmatprep.subr.bf16.mxu0 0
      %885 = vmatpush1.bf16.msra.mxu0 %v865
      %886 = vmatprep.subr.bf16.mxu0 0
      %887 = vmatpush1.bf16.msra.mxu0 %v866
      %888 = vmatprep.subr.bf16.mxu0 0
      %889 = vmatpush1.bf16.msra.mxu0 %v867
      %890 = vmatprep.subr.bf16.mxu0 0
      %891 = vmatpush1.bf16.msra.mxu0 %v868
      %892 = vmatprep.subr.bf16.mxu0 0
      %893 = vmatpush1.bf16.msra.mxu0 %v869
      %894 = vmatprep.subr.bf16.mxu0 0
      %895 = vmatpush1.bf16.msra.mxu0 0
      %896 = vmatprep.subr.bf16.mxu0 0
      %897 = vmatpush1.bf16.msra.mxu0 0
      %898 = vmatprep.subr.bf16.mxu0 0
      %899 = vmatpush1.bf16.msra.mxu0 0
      %900 = vmatprep.subr.bf16.mxu0 0
      %901 = vmatpush1.bf16.msra.mxu0 0
      %902 = vmatprep.subr.bf16.mxu0 0
      %903 = vmatpush1.bf16.msra.mxu0 0
      %904 = vmatprep.subr.bf16.mxu0 0
      %905 = vmatpush1.bf16.msra.mxu0 0
      %906 = vmatprep.subr.bf16.mxu0 0
      %907 = vmatpush1.bf16.msra.mxu0 0
      %908 = vmatprep.subr.bf16.mxu0 0
      %909 = vmatpush1.bf16.msra.mxu0 0
      %910 = vmatprep.mubr.bf16.mxu0 0
      %911 = vmatmul.mubr.bf16.gmra.mrb[0].mxu0 %v401
      %v912 = vpop.f32.mrb[0].mxu0
      %v913 = vadd.f32 %v670, %v912
      %v914 = vpop.f32.mrb[0].mxu0
      %v915 = vpop.f32.mrb[0].mxu0
      %v916 = vadd.f32 %v673, %v915
      %v917 = vpop.f32.mrb[0].mxu0
      %918 = vmatprep.mubr.bf16.mxu0 0
      %919 = vmatmul.mubr.bf16.gmra.mrb[0].mxu0 %v402
      %v920 = vpop.f32.mrb[0].mxu0
      %v921 = vadd.f32 %v678, %v920
      %v922 = vpop.f32.mrb[0].mxu0
      %v923 = vpop.f32.mrb[0].mxu0
      %v924 = vadd.f32 %v681, %v923
      %v925 = vpop.f32.mrb[0].mxu0
      %926 = vmatprep.mubr.bf16.mxu0 0
      %927 = vmatmul.mubr.bf16.gmra.mrb[0].mxu0 %v403
      %v928 = vpop.f32.mrb[0].mxu0
      %v929 = vadd.f32 %v686, %v928
      %v930 = vpop.f32.mrb[0].mxu0
      %v931 = vpop.f32.mrb[0].mxu0
      %v932 = vadd.f32 %v689, %v931
      %v933 = vpop.f32.mrb[0].mxu0
      %934 = vmatprep.mubr.bf16.mxu0 0
      %935 = vmatmul.mubr.bf16.gmra.mrb[0].mxu0 %v404
      %v936 = vpop.f32.mrb[0].mxu0
      %v937 = vadd.f32 %v694, %v936
      %v938 = vpop.f32.mrb[0].mxu0
      %v939 = vpop.f32.mrb[0].mxu0
      %v940 = vadd.f32 %v697, %v939
      %v941 = vpop.f32.mrb[0].mxu0
      %942 = vmatprep.mubr.bf16.mxu0 0
      %943 = vmatmul.mubr.bf16.gmra.mrb[0].mxu0 %v405
      %v944 = vpop.f32.mrb[0].mxu0
      %v945 = vadd.f32 %v702, %v944
      %v946 = vpop.f32.mrb[0].mxu0
      %v947 = vpop.f32.mrb[0].mxu0
      %v948 = vadd.f32 %v705, %v947
      %v949 = vpop.f32.mrb[0].mxu0
      %950 = vmatprep.mubr.bf16.mxu0 0
      %951 = vmatmul.mubr.bf16.gmra.mrb[0].mxu0 %v406
      %v952 = vpop.f32.mrb[0].mxu0
      %v953 = vadd.f32 %v710, %v952
      %v954 = vpop.f32.mrb[0].mxu0
      %v955 = vpop.f32.mrb[0].mxu0
      %v956 = vadd.f32 %v713, %v955
      %v957 = vpop.f32.mrb[0].mxu0
      %958 = vmatprep.mubr.bf16.mxu0 0
      %959 = vmatmul.mubr.bf16.gmra.mrb[0].mxu0 %v407
      %v960 = vpop.f32.mrb[0].mxu0
      %v961 = vadd.f32 %v718, %v960
      %v962 = vpop.f32.mrb[0].mxu0
      %v963 = vpop.f32.mrb[0].mxu0
      %v964 = vadd.f32 %v721, %v963
      %v965 = vpop.f32.mrb[0].mxu0
      %966 = vmatprep.mubr.bf16.mxu0 0
      %967 = vmatmul.mubr.bf16.gmra.mrb[0].mxu0 %v408
      %v968 = vpop.f32.mrb[0].mxu0
      %v969 = vadd.f32 %v726, %v968
      %v970 = vpop.f32.mrb[0].mxu0
      %v971 = vpop.f32.mrb[0].mxu0
      %v972 = vadd.f32 %v729, %v971
      %v973 = vpop.f32.mrb[0].mxu0
      %974 = vmatprep.mubr.bf16.mxu0 0
      %975 = vmatmul.mubr.bf16.gmra.mrb[0].mxu0 %v409
      %v976 = vpop.f32.mrb[0].mxu0
      %v977 = vadd.f32 %v734, %v976
      %v978 = vpop.f32.mrb[0].mxu0
      %v979 = vpop.f32.mrb[0].mxu0
      %v980 = vadd.f32 %v737, %v979
      %v981 = vpop.f32.mrb[0].mxu0
      %982 = vmatprep.mubr.bf16.mxu0 0
      %983 = vmatmul.mubr.bf16.gmra.mrb[0].mxu0 %v410
      %v984 = vpop.f32.mrb[0].mxu0
      %v985 = vadd.f32 %v742, %v984
      %v986 = vpop.f32.mrb[0].mxu0
      %v987 = vpop.f32.mrb[0].mxu0
      %v988 = vadd.f32 %v745, %v987
      %v989 = vpop.f32.mrb[0].mxu0
      %990 = vmatprep.mubr.bf16.mxu0 0
      %991 = vmatmul.mubr.bf16.gmra.mrb[0].mxu0 %v411
      %v992 = vpop.f32.mrb[0].mxu0
      %v993 = vadd.f32 %v750, %v992
      %v994 = vpop.f32.mrb[0].mxu0
      %v995 = vpop.f32.mrb[0].mxu0
      %v996 = vadd.f32 %v753, %v995
      %v997 = vpop.f32.mrb[0].mxu0
      %998 = vmatprep.mubr.bf16.mxu0 0
      %999 = vmatmul.mubr.bf16.gmra.mrb[0].mxu0 %v412
      %v1000 = vpop.f32.mrb[0].mxu0
      %v1001 = vadd.f32 %v758, %v1000
      %v1002 = vpop.f32.mrb[0].mxu0
      %v1003 = vpop.f32.mrb[0].mxu0
      %v1004 = vadd.f32 %v761, %v1003
      %v1005 = vpop.f32.mrb[0].mxu0
      %1006 = vmatprep.mubr.bf16.mxu0 0
      %1007 = vmatmul.mubr.bf16.gmra.mrb[0].mxu0 %v413
      %v1008 = vpop.f32.mrb[0].mxu0
      %v1009 = vadd.f32 %v766, %v1008
      %v1010 = vpop.f32.mrb[0].mxu0
      %v1011 = vpop.f32.mrb[0].mxu0
      %v1012 = vadd.f32 %v769, %v1011
      %v1013 = vpop.f32.mrb[0].mxu0
      %1014 = vmatprep.mubr.bf16.mxu0 0
      %1015 = vmatmul.mubr.bf16.gmra.mrb[0].mxu0 %v414
      %v1016 = vpop.f32.mrb[0].mxu0
      %v1017 = vadd.f32 %v774, %v1016
      %v1018 = vpop.f32.mrb[0].mxu0
      %v1019 = vpop.f32.mrb[0].mxu0
      %v1020 = vadd.f32 %v777, %v1019
      %v1021 = vpop.f32.mrb[0].mxu0
      %1022 = vmatprep.mubr.bf16.mxu0 0
      %1023 = vmatmul.mubr.bf16.gmra.mrb[0].mxu0 %v415
      %v1024 = vpop.f32.mrb[0].mxu0
      %v1025 = vadd.f32 %v782, %v1024
      %v1026 = vpop.f32.mrb[0].mxu0
      %v1027 = vpop.f32.mrb[0].mxu0
      %v1028 = vadd.f32 %v785, %v1027
      %v1029 = vpop.f32.mrb[0].mxu0
      %1030 = vmatprep.mubr.bf16.mxu0 0
      %1031 = vmatmul.mubr.bf16.gmra.mrb[0].mxu0 %v416
      %v1032 = vpop.f32.mrb[0].mxu0
      %v1033 = vadd.f32 %v790, %v1032
      %v1034 = vpop.f32.mrb[0].mxu0
      %v1035 = vpop.f32.mrb[0].mxu0
      %v1036 = vadd.f32 %v793, %v1035
      %v1037 = vpop.f32.mrb[0].mxu0
      %1038 = vmatprep.mubr.bf16.mxu0 0
      %1039 = vmatmul.mubr.bf16.gmra.mrb[0].mxu0 %v417
      %v1040 = vpop.f32.mrb[0].mxu0
      %v1041 = vadd.f32 %v798, %v1040
      %v1042 = vpop.f32.mrb[0].mxu0
      %v1043 = vpop.f32.mrb[0].mxu0
      %v1044 = vadd.f32 %v801, %v1043
      %v1045 = vpop.f32.mrb[0].mxu0
      %1046 = vmatprep.mubr.bf16.mxu0 0
      %1047 = vmatmul.mubr.bf16.gmra.mrb[0].mxu0 %v418
      %v1048 = vpop.f32.mrb[0].mxu0
      %v1049 = vadd.f32 %v806, %v1048
      %v1050 = vpop.f32.mrb[0].mxu0
      %v1051 = vpop.f32.mrb[0].mxu0
      %v1052 = vadd.f32 %v809, %v1051
      %v1053 = vpop.f32.mrb[0].mxu0
      %1054 = vdwg.mxu0
      %v1055 = vld [vmem:[%s235] sm:$0xe]
      %s1056 = scalar_lea.vmem %s240, 128
      %v1057 = vld [vmem:[%s1056] sm:$0xf]
      %v1058 = vld [vmem:[%s1056 + $0x4] sm:$0xf]
      %v1059 = vld [vmem:[%s1056 + $0x8] sm:$0xf]
      %v1060 = vld [vmem:[%s1056 + $0xc] sm:$0xf]
      %v1061 = vld [vmem:[%s1056 + $0x10] sm:$0xf]
      %v1062 = vld [vmem:[%s1056 + $0x14] sm:$0xf]
      %v1063 = vld [vmem:[%s1056 + $0x18] sm:$0xf]
      %v1064 = vld [vmem:[%s1056 + $0x1c] sm:$0xf]
      %v1065 = vld [vmem:[%s1056 + $0x20] sm:$0xf]
      %v1066 = vld [vmem:[%s1056 + $0x24] sm:$0xf]
      %v1067 = vld [vmem:[%s1056 + $0x28] sm:$0xf]
      %v1068 = vld [vmem:[%s1056 + $0x2c] sm:$0xf]
      %v1069 = vld [vmem:[%s1056 + $0x30] sm:$0xf]
      %v1070 = vld [vmem:[%s1056 + $0x34] sm:$0xf]
      %v1071 = vld [vmem:[%s1056 + $0x38] sm:$0xf]
      %v1072 = vld [vmem:[%s1056 + $0x3c] sm:$0xf]
      %v1074 = vunpack.c.l.b16 %v1055
      %v1075 = vpack.c.b16 %v365, %v1074
      %vm1076 = vcmask 1046528
      %v1077 = vrot.slane %v1075, 1
      %v1078 = vrot.slane %v402, 1
      %v1079 = vsel %vm1076, %v1077, %v1078
      %v1080 = vrot.slane %v403, 1
      %v1081 = vsel %vm1076, %v1078, %v1080
      %v1082 = vrot.slane %v404, 1
      %v1083 = vsel %vm1076, %v1080, %v1082
      %v1084 = vrot.slane %v405, 1
      %v1085 = vsel %vm1076, %v1082, %v1084
      %v1086 = vrot.slane %v406, 1
      %v1087 = vsel %vm1076, %v1084, %v1086
      %v1088 = vrot.slane %v407, 1
      %v1089 = vsel %vm1076, %v1086, %v1088
      %v1090 = vrot.slane %v408, 1
      %v1091 = vsel %vm1076, %v1088, %v1090
      %v1092 = vrot.slane %v409, 1
      %v1093 = vsel %vm1076, %v1090, %v1092
      %v1094 = vrot.slane %v410, 1
      %v1095 = vsel %vm1076, %v1092, %v1094
      %v1096 = vrot.slane %v411, 1
      %v1097 = vsel %vm1076, %v1094, %v1096
      %v1098 = vrot.slane %v412, 1
      %v1099 = vsel %vm1076, %v1096, %v1098
      %v1100 = vrot.slane %v413, 1
      %v1101 = vsel %vm1076, %v1098, %v1100
      %v1102 = vrot.slane %v414, 1
      %v1103 = vsel %vm1076, %v1100, %v1102
      %v1104 = vrot.slane %v415, 1
      %v1105 = vsel %vm1076, %v1102, %v1104
      %v1106 = vrot.slane %v416, 1
      %v1107 = vsel %vm1076, %v1104, %v1106
      %v1108 = vrot.slane %v417, 1
      %v1109 = vsel %vm1076, %v1106, %v1108
      %v1110 = vrot.slane %v418, 1
      %v1111 = vsel %vm1076, %v1108, %v1110
      %v1112 = vrot.slane %v419, 1
      %v1113 = vsel %vm1076, %v1110, %v1112
      %v1148 = vunpack.c.l.b16 %v1057
      %v1149 = vunpack.c.l.b16 %v1058
      %v1150 = vunpack.c.l.b16 %v1059
      %v1151 = vunpack.c.l.b16 %v1060
      %v1152 = vunpack.c.l.b16 %v1061
      %v1153 = vunpack.c.l.b16 %v1062
      %v1154 = vunpack.c.l.b16 %v1063
      %v1155 = vunpack.c.l.b16 %v1064
      %v1156 = vunpack.c.l.b16 %v1065
      %v1157 = vunpack.c.l.b16 %v1066
      %v1158 = vunpack.c.l.b16 %v1067
      %v1159 = vunpack.c.l.b16 %v1068
      %v1160 = vunpack.c.l.b16 %v1069
      %v1161 = vunpack.c.l.b16 %v1070
      %v1162 = vunpack.c.l.b16 %v1071
      %v1163 = vunpack.c.l.b16 %v1072
      %v1164 = vpack.c.b16 %v1149, %v1148
      %v1165 = vpack.c.b16 %v1151, %v1150
      %v1166 = vpack.c.b16 %v1153, %v1152
      %v1167 = vpack.c.b16 %v1155, %v1154
      %v1168 = vpack.c.b16 %v1157, %v1156
      %v1169 = vpack.c.b16 %v1159, %v1158
      %v1170 = vpack.c.b16 %v1161, %v1160
      %v1171 = vpack.c.b16 %v1163, %v1162
      %1180 = vmatprep.subr.bf16.mxu0 0
      %1181 = vmatpush1.bf16.msra.mxu0 %v1164
      %1182 = vmatprep.subr.bf16.mxu0 0
      %1183 = vmatpush1.bf16.msra.mxu0 %v1165
      %1184 = vmatprep.subr.bf16.mxu0 0
      %1185 = vmatpush1.bf16.msra.mxu0 %v1166
      %1186 = vmatprep.subr.bf16.mxu0 0
      %1187 = vmatpush1.bf16.msra.mxu0 %v1167
      %1188 = vmatprep.subr.bf16.mxu0 0
      %1189 = vmatpush1.bf16.msra.mxu0 %v1168
      %1190 = vmatprep.subr.bf16.mxu0 0
      %1191 = vmatpush1.bf16.msra.mxu0 %v1169
      %1192 = vmatprep.subr.bf16.mxu0 0
      %1193 = vmatpush1.bf16.msra.mxu0 %v1170
      %1194 = vmatprep.subr.bf16.mxu0 0
      %1195 = vmatpush1.bf16.msra.mxu0 %v1171
      %1196 = vmatprep.subr.bf16.mxu0 0
      %1197 = vmatpush1.bf16.msra.mxu0 0
      %1198 = vmatprep.subr.bf16.mxu0 0
      %1199 = vmatpush1.bf16.msra.mxu0 0
      %1200 = vmatprep.subr.bf16.mxu0 0
      %1201 = vmatpush1.bf16.msra.mxu0 0
      %1202 = vmatprep.subr.bf16.mxu0 0
      %1203 = vmatpush1.bf16.msra.mxu0 0
      %1204 = vmatprep.subr.bf16.mxu0 0
      %1205 = vmatpush1.bf16.msra.mxu0 0
      %1206 = vmatprep.subr.bf16.mxu0 0
      %1207 = vmatpush1.bf16.msra.mxu0 0
      %1208 = vmatprep.subr.bf16.mxu0 0
      %1209 = vmatpush1.bf16.msra.mxu0 0
      %1210 = vmatprep.subr.bf16.mxu0 0
      %1211 = vmatpush1.bf16.msra.mxu0 0
      %1212 = vmatprep.mubr.bf16.mxu0 0
      %1213 = vmatmul.mubr.bf16.gmra.mrb[0].mxu0 %v1079
      %v1214 = vpop.f32.mrb[0].mxu0
      %v1215 = vadd.f32 0.0, %v1214
      %v1216 = vpop.f32.mrb[0].mxu0
      %v1217 = vpop.f32.mrb[0].mxu0
      %v1218 = vadd.f32 0.0, %v1217
      %v1219 = vpop.f32.mrb[0].mxu0
      %1220 = vmatprep.mubr.bf16.mxu0 0
      %1221 = vmatmul.mubr.bf16.gmra.mrb[0].mxu0 %v1081
      %v1222 = vpop.f32.mrb[0].mxu0
      %v1223 = vadd.f32 0.0, %v1222
      %v1224 = vpop.f32.mrb[0].mxu0
      %v1225 = vpop.f32.mrb[0].mxu0
      %v1226 = vadd.f32 0.0, %v1225
      %v1227 = vpop.f32.mrb[0].mxu0
      %1228 = vmatprep.mubr.bf16.mxu0 0
      %1229 = vmatmul.mubr.bf16.gmra.mrb[0].mxu0 %v1083
      %v1230 = vpop.f32.mrb[0].mxu0
      %v1231 = vadd.f32 0.0, %v1230
      %v1232 = vpop.f32.mrb[0].mxu0
      %v1233 = vpop.f32.mrb[0].mxu0
      %v1234 = vadd.f32 0.0, %v1233
      %v1235 = vpop.f32.mrb[0].mxu0
      %1236 = vmatprep.mubr.bf16.mxu0 0
      %1237 = vmatmul.mubr.bf16.gmra.mrb[0].mxu0 %v1085
      %v1238 = vpop.f32.mrb[0].mxu0
      %v1239 = vadd.f32 0.0, %v1238
      %v1240 = vpop.f32.mrb[0].mxu0
      %v1241 = vpop.f32.mrb[0].mxu0
      %v1242 = vadd.f32 0.0, %v1241
      %v1243 = vpop.f32.mrb[0].mxu0
      %1244 = vmatprep.mubr.bf16.mxu0 0
      %1245 = vmatmul.mubr.bf16.gmra.mrb[0].mxu0 %v1087
      %v1246 = vpop.f32.mrb[0].mxu0
      %v1247 = vadd.f32 0.0, %v1246
      %v1248 = vpop.f32.mrb[0].mxu0
      %v1249 = vpop.f32.mrb[0].mxu0
      %v1250 = vadd.f32 0.0, %v1249
      %v1251 = vpop.f32.mrb[0].mxu0
      %1252 = vmatprep.mubr.bf16.mxu0 0
      %1253 = vmatmul.mubr.bf16.gmra.mrb[0].mxu0 %v1089
      %v1254 = vpop.f32.mrb[0].mxu0
      %v1255 = vadd.f32 0.0, %v1254
      %v1256 = vpop.f32.mrb[0].mxu0
      %v1257 = vpop.f32.mrb[0].mxu0
      %v1258 = vadd.f32 0.0, %v1257
      %v1259 = vpop.f32.mrb[0].mxu0
      %1260 = vmatprep.mubr.bf16.mxu0 0
      %1261 = vmatmul.mubr.bf16.gmra.mrb[0].mxu0 %v1091
      %v1262 = vpop.f32.mrb[0].mxu0
      %v1263 = vadd.f32 0.0, %v1262
      %v1264 = vpop.f32.mrb[0].mxu0
      %v1265 = vpop.f32.mrb[0].mxu0
      %v1266 = vadd.f32 0.0, %v1265
      %v1267 = vpop.f32.mrb[0].mxu0
      %1268 = vmatprep.mubr.bf16.mxu0 0
      %1269 = vmatmul.mubr.bf16.gmra.mrb[0].mxu0 %v1093
      %v1270 = vpop.f32.mrb[0].mxu0
      %v1271 = vadd.f32 0.0, %v1270
      %v1272 = vpop.f32.mrb[0].mxu0
      %v1273 = vpop.f32.mrb[0].mxu0
      %v1274 = vadd.f32 0.0, %v1273
      %v1275 = vpop.f32.mrb[0].mxu0
      %1276 = vmatprep.mubr.bf16.mxu0 0
      %1277 = vmatmul.mubr.bf16.gmra.mrb[0].mxu0 %v1095
      %v1278 = vpop.f32.mrb[0].mxu0
      %v1279 = vadd.f32 0.0, %v1278
      %v1280 = vpop.f32.mrb[0].mxu0
      %v1281 = vpop.f32.mrb[0].mxu0
      %v1282 = vadd.f32 0.0, %v1281
      %v1283 = vpop.f32.mrb[0].mxu0
      %1284 = vmatprep.mubr.bf16.mxu0 0
      %1285 = vmatmul.mubr.bf16.gmra.mrb[0].mxu0 %v1097
      %v1286 = vpop.f32.mrb[0].mxu0
      %v1287 = vadd.f32 0.0, %v1286
      %v1288 = vpop.f32.mrb[0].mxu0
      %v1289 = vpop.f32.mrb[0].mxu0
      %v1290 = vadd.f32 0.0, %v1289
      %v1291 = vpop.f32.mrb[0].mxu0
      %1292 = vmatprep.mubr.bf16.mxu0 0
      %1293 = vmatmul.mubr.bf16.gmra.mrb[0].mxu0 %v1099
      %v1294 = vpop.f32.mrb[0].mxu0
      %v1295 = vadd.f32 0.0, %v1294
      %v1296 = vpop.f32.mrb[0].mxu0
      %v1297 = vpop.f32.mrb[0].mxu0
      %v1298 = vadd.f32 0.0, %v1297
      %v1299 = vpop.f32.mrb[0].mxu0
      %1300 = vmatprep.mubr.bf16.mxu0 0
      %1301 = vmatmul.mubr.bf16.gmra.mrb[0].mxu0 %v1101
      %v1302 = vpop.f32.mrb[0].mxu0
      %v1303 = vadd.f32 0.0, %v1302
      %v1304 = vpop.f32.mrb[0].mxu0
      %v1305 = vpop.f32.mrb[0].mxu0
      %v1306 = vadd.f32 0.0, %v1305
      %v1307 = vpop.f32.mrb[0].mxu0
      %1308 = vmatprep.mubr.bf16.mxu0 0
      %1309 = vmatmul.mubr.bf16.gmra.mrb[0].mxu0 %v1103
      %v1310 = vpop.f32.mrb[0].mxu0
      %v1311 = vadd.f32 0.0, %v1310
      %v1312 = vpop.f32.mrb[0].mxu0
      %v1313 = vpop.f32.mrb[0].mxu0
      %v1314 = vadd.f32 0.0, %v1313
      %v1315 = vpop.f32.mrb[0].mxu0
      %1316 = vmatprep.mubr.bf16.mxu0 0
      %1317 = vmatmul.mubr.bf16.gmra.mrb[0].mxu0 %v1105
      %v1318 = vpop.f32.mrb[0].mxu0
      %v1319 = vadd.f32 0.0, %v1318
      %v1320 = vpop.f32.mrb[0].mxu0
      %v1321 = vpop.f32.mrb[0].mxu0
      %v1322 = vadd.f32 0.0, %v1321
      %v1323 = vpop.f32.mrb[0].mxu0
      %1324 = vmatprep.mubr.bf16.mxu0 0
      %1325 = vmatmul.mubr.bf16.gmra.mrb[0].mxu0 %v1107
      %v1326 = vpop.f32.mrb[0].mxu0
      %v1327 = vadd.f32 0.0, %v1326
      %v1328 = vpop.f32.mrb[0].mxu0
      %v1329 = vpop.f32.mrb[0].mxu0
      %v1330 = vadd.f32 0.0, %v1329
      %v1331 = vpop.f32.mrb[0].mxu0
      %1332 = vmatprep.mubr.bf16.mxu0 0
      %1333 = vmatmul.mubr.bf16.gmra.mrb[0].mxu0 %v1109
      %v1334 = vpop.f32.mrb[0].mxu0
      %v1335 = vadd.f32 0.0, %v1334
      %v1336 = vpop.f32.mrb[0].mxu0
      %v1337 = vpop.f32.mrb[0].mxu0
      %v1338 = vadd.f32 0.0, %v1337
      %v1339 = vpop.f32.mrb[0].mxu0
      %1340 = vmatprep.mubr.bf16.mxu0 0
      %1341 = vmatmul.mubr.bf16.gmra.mrb[0].mxu0 %v1111
      %v1342 = vpop.f32.mrb[0].mxu0
      %v1343 = vadd.f32 0.0, %v1342
      %v1344 = vpop.f32.mrb[0].mxu0
      %v1345 = vpop.f32.mrb[0].mxu0
      %v1346 = vadd.f32 0.0, %v1345
      %v1347 = vpop.f32.mrb[0].mxu0
      %1348 = vmatprep.mubr.bf16.mxu0 0
      %1349 = vmatmul.mubr.bf16.gmra.mrb[0].mxu0 %v1113
      %v1350 = vpop.f32.mrb[0].mxu0
      %v1351 = vadd.f32 0.0, %v1350
      %v1352 = vpop.f32.mrb[0].mxu0
      %v1353 = vpop.f32.mrb[0].mxu0
      %v1354 = vadd.f32 0.0, %v1353
      %v1355 = vpop.f32.mrb[0].mxu0
      %1356 = vdwg.mxu0
      %v1357 = vadd.f32 %v913, %v1215
      %v1358 = vadd.f32 %v916, %v1218
      %v1359 = vadd.f32 %v921, %v1223
      %v1360 = vadd.f32 %v924, %v1226
      %v1361 = vadd.f32 %v929, %v1231
      %v1362 = vadd.f32 %v932, %v1234
      %v1363 = vadd.f32 %v937, %v1239
      %v1364 = vadd.f32 %v940, %v1242
      %v1365 = vadd.f32 %v945, %v1247
      %v1366 = vadd.f32 %v948, %v1250
      %v1367 = vadd.f32 %v953, %v1255
      %v1368 = vadd.f32 %v956, %v1258
      %v1369 = vadd.f32 %v961, %v1263
      %v1370 = vadd.f32 %v964, %v1266
      %v1371 = vadd.f32 %v969, %v1271
      %v1372 = vadd.f32 %v972, %v1274
      %v1373 = vadd.f32 %v977, %v1279
      %v1374 = vadd.f32 %v980, %v1282
      %v1375 = vadd.f32 %v985, %v1287
      %v1376 = vadd.f32 %v988, %v1290
      %v1377 = vadd.f32 %v993, %v1295
      %v1378 = vadd.f32 %v996, %v1298
      %v1379 = vadd.f32 %v1001, %v1303
      %v1380 = vadd.f32 %v1004, %v1306
      %v1381 = vadd.f32 %v1009, %v1311
      %v1382 = vadd.f32 %v1012, %v1314
      %v1383 = vadd.f32 %v1017, %v1319
      %v1384 = vadd.f32 %v1020, %v1322
      %v1385 = vadd.f32 %v1025, %v1327
      %v1386 = vadd.f32 %v1028, %v1330
      %v1387 = vadd.f32 %v1033, %v1335
      %v1388 = vadd.f32 %v1036, %v1338
      %v1389 = vadd.f32 %v1041, %v1343
      %v1390 = vadd.f32 %v1044, %v1346
      %v1391 = vadd.f32 %v1049, %v1351
      %v1392 = vadd.f32 %v1052, %v1354
      %v1393 = vld [vmem:[%s235 + $0x8] sm:$0xe]
      %v1394 = vld [vmem:[%s235 + $0xc] sm:$0xf]
      %v1395 = vld [vmem:[%s235 + $0x10] sm:$0xf]
      %v1396 = vld [vmem:[%s235 + $0x14] sm:$0xf]
      %v1397 = vld [vmem:[%s235 + $0x18] sm:$0xf]
      %v1398 = vld [vmem:[%s235 + $0x1c] sm:$0xf]
      %v1399 = vld [vmem:[%s235 + $0x20] sm:$0xf]
      %v1400 = vld [vmem:[%s235 + $0x24] sm:$0xf]
      %v1401 = vld [vmem:[%s235 + $0x28] sm:$0xf]
      %v1402 = vld [vmem:[%s235 + $0x2c] sm:$0xf]
      %v1403 = vld [vmem:[%s235 + $0x30] sm:$0xf]
      %v1404 = vld [vmem:[%s235 + $0x34] sm:$0xf]
      %v1405 = vld [vmem:[%s235 + $0x38] sm:$0xf]
      %v1406 = vld [vmem:[%s235 + $0x3c] sm:$0xf]
      %v1407 = vld [vmem:[%s235 + $0x40] sm:$0xf]
      %v1408 = vld [vmem:[%s235 + $0x44] sm:$0xf]
      %v1409 = vld [vmem:[%s235 + $0x48] sm:$0xf]
      %v1410 = vld [vmem:[%s235 + $0x4c] sm:$0xf]
      %v1411 = vld [vmem:[%s235 + $0x50] sm:$0xf]
      %v1412 = vld [vmem:[%s235 + $0x54] sm:$0xf]
      %v1413 = vld [vmem:[%s235 + $0x58] sm:$0xf]
      %v1414 = vld [vmem:[%s235 + $0x5c] sm:$0xf]
      %v1415 = vld [vmem:[%s235 + $0x60] sm:$0xf]
      %v1416 = vld [vmem:[%s235 + $0x64] sm:$0xf]
      %v1417 = vld [vmem:[%s235 + $0x68] sm:$0xf]
      %v1418 = vld [vmem:[%s235 + $0x6c] sm:$0xf]
      %v1419 = vld [vmem:[%s235 + $0x70] sm:$0xf]
      %v1420 = vld [vmem:[%s235 + $0x74] sm:$0xf]
      %v1421 = vld [vmem:[%s235 + $0x78] sm:$0xf]
      %v1422 = vld [vmem:[%s235 + $0x7c] sm:$0xf]
      %v1423 = vld [vmem:[%s235 + $0x80] sm:$0xf]
      %v1424 = vld [vmem:[%s235 + $0x84] sm:$0xf]
      %v1425 = vld [vmem:[%s235 + $0x88] sm:$0xf]
      %v1426 = vld [vmem:[%s235 + $0x8c] sm:$0xf]
      %v1427 = vld [vmem:[%s235 + $0x90] sm:$0xf]
      %v1428 = vld [vmem:[%s235 + $0x94] sm:$0xf]
      %v1429 = vld [vmem:[%s235 + $0x98] sm:$0x1]
      %s1430 = scalar_lea.vmem %s240, 192
      %v1431 = vld [vmem:[%s1430] sm:$0xf]
      %v1432 = vld [vmem:[%s1430 + $0x4] sm:$0xf]
      %v1433 = vld [vmem:[%s1430 + $0x8] sm:$0xf]
      %v1434 = vld [vmem:[%s1430 + $0xc] sm:$0xf]
      %v1435 = vld [vmem:[%s1430 + $0x10] sm:$0xf]
      %v1436 = vld [vmem:[%s1430 + $0x14] sm:$0xf]
      %v1437 = vld [vmem:[%s1430 + $0x18] sm:$0xf]
      %v1438 = vld [vmem:[%s1430 + $0x1c] sm:$0xf]
      %v1439 = vld [vmem:[%s1430 + $0x20] sm:$0xf]
      %v1440 = vld [vmem:[%s1430 + $0x24] sm:$0xf]
      %v1441 = vld [vmem:[%s1430 + $0x28] sm:$0xf]
      %v1442 = vld [vmem:[%s1430 + $0x2c] sm:$0xf]
      %v1443 = vld [vmem:[%s1430 + $0x30] sm:$0xf]
      %v1444 = vld [vmem:[%s1430 + $0x34] sm:$0xf]
      %v1445 = vld [vmem:[%s1430 + $0x38] sm:$0xf]
      %v1446 = vld [vmem:[%s1430 + $0x3c] sm:$0xf]
      %v1484 = vunpack.c.l.b16 %v1393
      %v1485 = vunpack.c.l.b16 %v1394
      %v1486 = vunpack.c.l.b16 %v1395
      %v1487 = vunpack.c.l.b16 %v1396
      %v1488 = vunpack.c.l.b16 %v1397
      %v1489 = vunpack.c.l.b16 %v1398
      %v1490 = vunpack.c.l.b16 %v1399
      %v1491 = vunpack.c.l.b16 %v1400
      %v1492 = vunpack.c.l.b16 %v1401
      %v1493 = vunpack.c.l.b16 %v1402
      %v1494 = vunpack.c.l.b16 %v1403
      %v1495 = vunpack.c.l.b16 %v1404
      %v1496 = vunpack.c.l.b16 %v1405
      %v1497 = vunpack.c.l.b16 %v1406
      %v1498 = vunpack.c.l.b16 %v1407
      %v1499 = vunpack.c.l.b16 %v1408
      %v1500 = vunpack.c.l.b16 %v1409
      %v1501 = vunpack.c.l.b16 %v1410
      %v1502 = vunpack.c.l.b16 %v1411
      %v1503 = vunpack.c.l.b16 %v1412
      %v1504 = vunpack.c.l.b16 %v1413
      %v1505 = vunpack.c.l.b16 %v1414
      %v1506 = vunpack.c.l.b16 %v1415
      %v1507 = vunpack.c.l.b16 %v1416
      %v1508 = vunpack.c.l.b16 %v1417
      %v1509 = vunpack.c.l.b16 %v1418
      %v1510 = vunpack.c.l.b16 %v1419
      %v1511 = vunpack.c.l.b16 %v1420
      %v1512 = vunpack.c.l.b16 %v1421
      %v1513 = vunpack.c.l.b16 %v1422
      %v1514 = vunpack.c.l.b16 %v1423
      %v1515 = vunpack.c.l.b16 %v1424
      %v1516 = vunpack.c.l.b16 %v1425
      %v1517 = vunpack.c.l.b16 %v1426
      %v1518 = vunpack.c.l.b16 %v1427
      %v1519 = vunpack.c.l.b16 %v1428
      %v1520 = vunpack.c.l.b16 %v1429
      %v1521 = vpack.c.b16 %v1485, %v1484
      %v1522 = vpack.c.b16 %v1487, %v1486
      %v1523 = vpack.c.b16 %v1489, %v1488
      %v1524 = vpack.c.b16 %v1491, %v1490
      %v1525 = vpack.c.b16 %v1493, %v1492
      %v1526 = vpack.c.b16 %v1495, %v1494
      %v1527 = vpack.c.b16 %v1497, %v1496
      %v1528 = vpack.c.b16 %v1499, %v1498
      %v1529 = vpack.c.b16 %v1501, %v1500
      %v1530 = vpack.c.b16 %v1503, %v1502
      %v1531 = vpack.c.b16 %v1505, %v1504
      %v1532 = vpack.c.b16 %v1507, %v1506
      %v1533 = vpack.c.b16 %v1509, %v1508
      %v1534 = vpack.c.b16 %v1511, %v1510
      %v1535 = vpack.c.b16 %v1513, %v1512
      %v1536 = vpack.c.b16 %v1515, %v1514
      %v1537 = vpack.c.b16 %v1517, %v1516
      %v1538 = vpack.c.b16 %v1519, %v1518
      %v1539 = vpack.c.b16 %v1520, %v1520
      %v1540 = vrot.slane %v1521, 1
      %v1541 = vrot.slane %v1522, 1
      %v1542 = vsel %vm1076, %v1540, %v1541
      %v1543 = vrot.slane %v1523, 1
      %v1544 = vsel %vm1076, %v1541, %v1543
      %v1545 = vrot.slane %v1524, 1
      %v1546 = vsel %vm1076, %v1543, %v1545
      %v1547 = vrot.slane %v1525, 1
      %v1548 = vsel %vm1076, %v1545, %v1547
      %v1549 = vrot.slane %v1526, 1
      %v1550 = vsel %vm1076, %v1547, %v1549
      %v1551 = vrot.slane %v1527, 1
      %v1552 = vsel %vm1076, %v1549, %v1551
      %v1553 = vrot.slane %v1528, 1
      %v1554 = vsel %vm1076, %v1551, %v1553
      %v1555 = vrot.slane %v1529, 1
      %v1556 = vsel %vm1076, %v1553, %v1555
      %v1557 = vrot.slane %v1530, 1
      %v1558 = vsel %vm1076, %v1555, %v1557
      %v1559 = vrot.slane %v1531, 1
      %v1560 = vsel %vm1076, %v1557, %v1559
      %v1561 = vrot.slane %v1532, 1
      %v1562 = vsel %vm1076, %v1559, %v1561
      %v1563 = vrot.slane %v1533, 1
      %v1564 = vsel %vm1076, %v1561, %v1563
      %v1565 = vrot.slane %v1534, 1
      %v1566 = vsel %vm1076, %v1563, %v1565
      %v1567 = vrot.slane %v1535, 1
      %v1568 = vsel %vm1076, %v1565, %v1567
      %v1569 = vrot.slane %v1536, 1
      %v1570 = vsel %vm1076, %v1567, %v1569
      %v1571 = vrot.slane %v1537, 1
      %v1572 = vsel %vm1076, %v1569, %v1571
      %v1573 = vrot.slane %v1538, 1
      %v1574 = vsel %vm1076, %v1571, %v1573
      %v1575 = vrot.slane %v1539, 1
      %v1576 = vsel %vm1076, %v1573, %v1575
      %v1611 = vunpack.c.l.b16 %v1431
      %v1612 = vunpack.c.l.b16 %v1432
      %v1613 = vunpack.c.l.b16 %v1433
      %v1614 = vunpack.c.l.b16 %v1434
      %v1615 = vunpack.c.l.b16 %v1435
      %v1616 = vunpack.c.l.b16 %v1436
      %v1617 = vunpack.c.l.b16 %v1437
      %v1618 = vunpack.c.l.b16 %v1438
      %v1619 = vunpack.c.l.b16 %v1439
      %v1620 = vunpack.c.l.b16 %v1440
      %v1621 = vunpack.c.l.b16 %v1441
      %v1622 = vunpack.c.l.b16 %v1442
      %v1623 = vunpack.c.l.b16 %v1443
      %v1624 = vunpack.c.l.b16 %v1444
      %v1625 = vunpack.c.l.b16 %v1445
      %v1626 = vunpack.c.l.b16 %v1446
      %v1627 = vpack.c.b16 %v1612, %v1611
      %v1628 = vpack.c.b16 %v1614, %v1613
      %v1629 = vpack.c.b16 %v1616, %v1615
      %v1630 = vpack.c.b16 %v1618, %v1617
      %v1631 = vpack.c.b16 %v1620, %v1619
      %v1632 = vpack.c.b16 %v1622, %v1621
      %v1633 = vpack.c.b16 %v1624, %v1623
      %v1634 = vpack.c.b16 %v1626, %v1625
      %1643 = vmatprep.subr.bf16.mxu0 0
      %1644 = vmatpush1.bf16.msra.mxu0 %v1627
      %1645 = vmatprep.subr.bf16.mxu0 0
      %1646 = vmatpush1.bf16.msra.mxu0 %v1628
      %1647 = vmatprep.subr.bf16.mxu0 0
      %1648 = vmatpush1.bf16.msra.mxu0 %v1629
      %1649 = vmatprep.subr.bf16.mxu0 0
      %1650 = vmatpush1.bf16.msra.mxu0 %v1630
      %1651 = vmatprep.subr.bf16.mxu0 0
      %1652 = vmatpush1.bf16.msra.mxu0 %v1631
      %1653 = vmatprep.subr.bf16.mxu0 0
      %1654 = vmatpush1.bf16.msra.mxu0 %v1632
      %1655 = vmatprep.subr.bf16.mxu0 0
      %1656 = vmatpush1.bf16.msra.mxu0 %v1633
      %1657 = vmatprep.subr.bf16.mxu0 0
      %1658 = vmatpush1.bf16.msra.mxu0 %v1634
      %1659 = vmatprep.subr.bf16.mxu0 0
      %1660 = vmatpush1.bf16.msra.mxu0 0
      %1661 = vmatprep.subr.bf16.mxu0 0
      %1662 = vmatpush1.bf16.msra.mxu0 0
      %1663 = vmatprep.subr.bf16.mxu0 0
      %1664 = vmatpush1.bf16.msra.mxu0 0
      %1665 = vmatprep.subr.bf16.mxu0 0
      %1666 = vmatpush1.bf16.msra.mxu0 0
      %1667 = vmatprep.subr.bf16.mxu0 0
      %1668 = vmatpush1.bf16.msra.mxu0 0
      %1669 = vmatprep.subr.bf16.mxu0 0
      %1670 = vmatpush1.bf16.msra.mxu0 0
      %1671 = vmatprep.subr.bf16.mxu0 0
      %1672 = vmatpush1.bf16.msra.mxu0 0
      %1673 = vmatprep.subr.bf16.mxu0 0
      %1674 = vmatpush1.bf16.msra.mxu0 0
      %1675 = vmatprep.mubr.bf16.mxu0 0
      %1676 = vmatmul.mubr.bf16.gmra.mrb[0].mxu0 %v1542
      %v1677 = vpop.f32.mrb[0].mxu0
      %v1678 = vadd.f32 0.0, %v1677
      %v1679 = vpop.f32.mrb[0].mxu0
      %v1680 = vpop.f32.mrb[0].mxu0
      %v1681 = vadd.f32 0.0, %v1680
      %v1682 = vpop.f32.mrb[0].mxu0
      %1683 = vmatprep.mubr.bf16.mxu0 0
      %1684 = vmatmul.mubr.bf16.gmra.mrb[0].mxu0 %v1544
      %v1685 = vpop.f32.mrb[0].mxu0
      %v1686 = vadd.f32 0.0, %v1685
      %v1687 = vpop.f32.mrb[0].mxu0
      %v1688 = vpop.f32.mrb[0].mxu0
      %v1689 = vadd.f32 0.0, %v1688
      %v1690 = vpop.f32.mrb[0].mxu0
      %1691 = vmatprep.mubr.bf16.mxu0 0
      %1692 = vmatmul.mubr.bf16.gmra.mrb[0].mxu0 %v1546
      %v1693 = vpop.f32.mrb[0].mxu0
      %v1694 = vadd.f32 0.0, %v1693
      %v1695 = vpop.f32.mrb[0].mxu0
      %v1696 = vpop.f32.mrb[0].mxu0
      %v1697 = vadd.f32 0.0, %v1696
      %v1698 = vpop.f32.mrb[0].mxu0
      %1699 = vmatprep.mubr.bf16.mxu0 0
      %1700 = vmatmul.mubr.bf16.gmra.mrb[0].mxu0 %v1548
      %v1701 = vpop.f32.mrb[0].mxu0
      %v1702 = vadd.f32 0.0, %v1701
      %v1703 = vpop.f32.mrb[0].mxu0
      %v1704 = vpop.f32.mrb[0].mxu0
      %v1705 = vadd.f32 0.0, %v1704
      %v1706 = vpop.f32.mrb[0].mxu0
      %1707 = vmatprep.mubr.bf16.mxu0 0
      %1708 = vmatmul.mubr.bf16.gmra.mrb[0].mxu0 %v1550
      %v1709 = vpop.f32.mrb[0].mxu0
      %v1710 = vadd.f32 0.0, %v1709
      %v1711 = vpop.f32.mrb[0].mxu0
      %v1712 = vpop.f32.mrb[0].mxu0
      %v1713 = vadd.f32 0.0, %v1712
      %v1714 = vpop.f32.mrb[0].mxu0
      %1715 = vmatprep.mubr.bf16.mxu0 0
      %1716 = vmatmul.mubr.bf16.gmra.mrb[0].mxu0 %v1552
      %v1717 = vpop.f32.mrb[0].mxu0
      %v1718 = vadd.f32 0.0, %v1717
      %v1719 = vpop.f32.mrb[0].mxu0
      %v1720 = vpop.f32.mrb[0].mxu0
      %v1721 = vadd.f32 0.0, %v1720
      %v1722 = vpop.f32.mrb[0].mxu0
      %1723 = vmatprep.mubr.bf16.mxu0 0
      %1724 = vmatmul.mubr.bf16.gmra.mrb[0].mxu0 %v1554
      %v1725 = vpop.f32.mrb[0].mxu0
      %v1726 = vadd.f32 0.0, %v1725
      %v1727 = vpop.f32.mrb[0].mxu0
      %v1728 = vpop.f32.mrb[0].mxu0
      %v1729 = vadd.f32 0.0, %v1728
      %v1730 = vpop.f32.mrb[0].mxu0
      %1731 = vmatprep.mubr.bf16.mxu0 0
      %1732 = vmatmul.mubr.bf16.gmra.mrb[0].mxu0 %v1556
      %v1733 = vpop.f32.mrb[0].mxu0
      %v1734 = vadd.f32 0.0, %v1733
      %v1735 = vpop.f32.mrb[0].mxu0
      %v1736 = vpop.f32.mrb[0].mxu0
      %v1737 = vadd.f32 0.0, %v1736
      %v1738 = vpop.f32.mrb[0].mxu0
      %1739 = vmatprep.mubr.bf16.mxu0 0
      %1740 = vmatmul.mubr.bf16.gmra.mrb[0].mxu0 %v1558
      %v1741 = vpop.f32.mrb[0].mxu0
      %v1742 = vadd.f32 0.0, %v1741
      %v1743 = vpop.f32.mrb[0].mxu0
      %v1744 = vpop.f32.mrb[0].mxu0
      %v1745 = vadd.f32 0.0, %v1744
      %v1746 = vpop.f32.mrb[0].mxu0
      %1747 = vmatprep.mubr.bf16.mxu0 0
      %1748 = vmatmul.mubr.bf16.gmra.mrb[0].mxu0 %v1560
      %v1749 = vpop.f32.mrb[0].mxu0
      %v1750 = vadd.f32 0.0, %v1749
      %v1751 = vpop.f32.mrb[0].mxu0
      %v1752 = vpop.f32.mrb[0].mxu0
      %v1753 = vadd.f32 0.0, %v1752
      %v1754 = vpop.f32.mrb[0].mxu0
      %1755 = vmatprep.mubr.bf16.mxu0 0
      %1756 = vmatmul.mubr.bf16.gmra.mrb[0].mxu0 %v1562
      %v1757 = vpop.f32.mrb[0].mxu0
      %v1758 = vadd.f32 0.0, %v1757
      %v1759 = vpop.f32.mrb[0].mxu0
      %v1760 = vpop.f32.mrb[0].mxu0
      %v1761 = vadd.f32 0.0, %v1760
      %v1762 = vpop.f32.mrb[0].mxu0
      %1763 = vmatprep.mubr.bf16.mxu0 0
      %1764 = vmatmul.mubr.bf16.gmra.mrb[0].mxu0 %v1564
      %v1765 = vpop.f32.mrb[0].mxu0
      %v1766 = vadd.f32 0.0, %v1765
      %v1767 = vpop.f32.mrb[0].mxu0
      %v1768 = vpop.f32.mrb[0].mxu0
      %v1769 = vadd.f32 0.0, %v1768
      %v1770 = vpop.f32.mrb[0].mxu0
      %1771 = vmatprep.mubr.bf16.mxu0 0
      %1772 = vmatmul.mubr.bf16.gmra.mrb[0].mxu0 %v1566
      %v1773 = vpop.f32.mrb[0].mxu0
      %v1774 = vadd.f32 0.0, %v1773
      %v1775 = vpop.f32.mrb[0].mxu0
      %v1776 = vpop.f32.mrb[0].mxu0
      %v1777 = vadd.f32 0.0, %v1776
      %v1778 = vpop.f32.mrb[0].mxu0
      %1779 = vmatprep.mubr.bf16.mxu0 0
      %1780 = vmatmul.mubr.bf16.gmra.mrb[0].mxu0 %v1568
      %v1781 = vpop.f32.mrb[0].mxu0
      %v1782 = vadd.f32 0.0, %v1781
      %v1783 = vpop.f32.mrb[0].mxu0
      %v1784 = vpop.f32.mrb[0].mxu0
      %v1785 = vadd.f32 0.0, %v1784
      %v1786 = vpop.f32.mrb[0].mxu0
      %1787 = vmatprep.mubr.bf16.mxu0 0
      %1788 = vmatmul.mubr.bf16.gmra.mrb[0].mxu0 %v1570
      %v1789 = vpop.f32.mrb[0].mxu0
      %v1790 = vadd.f32 0.0, %v1789
      %v1791 = vpop.f32.mrb[0].mxu0
      %v1792 = vpop.f32.mrb[0].mxu0
      %v1793 = vadd.f32 0.0, %v1792
      %v1794 = vpop.f32.mrb[0].mxu0
      %1795 = vmatprep.mubr.bf16.mxu0 0
      %1796 = vmatmul.mubr.bf16.gmra.mrb[0].mxu0 %v1572
      %v1797 = vpop.f32.mrb[0].mxu0
      %v1798 = vadd.f32 0.0, %v1797
      %v1799 = vpop.f32.mrb[0].mxu0
      %v1800 = vpop.f32.mrb[0].mxu0
      %v1801 = vadd.f32 0.0, %v1800
      %v1802 = vpop.f32.mrb[0].mxu0
      %1803 = vmatprep.mubr.bf16.mxu0 0
      %1804 = vmatmul.mubr.bf16.gmra.mrb[0].mxu0 %v1574
      %v1805 = vpop.f32.mrb[0].mxu0
      %v1806 = vadd.f32 0.0, %v1805
      %v1807 = vpop.f32.mrb[0].mxu0
      %v1808 = vpop.f32.mrb[0].mxu0
      %v1809 = vadd.f32 0.0, %v1808
      %v1810 = vpop.f32.mrb[0].mxu0
      %1811 = vmatprep.mubr.bf16.mxu0 0
      %1812 = vmatmul.mubr.bf16.gmra.mrb[0].mxu0 %v1576
      %v1813 = vpop.f32.mrb[0].mxu0
      %v1814 = vadd.f32 0.0, %v1813
      %v1815 = vpop.f32.mrb[0].mxu0
      %v1816 = vpop.f32.mrb[0].mxu0
      %v1817 = vadd.f32 0.0, %v1816
      %v1818 = vpop.f32.mrb[0].mxu0
      %1819 = vdwg.mxu0
      %v1820 = vadd.f32 %v1357, %v1678
      %v1821 = vadd.f32 %v1358, %v1681
      %v1822 = vadd.f32 %v1359, %v1686
      %v1823 = vadd.f32 %v1360, %v1689
      %v1824 = vadd.f32 %v1361, %v1694
      %v1825 = vadd.f32 %v1362, %v1697
      %v1826 = vadd.f32 %v1363, %v1702
      %v1827 = vadd.f32 %v1364, %v1705
      %v1828 = vadd.f32 %v1365, %v1710
      %v1829 = vadd.f32 %v1366, %v1713
      %v1830 = vadd.f32 %v1367, %v1718
      %v1831 = vadd.f32 %v1368, %v1721
      %v1832 = vadd.f32 %v1369, %v1726
      %v1833 = vadd.f32 %v1370, %v1729
      %v1834 = vadd.f32 %v1371, %v1734
      %v1835 = vadd.f32 %v1372, %v1737
      %v1836 = vadd.f32 %v1373, %v1742
      %v1837 = vadd.f32 %v1374, %v1745
      %v1838 = vadd.f32 %v1375, %v1750
      %v1839 = vadd.f32 %v1376, %v1753
      %v1840 = vadd.f32 %v1377, %v1758
      %v1841 = vadd.f32 %v1378, %v1761
      %v1842 = vadd.f32 %v1379, %v1766
      %v1843 = vadd.f32 %v1380, %v1769
      %v1844 = vadd.f32 %v1381, %v1774
      %v1845 = vadd.f32 %v1382, %v1777
      %v1846 = vadd.f32 %v1383, %v1782
      %v1847 = vadd.f32 %v1384, %v1785
      %v1848 = vadd.f32 %v1385, %v1790
      %v1849 = vadd.f32 %v1386, %v1793
      %v1850 = vadd.f32 %v1387, %v1798
      %v1851 = vadd.f32 %v1388, %v1801
      %v1852 = vadd.f32 %v1389, %v1806
      %v1853 = vadd.f32 %v1390, %v1809
      %v1854 = vadd.f32 %v1391, %v1814
      %v1855 = vadd.f32 %v1392, %v1817
      %v1856 = vld [vmem:[%s235 + $0x98] sm:$0x3]
      %s1857 = scalar_lea.vmem %s240, 256
      %v1858 = vld [vmem:[%s1857] sm:$0xf]
      %v1859 = vld [vmem:[%s1857 + $0x4] sm:$0xf]
      %v1860 = vld [vmem:[%s1857 + $0x8] sm:$0xf]
      %v1861 = vld [vmem:[%s1857 + $0xc] sm:$0xf]
      %v1862 = vld [vmem:[%s1857 + $0x10] sm:$0xf]
      %v1863 = vld [vmem:[%s1857 + $0x14] sm:$0xf]
      %v1864 = vld [vmem:[%s1857 + $0x18] sm:$0xf]
      %v1865 = vld [vmem:[%s1857 + $0x1c] sm:$0xf]
      %v1866 = vld [vmem:[%s1857 + $0x20] sm:$0xf]
      %v1867 = vld [vmem:[%s1857 + $0x24] sm:$0xf]
      %v1868 = vld [vmem:[%s1857 + $0x28] sm:$0xf]
      %v1869 = vld [vmem:[%s1857 + $0x2c] sm:$0xf]
      %v1870 = vld [vmem:[%s1857 + $0x30] sm:$0xf]
      %v1871 = vld [vmem:[%s1857 + $0x34] sm:$0xf]
      %v1872 = vld [vmem:[%s1857 + $0x38] sm:$0xf]
      %v1873 = vld [vmem:[%s1857 + $0x3c] sm:$0xf]
      %v1875 = vunpack.c.l.b16 %v1856
      %v1876 = vpack.c.b16 %v1875, %v1875
      %vm1877 = vsmask.f32 6400
      %v1879 = vshrl.u32 %v1521, 16
      %v1881 = vrot.slane %v1879, 1
      %v1882 = vshll.u32 %v1521, 16
      %v1884 = vrot.slane %v1882, 2
      %v1885 = vor.u32 %v1881, %v1884
      %v1887 = vshrl.u32 %v1522, 16
      %v1889 = vrot.slane %v1887, 1
      %v1890 = vshll.u32 %v1522, 16
      %v1892 = vrot.slane %v1890, 2
      %v1893 = vor.u32 %v1889, %v1892
      %v1894 = vsel %vm1877, %v1885, %v1893
      %v1896 = vshrl.u32 %v1523, 16
      %v1898 = vrot.slane %v1896, 1
      %v1899 = vshll.u32 %v1523, 16
      %v1901 = vrot.slane %v1899, 2
      %v1902 = vor.u32 %v1898, %v1901
      %v1903 = vsel %vm1877, %v1893, %v1902
      %v1905 = vshrl.u32 %v1524, 16
      %v1907 = vrot.slane %v1905, 1
      %v1908 = vshll.u32 %v1524, 16
      %v1910 = vrot.slane %v1908, 2
      %v1911 = vor.u32 %v1907, %v1910
      %v1912 = vsel %vm1877, %v1902, %v1911
      %v1914 = vshrl.u32 %v1525, 16
      %v1916 = vrot.slane %v1914, 1
      %v1917 = vshll.u32 %v1525, 16
      %v1919 = vrot.slane %v1917, 2
      %v1920 = vor.u32 %v1916, %v1919
      %v1921 = vsel %vm1877, %v1911, %v1920
      %v1923 = vshrl.u32 %v1526, 16
      %v1925 = vrot.slane %v1923, 1
      %v1926 = vshll.u32 %v1526, 16
      %v1928 = vrot.slane %v1926, 2
      %v1929 = vor.u32 %v1925, %v1928
      %v1930 = vsel %vm1877, %v1920, %v1929
      %v1932 = vshrl.u32 %v1527, 16
      %v1934 = vrot.slane %v1932, 1
      %v1935 = vshll.u32 %v1527, 16
      %v1937 = vrot.slane %v1935, 2
      %v1938 = vor.u32 %v1934, %v1937
      %v1939 = vsel %vm1877, %v1929, %v1938
      %v1941 = vshrl.u32 %v1528, 16
      %v1943 = vrot.slane %v1941, 1
      %v1944 = vshll.u32 %v1528, 16
      %v1946 = vrot.slane %v1944, 2
      %v1947 = vor.u32 %v1943, %v1946
      %v1948 = vsel %vm1877, %v1938, %v1947
      %v1950 = vshrl.u32 %v1529, 16
      %v1952 = vrot.slane %v1950, 1
      %v1953 = vshll.u32 %v1529, 16
      %v1955 = vrot.slane %v1953, 2
      %v1956 = vor.u32 %v1952, %v1955
      %v1957 = vsel %vm1877, %v1947, %v1956
      %v1959 = vshrl.u32 %v1530, 16
      %v1961 = vrot.slane %v1959, 1
      %v1962 = vshll.u32 %v1530, 16
      %v1964 = vrot.slane %v1962, 2
      %v1965 = vor.u32 %v1961, %v1964
      %v1966 = vsel %vm1877, %v1956, %v1965
      %v1968 = vshrl.u32 %v1531, 16
      %v1970 = vrot.slane %v1968, 1
      %v1971 = vshll.u32 %v1531, 16
      %v1973 = vrot.slane %v1971, 2
      %v1974 = vor.u32 %v1970, %v1973
      %v1975 = vsel %vm1877, %v1965, %v1974
      %v1977 = vshrl.u32 %v1532, 16
      %v1979 = vrot.slane %v1977, 1
      %v1980 = vshll.u32 %v1532, 16
      %v1982 = vrot.slane %v1980, 2
      %v1983 = vor.u32 %v1979, %v1982
      %v1984 = vsel %vm1877, %v1974, %v1983
      %v1986 = vshrl.u32 %v1533, 16
      %v1988 = vrot.slane %v1986, 1
      %v1989 = vshll.u32 %v1533, 16
      %v1991 = vrot.slane %v1989, 2
      %v1992 = vor.u32 %v1988, %v1991
      %v1993 = vsel %vm1877, %v1983, %v1992
      %v1995 = vshrl.u32 %v1534, 16
      %v1997 = vrot.slane %v1995, 1
      %v1998 = vshll.u32 %v1534, 16
      %v2000 = vrot.slane %v1998, 2
      %v2001 = vor.u32 %v1997, %v2000
      %v2002 = vsel %vm1877, %v1992, %v2001
      %v2004 = vshrl.u32 %v1535, 16
      %v2006 = vrot.slane %v2004, 1
      %v2007 = vshll.u32 %v1535, 16
      %v2009 = vrot.slane %v2007, 2
      %v2010 = vor.u32 %v2006, %v2009
      %v2011 = vsel %vm1877, %v2001, %v2010
      %v2013 = vshrl.u32 %v1536, 16
      %v2015 = vrot.slane %v2013, 1
      %v2016 = vshll.u32 %v1536, 16
      %v2018 = vrot.slane %v2016, 2
      %v2019 = vor.u32 %v2015, %v2018
      %v2020 = vsel %vm1877, %v2010, %v2019
      %v2022 = vshrl.u32 %v1537, 16
      %v2024 = vrot.slane %v2022, 1
      %v2025 = vshll.u32 %v1537, 16
      %v2027 = vrot.slane %v2025, 2
      %v2028 = vor.u32 %v2024, %v2027
      %v2029 = vsel %vm1877, %v2019, %v2028
      %v2031 = vshrl.u32 %v1538, 16
      %v2033 = vrot.slane %v2031, 1
      %v2034 = vshll.u32 %v1538, 16
      %v2036 = vrot.slane %v2034, 2
      %v2037 = vor.u32 %v2033, %v2036
      %v2038 = vsel %vm1877, %v2028, %v2037
      %v2040 = vshrl.u32 %v1876, 16
      %v2042 = vrot.slane %v2040, 1
      %v2043 = vshll.u32 %v1876, 16
      %v2045 = vrot.slane %v2043, 2
      %v2046 = vor.u32 %v2042, %v2045
      %v2047 = vsel %vm1877, %v2037, %v2046
      %v2082 = vunpack.c.l.b16 %v1858
      %v2083 = vunpack.c.l.b16 %v1859
      %v2084 = vunpack.c.l.b16 %v1860
      %v2085 = vunpack.c.l.b16 %v1861
      %v2086 = vunpack.c.l.b16 %v1862
      %v2087 = vunpack.c.l.b16 %v1863
      %v2088 = vunpack.c.l.b16 %v1864
      %v2089 = vunpack.c.l.b16 %v1865
      %v2090 = vunpack.c.l.b16 %v1866
      %v2091 = vunpack.c.l.b16 %v1867
      %v2092 = vunpack.c.l.b16 %v1868
      %v2093 = vunpack.c.l.b16 %v1869
      %v2094 = vunpack.c.l.b16 %v1870
      %v2095 = vunpack.c.l.b16 %v1871
      %v2096 = vunpack.c.l.b16 %v1872
      %v2097 = vunpack.c.l.b16 %v1873
      %v2098 = vpack.c.b16 %v2083, %v2082
      %v2099 = vpack.c.b16 %v2085, %v2084
      %v2100 = vpack.c.b16 %v2087, %v2086
      %v2101 = vpack.c.b16 %v2089, %v2088
      %v2102 = vpack.c.b16 %v2091, %v2090
      %v2103 = vpack.c.b16 %v2093, %v2092
      %v2104 = vpack.c.b16 %v2095, %v2094
      %v2105 = vpack.c.b16 %v2097, %v2096
      %2114 = vmatprep.subr.bf16.mxu0 0
      %2115 = vmatpush1.bf16.msra.mxu0 %v2098
      %2116 = vmatprep.subr.bf16.mxu0 0
      %2117 = vmatpush1.bf16.msra.mxu0 %v2099
      %2118 = vmatprep.subr.bf16.mxu0 0
      %2119 = vmatpush1.bf16.msra.mxu0 %v2100
      %2120 = vmatprep.subr.bf16.mxu0 0
      %2121 = vmatpush1.bf16.msra.mxu0 %v2101
      %2122 = vmatprep.subr.bf16.mxu0 0
      %2123 = vmatpush1.bf16.msra.mxu0 %v2102
      %2124 = vmatprep.subr.bf16.mxu0 0
      %2125 = vmatpush1.bf16.msra.mxu0 %v2103
      %2126 = vmatprep.subr.bf16.mxu0 0
      %2127 = vmatpush1.bf16.msra.mxu0 %v2104
      %2128 = vmatprep.subr.bf16.mxu0 0
      %2129 = vmatpush1.bf16.msra.mxu0 %v2105
      %2130 = vmatprep.subr.bf16.mxu0 0
      %2131 = vmatpush1.bf16.msra.mxu0 0
      %2132 = vmatprep.subr.bf16.mxu0 0
      %2133 = vmatpush1.bf16.msra.mxu0 0
      %2134 = vmatprep.subr.bf16.mxu0 0
      %2135 = vmatpush1.bf16.msra.mxu0 0
      %2136 = vmatprep.subr.bf16.mxu0 0
      %2137 = vmatpush1.bf16.msra.mxu0 0
      %2138 = vmatprep.subr.bf16.mxu0 0
      %2139 = vmatpush1.bf16.msra.mxu0 0
      %2140 = vmatprep.subr.bf16.mxu0 0
      %2141 = vmatpush1.bf16.msra.mxu0 0
      %2142 = vmatprep.subr.bf16.mxu0 0
      %2143 = vmatpush1.bf16.msra.mxu0 0
      %2144 = vmatprep.subr.bf16.mxu0 0
      %2145 = vmatpush1.bf16.msra.mxu0 0
      %2146 = vmatprep.mubr.bf16.mxu0 0
      %2147 = vmatmul.mubr.bf16.gmra.mrb[0].mxu0 %v1894
      %v2148 = vpop.f32.mrb[0].mxu0
      %v2149 = vadd.f32 0.0, %v2148
      %v2150 = vpop.f32.mrb[0].mxu0
      %v2151 = vpop.f32.mrb[0].mxu0
      %v2152 = vadd.f32 0.0, %v2151
      %v2153 = vpop.f32.mrb[0].mxu0
      %2154 = vmatprep.mubr.bf16.mxu0 0
      %2155 = vmatmul.mubr.bf16.gmra.mrb[0].mxu0 %v1903
      %v2156 = vpop.f32.mrb[0].mxu0
      %v2157 = vadd.f32 0.0, %v2156
      %v2158 = vpop.f32.mrb[0].mxu0
      %v2159 = vpop.f32.mrb[0].mxu0
      %v2160 = vadd.f32 0.0, %v2159
      %v2161 = vpop.f32.mrb[0].mxu0
      %2162 = vmatprep.mubr.bf16.mxu0 0
      %2163 = vmatmul.mubr.bf16.gmra.mrb[0].mxu0 %v1912
      %v2164 = vpop.f32.mrb[0].mxu0
      %v2165 = vadd.f32 0.0, %v2164
      %v2166 = vpop.f32.mrb[0].mxu0
      %v2167 = vpop.f32.mrb[0].mxu0
      %v2168 = vadd.f32 0.0, %v2167
      %v2169 = vpop.f32.mrb[0].mxu0
      %2170 = vmatprep.mubr.bf16.mxu0 0
      %2171 = vmatmul.mubr.bf16.gmra.mrb[0].mxu0 %v1921
      %v2172 = vpop.f32.mrb[0].mxu0
      %v2173 = vadd.f32 0.0, %v2172
      %v2174 = vpop.f32.mrb[0].mxu0
      %v2175 = vpop.f32.mrb[0].mxu0
      %v2176 = vadd.f32 0.0, %v2175
      %v2177 = vpop.f32.mrb[0].mxu0
      %2178 = vmatprep.mubr.bf16.mxu0 0
      %2179 = vmatmul.mubr.bf16.gmra.mrb[0].mxu0 %v1930
      %v2180 = vpop.f32.mrb[0].mxu0
      %v2181 = vadd.f32 0.0, %v2180
      %v2182 = vpop.f32.mrb[0].mxu0
      %v2183 = vpop.f32.mrb[0].mxu0
      %v2184 = vadd.f32 0.0, %v2183
      %v2185 = vpop.f32.mrb[0].mxu0
      %2186 = vmatprep.mubr.bf16.mxu0 0
      %2187 = vmatmul.mubr.bf16.gmra.mrb[0].mxu0 %v1939
      %v2188 = vpop.f32.mrb[0].mxu0
      %v2189 = vadd.f32 0.0, %v2188
      %v2190 = vpop.f32.mrb[0].mxu0
      %v2191 = vpop.f32.mrb[0].mxu0
      %v2192 = vadd.f32 0.0, %v2191
      %v2193 = vpop.f32.mrb[0].mxu0
      %2194 = vmatprep.mubr.bf16.mxu0 0
      %2195 = vmatmul.mubr.bf16.gmra.mrb[0].mxu0 %v1948
      %v2196 = vpop.f32.mrb[0].mxu0
      %v2197 = vadd.f32 0.0, %v2196
      %v2198 = vpop.f32.mrb[0].mxu0
      %v2199 = vpop.f32.mrb[0].mxu0
      %v2200 = vadd.f32 0.0, %v2199
      %v2201 = vpop.f32.mrb[0].mxu0
      %2202 = vmatprep.mubr.bf16.mxu0 0
      %2203 = vmatmul.mubr.bf16.gmra.mrb[0].mxu0 %v1957
      %v2204 = vpop.f32.mrb[0].mxu0
      %v2205 = vadd.f32 0.0, %v2204
      %v2206 = vpop.f32.mrb[0].mxu0
      %v2207 = vpop.f32.mrb[0].mxu0
      %v2208 = vadd.f32 0.0, %v2207
      %v2209 = vpop.f32.mrb[0].mxu0
      %2210 = vmatprep.mubr.bf16.mxu0 0
      %2211 = vmatmul.mubr.bf16.gmra.mrb[0].mxu0 %v1966
      %v2212 = vpop.f32.mrb[0].mxu0
      %v2213 = vadd.f32 0.0, %v2212
      %v2214 = vpop.f32.mrb[0].mxu0
      %v2215 = vpop.f32.mrb[0].mxu0
      %v2216 = vadd.f32 0.0, %v2215
      %v2217 = vpop.f32.mrb[0].mxu0
      %2218 = vmatprep.mubr.bf16.mxu0 0
      %2219 = vmatmul.mubr.bf16.gmra.mrb[0].mxu0 %v1975
      %v2220 = vpop.f32.mrb[0].mxu0
      %v2221 = vadd.f32 0.0, %v2220
      %v2222 = vpop.f32.mrb[0].mxu0
      %v2223 = vpop.f32.mrb[0].mxu0
      %v2224 = vadd.f32 0.0, %v2223
      %v2225 = vpop.f32.mrb[0].mxu0
      %2226 = vmatprep.mubr.bf16.mxu0 0
      %2227 = vmatmul.mubr.bf16.gmra.mrb[0].mxu0 %v1984
      %v2228 = vpop.f32.mrb[0].mxu0
      %v2229 = vadd.f32 0.0, %v2228
      %v2230 = vpop.f32.mrb[0].mxu0
      %v2231 = vpop.f32.mrb[0].mxu0
      %v2232 = vadd.f32 0.0, %v2231
      %v2233 = vpop.f32.mrb[0].mxu0
      %2234 = vmatprep.mubr.bf16.mxu0 0
      %2235 = vmatmul.mubr.bf16.gmra.mrb[0].mxu0 %v1993
      %v2236 = vpop.f32.mrb[0].mxu0
      %v2237 = vadd.f32 0.0, %v2236
      %v2238 = vpop.f32.mrb[0].mxu0
      %v2239 = vpop.f32.mrb[0].mxu0
      %v2240 = vadd.f32 0.0, %v2239
      %v2241 = vpop.f32.mrb[0].mxu0
      %2242 = vmatprep.mubr.bf16.mxu0 0
      %2243 = vmatmul.mubr.bf16.gmra.mrb[0].mxu0 %v2002
      %v2244 = vpop.f32.mrb[0].mxu0
      %v2245 = vadd.f32 0.0, %v2244
      %v2246 = vpop.f32.mrb[0].mxu0
      %v2247 = vpop.f32.mrb[0].mxu0
      %v2248 = vadd.f32 0.0, %v2247
      %v2249 = vpop.f32.mrb[0].mxu0
      %2250 = vmatprep.mubr.bf16.mxu0 0
      %2251 = vmatmul.mubr.bf16.gmra.mrb[0].mxu0 %v2011
      %v2252 = vpop.f32.mrb[0].mxu0
      %v2253 = vadd.f32 0.0, %v2252
      %v2254 = vpop.f32.mrb[0].mxu0
      %v2255 = vpop.f32.mrb[0].mxu0
      %v2256 = vadd.f32 0.0, %v2255
      %v2257 = vpop.f32.mrb[0].mxu0
      %2258 = vmatprep.mubr.bf16.mxu0 0
      %2259 = vmatmul.mubr.bf16.gmra.mrb[0].mxu0 %v2020
      %v2260 = vpop.f32.mrb[0].mxu0
      %v2261 = vadd.f32 0.0, %v2260
      %v2262 = vpop.f32.mrb[0].mxu0
      %v2263 = vpop.f32.mrb[0].mxu0
      %v2264 = vadd.f32 0.0, %v2263
      %v2265 = vpop.f32.mrb[0].mxu0
      %2266 = vmatprep.mubr.bf16.mxu0 0
      %2267 = vmatmul.mubr.bf16.gmra.mrb[0].mxu0 %v2029
      %v2268 = vpop.f32.mrb[0].mxu0
      %v2269 = vadd.f32 0.0, %v2268
      %v2270 = vpop.f32.mrb[0].mxu0
      %v2271 = vpop.f32.mrb[0].mxu0
      %v2272 = vadd.f32 0.0, %v2271
      %v2273 = vpop.f32.mrb[0].mxu0
      %2274 = vmatprep.mubr.bf16.mxu0 0
      %2275 = vmatmul.mubr.bf16.gmra.mrb[0].mxu0 %v2038
      %v2276 = vpop.f32.mrb[0].mxu0
      %v2277 = vadd.f32 0.0, %v2276
      %v2278 = vpop.f32.mrb[0].mxu0
      %v2279 = vpop.f32.mrb[0].mxu0
      %v2280 = vadd.f32 0.0, %v2279
      %v2281 = vpop.f32.mrb[0].mxu0
      %2282 = vmatprep.mubr.bf16.mxu0 0
      %2283 = vmatmul.mubr.bf16.gmra.mrb[0].mxu0 %v2047
      %v2284 = vpop.f32.mrb[0].mxu0
      %v2285 = vadd.f32 0.0, %v2284
      %v2286 = vpop.f32.mrb[0].mxu0
      %v2287 = vpop.f32.mrb[0].mxu0
      %v2288 = vadd.f32 0.0, %v2287
      %v2289 = vpop.f32.mrb[0].mxu0
      %2290 = vdwg.mxu0
      %v2291 = vadd.f32 %v1820, %v2149
      %v2292 = vadd.f32 %v1821, %v2152
      %v2293 = vadd.f32 %v1822, %v2157
      %v2294 = vadd.f32 %v1823, %v2160
      %v2295 = vadd.f32 %v1824, %v2165
      %v2296 = vadd.f32 %v1825, %v2168
      %v2297 = vadd.f32 %v1826, %v2173
      %v2298 = vadd.f32 %v1827, %v2176
      %v2299 = vadd.f32 %v1828, %v2181
      %v2300 = vadd.f32 %v1829, %v2184
      %v2301 = vadd.f32 %v1830, %v2189
      %v2302 = vadd.f32 %v1831, %v2192
      %v2303 = vadd.f32 %v1832, %v2197
      %v2304 = vadd.f32 %v1833, %v2200
      %v2305 = vadd.f32 %v1834, %v2205
      %v2306 = vadd.f32 %v1835, %v2208
      %v2307 = vadd.f32 %v1836, %v2213
      %v2308 = vadd.f32 %v1837, %v2216
      %v2309 = vadd.f32 %v1838, %v2221
      %v2310 = vadd.f32 %v1839, %v2224
      %v2311 = vadd.f32 %v1840, %v2229
      %v2312 = vadd.f32 %v1841, %v2232
      %v2313 = vadd.f32 %v1842, %v2237
      %v2314 = vadd.f32 %v1843, %v2240
      %v2315 = vadd.f32 %v1844, %v2245
      %v2316 = vadd.f32 %v1845, %v2248
      %v2317 = vadd.f32 %v1846, %v2253
      %v2318 = vadd.f32 %v1847, %v2256
      %v2319 = vadd.f32 %v1848, %v2261
      %v2320 = vadd.f32 %v1849, %v2264
      %v2321 = vadd.f32 %v1850, %v2269
      %v2322 = vadd.f32 %v1851, %v2272
      %v2323 = vadd.f32 %v1852, %v2277
      %v2324 = vadd.f32 %v1853, %v2280
      %v2325 = vadd.f32 %v1854, %v2285
      %v2326 = vadd.f32 %v1855, %v2288
      %v2327 = vld [vmem:[%s235 + $0x8] sm:$0xc]
      %s2328 = scalar_lea.vmem %s240, 320
      %v2329 = vld [vmem:[%s2328] sm:$0xf]
      %v2330 = vld [vmem:[%s2328 + $0x4] sm:$0xf]
      %v2331 = vld [vmem:[%s2328 + $0x8] sm:$0xf]
      %v2332 = vld [vmem:[%s2328 + $0xc] sm:$0xf]
      %v2333 = vld [vmem:[%s2328 + $0x10] sm:$0xf]
      %v2334 = vld [vmem:[%s2328 + $0x14] sm:$0xf]
      %v2335 = vld [vmem:[%s2328 + $0x18] sm:$0xf]
      %v2336 = vld [vmem:[%s2328 + $0x1c] sm:$0xf]
      %v2337 = vld [vmem:[%s2328 + $0x20] sm:$0xf]
      %v2338 = vld [vmem:[%s2328 + $0x24] sm:$0xf]
      %v2339 = vld [vmem:[%s2328 + $0x28] sm:$0xf]
      %v2340 = vld [vmem:[%s2328 + $0x2c] sm:$0xf]
      %v2341 = vld [vmem:[%s2328 + $0x30] sm:$0xf]
      %v2342 = vld [vmem:[%s2328 + $0x34] sm:$0xf]
      %v2343 = vld [vmem:[%s2328 + $0x38] sm:$0xf]
      %v2344 = vld [vmem:[%s2328 + $0x3c] sm:$0xf]
      %v2346 = vunpack.c.l.b16 %v2327
      %v2347 = vpack.c.b16 %v1485, %v2346
      %vm2348 = vcmask 1045504
      %v2349 = vrot.slane %v2347, 2
      %v2350 = vrot.slane %v1522, 2
      %v2351 = vsel %vm2348, %v2349, %v2350
      %v2352 = vrot.slane %v1523, 2
      %v2353 = vsel %vm2348, %v2350, %v2352
      %v2354 = vrot.slane %v1524, 2
      %v2355 = vsel %vm2348, %v2352, %v2354
      %v2356 = vrot.slane %v1525, 2
      %v2357 = vsel %vm2348, %v2354, %v2356
      %v2358 = vrot.slane %v1526, 2
      %v2359 = vsel %vm2348, %v2356, %v2358
      %v2360 = vrot.slane %v1527, 2
      %v2361 = vsel %vm2348, %v2358, %v2360
      %v2362 = vrot.slane %v1528, 2
      %v2363 = vsel %vm2348, %v2360, %v2362
      %v2364 = vrot.slane %v1529, 2
      %v2365 = vsel %vm2348, %v2362, %v2364
      %v2366 = vrot.slane %v1530, 2
      %v2367 = vsel %vm2348, %v2364, %v2366
      %v2368 = vrot.slane %v1531, 2
      %v2369 = vsel %vm2348, %v2366, %v2368
      %v2370 = vrot.slane %v1532, 2
      %v2371 = vsel %vm2348, %v2368, %v2370
      %v2372 = vrot.slane %v1533, 2
      %v2373 = vsel %vm2348, %v2370, %v2372
      %v2374 = vrot.slane %v1534, 2
      %v2375 = vsel %vm2348, %v2372, %v2374
      %v2376 = vrot.slane %v1535, 2
      %v2377 = vsel %vm2348, %v2374, %v2376
      %v2378 = vrot.slane %v1536, 2
      %v2379 = vsel %vm2348, %v2376, %v2378
      %v2380 = vrot.slane %v1537, 2
      %v2381 = vsel %vm2348, %v2378, %v2380
      %v2382 = vrot.slane %v1538, 2
      %v2383 = vsel %vm2348, %v2380, %v2382
      %v2384 = vrot.slane %v1876, 2
      %v2385 = vsel %vm2348, %v2382, %v2384
      %v2420 = vunpack.c.l.b16 %v2329
      %v2421 = vunpack.c.l.b16 %v2330
      %v2422 = vunpack.c.l.b16 %v2331
      %v2423 = vunpack.c.l.b16 %v2332
      %v2424 = vunpack.c.l.b16 %v2333
      %v2425 = vunpack.c.l.b16 %v2334
      %v2426 = vunpack.c.l.b16 %v2335
      %v2427 = vunpack.c.l.b16 %v2336
      %v2428 = vunpack.c.l.b16 %v2337
      %v2429 = vunpack.c.l.b16 %v2338
      %v2430 = vunpack.c.l.b16 %v2339
      %v2431 = vunpack.c.l.b16 %v2340
      %v2432 = vunpack.c.l.b16 %v2341
      %v2433 = vunpack.c.l.b16 %v2342
      %v2434 = vunpack.c.l.b16 %v2343
      %v2435 = vunpack.c.l.b16 %v2344
      %v2436 = vpack.c.b16 %v2421, %v2420
      %v2437 = vpack.c.b16 %v2423, %v2422
      %v2438 = vpack.c.b16 %v2425, %v2424
      %v2439 = vpack.c.b16 %v2427, %v2426
      %v2440 = vpack.c.b16 %v2429, %v2428
      %v2441 = vpack.c.b16 %v2431, %v2430
      %v2442 = vpack.c.b16 %v2433, %v2432
      %v2443 = vpack.c.b16 %v2435, %v2434
      %2452 = vmatprep.subr.bf16.mxu0 0
      %2453 = vmatpush1.bf16.msra.mxu0 %v2436
      %2454 = vmatprep.subr.bf16.mxu0 0
      %2455 = vmatpush1.bf16.msra.mxu0 %v2437
      %2456 = vmatprep.subr.bf16.mxu0 0
      %2457 = vmatpush1.bf16.msra.mxu0 %v2438
      %2458 = vmatprep.subr.bf16.mxu0 0
      %2459 = vmatpush1.bf16.msra.mxu0 %v2439
      %2460 = vmatprep.subr.bf16.mxu0 0
      %2461 = vmatpush1.bf16.msra.mxu0 %v2440
      %2462 = vmatprep.subr.bf16.mxu0 0
      %2463 = vmatpush1.bf16.msra.mxu0 %v2441
      %2464 = vmatprep.subr.bf16.mxu0 0
      %2465 = vmatpush1.bf16.msra.mxu0 %v2442
      %2466 = vmatprep.subr.bf16.mxu0 0
      %2467 = vmatpush1.bf16.msra.mxu0 %v2443
      %2468 = vmatprep.subr.bf16.mxu0 0
      %2469 = vmatpush1.bf16.msra.mxu0 0
      %2470 = vmatprep.subr.bf16.mxu0 0
      %2471 = vmatpush1.bf16.msra.mxu0 0
      %2472 = vmatprep.subr.bf16.mxu0 0
      %2473 = vmatpush1.bf16.msra.mxu0 0
      %2474 = vmatprep.subr.bf16.mxu0 0
      %2475 = vmatpush1.bf16.msra.mxu0 0
      %2476 = vmatprep.subr.bf16.mxu0 0
      %2477 = vmatpush1.bf16.msra.mxu0 0
      %2478 = vmatprep.subr.bf16.mxu0 0
      %2479 = vmatpush1.bf16.msra.mxu0 0
      %2480 = vmatprep.subr.bf16.mxu0 0
      %2481 = vmatpush1.bf16.msra.mxu0 0
      %2482 = vmatprep.subr.bf16.mxu0 0
      %2483 = vmatpush1.bf16.msra.mxu0 0
      %2484 = vmatprep.mubr.bf16.mxu0 0
      %2485 = vmatmul.mubr.bf16.gmra.mrb[0].mxu0 %v2351
      %v2486 = vpop.f32.mrb[0].mxu0
      %v2487 = vadd.f32 0.0, %v2486
      %v2488 = vpop.f32.mrb[0].mxu0
      %v2489 = vpop.f32.mrb[0].mxu0
      %v2490 = vadd.f32 0.0, %v2489
      %v2491 = vpop.f32.mrb[0].mxu0
      %2492 = vmatprep.mubr.bf16.mxu0 0
      %2493 = vmatmul.mubr.bf16.gmra.mrb[0].mxu0 %v2353
      %v2494 = vpop.f32.mrb[0].mxu0
      %v2495 = vadd.f32 0.0, %v2494
      %v2496 = vpop.f32.mrb[0].mxu0
      %v2497 = vpop.f32.mrb[0].mxu0
      %v2498 = vadd.f32 0.0, %v2497
      %v2499 = vpop.f32.mrb[0].mxu0
      %2500 = vmatprep.mubr.bf16.mxu0 0
      %2501 = vmatmul.mubr.bf16.gmra.mrb[0].mxu0 %v2355
      %v2502 = vpop.f32.mrb[0].mxu0
      %v2503 = vadd.f32 0.0, %v2502
      %v2504 = vpop.f32.mrb[0].mxu0
      %v2505 = vpop.f32.mrb[0].mxu0
      %v2506 = vadd.f32 0.0, %v2505
      %v2507 = vpop.f32.mrb[0].mxu0
      %2508 = vmatprep.mubr.bf16.mxu0 0
      %2509 = vmatmul.mubr.bf16.gmra.mrb[0].mxu0 %v2357
      %v2510 = vpop.f32.mrb[0].mxu0
      %v2511 = vadd.f32 0.0, %v2510
      %v2512 = vpop.f32.mrb[0].mxu0
      %v2513 = vpop.f32.mrb[0].mxu0
      %v2514 = vadd.f32 0.0, %v2513
      %v2515 = vpop.f32.mrb[0].mxu0
      %2516 = vmatprep.mubr.bf16.mxu0 0
      %2517 = vmatmul.mubr.bf16.gmra.mrb[0].mxu0 %v2359
      %v2518 = vpop.f32.mrb[0].mxu0
      %v2519 = vadd.f32 0.0, %v2518
      %v2520 = vpop.f32.mrb[0].mxu0
      %v2521 = vpop.f32.mrb[0].mxu0
      %v2522 = vadd.f32 0.0, %v2521
      %v2523 = vpop.f32.mrb[0].mxu0
      %2524 = vmatprep.mubr.bf16.mxu0 0
      %2525 = vmatmul.mubr.bf16.gmra.mrb[0].mxu0 %v2361
      %v2526 = vpop.f32.mrb[0].mxu0
      %v2527 = vadd.f32 0.0, %v2526
      %v2528 = vpop.f32.mrb[0].mxu0
      %v2529 = vpop.f32.mrb[0].mxu0
      %v2530 = vadd.f32 0.0, %v2529
      %v2531 = vpop.f32.mrb[0].mxu0
      %2532 = vmatprep.mubr.bf16.mxu0 0
      %2533 = vmatmul.mubr.bf16.gmra.mrb[0].mxu0 %v2363
      %v2534 = vpop.f32.mrb[0].mxu0
      %v2535 = vadd.f32 0.0, %v2534
      %v2536 = vpop.f32.mrb[0].mxu0
      %v2537 = vpop.f32.mrb[0].mxu0
      %v2538 = vadd.f32 0.0, %v2537
      %v2539 = vpop.f32.mrb[0].mxu0
      %2540 = vmatprep.mubr.bf16.mxu0 0
      %2541 = vmatmul.mubr.bf16.gmra.mrb[0].mxu0 %v2365
      %v2542 = vpop.f32.mrb[0].mxu0
      %v2543 = vadd.f32 0.0, %v2542
      %v2544 = vpop.f32.mrb[0].mxu0
      %v2545 = vpop.f32.mrb[0].mxu0
      %v2546 = vadd.f32 0.0, %v2545
      %v2547 = vpop.f32.mrb[0].mxu0
      %2548 = vmatprep.mubr.bf16.mxu0 0
      %2549 = vmatmul.mubr.bf16.gmra.mrb[0].mxu0 %v2367
      %v2550 = vpop.f32.mrb[0].mxu0
      %v2551 = vadd.f32 0.0, %v2550
      %v2552 = vpop.f32.mrb[0].mxu0
      %v2553 = vpop.f32.mrb[0].mxu0
      %v2554 = vadd.f32 0.0, %v2553
      %v2555 = vpop.f32.mrb[0].mxu0
      %2556 = vmatprep.mubr.bf16.mxu0 0
      %2557 = vmatmul.mubr.bf16.gmra.mrb[0].mxu0 %v2369
      %v2558 = vpop.f32.mrb[0].mxu0
      %v2559 = vadd.f32 0.0, %v2558
      %v2560 = vpop.f32.mrb[0].mxu0
      %v2561 = vpop.f32.mrb[0].mxu0
      %v2562 = vadd.f32 0.0, %v2561
      %v2563 = vpop.f32.mrb[0].mxu0
      %2564 = vmatprep.mubr.bf16.mxu0 0
      %2565 = vmatmul.mubr.bf16.gmra.mrb[0].mxu0 %v2371
      %v2566 = vpop.f32.mrb[0].mxu0
      %v2567 = vadd.f32 0.0, %v2566
      %v2568 = vpop.f32.mrb[0].mxu0
      %v2569 = vpop.f32.mrb[0].mxu0
      %v2570 = vadd.f32 0.0, %v2569
      %v2571 = vpop.f32.mrb[0].mxu0
      %2572 = vmatprep.mubr.bf16.mxu0 0
      %2573 = vmatmul.mubr.bf16.gmra.mrb[0].mxu0 %v2373
      %v2574 = vpop.f32.mrb[0].mxu0
      %v2575 = vadd.f32 0.0, %v2574
      %v2576 = vpop.f32.mrb[0].mxu0
      %v2577 = vpop.f32.mrb[0].mxu0
      %v2578 = vadd.f32 0.0, %v2577
      %v2579 = vpop.f32.mrb[0].mxu0
      %2580 = vmatprep.mubr.bf16.mxu0 0
      %2581 = vmatmul.mubr.bf16.gmra.mrb[0].mxu0 %v2375
      %v2582 = vpop.f32.mrb[0].mxu0
      %v2583 = vadd.f32 0.0, %v2582
      %v2584 = vpop.f32.mrb[0].mxu0
      %v2585 = vpop.f32.mrb[0].mxu0
      %v2586 = vadd.f32 0.0, %v2585
      %v2587 = vpop.f32.mrb[0].mxu0
      %2588 = vmatprep.mubr.bf16.mxu0 0
      %2589 = vmatmul.mubr.bf16.gmra.mrb[0].mxu0 %v2377
      %v2590 = vpop.f32.mrb[0].mxu0
      %v2591 = vadd.f32 0.0, %v2590
      %v2592 = vpop.f32.mrb[0].mxu0
      %v2593 = vpop.f32.mrb[0].mxu0
      %v2594 = vadd.f32 0.0, %v2593
      %v2595 = vpop.f32.mrb[0].mxu0
      %2596 = vmatprep.mubr.bf16.mxu0 0
      %2597 = vmatmul.mubr.bf16.gmra.mrb[0].mxu0 %v2379
      %v2598 = vpop.f32.mrb[0].mxu0
      %v2599 = vadd.f32 0.0, %v2598
      %v2600 = vpop.f32.mrb[0].mxu0
      %v2601 = vpop.f32.mrb[0].mxu0
      %v2602 = vadd.f32 0.0, %v2601
      %v2603 = vpop.f32.mrb[0].mxu0
      %2604 = vmatprep.mubr.bf16.mxu0 0
      %2605 = vmatmul.mubr.bf16.gmra.mrb[0].mxu0 %v2381
      %v2606 = vpop.f32.mrb[0].mxu0
      %v2607 = vadd.f32 0.0, %v2606
      %v2608 = vpop.f32.mrb[0].mxu0
      %v2609 = vpop.f32.mrb[0].mxu0
      %v2610 = vadd.f32 0.0, %v2609
      %v2611 = vpop.f32.mrb[0].mxu0
      %2612 = vmatprep.mubr.bf16.mxu0 0
      %2613 = vmatmul.mubr.bf16.gmra.mrb[0].mxu0 %v2383
      %v2614 = vpop.f32.mrb[0].mxu0
      %v2615 = vadd.f32 0.0, %v2614
      %v2616 = vpop.f32.mrb[0].mxu0
      %v2617 = vpop.f32.mrb[0].mxu0
      %v2618 = vadd.f32 0.0, %v2617
      %v2619 = vpop.f32.mrb[0].mxu0
      %2620 = vmatprep.mubr.bf16.mxu0 0
      %2621 = vmatmul.mubr.bf16.gmra.mrb[0].mxu0 %v2385
      %v2622 = vpop.f32.mrb[0].mxu0
      %v2623 = vadd.f32 0.0, %v2622
      %v2624 = vpop.f32.mrb[0].mxu0
      %v2625 = vpop.f32.mrb[0].mxu0
      %v2626 = vadd.f32 0.0, %v2625
      %v2627 = vpop.f32.mrb[0].mxu0
      %2628 = vdwg.mxu0
      %v2629 = vadd.f32 %v2291, %v2487
      %v2630 = vadd.f32 %v2292, %v2490
      %v2631 = vadd.f32 %v2293, %v2495
      %v2632 = vadd.f32 %v2294, %v2498
      %v2633 = vadd.f32 %v2295, %v2503
      %v2634 = vadd.f32 %v2296, %v2506
      %v2635 = vadd.f32 %v2297, %v2511
      %v2636 = vadd.f32 %v2298, %v2514
      %v2637 = vadd.f32 %v2299, %v2519
      %v2638 = vadd.f32 %v2300, %v2522
      %v2639 = vadd.f32 %v2301, %v2527
      %v2640 = vadd.f32 %v2302, %v2530
      %v2641 = vadd.f32 %v2303, %v2535
      %v2642 = vadd.f32 %v2304, %v2538
      %v2643 = vadd.f32 %v2305, %v2543
      %v2644 = vadd.f32 %v2306, %v2546
      %v2645 = vadd.f32 %v2307, %v2551
      %v2646 = vadd.f32 %v2308, %v2554
      %v2647 = vadd.f32 %v2309, %v2559
      %v2648 = vadd.f32 %v2310, %v2562
      %v2649 = vadd.f32 %v2311, %v2567
      %v2650 = vadd.f32 %v2312, %v2570
      %v2651 = vadd.f32 %v2313, %v2575
      %v2652 = vadd.f32 %v2314, %v2578
      %v2653 = vadd.f32 %v2315, %v2583
      %v2654 = vadd.f32 %v2316, %v2586
      %v2655 = vadd.f32 %v2317, %v2591
      %v2656 = vadd.f32 %v2318, %v2594
      %v2657 = vadd.f32 %v2319, %v2599
      %v2658 = vadd.f32 %v2320, %v2602
      %v2659 = vadd.f32 %v2321, %v2607
      %v2660 = vadd.f32 %v2322, %v2610
      %v2661 = vadd.f32 %v2323, %v2615
      %v2662 = vadd.f32 %v2324, %v2618
      %v2663 = vadd.f32 %v2325, %v2623
      %v2664 = vadd.f32 %v2326, %v2626
      %v2665 = vld [vmem:[%s235 + $0x10] sm:$0xc]
      %v2666 = vld [vmem:[%s235 + $0x14] sm:$0xf]
      %v2667 = vld [vmem:[%s235 + $0x18] sm:$0xf]
      %v2668 = vld [vmem:[%s235 + $0x1c] sm:$0xf]
      %v2669 = vld [vmem:[%s235 + $0x20] sm:$0xf]
      %v2670 = vld [vmem:[%s235 + $0x24] sm:$0xf]
      %v2671 = vld [vmem:[%s235 + $0x28] sm:$0xf]
      %v2672 = vld [vmem:[%s235 + $0x2c] sm:$0xf]
      %v2673 = vld [vmem:[%s235 + $0x30] sm:$0xf]
      %v2674 = vld [vmem:[%s235 + $0x34] sm:$0xf]
      %v2675 = vld [vmem:[%s235 + $0x38] sm:$0xf]
      %v2676 = vld [vmem:[%s235 + $0x3c] sm:$0xf]
      %v2677 = vld [vmem:[%s235 + $0x40] sm:$0xf]
      %v2678 = vld [vmem:[%s235 + $0x44] sm:$0xf]
      %v2679 = vld [vmem:[%s235 + $0x48] sm:$0xf]
      %v2680 = vld [vmem:[%s235 + $0x4c] sm:$0xf]
      %v2681 = vld [vmem:[%s235 + $0x50] sm:$0xf]
      %v2682 = vld [vmem:[%s235 + $0x54] sm:$0xf]
      %v2683 = vld [vmem:[%s235 + $0x58] sm:$0xf]
      %v2684 = vld [vmem:[%s235 + $0x5c] sm:$0xf]
      %v2685 = vld [vmem:[%s235 + $0x60] sm:$0xf]
      %v2686 = vld [vmem:[%s235 + $0x64] sm:$0xf]
      %v2687 = vld [vmem:[%s235 + $0x68] sm:$0xf]
      %v2688 = vld [vmem:[%s235 + $0x6c] sm:$0xf]
      %v2689 = vld [vmem:[%s235 + $0x70] sm:$0xf]
      %v2690 = vld [vmem:[%s235 + $0x74] sm:$0xf]
      %v2691 = vld [vmem:[%s235 + $0x78] sm:$0xf]
      %v2692 = vld [vmem:[%s235 + $0x7c] sm:$0xf]
      %v2693 = vld [vmem:[%s235 + $0x80] sm:$0xf]
      %v2694 = vld [vmem:[%s235 + $0x84] sm:$0xf]
      %v2695 = vld [vmem:[%s235 + $0x88] sm:$0xf]
      %v2696 = vld [vmem:[%s235 + $0x8c] sm:$0xf]
      %v2697 = vld [vmem:[%s235 + $0x90] sm:$0xf]
      %v2698 = vld [vmem:[%s235 + $0x94] sm:$0xf]
      %v2699 = vld [vmem:[%s235 + $0x98] sm:$0xf]
      %v2700 = vld [vmem:[%s235 + $0x9c] sm:$0xf]
      %v2701 = vld [vmem:[%s235 + $0xa0] sm:$0x3]
      %s2702 = scalar_lea.vmem %s240, 384
      %v2703 = vld [vmem:[%s2702] sm:$0xf]
      %v2704 = vld [vmem:[%s2702 + $0x4] sm:$0xf]
      %v2705 = vld [vmem:[%s2702 + $0x8] sm:$0xf]
      %v2706 = vld [vmem:[%s2702 + $0xc] sm:$0xf]
      %v2707 = vld [vmem:[%s2702 + $0x10] sm:$0xf]
      %v2708 = vld [vmem:[%s2702 + $0x14] sm:$0xf]
      %v2709 = vld [vmem:[%s2702 + $0x18] sm:$0xf]
      %v2710 = vld [vmem:[%s2702 + $0x1c] sm:$0xf]
      %v2711 = vld [vmem:[%s2702 + $0x20] sm:$0xf]
      %v2712 = vld [vmem:[%s2702 + $0x24] sm:$0xf]
      %v2713 = vld [vmem:[%s2702 + $0x28] sm:$0xf]
      %v2714 = vld [vmem:[%s2702 + $0x2c] sm:$0xf]
      %v2715 = vld [vmem:[%s2702 + $0x30] sm:$0xf]
      %v2716 = vld [vmem:[%s2702 + $0x34] sm:$0xf]
      %v2717 = vld [vmem:[%s2702 + $0x38] sm:$0xf]
      %v2718 = vld [vmem:[%s2702 + $0x3c] sm:$0xf]
      %v2756 = vunpack.c.l.b16 %v2665
      %v2757 = vunpack.c.l.b16 %v2666
      %v2758 = vunpack.c.l.b16 %v2667
      %v2759 = vunpack.c.l.b16 %v2668
      %v2760 = vunpack.c.l.b16 %v2669
      %v2761 = vunpack.c.l.b16 %v2670
      %v2762 = vunpack.c.l.b16 %v2671
      %v2763 = vunpack.c.l.b16 %v2672
      %v2764 = vunpack.c.l.b16 %v2673
      %v2765 = vunpack.c.l.b16 %v2674
      %v2766 = vunpack.c.l.b16 %v2675
      %v2767 = vunpack.c.l.b16 %v2676
      %v2768 = vunpack.c.l.b16 %v2677
      %v2769 = vunpack.c.l.b16 %v2678
      %v2770 = vunpack.c.l.b16 %v2679
      %v2771 = vunpack.c.l.b16 %v2680
      %v2772 = vunpack.c.l.b16 %v2681
      %v2773 = vunpack.c.l.b16 %v2682
      %v2774 = vunpack.c.l.b16 %v2683
      %v2775 = vunpack.c.l.b16 %v2684
      %v2776 = vunpack.c.l.b16 %v2685
      %v2777 = vunpack.c.l.b16 %v2686
      %v2778 = vunpack.c.l.b16 %v2687
      %v2779 = vunpack.c.l.b16 %v2688
      %v2780 = vunpack.c.l.b16 %v2689
      %v2781 = vunpack.c.l.b16 %v2690
      %v2782 = vunpack.c.l.b16 %v2691
      %v2783 = vunpack.c.l.b16 %v2692
      %v2784 = vunpack.c.l.b16 %v2693
      %v2785 = vunpack.c.l.b16 %v2694
      %v2786 = vunpack.c.l.b16 %v2695
      %v2787 = vunpack.c.l.b16 %v2696
      %v2788 = vunpack.c.l.b16 %v2697
      %v2789 = vunpack.c.l.b16 %v2698
      %v2790 = vunpack.c.l.b16 %v2699
      %v2791 = vunpack.c.l.b16 %v2700
      %v2792 = vunpack.c.l.b16 %v2701
      %v2793 = vpack.c.b16 %v2757, %v2756
      %v2794 = vpack.c.b16 %v2759, %v2758
      %v2795 = vpack.c.b16 %v2761, %v2760
      %v2796 = vpack.c.b16 %v2763, %v2762
      %v2797 = vpack.c.b16 %v2765, %v2764
      %v2798 = vpack.c.b16 %v2767, %v2766
      %v2799 = vpack.c.b16 %v2769, %v2768
      %v2800 = vpack.c.b16 %v2771, %v2770
      %v2801 = vpack.c.b16 %v2773, %v2772
      %v2802 = vpack.c.b16 %v2775, %v2774
      %v2803 = vpack.c.b16 %v2777, %v2776
      %v2804 = vpack.c.b16 %v2779, %v2778
      %v2805 = vpack.c.b16 %v2781, %v2780
      %v2806 = vpack.c.b16 %v2783, %v2782
      %v2807 = vpack.c.b16 %v2785, %v2784
      %v2808 = vpack.c.b16 %v2787, %v2786
      %v2809 = vpack.c.b16 %v2789, %v2788
      %v2810 = vpack.c.b16 %v2791, %v2790
      %v2811 = vpack.c.b16 %v2792, %v2792
      %v2812 = vrot.slane %v2793, 2
      %v2813 = vrot.slane %v2794, 2
      %v2814 = vsel %vm2348, %v2812, %v2813
      %v2815 = vrot.slane %v2795, 2
      %v2816 = vsel %vm2348, %v2813, %v2815
      %v2817 = vrot.slane %v2796, 2
      %v2818 = vsel %vm2348, %v2815, %v2817
      %v2819 = vrot.slane %v2797, 2
      %v2820 = vsel %vm2348, %v2817, %v2819
      %v2821 = vrot.slane %v2798, 2
      %v2822 = vsel %vm2348, %v2819, %v2821
      %v2823 = vrot.slane %v2799, 2
      %v2824 = vsel %vm2348, %v2821, %v2823
      %v2825 = vrot.slane %v2800, 2
      %v2826 = vsel %vm2348, %v2823, %v2825
      %v2827 = vrot.slane %v2801, 2
      %v2828 = vsel %vm2348, %v2825, %v2827
      %v2829 = vrot.slane %v2802, 2
      %v2830 = vsel %vm2348, %v2827, %v2829
      %v2831 = vrot.slane %v2803, 2
      %v2832 = vsel %vm2348, %v2829, %v2831
      %v2833 = vrot.slane %v2804, 2
      %v2834 = vsel %vm2348, %v2831, %v2833
      %v2835 = vrot.slane %v2805, 2
      %v2836 = vsel %vm2348, %v2833, %v2835
      %v2837 = vrot.slane %v2806, 2
      %v2838 = vsel %vm2348, %v2835, %v2837
      %v2839 = vrot.slane %v2807, 2
      %v2840 = vsel %vm2348, %v2837, %v2839
      %v2841 = vrot.slane %v2808, 2
      %v2842 = vsel %vm2348, %v2839, %v2841
      %v2843 = vrot.slane %v2809, 2
      %v2844 = vsel %vm2348, %v2841, %v2843
      %v2845 = vrot.slane %v2810, 2
      %v2846 = vsel %vm2348, %v2843, %v2845
      %v2847 = vrot.slane %v2811, 2
      %v2848 = vsel %vm2348, %v2845, %v2847
      %v2883 = vunpack.c.l.b16 %v2703
      %v2884 = vunpack.c.l.b16 %v2704
      %v2885 = vunpack.c.l.b16 %v2705
      %v2886 = vunpack.c.l.b16 %v2706
      %v2887 = vunpack.c.l.b16 %v2707
      %v2888 = vunpack.c.l.b16 %v2708
      %v2889 = vunpack.c.l.b16 %v2709
      %v2890 = vunpack.c.l.b16 %v2710
      %v2891 = vunpack.c.l.b16 %v2711
      %v2892 = vunpack.c.l.b16 %v2712
      %v2893 = vunpack.c.l.b16 %v2713
      %v2894 = vunpack.c.l.b16 %v2714
      %v2895 = vunpack.c.l.b16 %v2715
      %v2896 = vunpack.c.l.b16 %v2716
      %v2897 = vunpack.c.l.b16 %v2717
      %v2898 = vunpack.c.l.b16 %v2718
      %v2899 = vpack.c.b16 %v2884, %v2883
      %v2900 = vpack.c.b16 %v2886, %v2885
      %v2901 = vpack.c.b16 %v2888, %v2887
      %v2902 = vpack.c.b16 %v2890, %v2889
      %v2903 = vpack.c.b16 %v2892, %v2891
      %v2904 = vpack.c.b16 %v2894, %v2893
      %v2905 = vpack.c.b16 %v2896, %v2895
      %v2906 = vpack.c.b16 %v2898, %v2897
      %2915 = vmatprep.subr.bf16.mxu0 0
      %2916 = vmatpush1.bf16.msra.mxu0 %v2899
      %2917 = vmatprep.subr.bf16.mxu0 0
      %2918 = vmatpush1.bf16.msra.mxu0 %v2900
      %2919 = vmatprep.subr.bf16.mxu0 0
      %2920 = vmatpush1.bf16.msra.mxu0 %v2901
      %2921 = vmatprep.subr.bf16.mxu0 0
      %2922 = vmatpush1.bf16.msra.mxu0 %v2902
      %2923 = vmatprep.subr.bf16.mxu0 0
      %2924 = vmatpush1.bf16.msra.mxu0 %v2903
      %2925 = vmatprep.subr.bf16.mxu0 0
      %2926 = vmatpush1.bf16.msra.mxu0 %v2904
      %2927 = vmatprep.subr.bf16.mxu0 0
      %2928 = vmatpush1.bf16.msra.mxu0 %v2905
      %2929 = vmatprep.subr.bf16.mxu0 0
      %2930 = vmatpush1.bf16.msra.mxu0 %v2906
      %2931 = vmatprep.subr.bf16.mxu0 0
      %2932 = vmatpush1.bf16.msra.mxu0 0
      %2933 = vmatprep.subr.bf16.mxu0 0
      %2934 = vmatpush1.bf16.msra.mxu0 0
      %2935 = vmatprep.subr.bf16.mxu0 0
      %2936 = vmatpush1.bf16.msra.mxu0 0
      %2937 = vmatprep.subr.bf16.mxu0 0
      %2938 = vmatpush1.bf16.msra.mxu0 0
      %2939 = vmatprep.subr.bf16.mxu0 0
      %2940 = vmatpush1.bf16.msra.mxu0 0
      %2941 = vmatprep.subr.bf16.mxu0 0
      %2942 = vmatpush1.bf16.msra.mxu0 0
      %2943 = vmatprep.subr.bf16.mxu0 0
      %2944 = vmatpush1.bf16.msra.mxu0 0
      %2945 = vmatprep.subr.bf16.mxu0 0
      %2946 = vmatpush1.bf16.msra.mxu0 0
      %2947 = vmatprep.mubr.bf16.mxu0 0
      %2948 = vmatmul.mubr.bf16.gmra.mrb[0].mxu0 %v2814
      %v2949 = vpop.f32.mrb[0].mxu0
      %v2950 = vadd.f32 0.0, %v2949
      %v2951 = vpop.f32.mrb[0].mxu0
      %v2952 = vpop.f32.mrb[0].mxu0
      %v2953 = vadd.f32 0.0, %v2952
      %v2954 = vpop.f32.mrb[0].mxu0
      %2955 = vmatprep.mubr.bf16.mxu0 0
      %2956 = vmatmul.mubr.bf16.gmra.mrb[0].mxu0 %v2816
      %v2957 = vpop.f32.mrb[0].mxu0
      %v2958 = vadd.f32 0.0, %v2957
      %v2959 = vpop.f32.mrb[0].mxu0
      %v2960 = vpop.f32.mrb[0].mxu0
      %v2961 = vadd.f32 0.0, %v2960
      %v2962 = vpop.f32.mrb[0].mxu0
      %2963 = vmatprep.mubr.bf16.mxu0 0
      %2964 = vmatmul.mubr.bf16.gmra.mrb[0].mxu0 %v2818
      %v2965 = vpop.f32.mrb[0].mxu0
      %v2966 = vadd.f32 0.0, %v2965
      %v2967 = vpop.f32.mrb[0].mxu0
      %v2968 = vpop.f32.mrb[0].mxu0
      %v2969 = vadd.f32 0.0, %v2968
      %v2970 = vpop.f32.mrb[0].mxu0
      %2971 = vmatprep.mubr.bf16.mxu0 0
      %2972 = vmatmul.mubr.bf16.gmra.mrb[0].mxu0 %v2820
      %v2973 = vpop.f32.mrb[0].mxu0
      %v2974 = vadd.f32 0.0, %v2973
      %v2975 = vpop.f32.mrb[0].mxu0
      %v2976 = vpop.f32.mrb[0].mxu0
      %v2977 = vadd.f32 0.0, %v2976
      %v2978 = vpop.f32.mrb[0].mxu0
      %2979 = vmatprep.mubr.bf16.mxu0 0
      %2980 = vmatmul.mubr.bf16.gmra.mrb[0].mxu0 %v2822
      %v2981 = vpop.f32.mrb[0].mxu0
      %v2982 = vadd.f32 0.0, %v2981
      %v2983 = vpop.f32.mrb[0].mxu0
      %v2984 = vpop.f32.mrb[0].mxu0
      %v2985 = vadd.f32 0.0, %v2984
      %v2986 = vpop.f32.mrb[0].mxu0
      %2987 = vmatprep.mubr.bf16.mxu0 0
      %2988 = vmatmul.mubr.bf16.gmra.mrb[0].mxu0 %v2824
      %v2989 = vpop.f32.mrb[0].mxu0
      %v2990 = vadd.f32 0.0, %v2989
      %v2991 = vpop.f32.mrb[0].mxu0
      %v2992 = vpop.f32.mrb[0].mxu0
      %v2993 = vadd.f32 0.0, %v2992
      %v2994 = vpop.f32.mrb[0].mxu0
      %2995 = vmatprep.mubr.bf16.mxu0 0
      %2996 = vmatmul.mubr.bf16.gmra.mrb[0].mxu0 %v2826
      %v2997 = vpop.f32.mrb[0].mxu0
      %v2998 = vadd.f32 0.0, %v2997
      %v2999 = vpop.f32.mrb[0].mxu0
      %v3000 = vpop.f32.mrb[0].mxu0
      %v3001 = vadd.f32 0.0, %v3000
      %v3002 = vpop.f32.mrb[0].mxu0
      %3003 = vmatprep.mubr.bf16.mxu0 0
      %3004 = vmatmul.mubr.bf16.gmra.mrb[0].mxu0 %v2828
      %v3005 = vpop.f32.mrb[0].mxu0
      %v3006 = vadd.f32 0.0, %v3005
      %v3007 = vpop.f32.mrb[0].mxu0
      %v3008 = vpop.f32.mrb[0].mxu0
      %v3009 = vadd.f32 0.0, %v3008
      %v3010 = vpop.f32.mrb[0].mxu0
      %3011 = vmatprep.mubr.bf16.mxu0 0
      %3012 = vmatmul.mubr.bf16.gmra.mrb[0].mxu0 %v2830
      %v3013 = vpop.f32.mrb[0].mxu0
      %v3014 = vadd.f32 0.0, %v3013
      %v3015 = vpop.f32.mrb[0].mxu0
      %v3016 = vpop.f32.mrb[0].mxu0
      %v3017 = vadd.f32 0.0, %v3016
      %v3018 = vpop.f32.mrb[0].mxu0
      %3019 = vmatprep.mubr.bf16.mxu0 0
      %3020 = vmatmul.mubr.bf16.gmra.mrb[0].mxu0 %v2832
      %v3021 = vpop.f32.mrb[0].mxu0
      %v3022 = vadd.f32 0.0, %v3021
      %v3023 = vpop.f32.mrb[0].mxu0
      %v3024 = vpop.f32.mrb[0].mxu0
      %v3025 = vadd.f32 0.0, %v3024
      %v3026 = vpop.f32.mrb[0].mxu0
      %3027 = vmatprep.mubr.bf16.mxu0 0
      %3028 = vmatmul.mubr.bf16.gmra.mrb[0].mxu0 %v2834
      %v3029 = vpop.f32.mrb[0].mxu0
      %v3030 = vadd.f32 0.0, %v3029
      %v3031 = vpop.f32.mrb[0].mxu0
      %v3032 = vpop.f32.mrb[0].mxu0
      %v3033 = vadd.f32 0.0, %v3032
      %v3034 = vpop.f32.mrb[0].mxu0
      %3035 = vmatprep.mubr.bf16.mxu0 0
      %3036 = vmatmul.mubr.bf16.gmra.mrb[0].mxu0 %v2836
      %v3037 = vpop.f32.mrb[0].mxu0
      %v3038 = vadd.f32 0.0, %v3037
      %v3039 = vpop.f32.mrb[0].mxu0
      %v3040 = vpop.f32.mrb[0].mxu0
      %v3041 = vadd.f32 0.0, %v3040
      %v3042 = vpop.f32.mrb[0].mxu0
      %3043 = vmatprep.mubr.bf16.mxu0 0
      %3044 = vmatmul.mubr.bf16.gmra.mrb[0].mxu0 %v2838
      %v3045 = vpop.f32.mrb[0].mxu0
      %v3046 = vadd.f32 0.0, %v3045
      %v3047 = vpop.f32.mrb[0].mxu0
      %v3048 = vpop.f32.mrb[0].mxu0
      %v3049 = vadd.f32 0.0, %v3048
      %v3050 = vpop.f32.mrb[0].mxu0
      %3051 = vmatprep.mubr.bf16.mxu0 0
      %3052 = vmatmul.mubr.bf16.gmra.mrb[0].mxu0 %v2840
      %v3053 = vpop.f32.mrb[0].mxu0
      %v3054 = vadd.f32 0.0, %v3053
      %v3055 = vpop.f32.mrb[0].mxu0
      %v3056 = vpop.f32.mrb[0].mxu0
      %v3057 = vadd.f32 0.0, %v3056
      %v3058 = vpop.f32.mrb[0].mxu0
      %3059 = vmatprep.mubr.bf16.mxu0 0
      %3060 = vmatmul.mubr.bf16.gmra.mrb[0].mxu0 %v2842
      %v3061 = vpop.f32.mrb[0].mxu0
      %v3062 = vadd.f32 0.0, %v3061
      %v3063 = vpop.f32.mrb[0].mxu0
      %v3064 = vpop.f32.mrb[0].mxu0
      %v3065 = vadd.f32 0.0, %v3064
      %v3066 = vpop.f32.mrb[0].mxu0
      %3067 = vmatprep.mubr.bf16.mxu0 0
      %3068 = vmatmul.mubr.bf16.gmra.mrb[0].mxu0 %v2844
      %v3069 = vpop.f32.mrb[0].mxu0
      %v3070 = vadd.f32 0.0, %v3069
      %v3071 = vpop.f32.mrb[0].mxu0
      %v3072 = vpop.f32.mrb[0].mxu0
      %v3073 = vadd.f32 0.0, %v3072
      %v3074 = vpop.f32.mrb[0].mxu0
      %3075 = vmatprep.mubr.bf16.mxu0 0
      %3076 = vmatmul.mubr.bf16.gmra.mrb[0].mxu0 %v2846
      %v3077 = vpop.f32.mrb[0].mxu0
      %v3078 = vadd.f32 0.0, %v3077
      %v3079 = vpop.f32.mrb[0].mxu0
      %v3080 = vpop.f32.mrb[0].mxu0
      %v3081 = vadd.f32 0.0, %v3080
      %v3082 = vpop.f32.mrb[0].mxu0
      %3083 = vmatprep.mubr.bf16.mxu0 0
      %3084 = vmatmul.mubr.bf16.gmra.mrb[0].mxu0 %v2848
      %v3085 = vpop.f32.mrb[0].mxu0
      %v3086 = vadd.f32 0.0, %v3085
      %v3087 = vpop.f32.mrb[0].mxu0
      %v3088 = vpop.f32.mrb[0].mxu0
      %v3089 = vadd.f32 0.0, %v3088
      %v3090 = vpop.f32.mrb[0].mxu0
      %3091 = vdwg.mxu0
      %v3092 = vadd.f32 %v2629, %v2950
      %v3093 = vadd.f32 %v2630, %v2953
      %v3094 = vadd.f32 %v2631, %v2958
      %v3095 = vadd.f32 %v2632, %v2961
      %v3096 = vadd.f32 %v2633, %v2966
      %v3097 = vadd.f32 %v2634, %v2969
      %v3098 = vadd.f32 %v2635, %v2974
      %v3099 = vadd.f32 %v2636, %v2977
      %v3100 = vadd.f32 %v2637, %v2982
      %v3101 = vadd.f32 %v2638, %v2985
      %v3102 = vadd.f32 %v2639, %v2990
      %v3103 = vadd.f32 %v2640, %v2993
      %v3104 = vadd.f32 %v2641, %v2998
      %v3105 = vadd.f32 %v2642, %v3001
      %v3106 = vadd.f32 %v2643, %v3006
      %v3107 = vadd.f32 %v2644, %v3009
      %v3108 = vadd.f32 %v2645, %v3014
      %v3109 = vadd.f32 %v2646, %v3017
      %v3110 = vadd.f32 %v2647, %v3022
      %v3111 = vadd.f32 %v2648, %v3025
      %v3112 = vadd.f32 %v2649, %v3030
      %v3113 = vadd.f32 %v2650, %v3033
      %v3114 = vadd.f32 %v2651, %v3038
      %v3115 = vadd.f32 %v2652, %v3041
      %v3116 = vadd.f32 %v2653, %v3046
      %v3117 = vadd.f32 %v2654, %v3049
      %v3118 = vadd.f32 %v2655, %v3054
      %v3119 = vadd.f32 %v2656, %v3057
      %v3120 = vadd.f32 %v2657, %v3062
      %v3121 = vadd.f32 %v2658, %v3065
      %v3122 = vadd.f32 %v2659, %v3070
      %v3123 = vadd.f32 %v2660, %v3073
      %v3124 = vadd.f32 %v2661, %v3078
      %v3125 = vadd.f32 %v2662, %v3081
      %v3126 = vadd.f32 %v2663, %v3086
      %v3127 = vadd.f32 %v2664, %v3089
      %v3128 = vld [vmem:[%s235 + $0xa0] sm:$0x7]
      %s3129 = scalar_lea.vmem %s240, 448
      %v3130 = vld [vmem:[%s3129] sm:$0xf]
      %v3131 = vld [vmem:[%s3129 + $0x4] sm:$0xf]
      %v3132 = vld [vmem:[%s3129 + $0x8] sm:$0xf]
      %v3133 = vld [vmem:[%s3129 + $0xc] sm:$0xf]
      %v3134 = vld [vmem:[%s3129 + $0x10] sm:$0xf]
      %v3135 = vld [vmem:[%s3129 + $0x14] sm:$0xf]
      %v3136 = vld [vmem:[%s3129 + $0x18] sm:$0xf]
      %v3137 = vld [vmem:[%s3129 + $0x1c] sm:$0xf]
      %v3138 = vld [vmem:[%s3129 + $0x20] sm:$0xf]
      %v3139 = vld [vmem:[%s3129 + $0x24] sm:$0xf]
      %v3140 = vld [vmem:[%s3129 + $0x28] sm:$0xf]
      %v3141 = vld [vmem:[%s3129 + $0x2c] sm:$0xf]
      %v3142 = vld [vmem:[%s3129 + $0x30] sm:$0xf]
      %v3143 = vld [vmem:[%s3129 + $0x34] sm:$0xf]
      %v3144 = vld [vmem:[%s3129 + $0x38] sm:$0xf]
      %v3145 = vld [vmem:[%s3129 + $0x3c] sm:$0xf]
      %v3147 = vunpack.c.l.b16 %v3128
      %v3148 = vpack.c.b16 %v3147, %v3147
      %vm3149 = vsmask.f32 5376
      %v3151 = vshrl.u32 %v2793, 16
      %v3153 = vrot.slane %v3151, 2
      %v3154 = vshll.u32 %v2793, 16
      %v3156 = vrot.slane %v3154, 3
      %v3157 = vor.u32 %v3153, %v3156
      %v3159 = vshrl.u32 %v2794, 16
      %v3161 = vrot.slane %v3159, 2
      %v3162 = vshll.u32 %v2794, 16
      %v3164 = vrot.slane %v3162, 3
      %v3165 = vor.u32 %v3161, %v3164
      %v3166 = vsel %vm3149, %v3157, %v3165
      %v3168 = vshrl.u32 %v2795, 16
      %v3170 = vrot.slane %v3168, 2
      %v3171 = vshll.u32 %v2795, 16
      %v3173 = vrot.slane %v3171, 3
      %v3174 = vor.u32 %v3170, %v3173
      %v3175 = vsel %vm3149, %v3165, %v3174
      %v3177 = vshrl.u32 %v2796, 16
      %v3179 = vrot.slane %v3177, 2
      %v3180 = vshll.u32 %v2796, 16
      %v3182 = vrot.slane %v3180, 3
      %v3183 = vor.u32 %v3179, %v3182
      %v3184 = vsel %vm3149, %v3174, %v3183
      %v3186 = vshrl.u32 %v2797, 16
      %v3188 = vrot.slane %v3186, 2
      %v3189 = vshll.u32 %v2797, 16
      %v3191 = vrot.slane %v3189, 3
      %v3192 = vor.u32 %v3188, %v3191
      %v3193 = vsel %vm3149, %v3183, %v3192
      %v3195 = vshrl.u32 %v2798, 16
      %v3197 = vrot.slane %v3195, 2
      %v3198 = vshll.u32 %v2798, 16
      %v3200 = vrot.slane %v3198, 3
      %v3201 = vor.u32 %v3197, %v3200
      %v3202 = vsel %vm3149, %v3192, %v3201
      %v3204 = vshrl.u32 %v2799, 16
      %v3206 = vrot.slane %v3204, 2
      %v3207 = vshll.u32 %v2799, 16
      %v3209 = vrot.slane %v3207, 3
      %v3210 = vor.u32 %v3206, %v3209
      %v3211 = vsel %vm3149, %v3201, %v3210
      %v3213 = vshrl.u32 %v2800, 16
      %v3215 = vrot.slane %v3213, 2
      %v3216 = vshll.u32 %v2800, 16
      %v3218 = vrot.slane %v3216, 3
      %v3219 = vor.u32 %v3215, %v3218
      %v3220 = vsel %vm3149, %v3210, %v3219
      %v3222 = vshrl.u32 %v2801, 16
      %v3224 = vrot.slane %v3222, 2
      %v3225 = vshll.u32 %v2801, 16
      %v3227 = vrot.slane %v3225, 3
      %v3228 = vor.u32 %v3224, %v3227
      %v3229 = vsel %vm3149, %v3219, %v3228
      %v3231 = vshrl.u32 %v2802, 16
      %v3233 = vrot.slane %v3231, 2
      %v3234 = vshll.u32 %v2802, 16
      %v3236 = vrot.slane %v3234, 3
      %v3237 = vor.u32 %v3233, %v3236
      %v3238 = vsel %vm3149, %v3228, %v3237
      %v3240 = vshrl.u32 %v2803, 16
      %v3242 = vrot.slane %v3240, 2
      %v3243 = vshll.u32 %v2803, 16
      %v3245 = vrot.slane %v3243, 3
      %v3246 = vor.u32 %v3242, %v3245
      %v3247 = vsel %vm3149, %v3237, %v3246
      %v3249 = vshrl.u32 %v2804, 16
      %v3251 = vrot.slane %v3249, 2
      %v3252 = vshll.u32 %v2804, 16
      %v3254 = vrot.slane %v3252, 3
      %v3255 = vor.u32 %v3251, %v3254
      %v3256 = vsel %vm3149, %v3246, %v3255
      %v3258 = vshrl.u32 %v2805, 16
      %v3260 = vrot.slane %v3258, 2
      %v3261 = vshll.u32 %v2805, 16
      %v3263 = vrot.slane %v3261, 3
      %v3264 = vor.u32 %v3260, %v3263
      %v3265 = vsel %vm3149, %v3255, %v3264
      %v3267 = vshrl.u32 %v2806, 16
      %v3269 = vrot.slane %v3267, 2
      %v3270 = vshll.u32 %v2806, 16
      %v3272 = vrot.slane %v3270, 3
      %v3273 = vor.u32 %v3269, %v3272
      %v3274 = vsel %vm3149, %v3264, %v3273
      %v3276 = vshrl.u32 %v2807, 16
      %v3278 = vrot.slane %v3276, 2
      %v3279 = vshll.u32 %v2807, 16
      %v3281 = vrot.slane %v3279, 3
      %v3282 = vor.u32 %v3278, %v3281
      %v3283 = vsel %vm3149, %v3273, %v3282
      %v3285 = vshrl.u32 %v2808, 16
      %v3287 = vrot.slane %v3285, 2
      %v3288 = vshll.u32 %v2808, 16
      %v3290 = vrot.slane %v3288, 3
      %v3291 = vor.u32 %v3287, %v3290
      %v3292 = vsel %vm3149, %v3282, %v3291
      %v3294 = vshrl.u32 %v2809, 16
      %v3296 = vrot.slane %v3294, 2
      %v3297 = vshll.u32 %v2809, 16
      %v3299 = vrot.slane %v3297, 3
      %v3300 = vor.u32 %v3296, %v3299
      %v3301 = vsel %vm3149, %v3291, %v3300
      %v3303 = vshrl.u32 %v2810, 16
      %v3305 = vrot.slane %v3303, 2
      %v3306 = vshll.u32 %v2810, 16
      %v3308 = vrot.slane %v3306, 3
      %v3309 = vor.u32 %v3305, %v3308
      %v3310 = vsel %vm3149, %v3300, %v3309
      %v3312 = vshrl.u32 %v3148, 16
      %v3314 = vrot.slane %v3312, 2
      %v3315 = vshll.u32 %v3148, 16
      %v3317 = vrot.slane %v3315, 3
      %v3318 = vor.u32 %v3314, %v3317
      %v3319 = vsel %vm3149, %v3309, %v3318
      %v3354 = vunpack.c.l.b16 %v3130
      %v3355 = vunpack.c.l.b16 %v3131
      %v3356 = vunpack.c.l.b16 %v3132
      %v3357 = vunpack.c.l.b16 %v3133
      %v3358 = vunpack.c.l.b16 %v3134
      %v3359 = vunpack.c.l.b16 %v3135
      %v3360 = vunpack.c.l.b16 %v3136
      %v3361 = vunpack.c.l.b16 %v3137
      %v3362 = vunpack.c.l.b16 %v3138
      %v3363 = vunpack.c.l.b16 %v3139
      %v3364 = vunpack.c.l.b16 %v3140
      %v3365 = vunpack.c.l.b16 %v3141
      %v3366 = vunpack.c.l.b16 %v3142
      %v3367 = vunpack.c.l.b16 %v3143
      %v3368 = vunpack.c.l.b16 %v3144
      %v3369 = vunpack.c.l.b16 %v3145
      %v3370 = vpack.c.b16 %v3355, %v3354
      %v3371 = vpack.c.b16 %v3357, %v3356
      %v3372 = vpack.c.b16 %v3359, %v3358
      %v3373 = vpack.c.b16 %v3361, %v3360
      %v3374 = vpack.c.b16 %v3363, %v3362
      %v3375 = vpack.c.b16 %v3365, %v3364
      %v3376 = vpack.c.b16 %v3367, %v3366
      %v3377 = vpack.c.b16 %v3369, %v3368
      %3386 = vmatprep.subr.bf16.mxu0 0
      %3387 = vmatpush1.bf16.msra.mxu0 %v3370
      %3388 = vmatprep.subr.bf16.mxu0 0
      %3389 = vmatpush1.bf16.msra.mxu0 %v3371
      %3390 = vmatprep.subr.bf16.mxu0 0
      %3391 = vmatpush1.bf16.msra.mxu0 %v3372
      %3392 = vmatprep.subr.bf16.mxu0 0
      %3393 = vmatpush1.bf16.msra.mxu0 %v3373
      %3394 = vmatprep.subr.bf16.mxu0 0
      %3395 = vmatpush1.bf16.msra.mxu0 %v3374
      %3396 = vmatprep.subr.bf16.mxu0 0
      %3397 = vmatpush1.bf16.msra.mxu0 %v3375
      %3398 = vmatprep.subr.bf16.mxu0 0
      %3399 = vmatpush1.bf16.msra.mxu0 %v3376
      %3400 = vmatprep.subr.bf16.mxu0 0
      %3401 = vmatpush1.bf16.msra.mxu0 %v3377
      %3402 = vmatprep.subr.bf16.mxu0 0
      %3403 = vmatpush1.bf16.msra.mxu0 0
      %3404 = vmatprep.subr.bf16.mxu0 0
      %3405 = vmatpush1.bf16.msra.mxu0 0
      %3406 = vmatprep.subr.bf16.mxu0 0
      %3407 = vmatpush1.bf16.msra.mxu0 0
      %3408 = vmatprep.subr.bf16.mxu0 0
      %3409 = vmatpush1.bf16.msra.mxu0 0
      %3410 = vmatprep.subr.bf16.mxu0 0
      %3411 = vmatpush1.bf16.msra.mxu0 0
      %3412 = vmatprep.subr.bf16.mxu0 0
      %3413 = vmatpush1.bf16.msra.mxu0 0
      %3414 = vmatprep.subr.bf16.mxu0 0
      %3415 = vmatpush1.bf16.msra.mxu0 0
      %3416 = vmatprep.subr.bf16.mxu0 0
      %3417 = vmatpush1.bf16.msra.mxu0 0
      %3418 = vmatprep.mubr.bf16.mxu0 0
      %3419 = vmatmul.mubr.bf16.gmra.mrb[0].mxu0 %v3166
      %v3420 = vpop.f32.mrb[0].mxu0
      %v3421 = vadd.f32 0.0, %v3420
      %v3422 = vpop.f32.mrb[0].mxu0
      %v3423 = vpop.f32.mrb[0].mxu0
      %v3424 = vadd.f32 0.0, %v3423
      %v3425 = vpop.f32.mrb[0].mxu0
      %3426 = vmatprep.mubr.bf16.mxu0 0
      %3427 = vmatmul.mubr.bf16.gmra.mrb[0].mxu0 %v3175
      %v3428 = vpop.f32.mrb[0].mxu0
      %v3429 = vadd.f32 0.0, %v3428
      %v3430 = vpop.f32.mrb[0].mxu0
      %v3431 = vpop.f32.mrb[0].mxu0
      %v3432 = vadd.f32 0.0, %v3431
      %v3433 = vpop.f32.mrb[0].mxu0
      %3434 = vmatprep.mubr.bf16.mxu0 0
      %3435 = vmatmul.mubr.bf16.gmra.mrb[0].mxu0 %v3184
      %v3436 = vpop.f32.mrb[0].mxu0
      %v3437 = vadd.f32 0.0, %v3436
      %v3438 = vpop.f32.mrb[0].mxu0
      %v3439 = vpop.f32.mrb[0].mxu0
      %v3440 = vadd.f32 0.0, %v3439
      %v3441 = vpop.f32.mrb[0].mxu0
      %3442 = vmatprep.mubr.bf16.mxu0 0
      %3443 = vmatmul.mubr.bf16.gmra.mrb[0].mxu0 %v3193
      %v3444 = vpop.f32.mrb[0].mxu0
      %v3445 = vadd.f32 0.0, %v3444
      %v3446 = vpop.f32.mrb[0].mxu0
      %v3447 = vpop.f32.mrb[0].mxu0
      %v3448 = vadd.f32 0.0, %v3447
      %v3449 = vpop.f32.mrb[0].mxu0
      %3450 = vmatprep.mubr.bf16.mxu0 0
      %3451 = vmatmul.mubr.bf16.gmra.mrb[0].mxu0 %v3202
      %v3452 = vpop.f32.mrb[0].mxu0
      %v3453 = vadd.f32 0.0, %v3452
      %v3454 = vpop.f32.mrb[0].mxu0
      %v3455 = vpop.f32.mrb[0].mxu0
      %v3456 = vadd.f32 0.0, %v3455
      %v3457 = vpop.f32.mrb[0].mxu0
      %3458 = vmatprep.mubr.bf16.mxu0 0
      %3459 = vmatmul.mubr.bf16.gmra.mrb[0].mxu0 %v3211
      %v3460 = vpop.f32.mrb[0].mxu0
      %v3461 = vadd.f32 0.0, %v3460
      %v3462 = vpop.f32.mrb[0].mxu0
      %v3463 = vpop.f32.mrb[0].mxu0
      %v3464 = vadd.f32 0.0, %v3463
      %v3465 = vpop.f32.mrb[0].mxu0
      %3466 = vmatprep.mubr.bf16.mxu0 0
      %3467 = vmatmul.mubr.bf16.gmra.mrb[0].mxu0 %v3220
      %v3468 = vpop.f32.mrb[0].mxu0
      %v3469 = vadd.f32 0.0, %v3468
      %v3470 = vpop.f32.mrb[0].mxu0
      %v3471 = vpop.f32.mrb[0].mxu0
      %v3472 = vadd.f32 0.0, %v3471
      %v3473 = vpop.f32.mrb[0].mxu0
      %3474 = vmatprep.mubr.bf16.mxu0 0
      %3475 = vmatmul.mubr.bf16.gmra.mrb[0].mxu0 %v3229
      %v3476 = vpop.f32.mrb[0].mxu0
      %v3477 = vadd.f32 0.0, %v3476
      %v3478 = vpop.f32.mrb[0].mxu0
      %v3479 = vpop.f32.mrb[0].mxu0
      %v3480 = vadd.f32 0.0, %v3479
      %v3481 = vpop.f32.mrb[0].mxu0
      %3482 = vmatprep.mubr.bf16.mxu0 0
      %3483 = vmatmul.mubr.bf16.gmra.mrb[0].mxu0 %v3238
      %v3484 = vpop.f32.mrb[0].mxu0
      %v3485 = vadd.f32 0.0, %v3484
      %v3486 = vpop.f32.mrb[0].mxu0
      %v3487 = vpop.f32.mrb[0].mxu0
      %v3488 = vadd.f32 0.0, %v3487
      %v3489 = vpop.f32.mrb[0].mxu0
      %3490 = vmatprep.mubr.bf16.mxu0 0
      %3491 = vmatmul.mubr.bf16.gmra.mrb[0].mxu0 %v3247
      %v3492 = vpop.f32.mrb[0].mxu0
      %v3493 = vadd.f32 0.0, %v3492
      %v3494 = vpop.f32.mrb[0].mxu0
      %v3495 = vpop.f32.mrb[0].mxu0
      %v3496 = vadd.f32 0.0, %v3495
      %v3497 = vpop.f32.mrb[0].mxu0
      %3498 = vmatprep.mubr.bf16.mxu0 0
      %3499 = vmatmul.mubr.bf16.gmra.mrb[0].mxu0 %v3256
      %v3500 = vpop.f32.mrb[0].mxu0
      %v3501 = vadd.f32 0.0, %v3500
      %v3502 = vpop.f32.mrb[0].mxu0
      %v3503 = vpop.f32.mrb[0].mxu0
      %v3504 = vadd.f32 0.0, %v3503
      %v3505 = vpop.f32.mrb[0].mxu0
      %3506 = vmatprep.mubr.bf16.mxu0 0
      %3507 = vmatmul.mubr.bf16.gmra.mrb[0].mxu0 %v3265
      %v3508 = vpop.f32.mrb[0].mxu0
      %v3509 = vadd.f32 0.0, %v3508
      %v3510 = vpop.f32.mrb[0].mxu0
      %v3511 = vpop.f32.mrb[0].mxu0
      %v3512 = vadd.f32 0.0, %v3511
      %v3513 = vpop.f32.mrb[0].mxu0
      %3514 = vmatprep.mubr.bf16.mxu0 0
      %3515 = vmatmul.mubr.bf16.gmra.mrb[0].mxu0 %v3274
      %v3516 = vpop.f32.mrb[0].mxu0
      %v3517 = vadd.f32 0.0, %v3516
      %v3518 = vpop.f32.mrb[0].mxu0
      %v3519 = vpop.f32.mrb[0].mxu0
      %v3520 = vadd.f32 0.0, %v3519
      %v3521 = vpop.f32.mrb[0].mxu0
      %3522 = vmatprep.mubr.bf16.mxu0 0
      %3523 = vmatmul.mubr.bf16.gmra.mrb[0].mxu0 %v3283
      %v3524 = vpop.f32.mrb[0].mxu0
      %v3525 = vadd.f32 0.0, %v3524
      %v3526 = vpop.f32.mrb[0].mxu0
      %v3527 = vpop.f32.mrb[0].mxu0
      %v3528 = vadd.f32 0.0, %v3527
      %v3529 = vpop.f32.mrb[0].mxu0
      %3530 = vmatprep.mubr.bf16.mxu0 0
      %3531 = vmatmul.mubr.bf16.gmra.mrb[0].mxu0 %v3292
      %v3532 = vpop.f32.mrb[0].mxu0
      %v3533 = vadd.f32 0.0, %v3532
      %v3534 = vpop.f32.mrb[0].mxu0
      %v3535 = vpop.f32.mrb[0].mxu0
      %v3536 = vadd.f32 0.0, %v3535
      %v3537 = vpop.f32.mrb[0].mxu0
      %3538 = vmatprep.mubr.bf16.mxu0 0
      %3539 = vmatmul.mubr.bf16.gmra.mrb[0].mxu0 %v3301
      %v3540 = vpop.f32.mrb[0].mxu0
      %v3541 = vadd.f32 0.0, %v3540
      %v3542 = vpop.f32.mrb[0].mxu0
      %v3543 = vpop.f32.mrb[0].mxu0
      %v3544 = vadd.f32 0.0, %v3543
      %v3545 = vpop.f32.mrb[0].mxu0
      %3546 = vmatprep.mubr.bf16.mxu0 0
      %3547 = vmatmul.mubr.bf16.gmra.mrb[0].mxu0 %v3310
      %v3548 = vpop.f32.mrb[0].mxu0
      %v3549 = vadd.f32 0.0, %v3548
      %v3550 = vpop.f32.mrb[0].mxu0
      %v3551 = vpop.f32.mrb[0].mxu0
      %v3552 = vadd.f32 0.0, %v3551
      %v3553 = vpop.f32.mrb[0].mxu0
      %3554 = vmatprep.mubr.bf16.mxu0 0
      %3555 = vmatmul.mubr.bf16.gmra.mrb[0].mxu0 %v3319
      %v3556 = vpop.f32.mrb[0].mxu0
      %v3557 = vadd.f32 0.0, %v3556
      %v3558 = vpop.f32.mrb[0].mxu0
      %v3559 = vpop.f32.mrb[0].mxu0
      %v3560 = vadd.f32 0.0, %v3559
      %v3561 = vpop.f32.mrb[0].mxu0
      %3562 = vdwg.mxu0
      %v3563 = vadd.f32 %v3092, %v3421
      %v3564 = vadd.f32 %v3093, %v3424
      %v3565 = vadd.f32 %v3094, %v3429
      %v3566 = vadd.f32 %v3095, %v3432
      %v3567 = vadd.f32 %v3096, %v3437
      %v3568 = vadd.f32 %v3097, %v3440
      %v3569 = vadd.f32 %v3098, %v3445
      %v3570 = vadd.f32 %v3099, %v3448
      %v3571 = vadd.f32 %v3100, %v3453
      %v3572 = vadd.f32 %v3101, %v3456
      %v3573 = vadd.f32 %v3102, %v3461
      %v3574 = vadd.f32 %v3103, %v3464
      %v3575 = vadd.f32 %v3104, %v3469
      %v3576 = vadd.f32 %v3105, %v3472
      %v3577 = vadd.f32 %v3106, %v3477
      %v3578 = vadd.f32 %v3107, %v3480
      %v3579 = vadd.f32 %v3108, %v3485
      %v3580 = vadd.f32 %v3109, %v3488
      %v3581 = vadd.f32 %v3110, %v3493
      %v3582 = vadd.f32 %v3111, %v3496
      %v3583 = vadd.f32 %v3112, %v3501
      %v3584 = vadd.f32 %v3113, %v3504
      %v3585 = vadd.f32 %v3114, %v3509
      %v3586 = vadd.f32 %v3115, %v3512
      %v3587 = vadd.f32 %v3116, %v3517
      %v3588 = vadd.f32 %v3117, %v3520
      %v3589 = vadd.f32 %v3118, %v3525
      %v3590 = vadd.f32 %v3119, %v3528
      %v3591 = vadd.f32 %v3120, %v3533
      %v3592 = vadd.f32 %v3121, %v3536
      %v3593 = vadd.f32 %v3122, %v3541
      %v3594 = vadd.f32 %v3123, %v3544
      %v3595 = vadd.f32 %v3124, %v3549
      %v3596 = vadd.f32 %v3125, %v3552
      %v3597 = vadd.f32 %v3126, %v3557
      %v3598 = vadd.f32 %v3127, %v3560
      %v3599 = vld [vmem:[%s235 + $0x10] sm:$0x8]
      %s3600 = scalar_lea.vmem %s240, 512
      %v3601 = vld [vmem:[%s3600] sm:$0xf]
      %v3602 = vld [vmem:[%s3600 + $0x4] sm:$0xf]
      %v3603 = vld [vmem:[%s3600 + $0x8] sm:$0xf]
      %v3604 = vld [vmem:[%s3600 + $0xc] sm:$0xf]
      %v3605 = vld [vmem:[%s3600 + $0x10] sm:$0xf]
      %v3606 = vld [vmem:[%s3600 + $0x14] sm:$0xf]
      %v3607 = vld [vmem:[%s3600 + $0x18] sm:$0xf]
      %v3608 = vld [vmem:[%s3600 + $0x1c] sm:$0xf]
      %v3609 = vld [vmem:[%s3600 + $0x20] sm:$0xf]
      %v3610 = vld [vmem:[%s3600 + $0x24] sm:$0xf]
      %v3611 = vld [vmem:[%s3600 + $0x28] sm:$0xf]
      %v3612 = vld [vmem:[%s3600 + $0x2c] sm:$0xf]
      %v3613 = vld [vmem:[%s3600 + $0x30] sm:$0xf]
      %v3614 = vld [vmem:[%s3600 + $0x34] sm:$0xf]
      %v3615 = vld [vmem:[%s3600 + $0x38] sm:$0xf]
      %v3616 = vld [vmem:[%s3600 + $0x3c] sm:$0xf]
      %v3618 = vunpack.c.l.b16 %v3599
      %v3619 = vpack.c.b16 %v2757, %v3618
      %vm3620 = vcmask 1044480
      %v3621 = vrot.slane %v3619, 3
      %v3622 = vrot.slane %v2794, 3
      %v3623 = vsel %vm3620, %v3621, %v3622
      %v3624 = vrot.slane %v2795, 3
      %v3625 = vsel %vm3620, %v3622, %v3624
      %v3626 = vrot.slane %v2796, 3
      %v3627 = vsel %vm3620, %v3624, %v3626
      %v3628 = vrot.slane %v2797, 3
      %v3629 = vsel %vm3620, %v3626, %v3628
      %v3630 = vrot.slane %v2798, 3
      %v3631 = vsel %vm3620, %v3628, %v3630
      %v3632 = vrot.slane %v2799, 3
      %v3633 = vsel %vm3620, %v3630, %v3632
      %v3634 = vrot.slane %v2800, 3
      %v3635 = vsel %vm3620, %v3632, %v3634
      %v3636 = vrot.slane %v2801, 3
      %v3637 = vsel %vm3620, %v3634, %v3636
      %v3638 = vrot.slane %v2802, 3
      %v3639 = vsel %vm3620, %v3636, %v3638
      %v3640 = vrot.slane %v2803, 3
      %v3641 = vsel %vm3620, %v3638, %v3640
      %v3642 = vrot.slane %v2804, 3
      %v3643 = vsel %vm3620, %v3640, %v3642
      %v3644 = vrot.slane %v2805, 3
      %v3645 = vsel %vm3620, %v3642, %v3644
      %v3646 = vrot.slane %v2806, 3
      %v3647 = vsel %vm3620, %v3644, %v3646
      %v3648 = vrot.slane %v2807, 3
      %v3649 = vsel %vm3620, %v3646, %v3648
      %v3650 = vrot.slane %v2808, 3
      %v3651 = vsel %vm3620, %v3648, %v3650
      %v3652 = vrot.slane %v2809, 3
      %v3653 = vsel %vm3620, %v3650, %v3652
      %v3654 = vrot.slane %v2810, 3
      %v3655 = vsel %vm3620, %v3652, %v3654
      %v3656 = vrot.slane %v3148, 3
      %v3657 = vsel %vm3620, %v3654, %v3656
      %v3692 = vunpack.c.l.b16 %v3601
      %v3693 = vunpack.c.l.b16 %v3602
      %v3694 = vunpack.c.l.b16 %v3603
      %v3695 = vunpack.c.l.b16 %v3604
      %v3696 = vunpack.c.l.b16 %v3605
      %v3697 = vunpack.c.l.b16 %v3606
      %v3698 = vunpack.c.l.b16 %v3607
      %v3699 = vunpack.c.l.b16 %v3608
      %v3700 = vunpack.c.l.b16 %v3609
      %v3701 = vunpack.c.l.b16 %v3610
      %v3702 = vunpack.c.l.b16 %v3611
      %v3703 = vunpack.c.l.b16 %v3612
      %v3704 = vunpack.c.l.b16 %v3613
      %v3705 = vunpack.c.l.b16 %v3614
      %v3706 = vunpack.c.l.b16 %v3615
      %v3707 = vunpack.c.l.b16 %v3616
      %v3708 = vpack.c.b16 %v3693, %v3692
      %v3709 = vpack.c.b16 %v3695, %v3694
      %v3710 = vpack.c.b16 %v3697, %v3696
      %v3711 = vpack.c.b16 %v3699, %v3698
      %v3712 = vpack.c.b16 %v3701, %v3700
      %v3713 = vpack.c.b16 %v3703, %v3702
      %v3714 = vpack.c.b16 %v3705, %v3704
      %v3715 = vpack.c.b16 %v3707, %v3706
      %3724 = vmatprep.subr.bf16.mxu0 0
      %3725 = vmatpush1.bf16.msra.mxu0 %v3708
      %3726 = vmatprep.subr.bf16.mxu0 0
      %3727 = vmatpush1.bf16.msra.mxu0 %v3709
      %3728 = vmatprep.subr.bf16.mxu0 0
      %3729 = vmatpush1.bf16.msra.mxu0 %v3710
      %3730 = vmatprep.subr.bf16.mxu0 0
      %3731 = vmatpush1.bf16.msra.mxu0 %v3711
      %3732 = vmatprep.subr.bf16.mxu0 0
      %3733 = vmatpush1.bf16.msra.mxu0 %v3712
      %3734 = vmatprep.subr.bf16.mxu0 0
      %3735 = vmatpush1.bf16.msra.mxu0 %v3713
      %3736 = vmatprep.subr.bf16.mxu0 0
      %3737 = vmatpush1.bf16.msra.mxu0 %v3714
      %3738 = vmatprep.subr.bf16.mxu0 0
      %3739 = vmatpush1.bf16.msra.mxu0 %v3715
      %3740 = vmatprep.subr.bf16.mxu0 0
      %3741 = vmatpush1.bf16.msra.mxu0 0
      %3742 = vmatprep.subr.bf16.mxu0 0
      %3743 = vmatpush1.bf16.msra.mxu0 0
      %3744 = vmatprep.subr.bf16.mxu0 0
      %3745 = vmatpush1.bf16.msra.mxu0 0
      %3746 = vmatprep.subr.bf16.mxu0 0
      %3747 = vmatpush1.bf16.msra.mxu0 0
      %3748 = vmatprep.subr.bf16.mxu0 0
      %3749 = vmatpush1.bf16.msra.mxu0 0
      %3750 = vmatprep.subr.bf16.mxu0 0
      %3751 = vmatpush1.bf16.msra.mxu0 0
      %3752 = vmatprep.subr.bf16.mxu0 0
      %3753 = vmatpush1.bf16.msra.mxu0 0
      %3754 = vmatprep.subr.bf16.mxu0 0
      %3755 = vmatpush1.bf16.msra.mxu0 0
      %3756 = vmatprep.mubr.bf16.mxu0 0
      %3757 = vmatmul.mubr.bf16.gmra.mrb[0].mxu0 %v3623
      %v3758 = vpop.f32.mrb[0].mxu0
      %v3759 = vadd.f32 0.0, %v3758
      %v3760 = vpop.f32.mrb[0].mxu0
      %v3761 = vpop.f32.mrb[0].mxu0
      %v3762 = vadd.f32 0.0, %v3761
      %v3763 = vpop.f32.mrb[0].mxu0
      %3764 = vmatprep.mubr.bf16.mxu0 0
      %3765 = vmatmul.mubr.bf16.gmra.mrb[0].mxu0 %v3625
      %v3766 = vpop.f32.mrb[0].mxu0
      %v3767 = vadd.f32 0.0, %v3766
      %v3768 = vpop.f32.mrb[0].mxu0
      %v3769 = vpop.f32.mrb[0].mxu0
      %v3770 = vadd.f32 0.0, %v3769
      %v3771 = vpop.f32.mrb[0].mxu0
      %3772 = vmatprep.mubr.bf16.mxu0 0
      %3773 = vmatmul.mubr.bf16.gmra.mrb[0].mxu0 %v3627
      %v3774 = vpop.f32.mrb[0].mxu0
      %v3775 = vadd.f32 0.0, %v3774
      %v3776 = vpop.f32.mrb[0].mxu0
      %v3777 = vpop.f32.mrb[0].mxu0
      %v3778 = vadd.f32 0.0, %v3777
      %v3779 = vpop.f32.mrb[0].mxu0
      %3780 = vmatprep.mubr.bf16.mxu0 0
      %3781 = vmatmul.mubr.bf16.gmra.mrb[0].mxu0 %v3629
      %v3782 = vpop.f32.mrb[0].mxu0
      %v3783 = vadd.f32 0.0, %v3782
      %v3784 = vpop.f32.mrb[0].mxu0
      %v3785 = vpop.f32.mrb[0].mxu0
      %v3786 = vadd.f32 0.0, %v3785
      %v3787 = vpop.f32.mrb[0].mxu0
      %3788 = vmatprep.mubr.bf16.mxu0 0
      %3789 = vmatmul.mubr.bf16.gmra.mrb[0].mxu0 %v3631
      %v3790 = vpop.f32.mrb[0].mxu0
      %v3791 = vadd.f32 0.0, %v3790
      %v3792 = vpop.f32.mrb[0].mxu0
      %v3793 = vpop.f32.mrb[0].mxu0
      %v3794 = vadd.f32 0.0, %v3793
      %v3795 = vpop.f32.mrb[0].mxu0
      %3796 = vmatprep.mubr.bf16.mxu0 0
      %3797 = vmatmul.mubr.bf16.gmra.mrb[0].mxu0 %v3633
      %v3798 = vpop.f32.mrb[0].mxu0
      %v3799 = vadd.f32 0.0, %v3798
      %v3800 = vpop.f32.mrb[0].mxu0
      %v3801 = vpop.f32.mrb[0].mxu0
      %v3802 = vadd.f32 0.0, %v3801
      %v3803 = vpop.f32.mrb[0].mxu0
      %3804 = vmatprep.mubr.bf16.mxu0 0
      %3805 = vmatmul.mubr.bf16.gmra.mrb[0].mxu0 %v3635
      %v3806 = vpop.f32.mrb[0].mxu0
      %v3807 = vadd.f32 0.0, %v3806
      %v3808 = vpop.f32.mrb[0].mxu0
      %v3809 = vpop.f32.mrb[0].mxu0
      %v3810 = vadd.f32 0.0, %v3809
      %v3811 = vpop.f32.mrb[0].mxu0
      %3812 = vmatprep.mubr.bf16.mxu0 0
      %3813 = vmatmul.mubr.bf16.gmra.mrb[0].mxu0 %v3637
      %v3814 = vpop.f32.mrb[0].mxu0
      %v3815 = vadd.f32 0.0, %v3814
      %v3816 = vpop.f32.mrb[0].mxu0
      %v3817 = vpop.f32.mrb[0].mxu0
      %v3818 = vadd.f32 0.0, %v3817
      %v3819 = vpop.f32.mrb[0].mxu0
      %3820 = vmatprep.mubr.bf16.mxu0 0
      %3821 = vmatmul.mubr.bf16.gmra.mrb[0].mxu0 %v3639
      %v3822 = vpop.f32.mrb[0].mxu0
      %v3823 = vadd.f32 0.0, %v3822
      %v3824 = vpop.f32.mrb[0].mxu0
      %v3825 = vpop.f32.mrb[0].mxu0
      %v3826 = vadd.f32 0.0, %v3825
      %v3827 = vpop.f32.mrb[0].mxu0
      %3828 = vmatprep.mubr.bf16.mxu0 0
      %3829 = vmatmul.mubr.bf16.gmra.mrb[0].mxu0 %v3641
      %v3830 = vpop.f32.mrb[0].mxu0
      %v3831 = vadd.f32 0.0, %v3830
      %v3832 = vpop.f32.mrb[0].mxu0
      %v3833 = vpop.f32.mrb[0].mxu0
      %v3834 = vadd.f32 0.0, %v3833
      %v3835 = vpop.f32.mrb[0].mxu0
      %3836 = vmatprep.mubr.bf16.mxu0 0
      %3837 = vmatmul.mubr.bf16.gmra.mrb[0].mxu0 %v3643
      %v3838 = vpop.f32.mrb[0].mxu0
      %v3839 = vadd.f32 0.0, %v3838
      %v3840 = vpop.f32.mrb[0].mxu0
      %v3841 = vpop.f32.mrb[0].mxu0
      %v3842 = vadd.f32 0.0, %v3841
      %v3843 = vpop.f32.mrb[0].mxu0
      %3844 = vmatprep.mubr.bf16.mxu0 0
      %3845 = vmatmul.mubr.bf16.gmra.mrb[0].mxu0 %v3645
      %v3846 = vpop.f32.mrb[0].mxu0
      %v3847 = vadd.f32 0.0, %v3846
      %v3848 = vpop.f32.mrb[0].mxu0
      %v3849 = vpop.f32.mrb[0].mxu0
      %v3850 = vadd.f32 0.0, %v3849
      %v3851 = vpop.f32.mrb[0].mxu0
      %3852 = vmatprep.mubr.bf16.mxu0 0
      %3853 = vmatmul.mubr.bf16.gmra.mrb[0].mxu0 %v3647
      %v3854 = vpop.f32.mrb[0].mxu0
      %v3855 = vadd.f32 0.0, %v3854
      %v3856 = vpop.f32.mrb[0].mxu0
      %v3857 = vpop.f32.mrb[0].mxu0
      %v3858 = vadd.f32 0.0, %v3857
      %v3859 = vpop.f32.mrb[0].mxu0
      %3860 = vmatprep.mubr.bf16.mxu0 0
      %3861 = vmatmul.mubr.bf16.gmra.mrb[0].mxu0 %v3649
      %v3862 = vpop.f32.mrb[0].mxu0
      %v3863 = vadd.f32 0.0, %v3862
      %v3864 = vpop.f32.mrb[0].mxu0
      %v3865 = vpop.f32.mrb[0].mxu0
      %v3866 = vadd.f32 0.0, %v3865
      %v3867 = vpop.f32.mrb[0].mxu0
      %3868 = vmatprep.mubr.bf16.mxu0 0
      %3869 = vmatmul.mubr.bf16.gmra.mrb[0].mxu0 %v3651
      %v3870 = vpop.f32.mrb[0].mxu0
      %v3871 = vadd.f32 0.0, %v3870
      %v3872 = vpop.f32.mrb[0].mxu0
      %v3873 = vpop.f32.mrb[0].mxu0
      %v3874 = vadd.f32 0.0, %v3873
      %v3875 = vpop.f32.mrb[0].mxu0
      %3876 = vmatprep.mubr.bf16.mxu0 0
      %3877 = vmatmul.mubr.bf16.gmra.mrb[0].mxu0 %v3653
      %v3878 = vpop.f32.mrb[0].mxu0
      %v3879 = vadd.f32 0.0, %v3878
      %v3880 = vpop.f32.mrb[0].mxu0
      %v3881 = vpop.f32.mrb[0].mxu0
      %v3882 = vadd.f32 0.0, %v3881
      %v3883 = vpop.f32.mrb[0].mxu0
      %3884 = vmatprep.mubr.bf16.mxu0 0
      %3885 = vmatmul.mubr.bf16.gmra.mrb[0].mxu0 %v3655
      %v3886 = vpop.f32.mrb[0].mxu0
      %v3887 = vadd.f32 0.0, %v3886
      %v3888 = vpop.f32.mrb[0].mxu0
      %v3889 = vpop.f32.mrb[0].mxu0
      %v3890 = vadd.f32 0.0, %v3889
      %v3891 = vpop.f32.mrb[0].mxu0
      %3892 = vmatprep.mubr.bf16.mxu0 0
      %3893 = vmatmul.mubr.bf16.gmra.mrb[0].mxu0 %v3657
      %v3894 = vpop.f32.mrb[0].mxu0
      %v3895 = vadd.f32 0.0, %v3894
      %v3896 = vpop.f32.mrb[0].mxu0
      %v3897 = vpop.f32.mrb[0].mxu0
      %v3898 = vadd.f32 0.0, %v3897
      %v3899 = vpop.f32.mrb[0].mxu0
      %3900 = vdwg.mxu0
      %v3901 = vadd.f32 %v3563, %v3759
      %v3902 = vadd.f32 %v3564, %v3762
      %v3903 = vadd.f32 %v3565, %v3767
      %v3904 = vadd.f32 %v3566, %v3770
      %v3905 = vadd.f32 %v3567, %v3775
      %v3906 = vadd.f32 %v3568, %v3778
      %v3907 = vadd.f32 %v3569, %v3783
      %v3908 = vadd.f32 %v3570, %v3786
      %v3909 = vadd.f32 %v3571, %v3791
      %v3910 = vadd.f32 %v3572, %v3794
      %v3911 = vadd.f32 %v3573, %v3799
      %v3912 = vadd.f32 %v3574, %v3802
      %v3913 = vadd.f32 %v3575, %v3807
      %v3914 = vadd.f32 %v3576, %v3810
      %v3915 = vadd.f32 %v3577, %v3815
      %v3916 = vadd.f32 %v3578, %v3818
      %v3917 = vadd.f32 %v3579, %v3823
      %v3918 = vadd.f32 %v3580, %v3826
      %v3919 = vadd.f32 %v3581, %v3831
      %v3920 = vadd.f32 %v3582, %v3834
      %v3921 = vadd.f32 %v3583, %v3839
      %v3922 = vadd.f32 %v3584, %v3842
      %v3923 = vadd.f32 %v3585, %v3847
      %v3924 = vadd.f32 %v3586, %v3850
      %v3925 = vadd.f32 %v3587, %v3855
      %v3926 = vadd.f32 %v3588, %v3858
      %v3927 = vadd.f32 %v3589, %v3863
      %v3928 = vadd.f32 %v3590, %v3866
      %v3929 = vadd.f32 %v3591, %v3871
      %v3930 = vadd.f32 %v3592, %v3874
      %v3931 = vadd.f32 %v3593, %v3879
      %v3932 = vadd.f32 %v3594, %v3882
      %v3933 = vadd.f32 %v3595, %v3887
      %v3934 = vadd.f32 %v3596, %v3890
      %v3935 = vadd.f32 %v3597, %v3895
      %v3936 = vadd.f32 %v3598, %v3898
      %v3937 = vpack.c.bf16 %v3902, %v3901
      %v3938 = vpack.c.bf16 %v3904, %v3903
      %v3939 = vpack.c.bf16 %v3906, %v3905
      %v3940 = vpack.c.bf16 %v3908, %v3907
      %v3941 = vpack.c.bf16 %v3910, %v3909
      %v3942 = vpack.c.bf16 %v3912, %v3911
      %v3943 = vpack.c.bf16 %v3914, %v3913
      %v3944 = vpack.c.bf16 %v3916, %v3915
      %v3945 = vpack.c.bf16 %v3918, %v3917
      %v3946 = vpack.c.bf16 %v3920, %v3919
      %v3947 = vpack.c.bf16 %v3922, %v3921
      %v3948 = vpack.c.bf16 %v3924, %v3923
      %v3949 = vpack.c.bf16 %v3926, %v3925
      %v3950 = vpack.c.bf16 %v3928, %v3927
      %v3951 = vpack.c.bf16 %v3930, %v3929
      %v3952 = vpack.c.bf16 %v3932, %v3931
      %v3953 = vpack.c.bf16 %v3934, %v3933
      %v3954 = vpack.c.bf16 %v3936, %v3935
      %v3973 = vunpack.c.l.b16 %v3937
      %v3974 = vunpack.c.h.b16 %v3937
      %v3975 = vunpack.c.l.b16 %v3938
      %v3976 = vunpack.c.h.b16 %v3938
      %v3977 = vunpack.c.l.b16 %v3939
      %v3978 = vunpack.c.h.b16 %v3939
      %v3979 = vunpack.c.l.b16 %v3940
      %v3980 = vunpack.c.h.b16 %v3940
      %v3981 = vunpack.c.l.b16 %v3941
      %v3982 = vunpack.c.h.b16 %v3941
      %v3983 = vunpack.c.l.b16 %v3942
      %v3984 = vunpack.c.h.b16 %v3942
      %v3985 = vunpack.c.l.b16 %v3943
      %v3986 = vunpack.c.h.b16 %v3943
      %v3987 = vunpack.c.l.b16 %v3944
      %v3988 = vunpack.c.h.b16 %v3944
      %v3989 = vunpack.c.l.b16 %v3945
      %v3990 = vunpack.c.h.b16 %v3945
      %v3991 = vunpack.c.l.b16 %v3946
      %v3992 = vunpack.c.h.b16 %v3946
      %v3993 = vunpack.c.l.b16 %v3947
      %v3994 = vunpack.c.h.b16 %v3947
      %v3995 = vunpack.c.l.b16 %v3948
      %v3996 = vunpack.c.h.b16 %v3948
      %v3997 = vunpack.c.l.b16 %v3949
      %v3998 = vunpack.c.h.b16 %v3949
      %v3999 = vunpack.c.l.b16 %v3950
      %v4000 = vunpack.c.h.b16 %v3950
      %v4001 = vunpack.c.l.b16 %v3951
      %v4002 = vunpack.c.h.b16 %v3951
      %v4003 = vunpack.c.l.b16 %v3952
      %v4004 = vunpack.c.h.b16 %v3952
      %v4005 = vunpack.c.l.b16 %v3953
      %v4006 = vunpack.c.h.b16 %v3953
      %v4007 = vunpack.c.l.b16 %v3954
      %v4008 = vunpack.c.h.b16 %v3954
      %v4009 = vpack.c.b16 %v3973, %v3973
      %v4010 = vpack.c.b16 %v3974, %v3974
      %v4011 = vpack.c.b16 %v3975, %v3975
      %v4012 = vpack.c.b16 %v3976, %v3976
      %v4013 = vpack.c.b16 %v3977, %v3977
      %v4014 = vpack.c.b16 %v3978, %v3978
      %v4015 = vpack.c.b16 %v3979, %v3979
      %v4016 = vpack.c.b16 %v3980, %v3980
      %v4017 = vpack.c.b16 %v3981, %v3981
      %v4018 = vpack.c.b16 %v3982, %v3982
      %v4019 = vpack.c.b16 %v3983, %v3983
      %v4020 = vpack.c.b16 %v3984, %v3984
      %v4021 = vpack.c.b16 %v3985, %v3985
      %v4022 = vpack.c.b16 %v3986, %v3986
      %v4023 = vpack.c.b16 %v3987, %v3987
      %v4024 = vpack.c.b16 %v3988, %v3988
      %v4025 = vpack.c.b16 %v3989, %v3989
      %v4026 = vpack.c.b16 %v3990, %v3990
      %v4027 = vpack.c.b16 %v3991, %v3991
      %v4028 = vpack.c.b16 %v3992, %v3992
      %v4029 = vpack.c.b16 %v3993, %v3993
      %v4030 = vpack.c.b16 %v3994, %v3994
      %v4031 = vpack.c.b16 %v3995, %v3995
      %v4032 = vpack.c.b16 %v3996, %v3996
      %v4033 = vpack.c.b16 %v3997, %v3997
      %v4034 = vpack.c.b16 %v3998, %v3998
      %v4035 = vpack.c.b16 %v3999, %v3999
      %v4036 = vpack.c.b16 %v4000, %v4000
      %v4037 = vpack.c.b16 %v4001, %v4001
      %v4038 = vpack.c.b16 %v4002, %v4002
      %v4039 = vpack.c.b16 %v4003, %v4003
      %v4040 = vpack.c.b16 %v4004, %v4004
      %v4041 = vpack.c.b16 %v4005, %v4005
      %v4042 = vpack.c.b16 %v4006, %v4006
      %v4043 = vpack.c.b16 %v4007, %v4007
      %v4044 = vpack.c.b16 %v4008, %v4008
      %4081 = vst [vmem:[%s248] sm:$0xf] %v4009
      %4082 = vst [vmem:[%s248 + $0x4] sm:$0xf] %v4010
      %4083 = vst [vmem:[%s248 + $0x8] sm:$0xf] %v4011
      %4084 = vst [vmem:[%s248 + $0xc] sm:$0xf] %v4012
      %4085 = vst [vmem:[%s248 + $0x10] sm:$0xf] %v4013
      %4086 = vst [vmem:[%s248 + $0x14] sm:$0xf] %v4014
      %4087 = vst [vmem:[%s248 + $0x18] sm:$0xf] %v4015
      %4088 = vst [vmem:[%s248 + $0x1c] sm:$0xf] %v4016
      %4089 = vst [vmem:[%s248 + $0x20] sm:$0xf] %v4017
      %4090 = vst [vmem:[%s248 + $0x24] sm:$0xf] %v4018
      %4091 = vst [vmem:[%s248 + $0x28] sm:$0xf] %v4019
      %4092 = vst [vmem:[%s248 + $0x2c] sm:$0xf] %v4020
      %4093 = vst [vmem:[%s248 + $0x30] sm:$0xf] %v4021
      %4094 = vst [vmem:[%s248 + $0x34] sm:$0xf] %v4022
      %4095 = vst [vmem:[%s248 + $0x38] sm:$0xf] %v4023
      %4096 = vst [vmem:[%s248 + $0x3c] sm:$0xf] %v4024
      %4097 = vst [vmem:[%s248 + $0x40] sm:$0xf] %v4025
      %4098 = vst [vmem:[%s248 + $0x44] sm:$0xf] %v4026
      %4099 = vst [vmem:[%s248 + $0x48] sm:$0xf] %v4027
      %4100 = vst [vmem:[%s248 + $0x4c] sm:$0xf] %v4028
      %4101 = vst [vmem:[%s248 + $0x50] sm:$0xf] %v4029
      %4102 = vst [vmem:[%s248 + $0x54] sm:$0xf] %v4030
      %4103 = vst [vmem:[%s248 + $0x58] sm:$0xf] %v4031
      %4104 = vst [vmem:[%s248 + $0x5c] sm:$0xf] %v4032
      %4105 = vst [vmem:[%s248 + $0x60] sm:$0xf] %v4033
      %4106 = vst [vmem:[%s248 + $0x64] sm:$0xf] %v4034
      %4107 = vst [vmem:[%s248 + $0x68] sm:$0xf] %v4035
      %4108 = vst [vmem:[%s248 + $0x6c] sm:$0xf] %v4036
      %4109 = vst [vmem:[%s248 + $0x70] sm:$0xf] %v4037
      %4110 = vst [vmem:[%s248 + $0x74] sm:$0xf] %v4038
      %4111 = vst [vmem:[%s248 + $0x78] sm:$0xf] %v4039
      %4112 = vst [vmem:[%s248 + $0x7c] sm:$0xf] %v4040
      %4113 = vst [vmem:[%s248 + $0x80] sm:$0xf] %v4041
      %4114 = vst [vmem:[%s248 + $0x84] sm:$0xf] %v4042
      %4115 = vst [vmem:[%s248 + $0x88] sm:$0xf] %v4043
      %4116 = vst [vmem:[%s248 + $0x8c] sm:$0xf] %v4044
      %v4117 = vld [vmem:[%s2] sm:$0xff]
      %v4118 = vld [vmem:[%s2 + $0x8] sm:$0xff]
      %v4119 = vld [vmem:[%s2 + $0x10] sm:$0xff]
      %v4120 = vld [vmem:[%s2 + $0x18] sm:$0xff]
      %v4121 = vld [vmem:[%s2 + $0x20] sm:$0xff]
      %v4122 = vld [vmem:[%s2 + $0x28] sm:$0xff]
      %v4123 = vld [vmem:[%s2 + $0x30] sm:$0xff]
      %v4124 = vld [vmem:[%s2 + $0x38] sm:$0xff]
      %v4125 = vld [vmem:[%s2 + $0x40] sm:$0xff]
      %v4126 = vld [vmem:[%s2 + $0x48] sm:$0xff]
      %v4127 = vld [vmem:[%s2 + $0x50] sm:$0xff]
      %v4128 = vld [vmem:[%s2 + $0x58] sm:$0xff]
      %v4129 = vld [vmem:[%s2 + $0x60] sm:$0xff]
      %v4130 = vld [vmem:[%s2 + $0x68] sm:$0xff]
      %v4131 = vld [vmem:[%s2 + $0x70] sm:$0xff]
      %v4132 = vld [vmem:[%s2 + $0x78] sm:$0xff]
      %v4133 = vld [vmem:[%s2 + $0x80] sm:$0xff]
      %v4134 = vld [vmem:[%s2 + $0x88] sm:$0xff]
      %v4135 = vld [vmem:[%s2 + $0x90] sm:$0xff]
      %v4136 = vld [vmem:[%s2 + $0x98] sm:$0xff]
      %v4137 = vld [vmem:[%s2 + $0xa0] sm:$0xff]
      %v4138 = vld [vmem:[%s2 + $0xa8] sm:$0xff]
      %v4139 = vld [vmem:[%s2 + $0xb0] sm:$0xff]
      %v4140 = vld [vmem:[%s2 + $0xb8] sm:$0xff]
      %v4141 = vld [vmem:[%s2 + $0xc0] sm:$0xff]
      %v4142 = vld [vmem:[%s2 + $0xc8] sm:$0xff]
      %v4143 = vld [vmem:[%s2 + $0xd0] sm:$0xff]
      %v4144 = vld [vmem:[%s2 + $0xd8] sm:$0xff]
      %v4145 = vld [vmem:[%s2 + $0xe0] sm:$0xff]
      %v4146 = vld [vmem:[%s2 + $0xe8] sm:$0xff]
      %v4147 = vld [vmem:[%s2 + $0xf0] sm:$0xff]
      %v4148 = vld [vmem:[%s2 + $0xf8] sm:$0xff]
      %v4149 = vld [vmem:[%s2 + $0x100] sm:$0xff]
      %v4150 = vld [vmem:[%s2 + $0x108] sm:$0xff]
      %v4151 = vld [vmem:[%s2 + $0x110] sm:$0xff]
      %v4152 = vld [vmem:[%s2 + $0x118] sm:$0xff]
      %4154 = vset.pattern.permute.xlu0 0
      %4155 = vperm.xlu0 %4154, %v4117
      %v4156 = vpop.permute.xlu0 %4155
      %4159 = vset.pattern.permute.xlu0 0
      %4160 = vperm.xlu0 %4159, %v4118
      %v4161 = vpop.permute.xlu0 %4160
      %4164 = vset.pattern.permute.xlu0 0
      %4165 = vperm.xlu0 %4164, %v4119
      %v4166 = vpop.permute.xlu0 %4165
      %4169 = vset.pattern.permute.xlu0 0
      %4170 = vperm.xlu0 %4169, %v4120
      %v4171 = vpop.permute.xlu0 %4170
      %4174 = vset.pattern.permute.xlu0 0
      %4175 = vperm.xlu0 %4174, %v4121
      %v4176 = vpop.permute.xlu0 %4175
      %4179 = vset.pattern.permute.xlu0 0
      %4180 = vperm.xlu0 %4179, %v4122
      %v4181 = vpop.permute.xlu0 %4180
      %4184 = vset.pattern.permute.xlu0 0
      %4185 = vperm.xlu0 %4184, %v4123
      %v4186 = vpop.permute.xlu0 %4185
      %4189 = vset.pattern.permute.xlu0 0
      %4190 = vperm.xlu0 %4189, %v4124
      %v4191 = vpop.permute.xlu0 %4190
      %4194 = vset.pattern.permute.xlu0 0
      %4195 = vperm.xlu0 %4194, %v4125
      %v4196 = vpop.permute.xlu0 %4195
      %4199 = vset.pattern.permute.xlu0 0
      %4200 = vperm.xlu0 %4199, %v4126
      %v4201 = vpop.permute.xlu0 %4200
      %4204 = vset.pattern.permute.xlu0 0
      %4205 = vperm.xlu0 %4204, %v4127
      %v4206 = vpop.permute.xlu0 %4205
      %4209 = vset.pattern.permute.xlu0 0
      %4210 = vperm.xlu0 %4209, %v4128
      %v4211 = vpop.permute.xlu0 %4210
      %4214 = vset.pattern.permute.xlu0 0
      %4215 = vperm.xlu0 %4214, %v4129
      %v4216 = vpop.permute.xlu0 %4215
      %4219 = vset.pattern.permute.xlu0 0
      %4220 = vperm.xlu0 %4219, %v4130
      %v4221 = vpop.permute.xlu0 %4220
      %4224 = vset.pattern.permute.xlu0 0
      %4225 = vperm.xlu0 %4224, %v4131
      %v4226 = vpop.permute.xlu0 %4225
      %4229 = vset.pattern.permute.xlu0 0
      %4230 = vperm.xlu0 %4229, %v4132
      %v4231 = vpop.permute.xlu0 %4230
      %4234 = vset.pattern.permute.xlu0 0
      %4235 = vperm.xlu0 %4234, %v4133
      %v4236 = vpop.permute.xlu0 %4235
      %4239 = vset.pattern.permute.xlu0 0
      %4240 = vperm.xlu0 %4239, %v4134
      %v4241 = vpop.permute.xlu0 %4240
      %4244 = vset.pattern.permute.xlu0 0
      %4245 = vperm.xlu0 %4244, %v4135
      %v4246 = vpop.permute.xlu0 %4245
      %4249 = vset.pattern.permute.xlu0 0
      %4250 = vperm.xlu0 %4249, %v4136
      %v4251 = vpop.permute.xlu0 %4250
      %4254 = vset.pattern.permute.xlu0 0
      %4255 = vperm.xlu0 %4254, %v4137
      %v4256 = vpop.permute.xlu0 %4255
      %4259 = vset.pattern.permute.xlu0 0
      %4260 = vperm.xlu0 %4259, %v4138
      %v4261 = vpop.permute.xlu0 %4260
      %4264 = vset.pattern.permute.xlu0 0
      %4265 = vperm.xlu0 %4264, %v4139
      %v4266 = vpop.permute.xlu0 %4265
      %4269 = vset.pattern.permute.xlu0 0
      %4270 = vperm.xlu0 %4269, %v4140
      %v4271 = vpop.permute.xlu0 %4270
      %4274 = vset.pattern.permute.xlu0 0
      %4275 = vperm.xlu0 %4274, %v4141
      %v4276 = vpop.permute.xlu0 %4275
      %4279 = vset.pattern.permute.xlu0 0
      %4280 = vperm.xlu0 %4279, %v4142
      %v4281 = vpop.permute.xlu0 %4280
      %4284 = vset.pattern.permute.xlu0 0
      %4285 = vperm.xlu0 %4284, %v4143
      %v4286 = vpop.permute.xlu0 %4285
      %4289 = vset.pattern.permute.xlu0 0
      %4290 = vperm.xlu0 %4289, %v4144
      %v4291 = vpop.permute.xlu0 %4290
      %4294 = vset.pattern.permute.xlu0 0
      %4295 = vperm.xlu0 %4294, %v4145
      %v4296 = vpop.permute.xlu0 %4295
      %4299 = vset.pattern.permute.xlu0 0
      %4300 = vperm.xlu0 %4299, %v4146
      %v4301 = vpop.permute.xlu0 %4300
      %4304 = vset.pattern.permute.xlu0 0
      %4305 = vperm.xlu0 %4304, %v4147
      %v4306 = vpop.permute.xlu0 %4305
      %4309 = vset.pattern.permute.xlu0 0
      %4310 = vperm.xlu0 %4309, %v4148
      %v4311 = vpop.permute.xlu0 %4310
      %4314 = vset.pattern.permute.xlu0 0
      %4315 = vperm.xlu0 %4314, %v4149
      %v4316 = vpop.permute.xlu0 %4315
      %4319 = vset.pattern.permute.xlu0 0
      %4320 = vperm.xlu0 %4319, %v4150
      %v4321 = vpop.permute.xlu0 %4320
      %4324 = vset.pattern.permute.xlu0 0
      %4325 = vperm.xlu0 %4324, %v4151
      %v4326 = vpop.permute.xlu0 %4325
      %4329 = vset.pattern.permute.xlu0 0
      %4330 = vperm.xlu0 %4329, %v4152
      %v4331 = vpop.permute.xlu0 %4330
      %v4333 = vmul.f32 %v3901, %v4156
      %v4334 = vmul.f32 %v3902, %v4161
      %v4335 = vmul.f32 %v3903, %v4166
      %v4336 = vmul.f32 %v3904, %v4171
      %v4337 = vmul.f32 %v3905, %v4176
      %v4338 = vmul.f32 %v3906, %v4181
      %v4339 = vmul.f32 %v3907, %v4186
      %v4340 = vmul.f32 %v3908, %v4191
      %v4341 = vmul.f32 %v3909, %v4196
      %v4342 = vmul.f32 %v3910, %v4201
      %v4343 = vmul.f32 %v3911, %v4206
      %v4344 = vmul.f32 %v3912, %v4211
      %v4345 = vmul.f32 %v3913, %v4216
      %v4346 = vmul.f32 %v3914, %v4221
      %v4347 = vmul.f32 %v3915, %v4226
      %v4348 = vmul.f32 %v3916, %v4231
      %v4349 = vmul.f32 %v3917, %v4236
      %v4350 = vmul.f32 %v3918, %v4241
      %v4351 = vmul.f32 %v3919, %v4246
      %v4352 = vmul.f32 %v3920, %v4251
      %v4353 = vmul.f32 %v3921, %v4256
      %v4354 = vmul.f32 %v3922, %v4261
      %v4355 = vmul.f32 %v3923, %v4266
      %v4356 = vmul.f32 %v3924, %v4271
      %v4357 = vmul.f32 %v3925, %v4276
      %v4358 = vmul.f32 %v3926, %v4281
      %v4359 = vmul.f32 %v3927, %v4286
      %v4360 = vmul.f32 %v3928, %v4291
      %v4361 = vmul.f32 %v3929, %v4296
      %v4362 = vmul.f32 %v3930, %v4301
      %v4363 = vmul.f32 %v3931, %v4306
      %v4364 = vmul.f32 %v3932, %v4311
      %v4365 = vmul.f32 %v3933, %v4316
      %v4366 = vmul.f32 %v3934, %v4321
      %v4367 = vmul.f32 %v3935, %v4326
      %v4368 = vmul.f32 %v3936, %v4331
      %v4369 = vadd.f32 %v4333, %v4334
      %v4370 = vadd.f32 %v4369, %v4335
      %v4371 = vadd.f32 %v4370, %v4336
      %v4372 = vadd.f32 %v4371, %v4337
      %v4373 = vadd.f32 %v4372, %v4338
      %v4374 = vadd.f32 %v4373, %v4339
      %v4375 = vadd.f32 %v4374, %v4340
      %v4376 = vadd.f32 %v4375, %v4341
      %v4377 = vadd.f32 %v4376, %v4342
      %v4378 = vadd.f32 %v4377, %v4343
      %v4379 = vadd.f32 %v4378, %v4344
      %v4380 = vadd.f32 %v4379, %v4345
      %v4381 = vadd.f32 %v4380, %v4346
      %v4382 = vadd.f32 %v4381, %v4347
      %v4383 = vadd.f32 %v4382, %v4348
      %v4384 = vadd.f32 %v4383, %v4349
      %v4385 = vadd.f32 %v4384, %v4350
      %v4386 = vadd.f32 %v4385, %v4351
      %v4387 = vadd.f32 %v4386, %v4352
      %v4388 = vadd.f32 %v4387, %v4353
      %v4389 = vadd.f32 %v4388, %v4354
      %v4390 = vadd.f32 %v4389, %v4355
      %v4391 = vadd.f32 %v4390, %v4356
      %v4392 = vadd.f32 %v4391, %v4357
      %v4393 = vadd.f32 %v4392, %v4358
      %v4394 = vadd.f32 %v4393, %v4359
      %v4395 = vadd.f32 %v4394, %v4360
      %v4396 = vadd.f32 %v4395, %v4361
      %v4397 = vadd.f32 %v4396, %v4362
      %v4398 = vadd.f32 %v4397, %v4363
      %v4399 = vadd.f32 %v4398, %v4364
      %v4400 = vadd.f32 %v4399, %v4365
      %v4401 = vadd.f32 %v4400, %v4366
      %v4402 = vadd.f32 %v4401, %v4367
      %v4403 = vadd.f32 %v4402, %v4368
      %v4404 = vrot.slane %v4403, 4
      %v4405 = vadd.f32 %v4403, %v4404
      %v4406 = vrot.slane %v4405, 2
      %v4407 = vadd.f32 %v4405, %v4406
      %v4408 = vrot.slane %v4407, 1
      %v4409 = vadd.f32 %v4407, %v4408
      %v4410 = vmul.f32 %v4333, %v3901
      %v4411 = vmul.f32 %v4334, %v3902
      %v4412 = vmul.f32 %v4335, %v3903
      %v4413 = vmul.f32 %v4336, %v3904
      %v4414 = vmul.f32 %v4337, %v3905
      %v4415 = vmul.f32 %v4338, %v3906
      %v4416 = vmul.f32 %v4339, %v3907
      %v4417 = vmul.f32 %v4340, %v3908
      %v4418 = vmul.f32 %v4341, %v3909
      %v4419 = vmul.f32 %v4342, %v3910
      %v4420 = vmul.f32 %v4343, %v3911
      %v4421 = vmul.f32 %v4344, %v3912
      %v4422 = vmul.f32 %v4345, %v3913
      %v4423 = vmul.f32 %v4346, %v3914
      %v4424 = vmul.f32 %v4347, %v3915
      %v4425 = vmul.f32 %v4348, %v3916
      %v4426 = vmul.f32 %v4349, %v3917
      %v4427 = vmul.f32 %v4350, %v3918
      %v4428 = vmul.f32 %v4351, %v3919
      %v4429 = vmul.f32 %v4352, %v3920
      %v4430 = vmul.f32 %v4353, %v3921
      %v4431 = vmul.f32 %v4354, %v3922
      %v4432 = vmul.f32 %v4355, %v3923
      %v4433 = vmul.f32 %v4356, %v3924
      %v4434 = vmul.f32 %v4357, %v3925
      %v4435 = vmul.f32 %v4358, %v3926
      %v4436 = vmul.f32 %v4359, %v3927
      %v4437 = vmul.f32 %v4360, %v3928
      %v4438 = vmul.f32 %v4361, %v3929
      %v4439 = vmul.f32 %v4362, %v3930
      %v4440 = vmul.f32 %v4363, %v3931
      %v4441 = vmul.f32 %v4364, %v3932
      %v4442 = vmul.f32 %v4365, %v3933
      %v4443 = vmul.f32 %v4366, %v3934
      %v4444 = vmul.f32 %v4367, %v3935
      %v4445 = vmul.f32 %v4368, %v3936
      %v4446 = vadd.f32 %v4410, %v4411
      %v4447 = vadd.f32 %v4446, %v4412
      %v4448 = vadd.f32 %v4447, %v4413
      %v4449 = vadd.f32 %v4448, %v4414
      %v4450 = vadd.f32 %v4449, %v4415
      %v4451 = vadd.f32 %v4450, %v4416
      %v4452 = vadd.f32 %v4451, %v4417
      %v4453 = vadd.f32 %v4452, %v4418
      %v4454 = vadd.f32 %v4453, %v4419
      %v4455 = vadd.f32 %v4454, %v4420
      %v4456 = vadd.f32 %v4455, %v4421
      %v4457 = vadd.f32 %v4456, %v4422
      %v4458 = vadd.f32 %v4457, %v4423
      %v4459 = vadd.f32 %v4458, %v4424
      %v4460 = vadd.f32 %v4459, %v4425
      %v4461 = vadd.f32 %v4460, %v4426
      %v4462 = vadd.f32 %v4461, %v4427
      %v4463 = vadd.f32 %v4462, %v4428
      %v4464 = vadd.f32 %v4463, %v4429
      %v4465 = vadd.f32 %v4464, %v4430
      %v4466 = vadd.f32 %v4465, %v4431
      %v4467 = vadd.f32 %v4466, %v4432
      %v4468 = vadd.f32 %v4467, %v4433
      %v4469 = vadd.f32 %v4468, %v4434
      %v4470 = vadd.f32 %v4469, %v4435
      %v4471 = vadd.f32 %v4470, %v4436
      %v4472 = vadd.f32 %v4471, %v4437
      %v4473 = vadd.f32 %v4472, %v4438
      %v4474 = vadd.f32 %v4473, %v4439
      %v4475 = vadd.f32 %v4474, %v4440
      %v4476 = vadd.f32 %v4475, %v4441
      %v4477 = vadd.f32 %v4476, %v4442
      %v4478 = vadd.f32 %v4477, %v4443
      %v4479 = vadd.f32 %v4478, %v4444
      %v4480 = vadd.f32 %v4479, %v4445
      %v4481 = vrot.slane %v4480, 4
      %v4482 = vadd.f32 %v4480, %v4481
      %v4483 = vrot.slane %v4482, 2
      %v4484 = vadd.f32 %v4482, %v4483
      %v4485 = vrot.slane %v4484, 1
      %v4486 = vadd.f32 %v4484, %v4485
      %vm4487 = vcmask 1040384
      %v4488 = vsel %vm4487, %v4409, %v4486
      %4489 = vst [vmem:[%s255] sm:$0x3] %v4488
      %p4490 = scmp.lt.s32.totalorder %s20, 1
      %s4491 = scalar_select %p4490, %s20, 1
      %p4492 = scmp.lt.s32.totalorder %s21, 0
      %s4493 = scalar_select %p4492, %s21, 0
      %s4494 = smul.addr %s4491, 36
      %s4495 = sadd.s32 %s4493, %s4494
      %s4496 = smul.addr %s4495, 4
      %s4497 = scalar_lea.vmem %s3, %s4496
      %p4498 = scmp.lt.s32.totalorder %s20, 1
      %s4499 = scalar_select %p4498, %s20, 1
      %p4500 = scmp.lt.s32.totalorder %s21, 0
      %s4501 = scalar_select %p4500, %s21, 0
      %s4502 = sadd.s32 %s4501, %s4499
      %s4503 = smul.addr %s4502, 2
      %s4504 = scalar_lea.vmem %s4, %s4503
      // Predicated region
      $region33: #{inception_v2b_forward.13} parent=31 // pred_check
        %p4505 = pneg %p121
      $region34: #{inception_v2b_forward.13} parent=31 // pred_check_branch
        %4507 = sbr.rel (%p4505) target = $region36
      $region35: #{inception_v2b_forward.13} parent=31 // pred_region
        _
      $region36: #{inception_v2b_forward.13} parent=31 // pred_fallthru
        _
      // Predicated region
      $region37: #{inception_v2b_forward.13} parent=31 // pred_check
        %p4508 = pneg %p149
      $region38: #{inception_v2b_forward.13} parent=31 // pred_check_branch
        %4510 = sbr.rel (%p4508) target = $region40
      $region39: #{inception_v2b_forward.13} parent=31 // pred_region
        _
      $region40: #{inception_v2b_forward.13} parent=31 // pred_fallthru
        _
    $region32: #{inception_v2b_forward.13} parent=5 // pred_fallthru
      _
    %p4511 = scmp.le.s32.totalorder 2, %s11
    // Predicated region
    $region41: #{inception_v2b_forward.13} parent=5 // pred_check
      %p4512 = pneg %p4511
    $region42: #{inception_v2b_forward.13} parent=5 // pred_check_branch
      %4514 = sbr.rel (%p4512) target = $region44
    $region43: #{inception_v2b_forward.13} parent=5 // pred_region
      %s4515 = ssub.s32 %s11, 2
      // Predicated region
      $region45: #{inception_v2b_forward.13} parent=43 // pred_check
        %p4516 = pneg %p127
      $region46: #{inception_v2b_forward.13} parent=43 // pred_check_branch
        %4518 = sbr.rel (%p4516) target = $region48
      $region47: #{inception_v2b_forward.13} parent=43 // pred_region
        %p4519 = scmp.lt.s32.totalorder %s22, 1
        %s4520 = scalar_select %p4519, %s22, 1
        %p4521 = scmp.lt.s32.totalorder %s23, 0
        %s4522 = scalar_select %p4521, %s23, 0
        %s4523 = smul.addr %s4520, 36
        %s4524 = sadd.s32 %s4522, %s4523
        %s4525 = smul.addr %s4524, 4
        %s4526 = scalar_lea.vmem %s3, %s4525
      $region48: #{inception_v2b_forward.13} parent=43 // pred_fallthru
        _
      // Predicated region
      $region49: #{inception_v2b_forward.13} parent=43 // pred_check
        %p4527 = pneg %p155
      $region50: #{inception_v2b_forward.13} parent=43 // pred_check_branch
        %4529 = sbr.rel (%p4527) target = $region52
      $region51: #{inception_v2b_forward.13} parent=43 // pred_region
        %p4530 = scmp.lt.s32.totalorder %s22, 1
        %s4531 = scalar_select %p4530, %s22, 1
        %p4532 = scmp.lt.s32.totalorder %s23, 0
        %s4533 = scalar_select %p4532, %s23, 0
        %s4534 = sadd.s32 %s4533, %s4531
        %s4535 = smul.addr %s4534, 2
        %s4536 = scalar_lea.vmem %s4, %s4535
      $region52: #{inception_v2b_forward.13} parent=43 // pred_fallthru
        _
    $region44: #{inception_v2b_forward.13} parent=5 // pred_fallthru
      _
  $region6: #{inception_v2b_forward.13} parent=0 // loop_footer
    %s15 = sadd.s32 1, %s11
  $region7: #{inception_v2b_forward.13} parent=0 // loop_footer_branch
    %10 = sbr.rel target = $region3
  $region8: #{inception_v2b_forward.13} parent=0 // loop_exit
    _

// kernel: inception_v2b_forward.16
$region0: #{inception_v2b_forward.16}
  #allocation0 [shape = 'u32[]', space=smem, size = 0x4, offset = 0x4, fixed_abs, tag = 'smem constant byte address 0x4 - core index']
  #allocation1 [shape = 'u32[144,128]{1,0:T(1,128)}', space=vmem, size = 0x12000, scoped, tag = 'internal scratch']
  %s0 = inlined_call_operand.vmem [shape: bf16[160,128], index: 0, kind: input, shape index: {}]
  %s1 = inlined_call_operand.vmem [shape: f32[1,128], index: 1, kind: input, shape index: {}]
  %s2 = inlined_call_operand.vmem [shape: f32[1,128], index: 2, kind: input, shape index: {}]
  %s3 = inlined_call_operand.vmem [shape: bf16[160,128], index: 3, kind: output, shape index: {}]
  %s4 = sld [smem:[#allocation0]]
  $region22: #{inception_v2b_forward.16} parent=0
    _
  %s6 = ssub.s32 1, %s4
  %s7 = scalar_select 0, %s6, %s4
  // Predicated region
  $region2: #{inception_v2b_forward.16} parent=0 // pred_check
    _
  $region3: #{inception_v2b_forward.16} parent=0 // pred_check_branch
    %9 = sbr.rel (0) target = $region5
  $region4: #{inception_v2b_forward.16} parent=0 // pred_region
    _
  $region5: #{inception_v2b_forward.16} parent=0 // pred_fallthru
    _
  // Predicated region
  $region6: #{inception_v2b_forward.16} parent=0 // pred_check
    _
  $region7: #{inception_v2b_forward.16} parent=0 // pred_check_branch
    %11 = sbr.rel (0) target = $region9
  $region8: #{inception_v2b_forward.16} parent=0 // pred_region
    _
  $region9: #{inception_v2b_forward.16} parent=0 // pred_fallthru
    _
  // Predicated region
  $region10: #{inception_v2b_forward.16} parent=0 // pred_check
    _
  $region11: #{inception_v2b_forward.16} parent=0 // pred_check_branch
    %13 = sbr.rel (0) target = $region13
  $region12: #{inception_v2b_forward.16} parent=0 // pred_region
    _
  $region13: #{inception_v2b_forward.16} parent=0 // pred_fallthru
    _
  %v14 = vld [vmem:[%s0] sm:$0xf]
  %v15 = vld [vmem:[%s0 + $0x4] sm:$0xf]
  %v16 = vld [vmem:[%s0 + $0x8] sm:$0xf]
  %v17 = vld [vmem:[%s0 + $0xc] sm:$0xf]
  %v18 = vld [vmem:[%s0 + $0x10] sm:$0xf]
  %v19 = vld [vmem:[%s0 + $0x14] sm:$0xf]
  %v20 = vld [vmem:[%s0 + $0x18] sm:$0xf]
  %v21 = vld [vmem:[%s0 + $0x1c] sm:$0xf]
  %v22 = vld [vmem:[%s0 + $0x20] sm:$0xf]
  %v23 = vld [vmem:[%s0 + $0x24] sm:$0xf]
  %v24 = vld [vmem:[%s0 + $0x28] sm:$0xf]
  %v25 = vld [vmem:[%s0 + $0x2c] sm:$0xf]
  %v26 = vld [vmem:[%s0 + $0x30] sm:$0xf]
  %v27 = vld [vmem:[%s0 + $0x34] sm:$0xf]
  %v28 = vld [vmem:[%s0 + $0x38] sm:$0xf]
  %v29 = vld [vmem:[%s0 + $0x3c] sm:$0xf]
  %v30 = vld [vmem:[%s0 + $0x40] sm:$0xf]
  %v31 = vld [vmem:[%s0 + $0x44] sm:$0xf]
  %v32 = vld [vmem:[%s0 + $0x48] sm:$0xf]
  %v33 = vld [vmem:[%s0 + $0x4c] sm:$0xf]
  %v34 = vunpack.c.l.bf16 %v14
  %v35 = vunpack.c.l.bf16 %v15
  %v36 = vunpack.c.l.bf16 %v16
  %v37 = vunpack.c.l.bf16 %v17
  %v38 = vunpack.c.l.bf16 %v18
  %v39 = vunpack.c.l.bf16 %v19
  %v40 = vunpack.c.l.bf16 %v20
  %v41 = vunpack.c.l.bf16 %v21
  %v42 = vunpack.c.l.bf16 %v22
  %v43 = vunpack.c.l.bf16 %v23
  %v44 = vunpack.c.l.bf16 %v24
  %v45 = vunpack.c.l.bf16 %v25
  %v46 = vunpack.c.l.bf16 %v26
  %v47 = vunpack.c.l.bf16 %v27
  %v48 = vunpack.c.l.bf16 %v28
  %v49 = vunpack.c.l.bf16 %v29
  %v50 = vunpack.c.l.bf16 %v30
  %v51 = vunpack.c.l.bf16 %v31
  %v52 = vunpack.c.l.bf16 %v32
  %v53 = vunpack.c.l.bf16 %v33
  %v54 = vld [vmem:[%s1] sm:$0x1]
  %v56 = vlaneseq
  %v57 = vshrl.u32 %v56, 7
  %v58 = vsub.s32 0, %v57
  %v59 = vrot.slane %v54, %v58
  %v61 = vmul.f32 %v34, %v59
  %v62 = vmul.f32 %v35, %v59
  %v63 = vmul.f32 %v36, %v59
  %v64 = vmul.f32 %v37, %v59
  %v65 = vmul.f32 %v38, %v59
  %v66 = vmul.f32 %v39, %v59
  %v67 = vmul.f32 %v40, %v59
  %v68 = vmul.f32 %v41, %v59
  %v69 = vmul.f32 %v42, %v59
  %v70 = vmul.f32 %v43, %v59
  %v71 = vmul.f32 %v44, %v59
  %v72 = vmul.f32 %v45, %v59
  %v73 = vmul.f32 %v46, %v59
  %v74 = vmul.f32 %v47, %v59
  %v75 = vmul.f32 %v48, %v59
  %v76 = vmul.f32 %v49, %v59
  %v77 = vmul.f32 %v50, %v59
  %v78 = vmul.f32 %v51, %v59
  %v79 = vmul.f32 %v52, %v59
  %v80 = vmul.f32 %v53, %v59
  %v81 = vld [vmem:[%s2] sm:$0x1]
  %v83 = vlaneseq
  %v84 = vshrl.u32 %v83, 7
  %v85 = vsub.s32 0, %v84
  %v86 = vrot.slane %v81, %v85
  %v88 = vadd.f32 %v61, %v86
  %v89 = vadd.f32 %v62, %v86
  %v90 = vadd.f32 %v63, %v86
  %v91 = vadd.f32 %v64, %v86
  %v92 = vadd.f32 %v65, %v86
  %v93 = vadd.f32 %v66, %v86
  %v94 = vadd.f32 %v67, %v86
  %v95 = vadd.f32 %v68, %v86
  %v96 = vadd.f32 %v69, %v86
  %v97 = vadd.f32 %v70, %v86
  %v98 = vadd.f32 %v71, %v86
  %v99 = vadd.f32 %v72, %v86
  %v100 = vadd.f32 %v73, %v86
  %v101 = vadd.f32 %v74, %v86
  %v102 = vadd.f32 %v75, %v86
  %v103 = vadd.f32 %v76, %v86
  %v104 = vadd.f32 %v77, %v86
  %v105 = vadd.f32 %v78, %v86
  %v106 = vadd.f32 %v79, %v86
  %v107 = vadd.f32 %v80, %v86
  %v108 = vmax.f32 %v88, 0.0
  %v109 = vmax.f32 %v89, 0.0
  %v110 = vmax.f32 %v90, 0.0
  %v111 = vmax.f32 %v91, 0.0
  %v112 = vmax.f32 %v92, 0.0
  %v113 = vmax.f32 %v93, 0.0
  %v114 = vmax.f32 %v94, 0.0
  %v115 = vmax.f32 %v95, 0.0
  %v116 = vmax.f32 %v96, 0.0
  %v117 = vmax.f32 %v97, 0.0
  %v118 = vmax.f32 %v98, 0.0
  %v119 = vmax.f32 %v99, 0.0
  %v120 = vmax.f32 %v100, 0.0
  %v121 = vmax.f32 %v101, 0.0
  %v122 = vmax.f32 %v102, 0.0
  %v123 = vmax.f32 %v103, 0.0
  %v124 = vmax.f32 %v104, 0.0
  %v125 = vmax.f32 %v105, 0.0
  %v126 = vmax.f32 %v106, 0.0
  %v127 = vmax.f32 %v107, 0.0
  %v128 = vpack.c.bf16 %v109, %v108
  %v129 = vpack.c.bf16 %v111, %v110
  %v130 = vpack.c.bf16 %v113, %v112
  %v131 = vpack.c.bf16 %v115, %v114
  %v132 = vpack.c.bf16 %v117, %v116
  %v133 = vpack.c.bf16 %v119, %v118
  %v134 = vpack.c.bf16 %v121, %v120
  %v135 = vpack.c.bf16 %v123, %v122
  %v136 = vpack.c.bf16 %v125, %v124
  %v137 = vpack.c.bf16 %v127, %v126
  %v148 = vunpack.c.l.b16 %v128
  %v149 = vunpack.c.h.b16 %v128
  %v150 = vunpack.c.l.b16 %v129
  %v151 = vunpack.c.h.b16 %v129
  %v152 = vunpack.c.l.b16 %v130
  %v153 = vunpack.c.h.b16 %v130
  %v154 = vunpack.c.l.b16 %v131
  %v155 = vunpack.c.h.b16 %v131
  %v156 = vunpack.c.l.b16 %v132
  %v157 = vunpack.c.h.b16 %v132
  %v158 = vunpack.c.l.b16 %v133
  %v159 = vunpack.c.h.b16 %v133
  %v160 = vunpack.c.l.b16 %v134
  %v161 = vunpack.c.h.b16 %v134
  %v162 = vunpack.c.l.b16 %v135
  %v163 = vunpack.c.h.b16 %v135
  %v164 = vunpack.c.l.b16 %v136
  %v165 = vunpack.c.h.b16 %v136
  %v166 = vunpack.c.l.b16 %v137
  %v167 = vunpack.c.h.b16 %v137
  %v168 = vpack.c.b16 %v148, %v148
  %v169 = vpack.c.b16 %v149, %v149
  %v170 = vpack.c.b16 %v150, %v150
  %v171 = vpack.c.b16 %v151, %v151
  %v172 = vpack.c.b16 %v152, %v152
  %v173 = vpack.c.b16 %v153, %v153
  %v174 = vpack.c.b16 %v154, %v154
  %v175 = vpack.c.b16 %v155, %v155
  %v176 = vpack.c.b16 %v156, %v156
  %v177 = vpack.c.b16 %v157, %v157
  %v178 = vpack.c.b16 %v158, %v158
  %v179 = vpack.c.b16 %v159, %v159
  %v180 = vpack.c.b16 %v160, %v160
  %v181 = vpack.c.b16 %v161, %v161
  %v182 = vpack.c.b16 %v162, %v162
  %v183 = vpack.c.b16 %v163, %v163
  %v184 = vpack.c.b16 %v164, %v164
  %v185 = vpack.c.b16 %v165, %v165
  %v186 = vpack.c.b16 %v166, %v166
  %v187 = vpack.c.b16 %v167, %v167
  %208 = vst [vmem:[%s3] sm:$0xf] %v168
  %209 = vst [vmem:[%s3 + $0x4] sm:$0xf] %v169
  %210 = vst [vmem:[%s3 + $0x8] sm:$0xf] %v170
  %211 = vst [vmem:[%s3 + $0xc] sm:$0xf] %v171
  %212 = vst [vmem:[%s3 + $0x10] sm:$0xf] %v172
  %213 = vst [vmem:[%s3 + $0x14] sm:$0xf] %v173
  %214 = vst [vmem:[%s3 + $0x18] sm:$0xf] %v174
  %215 = vst [vmem:[%s3 + $0x1c] sm:$0xf] %v175
  %216 = vst [vmem:[%s3 + $0x20] sm:$0xf] %v176
  %217 = vst [vmem:[%s3 + $0x24] sm:$0xf] %v177
  %218 = vst [vmem:[%s3 + $0x28] sm:$0xf] %v178
  %219 = vst [vmem:[%s3 + $0x2c] sm:$0xf] %v179
  %220 = vst [vmem:[%s3 + $0x30] sm:$0xf] %v180
  %221 = vst [vmem:[%s3 + $0x34] sm:$0xf] %v181
  %222 = vst [vmem:[%s3 + $0x38] sm:$0xf] %v182
  %223 = vst [vmem:[%s3 + $0x3c] sm:$0xf] %v183
  %224 = vst [vmem:[%s3 + $0x40] sm:$0xf] %v184
  %225 = vst [vmem:[%s3 + $0x44] sm:$0xf] %v185
  %226 = vst [vmem:[%s3 + $0x48] sm:$0xf] %v186
  %227 = vst [vmem:[%s3 + $0x4c] sm:$0xf] %v187
  // Predicated region
  $region14: #{inception_v2b_forward.16} parent=0 // pred_check
    _
  $region15: #{inception_v2b_forward.16} parent=0 // pred_check_branch
    %229 = sbr.rel (0) target = $region17
  $region16: #{inception_v2b_forward.16} parent=0 // pred_region
    _
  $region17: #{inception_v2b_forward.16} parent=0 // pred_fallthru
    _
  // Predicated region
  $region18: #{inception_v2b_forward.16} parent=0 // pred_check
    _
  $region19: #{inception_v2b_forward.16} parent=0 // pred_check_branch
    %231 = sbr.rel (0) target = $region21
  $region20: #{inception_v2b_forward.16} parent=0 // pred_region
    _
  $region21: #{inception_v2b_forward.16} parent=0 // pred_fallthru
    _

// kernel: inception_v2b_forward.15
$region0: #{inception_v2b_forward.15}
  #allocation0 [shape = 'u32[]', space=smem, size = 0x4, offset = 0x4, fixed_abs, tag = 'smem constant byte address 0x4 - core index']
  #allocation1 [shape = 'u32[144,128]{1,0:T(1,128)}', space=vmem, size = 0x12000, scoped, tag = 'internal scratch']
  %s0 = inlined_call_operand.vmem [shape: bf16[4,176,128], index: 0, kind: input, shape index: {}]
  %s1 = inlined_call_operand.vmem [shape: bf16[9,128,128], index: 1, kind: input, shape index: {}]
  %s2 = inlined_call_operand.vmem [shape: f32[160,1], index: 2, kind: input, shape index: {}]
  %s3 = inlined_call_operand.vmem [shape: bf16[1,160,128], index: 3, kind: output, shape index: {0}]
  %s4 = inlined_call_operand.vmem [shape: f32[1,2,128], index: 4, kind: output, shape index: {1}]
  %5 = xla_tuple %s3, %s4
  %s6 = sld [smem:[#allocation0]]
  $region30: #{inception_v2b_forward.15} parent=0
    _
  %s8 = ssub.s32 1, %s6
  %s9 = scalar_select 0, %s8, %s6
  // Predicated region
  $region2: #{inception_v2b_forward.15} parent=0 // pred_check
    _
  $region3: #{inception_v2b_forward.15} parent=0 // pred_check_branch
    %11 = sbr.rel (0) target = $region5
  $region4: #{inception_v2b_forward.15} parent=0 // pred_region
    _
  $region5: #{inception_v2b_forward.15} parent=0 // pred_fallthru
    _
  // Predicated region
  $region6: #{inception_v2b_forward.15} parent=0 // pred_check
    _
  $region7: #{inception_v2b_forward.15} parent=0 // pred_check_branch
    %13 = sbr.rel (0) target = $region9
  $region8: #{inception_v2b_forward.15} parent=0 // pred_region
    _
  $region9: #{inception_v2b_forward.15} parent=0 // pred_fallthru
    _
  // Predicated region
  $region10: #{inception_v2b_forward.15} parent=0 // pred_check
    _
  $region11: #{inception_v2b_forward.15} parent=0 // pred_check_branch
    %15 = sbr.rel (0) target = $region13
  $region12: #{inception_v2b_forward.15} parent=0 // pred_region
    _
  $region13: #{inception_v2b_forward.15} parent=0 // pred_fallthru
    _
  %v17 = vld [vmem:[%s0] sm:$0xf]
  %v18 = vld [vmem:[%s0 + $0x4] sm:$0xf]
  %v19 = vld [vmem:[%s0 + $0x8] sm:$0xf]
  %v20 = vld [vmem:[%s0 + $0xc] sm:$0xf]
  %v21 = vld [vmem:[%s0 + $0x10] sm:$0xf]
  %v22 = vld [vmem:[%s0 + $0x14] sm:$0xf]
  %v23 = vld [vmem:[%s0 + $0x18] sm:$0xf]
  %v24 = vld [vmem:[%s0 + $0x1c] sm:$0xf]
  %v25 = vld [vmem:[%s0 + $0x20] sm:$0xf]
  %v26 = vld [vmem:[%s0 + $0x24] sm:$0xf]
  %v27 = vld [vmem:[%s0 + $0x28] sm:$0xf]
  %v28 = vld [vmem:[%s0 + $0x2c] sm:$0xf]
  %v29 = vld [vmem:[%s0 + $0x30] sm:$0xf]
  %v30 = vld [vmem:[%s0 + $0x34] sm:$0xf]
  %v31 = vld [vmem:[%s0 + $0x38] sm:$0xf]
  %v32 = vld [vmem:[%s0 + $0x3c] sm:$0xf]
  %v33 = vld [vmem:[%s0 + $0x40] sm:$0xf]
  %v34 = vld [vmem:[%s0 + $0x44] sm:$0xf]
  %v35 = vld [vmem:[%s0 + $0x48] sm:$0xf]
  %v36 = vld [vmem:[%s0 + $0x4c] sm:$0xf]
  %v37 = vld [vmem:[%s1] sm:$0xf]
  %v38 = vld [vmem:[%s1 + $0x4] sm:$0xf]
  %v39 = vld [vmem:[%s1 + $0x8] sm:$0xf]
  %v40 = vld [vmem:[%s1 + $0xc] sm:$0xf]
  %v41 = vld [vmem:[%s1 + $0x10] sm:$0xf]
  %v42 = vld [vmem:[%s1 + $0x14] sm:$0xf]
  %v43 = vld [vmem:[%s1 + $0x18] sm:$0xf]
  %v44 = vld [vmem:[%s1 + $0x1c] sm:$0xf]
  %v45 = vld [vmem:[%s1 + $0x20] sm:$0xf]
  %v46 = vld [vmem:[%s1 + $0x24] sm:$0xf]
  %v47 = vld [vmem:[%s1 + $0x28] sm:$0xf]
  %v48 = vld [vmem:[%s1 + $0x2c] sm:$0xf]
  %v49 = vld [vmem:[%s1 + $0x30] sm:$0xf]
  %v50 = vld [vmem:[%s1 + $0x34] sm:$0xf]
  %v51 = vld [vmem:[%s1 + $0x38] sm:$0xf]
  %v52 = vld [vmem:[%s1 + $0x3c] sm:$0xf]
  %s53 = scalar_lea.vmem %s0, 88
  %v54 = vld [vmem:[%s53] sm:$0xf]
  %v55 = vld [vmem:[%s53 + $0x4] sm:$0xf]
  %v56 = vld [vmem:[%s53 + $0x8] sm:$0xf]
  %v57 = vld [vmem:[%s53 + $0xc] sm:$0xf]
  %v58 = vld [vmem:[%s53 + $0x10] sm:$0xf]
  %v59 = vld [vmem:[%s53 + $0x14] sm:$0xf]
  %v60 = vld [vmem:[%s53 + $0x18] sm:$0xf]
  %v61 = vld [vmem:[%s53 + $0x1c] sm:$0xf]
  %v62 = vld [vmem:[%s53 + $0x20] sm:$0xf]
  %v63 = vld [vmem:[%s53 + $0x24] sm:$0xf]
  %v64 = vld [vmem:[%s53 + $0x28] sm:$0xf]
  %v65 = vld [vmem:[%s53 + $0x2c] sm:$0xf]
  %v66 = vld [vmem:[%s53 + $0x30] sm:$0xf]
  %v67 = vld [vmem:[%s53 + $0x34] sm:$0xf]
  %v68 = vld [vmem:[%s53 + $0x38] sm:$0xf]
  %v69 = vld [vmem:[%s53 + $0x3c] sm:$0xf]
  %v70 = vld [vmem:[%s53 + $0x40] sm:$0xf]
  %v71 = vld [vmem:[%s53 + $0x44] sm:$0xf]
  %v72 = vld [vmem:[%s53 + $0x48] sm:$0xf]
  %v73 = vld [vmem:[%s53 + $0x4c] sm:$0xf]
  %s74 = scalar_lea.vmem %s1, 64
  %v75 = vld [vmem:[%s74] sm:$0xf]
  %v76 = vld [vmem:[%s74 + $0x4] sm:$0xf]
  %v77 = vld [vmem:[%s74 + $0x8] sm:$0xf]
  %v78 = vld [vmem:[%s74 + $0xc] sm:$0xf]
  %v79 = vld [vmem:[%s74 + $0x10] sm:$0xf]
  %v80 = vld [vmem:[%s74 + $0x14] sm:$0xf]
  %v81 = vld [vmem:[%s74 + $0x18] sm:$0xf]
  %v82 = vld [vmem:[%s74 + $0x1c] sm:$0xf]
  %v83 = vld [vmem:[%s74 + $0x20] sm:$0xf]
  %v84 = vld [vmem:[%s74 + $0x24] sm:$0xf]
  %v85 = vld [vmem:[%s74 + $0x28] sm:$0xf]
  %v86 = vld [vmem:[%s74 + $0x2c] sm:$0xf]
  %v87 = vld [vmem:[%s74 + $0x30] sm:$0xf]
  %v88 = vld [vmem:[%s74 + $0x34] sm:$0xf]
  %v89 = vld [vmem:[%s74 + $0x38] sm:$0xf]
  %v90 = vld [vmem:[%s74 + $0x3c] sm:$0xf]
  %v111 = vunpack.c.l.b16 %v54
  %v112 = vunpack.c.l.b16 %v55
  %v113 = vunpack.c.l.b16 %v56
  %v114 = vunpack.c.l.b16 %v57
  %v115 = vunpack.c.l.b16 %v58
  %v116 = vunpack.c.l.b16 %v59
  %v117 = vunpack.c.l.b16 %v60
  %v118 = vunpack.c.l.b16 %v61
  %v119 = vunpack.c.l.b16 %v62
  %v120 = vunpack.c.l.b16 %v63
  %v121 = vunpack.c.l.b16 %v64
  %v122 = vunpack.c.l.b16 %v65
  %v123 = vunpack.c.l.b16 %v66
  %v124 = vunpack.c.l.b16 %v67
  %v125 = vunpack.c.l.b16 %v68
  %v126 = vunpack.c.l.b16 %v69
  %v127 = vunpack.c.l.b16 %v70
  %v128 = vunpack.c.l.b16 %v71
  %v129 = vunpack.c.l.b16 %v72
  %v130 = vunpack.c.l.b16 %v73
  %v131 = vpack.c.b16 %v112, %v111
  %v132 = vpack.c.b16 %v114, %v113
  %v133 = vpack.c.b16 %v116, %v115
  %v134 = vpack.c.b16 %v118, %v117
  %v135 = vpack.c.b16 %v120, %v119
  %v136 = vpack.c.b16 %v122, %v121
  %v137 = vpack.c.b16 %v124, %v123
  %v138 = vpack.c.b16 %v126, %v125
  %v139 = vpack.c.b16 %v128, %v127
  %v140 = vpack.c.b16 %v130, %v129
  %v167 = vunpack.c.l.b16 %v75
  %v168 = vunpack.c.l.b16 %v76
  %v169 = vunpack.c.l.b16 %v77
  %v170 = vunpack.c.l.b16 %v78
  %v171 = vunpack.c.l.b16 %v79
  %v172 = vunpack.c.l.b16 %v80
  %v173 = vunpack.c.l.b16 %v81
  %v174 = vunpack.c.l.b16 %v82
  %v175 = vunpack.c.l.b16 %v83
  %v176 = vunpack.c.l.b16 %v84
  %v177 = vunpack.c.l.b16 %v85
  %v178 = vunpack.c.l.b16 %v86
  %v179 = vunpack.c.l.b16 %v87
  %v180 = vunpack.c.l.b16 %v88
  %v181 = vunpack.c.l.b16 %v89
  %v182 = vunpack.c.l.b16 %v90
  %v183 = vpack.c.b16 %v168, %v167
  %v184 = vpack.c.b16 %v170, %v169
  %v185 = vpack.c.b16 %v172, %v171
  %v186 = vpack.c.b16 %v174, %v173
  %v187 = vpack.c.b16 %v176, %v175
  %v188 = vpack.c.b16 %v178, %v177
  %v189 = vpack.c.b16 %v180, %v179
  %v190 = vpack.c.b16 %v182, %v181
  %199 = vmatprep.subr.bf16.mxu0 0
  %200 = vmatpush1.bf16.msra.mxu0 %v183
  %201 = vmatprep.subr.bf16.mxu0 0
  %202 = vmatpush1.bf16.msra.mxu0 %v184
  %203 = vmatprep.subr.bf16.mxu0 0
  %204 = vmatpush1.bf16.msra.mxu0 %v185
  %205 = vmatprep.subr.bf16.mxu0 0
  %206 = vmatpush1.bf16.msra.mxu0 %v186
  %207 = vmatprep.subr.bf16.mxu0 0
  %208 = vmatpush1.bf16.msra.mxu0 %v187
  %209 = vmatprep.subr.bf16.mxu0 0
  %210 = vmatpush1.bf16.msra.mxu0 %v188
  %211 = vmatprep.subr.bf16.mxu0 0
  %212 = vmatpush1.bf16.msra.mxu0 %v189
  %213 = vmatprep.subr.bf16.mxu0 0
  %214 = vmatpush1.bf16.msra.mxu0 %v190
  %215 = vmatprep.subr.bf16.mxu0 0
  %216 = vmatpush1.bf16.msra.mxu0 0
  %217 = vmatprep.subr.bf16.mxu0 0
  %218 = vmatpush1.bf16.msra.mxu0 0
  %219 = vmatprep.subr.bf16.mxu0 0
  %220 = vmatpush1.bf16.msra.mxu0 0
  %221 = vmatprep.subr.bf16.mxu0 0
  %222 = vmatpush1.bf16.msra.mxu0 0
  %223 = vmatprep.subr.bf16.mxu0 0
  %224 = vmatpush1.bf16.msra.mxu0 0
  %225 = vmatprep.subr.bf16.mxu0 0
  %226 = vmatpush1.bf16.msra.mxu0 0
  %227 = vmatprep.subr.bf16.mxu0 0
  %228 = vmatpush1.bf16.msra.mxu0 0
  %229 = vmatprep.subr.bf16.mxu0 0
  %230 = vmatpush1.bf16.msra.mxu0 0
  %231 = vmatprep.mubr.bf16.mxu0 0
  %232 = vmatmul.mubr.bf16.gmra.mrb[0].mxu0 %v131
  %v233 = vpop.f32.mrb[0].mxu0
  %v234 = vadd.f32 0.0, %v233
  %v235 = vpop.f32.mrb[0].mxu0
  %v236 = vpop.f32.mrb[0].mxu0
  %v237 = vadd.f32 0.0, %v236
  %v238 = vpop.f32.mrb[0].mxu0
  %239 = vmatprep.mubr.bf16.mxu0 0
  %240 = vmatmul.mubr.bf16.gmra.mrb[0].mxu0 %v132
  %v241 = vpop.f32.mrb[0].mxu0
  %v242 = vadd.f32 0.0, %v241
  %v243 = vpop.f32.mrb[0].mxu0
  %v244 = vpop.f32.mrb[0].mxu0
  %v245 = vadd.f32 0.0, %v244
  %v246 = vpop.f32.mrb[0].mxu0
  %247 = vmatprep.mubr.bf16.mxu0 0
  %248 = vmatmul.mubr.bf16.gmra.mrb[0].mxu0 %v133
  %v249 = vpop.f32.mrb[0].mxu0
  %v250 = vadd.f32 0.0, %v249
  %v251 = vpop.f32.mrb[0].mxu0
  %v252 = vpop.f32.mrb[0].mxu0
  %v253 = vadd.f32 0.0, %v252
  %v254 = vpop.f32.mrb[0].mxu0
  %255 = vmatprep.mubr.bf16.mxu0 0
  %256 = vmatmul.mubr.bf16.gmra.mrb[0].mxu0 %v134
  %v257 = vpop.f32.mrb[0].mxu0
  %v258 = vadd.f32 0.0, %v257
  %v259 = vpop.f32.mrb[0].mxu0
  %v260 = vpop.f32.mrb[0].mxu0
  %v261 = vadd.f32 0.0, %v260
  %v262 = vpop.f32.mrb[0].mxu0
  %263 = vmatprep.mubr.bf16.mxu0 0
  %264 = vmatmul.mubr.bf16.gmra.mrb[0].mxu0 %v135
  %v265 = vpop.f32.mrb[0].mxu0
  %v266 = vadd.f32 0.0, %v265
  %v267 = vpop.f32.mrb[0].mxu0
  %v268 = vpop.f32.mrb[0].mxu0
  %v269 = vadd.f32 0.0, %v268
  %v270 = vpop.f32.mrb[0].mxu0
  %271 = vmatprep.mubr.bf16.mxu0 0
  %272 = vmatmul.mubr.bf16.gmra.mrb[0].mxu0 %v136
  %v273 = vpop.f32.mrb[0].mxu0
  %v274 = vadd.f32 0.0, %v273
  %v275 = vpop.f32.mrb[0].mxu0
  %v276 = vpop.f32.mrb[0].mxu0
  %v277 = vadd.f32 0.0, %v276
  %v278 = vpop.f32.mrb[0].mxu0
  %279 = vmatprep.mubr.bf16.mxu0 0
  %280 = vmatmul.mubr.bf16.gmra.mrb[0].mxu0 %v137
  %v281 = vpop.f32.mrb[0].mxu0
  %v282 = vadd.f32 0.0, %v281
  %v283 = vpop.f32.mrb[0].mxu0
  %v284 = vpop.f32.mrb[0].mxu0
  %v285 = vadd.f32 0.0, %v284
  %v286 = vpop.f32.mrb[0].mxu0
  %287 = vmatprep.mubr.bf16.mxu0 0
  %288 = vmatmul.mubr.bf16.gmra.mrb[0].mxu0 %v138
  %v289 = vpop.f32.mrb[0].mxu0
  %v290 = vadd.f32 0.0, %v289
  %v291 = vpop.f32.mrb[0].mxu0
  %v292 = vpop.f32.mrb[0].mxu0
  %v293 = vadd.f32 0.0, %v292
  %v294 = vpop.f32.mrb[0].mxu0
  %295 = vmatprep.mubr.bf16.mxu0 0
  %296 = vmatmul.mubr.bf16.gmra.mrb[0].mxu0 %v139
  %v297 = vpop.f32.mrb[0].mxu0
  %v298 = vadd.f32 0.0, %v297
  %v299 = vpop.f32.mrb[0].mxu0
  %v300 = vpop.f32.mrb[0].mxu0
  %v301 = vadd.f32 0.0, %v300
  %v302 = vpop.f32.mrb[0].mxu0
  %303 = vmatprep.mubr.bf16.mxu0 0
  %304 = vmatmul.mubr.bf16.gmra.mrb[0].mxu0 %v140
  %v305 = vpop.f32.mrb[0].mxu0
  %v306 = vadd.f32 0.0, %v305
  %v307 = vpop.f32.mrb[0].mxu0
  %v308 = vpop.f32.mrb[0].mxu0
  %v309 = vadd.f32 0.0, %v308
  %v310 = vpop.f32.mrb[0].mxu0
  %311 = vdwg.mxu0
  %v332 = vunpack.c.l.b16 %v17
  %v333 = vunpack.c.l.b16 %v18
  %v334 = vunpack.c.l.b16 %v19
  %v335 = vunpack.c.l.b16 %v20
  %v336 = vunpack.c.l.b16 %v21
  %v337 = vunpack.c.l.b16 %v22
  %v338 = vunpack.c.l.b16 %v23
  %v339 = vunpack.c.l.b16 %v24
  %v340 = vunpack.c.l.b16 %v25
  %v341 = vunpack.c.l.b16 %v26
  %v342 = vunpack.c.l.b16 %v27
  %v343 = vunpack.c.l.b16 %v28
  %v344 = vunpack.c.l.b16 %v29
  %v345 = vunpack.c.l.b16 %v30
  %v346 = vunpack.c.l.b16 %v31
  %v347 = vunpack.c.l.b16 %v32
  %v348 = vunpack.c.l.b16 %v33
  %v349 = vunpack.c.l.b16 %v34
  %v350 = vunpack.c.l.b16 %v35
  %v351 = vunpack.c.l.b16 %v36
  %v352 = vpack.c.b16 %v333, %v332
  %v353 = vpack.c.b16 %v335, %v334
  %v354 = vpack.c.b16 %v337, %v336
  %v355 = vpack.c.b16 %v339, %v338
  %v356 = vpack.c.b16 %v341, %v340
  %v357 = vpack.c.b16 %v343, %v342
  %v358 = vpack.c.b16 %v345, %v344
  %v359 = vpack.c.b16 %v347, %v346
  %v360 = vpack.c.b16 %v349, %v348
  %v361 = vpack.c.b16 %v351, %v350
  %v388 = vunpack.c.l.b16 %v37
  %v389 = vunpack.c.l.b16 %v38
  %v390 = vunpack.c.l.b16 %v39
  %v391 = vunpack.c.l.b16 %v40
  %v392 = vunpack.c.l.b16 %v41
  %v393 = vunpack.c.l.b16 %v42
  %v394 = vunpack.c.l.b16 %v43
  %v395 = vunpack.c.l.b16 %v44
  %v396 = vunpack.c.l.b16 %v45
  %v397 = vunpack.c.l.b16 %v46
  %v398 = vunpack.c.l.b16 %v47
  %v399 = vunpack.c.l.b16 %v48
  %v400 = vunpack.c.l.b16 %v49
  %v401 = vunpack.c.l.b16 %v50
  %v402 = vunpack.c.l.b16 %v51
  %v403 = vunpack.c.l.b16 %v52
  %v404 = vpack.c.b16 %v389, %v388
  %v405 = vpack.c.b16 %v391, %v390
  %v406 = vpack.c.b16 %v393, %v392
  %v407 = vpack.c.b16 %v395, %v394
  %v408 = vpack.c.b16 %v397, %v396
  %v409 = vpack.c.b16 %v399, %v398
  %v410 = vpack.c.b16 %v401, %v400
  %v411 = vpack.c.b16 %v403, %v402
  %420 = vmatprep.subr.bf16.mxu0 0
  %421 = vmatpush1.bf16.msra.mxu0 %v404
  %422 = vmatprep.subr.bf16.mxu0 0
  %423 = vmatpush1.bf16.msra.mxu0 %v405
  %424 = vmatprep.subr.bf16.mxu0 0
  %425 = vmatpush1.bf16.msra.mxu0 %v406
  %426 = vmatprep.subr.bf16.mxu0 0
  %427 = vmatpush1.bf16.msra.mxu0 %v407
  %428 = vmatprep.subr.bf16.mxu0 0
  %429 = vmatpush1.bf16.msra.mxu0 %v408
  %430 = vmatprep.subr.bf16.mxu0 0
  %431 = vmatpush1.bf16.msra.mxu0 %v409
  %432 = vmatprep.subr.bf16.mxu0 0
  %433 = vmatpush1.bf16.msra.mxu0 %v410
  %434 = vmatprep.subr.bf16.mxu0 0
  %435 = vmatpush1.bf16.msra.mxu0 %v411
  %436 = vmatprep.subr.bf16.mxu0 0
  %437 = vmatpush1.bf16.msra.mxu0 0
  %438 = vmatprep.subr.bf16.mxu0 0
  %439 = vmatpush1.bf16.msra.mxu0 0
  %440 = vmatprep.subr.bf16.mxu0 0
  %441 = vmatpush1.bf16.msra.mxu0 0
  %442 = vmatprep.subr.bf16.mxu0 0
  %443 = vmatpush1.bf16.msra.mxu0 0
  %444 = vmatprep.subr.bf16.mxu0 0
  %445 = vmatpush1.bf16.msra.mxu0 0
  %446 = vmatprep.subr.bf16.mxu0 0
  %447 = vmatpush1.bf16.msra.mxu0 0
  %448 = vmatprep.subr.bf16.mxu0 0
  %449 = vmatpush1.bf16.msra.mxu0 0
  %450 = vmatprep.subr.bf16.mxu0 0
  %451 = vmatpush1.bf16.msra.mxu0 0
  %452 = vmatprep.mubr.bf16.mxu0 0
  %453 = vmatmul.mubr.bf16.gmra.mrb[0].mxu0 %v352
  %v454 = vpop.f32.mrb[0].mxu0
  %v455 = vadd.f32 %v234, %v454
  %v456 = vpop.f32.mrb[0].mxu0
  %v457 = vpop.f32.mrb[0].mxu0
  %v458 = vadd.f32 %v237, %v457
  %v459 = vpop.f32.mrb[0].mxu0
  %460 = vmatprep.mubr.bf16.mxu0 0
  %461 = vmatmul.mubr.bf16.gmra.mrb[0].mxu0 %v353
  %v462 = vpop.f32.mrb[0].mxu0
  %v463 = vadd.f32 %v242, %v462
  %v464 = vpop.f32.mrb[0].mxu0
  %v465 = vpop.f32.mrb[0].mxu0
  %v466 = vadd.f32 %v245, %v465
  %v467 = vpop.f32.mrb[0].mxu0
  %468 = vmatprep.mubr.bf16.mxu0 0
  %469 = vmatmul.mubr.bf16.gmra.mrb[0].mxu0 %v354
  %v470 = vpop.f32.mrb[0].mxu0
  %v471 = vadd.f32 %v250, %v470
  %v472 = vpop.f32.mrb[0].mxu0
  %v473 = vpop.f32.mrb[0].mxu0
  %v474 = vadd.f32 %v253, %v473
  %v475 = vpop.f32.mrb[0].mxu0
  %476 = vmatprep.mubr.bf16.mxu0 0
  %477 = vmatmul.mubr.bf16.gmra.mrb[0].mxu0 %v355
  %v478 = vpop.f32.mrb[0].mxu0
  %v479 = vadd.f32 %v258, %v478
  %v480 = vpop.f32.mrb[0].mxu0
  %v481 = vpop.f32.mrb[0].mxu0
  %v482 = vadd.f32 %v261, %v481
  %v483 = vpop.f32.mrb[0].mxu0
  %484 = vmatprep.mubr.bf16.mxu0 0
  %485 = vmatmul.mubr.bf16.gmra.mrb[0].mxu0 %v356
  %v486 = vpop.f32.mrb[0].mxu0
  %v487 = vadd.f32 %v266, %v486
  %v488 = vpop.f32.mrb[0].mxu0
  %v489 = vpop.f32.mrb[0].mxu0
  %v490 = vadd.f32 %v269, %v489
  %v491 = vpop.f32.mrb[0].mxu0
  %492 = vmatprep.mubr.bf16.mxu0 0
  %493 = vmatmul.mubr.bf16.gmra.mrb[0].mxu0 %v357
  %v494 = vpop.f32.mrb[0].mxu0
  %v495 = vadd.f32 %v274, %v494
  %v496 = vpop.f32.mrb[0].mxu0
  %v497 = vpop.f32.mrb[0].mxu0
  %v498 = vadd.f32 %v277, %v497
  %v499 = vpop.f32.mrb[0].mxu0
  %500 = vmatprep.mubr.bf16.mxu0 0
  %501 = vmatmul.mubr.bf16.gmra.mrb[0].mxu0 %v358
  %v502 = vpop.f32.mrb[0].mxu0
  %v503 = vadd.f32 %v282, %v502
  %v504 = vpop.f32.mrb[0].mxu0
  %v505 = vpop.f32.mrb[0].mxu0
  %v506 = vadd.f32 %v285, %v505
  %v507 = vpop.f32.mrb[0].mxu0
  %508 = vmatprep.mubr.bf16.mxu0 0
  %509 = vmatmul.mubr.bf16.gmra.mrb[0].mxu0 %v359
  %v510 = vpop.f32.mrb[0].mxu0
  %v511 = vadd.f32 %v290, %v510
  %v512 = vpop.f32.mrb[0].mxu0
  %v513 = vpop.f32.mrb[0].mxu0
  %v514 = vadd.f32 %v293, %v513
  %v515 = vpop.f32.mrb[0].mxu0
  %516 = vmatprep.mubr.bf16.mxu0 0
  %517 = vmatmul.mubr.bf16.gmra.mrb[0].mxu0 %v360
  %v518 = vpop.f32.mrb[0].mxu0
  %v519 = vadd.f32 %v298, %v518
  %v520 = vpop.f32.mrb[0].mxu0
  %v521 = vpop.f32.mrb[0].mxu0
  %v522 = vadd.f32 %v301, %v521
  %v523 = vpop.f32.mrb[0].mxu0
  %524 = vmatprep.mubr.bf16.mxu0 0
  %525 = vmatmul.mubr.bf16.gmra.mrb[0].mxu0 %v361
  %v526 = vpop.f32.mrb[0].mxu0
  %v527 = vadd.f32 %v306, %v526
  %v528 = vpop.f32.mrb[0].mxu0
  %v529 = vpop.f32.mrb[0].mxu0
  %v530 = vadd.f32 %v309, %v529
  %v531 = vpop.f32.mrb[0].mxu0
  %532 = vdwg.mxu0
  %v533 = vld [vmem:[%s0] sm:$0xf]
  %v534 = vld [vmem:[%s0 + $0x4] sm:$0xf]
  %v535 = vld [vmem:[%s0 + $0x8] sm:$0xf]
  %v536 = vld [vmem:[%s0 + $0xc] sm:$0xf]
  %v537 = vld [vmem:[%s0 + $0x10] sm:$0xf]
  %v538 = vld [vmem:[%s0 + $0x14] sm:$0xf]
  %v539 = vld [vmem:[%s0 + $0x18] sm:$0xf]
  %v540 = vld [vmem:[%s0 + $0x1c] sm:$0xf]
  %v541 = vld [vmem:[%s0 + $0x20] sm:$0xf]
  %v542 = vld [vmem:[%s0 + $0x24] sm:$0xf]
  %v543 = vld [vmem:[%s0 + $0x28] sm:$0xf]
  %v544 = vld [vmem:[%s0 + $0x2c] sm:$0xf]
  %v545 = vld [vmem:[%s0 + $0x30] sm:$0xf]
  %v546 = vld [vmem:[%s0 + $0x34] sm:$0xf]
  %v547 = vld [vmem:[%s0 + $0x38] sm:$0xf]
  %v548 = vld [vmem:[%s0 + $0x3c] sm:$0xf]
  %v549 = vld [vmem:[%s0 + $0x40] sm:$0xf]
  %v550 = vld [vmem:[%s0 + $0x44] sm:$0xf]
  %v551 = vld [vmem:[%s0 + $0x48] sm:$0xf]
  %v552 = vld [vmem:[%s0 + $0x4c] sm:$0xf]
  %v553 = vld [vmem:[%s0 + $0x50] sm:$0x1]
  %s554 = scalar_lea.vmem %s1, 128
  %v555 = vld [vmem:[%s554] sm:$0xf]
  %v556 = vld [vmem:[%s554 + $0x4] sm:$0xf]
  %v557 = vld [vmem:[%s554 + $0x8] sm:$0xf]
  %v558 = vld [vmem:[%s554 + $0xc] sm:$0xf]
  %v559 = vld [vmem:[%s554 + $0x10] sm:$0xf]
  %v560 = vld [vmem:[%s554 + $0x14] sm:$0xf]
  %v561 = vld [vmem:[%s554 + $0x18] sm:$0xf]
  %v562 = vld [vmem:[%s554 + $0x1c] sm:$0xf]
  %v563 = vld [vmem:[%s554 + $0x20] sm:$0xf]
  %v564 = vld [vmem:[%s554 + $0x24] sm:$0xf]
  %v565 = vld [vmem:[%s554 + $0x28] sm:$0xf]
  %v566 = vld [vmem:[%s554 + $0x2c] sm:$0xf]
  %v567 = vld [vmem:[%s554 + $0x30] sm:$0xf]
  %v568 = vld [vmem:[%s554 + $0x34] sm:$0xf]
  %v569 = vld [vmem:[%s554 + $0x38] sm:$0xf]
  %v570 = vld [vmem:[%s554 + $0x3c] sm:$0xf]
  %v592 = vunpack.c.l.b16 %v533
  %v593 = vunpack.c.l.b16 %v534
  %v594 = vunpack.c.l.b16 %v535
  %v595 = vunpack.c.l.b16 %v536
  %v596 = vunpack.c.l.b16 %v537
  %v597 = vunpack.c.l.b16 %v538
  %v598 = vunpack.c.l.b16 %v539
  %v599 = vunpack.c.l.b16 %v540
  %v600 = vunpack.c.l.b16 %v541
  %v601 = vunpack.c.l.b16 %v542
  %v602 = vunpack.c.l.b16 %v543
  %v603 = vunpack.c.l.b16 %v544
  %v604 = vunpack.c.l.b16 %v545
  %v605 = vunpack.c.l.b16 %v546
  %v606 = vunpack.c.l.b16 %v547
  %v607 = vunpack.c.l.b16 %v548
  %v608 = vunpack.c.l.b16 %v549
  %v609 = vunpack.c.l.b16 %v550
  %v610 = vunpack.c.l.b16 %v551
  %v611 = vunpack.c.l.b16 %v552
  %v612 = vunpack.c.l.b16 %v553
  %v613 = vpack.c.b16 %v593, %v592
  %v614 = vpack.c.b16 %v595, %v594
  %v615 = vpack.c.b16 %v597, %v596
  %v616 = vpack.c.b16 %v599, %v598
  %v617 = vpack.c.b16 %v601, %v600
  %v618 = vpack.c.b16 %v603, %v602
  %v619 = vpack.c.b16 %v605, %v604
  %v620 = vpack.c.b16 %v607, %v606
  %v621 = vpack.c.b16 %v609, %v608
  %v622 = vpack.c.b16 %v611, %v610
  %v623 = vpack.c.b16 %v612, %v612
  %vm624 = vsmask.f32 7424
  %v626 = vshrl.u32 %v613, 16
  %v628 = vshll.u32 %v613, 16
  %v630 = vrot.slane %v628, 1
  %v631 = vor.u32 %v626, %v630
  %v633 = vshll.u32 %v614, 16
  %v635 = vrot.slane %v633, 1
  %v636 = vsel %vm624, %v631, %v635
  %v637 = vshrl.u32 %v614, 16
  %v639 = vor.u32 %v637, %v635
  %v641 = vshll.u32 %v615, 16
  %v643 = vrot.slane %v641, 1
  %v644 = vsel %vm624, %v639, %v643
  %v645 = vshrl.u32 %v615, 16
  %v647 = vor.u32 %v645, %v643
  %v649 = vshll.u32 %v616, 16
  %v651 = vrot.slane %v649, 1
  %v652 = vsel %vm624, %v647, %v651
  %v653 = vshrl.u32 %v616, 16
  %v655 = vor.u32 %v653, %v651
  %v657 = vshll.u32 %v617, 16
  %v659 = vrot.slane %v657, 1
  %v660 = vsel %vm624, %v655, %v659
  %v661 = vshrl.u32 %v617, 16
  %v663 = vor.u32 %v661, %v659
  %v665 = vshll.u32 %v618, 16
  %v667 = vrot.slane %v665, 1
  %v668 = vsel %vm624, %v663, %v667
  %v669 = vshrl.u32 %v618, 16
  %v671 = vor.u32 %v669, %v667
  %v673 = vshll.u32 %v619, 16
  %v675 = vrot.slane %v673, 1
  %v676 = vsel %vm624, %v671, %v675
  %v677 = vshrl.u32 %v619, 16
  %v679 = vor.u32 %v677, %v675
  %v681 = vshll.u32 %v620, 16
  %v683 = vrot.slane %v681, 1
  %v684 = vsel %vm624, %v679, %v683
  %v685 = vshrl.u32 %v620, 16
  %v687 = vor.u32 %v685, %v683
  %v689 = vshll.u32 %v621, 16
  %v691 = vrot.slane %v689, 1
  %v692 = vsel %vm624, %v687, %v691
  %v693 = vshrl.u32 %v621, 16
  %v695 = vor.u32 %v693, %v691
  %v697 = vshll.u32 %v622, 16
  %v699 = vrot.slane %v697, 1
  %v700 = vsel %vm624, %v695, %v699
  %v701 = vshrl.u32 %v622, 16
  %v703 = vor.u32 %v701, %v699
  %v705 = vshll.u32 %v623, 16
  %v707 = vrot.slane %v705, 1
  %v708 = vsel %vm624, %v703, %v707
  %v735 = vunpack.c.l.b16 %v555
  %v736 = vunpack.c.l.b16 %v556
  %v737 = vunpack.c.l.b16 %v557
  %v738 = vunpack.c.l.b16 %v558
  %v739 = vunpack.c.l.b16 %v559
  %v740 = vunpack.c.l.b16 %v560
  %v741 = vunpack.c.l.b16 %v561
  %v742 = vunpack.c.l.b16 %v562
  %v743 = vunpack.c.l.b16 %v563
  %v744 = vunpack.c.l.b16 %v564
  %v745 = vunpack.c.l.b16 %v565
  %v746 = vunpack.c.l.b16 %v566
  %v747 = vunpack.c.l.b16 %v567
  %v748 = vunpack.c.l.b16 %v568
  %v749 = vunpack.c.l.b16 %v569
  %v750 = vunpack.c.l.b16 %v570
  %v751 = vpack.c.b16 %v736, %v735
  %v752 = vpack.c.b16 %v738, %v737
  %v753 = vpack.c.b16 %v740, %v739
  %v754 = vpack.c.b16 %v742, %v741
  %v755 = vpack.c.b16 %v744, %v743
  %v756 = vpack.c.b16 %v746, %v745
  %v757 = vpack.c.b16 %v748, %v747
  %v758 = vpack.c.b16 %v750, %v749
  %767 = vmatprep.subr.bf16.mxu0 0
  %768 = vmatpush1.bf16.msra.mxu0 %v751
  %769 = vmatprep.subr.bf16.mxu0 0
  %770 = vmatpush1.bf16.msra.mxu0 %v752
  %771 = vmatprep.subr.bf16.mxu0 0
  %772 = vmatpush1.bf16.msra.mxu0 %v753
  %773 = vmatprep.subr.bf16.mxu0 0
  %774 = vmatpush1.bf16.msra.mxu0 %v754
  %775 = vmatprep.subr.bf16.mxu0 0
  %776 = vmatpush1.bf16.msra.mxu0 %v755
  %777 = vmatprep.subr.bf16.mxu0 0
  %778 = vmatpush1.bf16.msra.mxu0 %v756
  %779 = vmatprep.subr.bf16.mxu0 0
  %780 = vmatpush1.bf16.msra.mxu0 %v757
  %781 = vmatprep.subr.bf16.mxu0 0
  %782 = vmatpush1.bf16.msra.mxu0 %v758
  %783 = vmatprep.subr.bf16.mxu0 0
  %784 = vmatpush1.bf16.msra.mxu0 0
  %785 = vmatprep.subr.bf16.mxu0 0
  %786 = vmatpush1.bf16.msra.mxu0 0
  %787 = vmatprep.subr.bf16.mxu0 0
  %788 = vmatpush1.bf16.msra.mxu0 0
  %789 = vmatprep.subr.bf16.mxu0 0
  %790 = vmatpush1.bf16.msra.mxu0 0
  %791 = vmatprep.subr.bf16.mxu0 0
  %792 = vmatpush1.bf16.msra.mxu0 0
  %793 = vmatprep.subr.bf16.mxu0 0
  %794 = vmatpush1.bf16.msra.mxu0 0
  %795 = vmatprep.subr.bf16.mxu0 0
  %796 = vmatpush1.bf16.msra.mxu0 0
  %797 = vmatprep.subr.bf16.mxu0 0
  %798 = vmatpush1.bf16.msra.mxu0 0
  %799 = vmatprep.mubr.bf16.mxu0 0
  %800 = vmatmul.mubr.bf16.gmra.mrb[0].mxu0 %v636
  %v801 = vpop.f32.mrb[0].mxu0
  %v802 = vadd.f32 0.0, %v801
  %v803 = vpop.f32.mrb[0].mxu0
  %v804 = vpop.f32.mrb[0].mxu0
  %v805 = vadd.f32 0.0, %v804
  %v806 = vpop.f32.mrb[0].mxu0
  %807 = vmatprep.mubr.bf16.mxu0 0
  %808 = vmatmul.mubr.bf16.gmra.mrb[0].mxu0 %v644
  %v809 = vpop.f32.mrb[0].mxu0
  %v810 = vadd.f32 0.0, %v809
  %v811 = vpop.f32.mrb[0].mxu0
  %v812 = vpop.f32.mrb[0].mxu0
  %v813 = vadd.f32 0.0, %v812
  %v814 = vpop.f32.mrb[0].mxu0
  %815 = vmatprep.mubr.bf16.mxu0 0
  %816 = vmatmul.mubr.bf16.gmra.mrb[0].mxu0 %v652
  %v817 = vpop.f32.mrb[0].mxu0
  %v818 = vadd.f32 0.0, %v817
  %v819 = vpop.f32.mrb[0].mxu0
  %v820 = vpop.f32.mrb[0].mxu0
  %v821 = vadd.f32 0.0, %v820
  %v822 = vpop.f32.mrb[0].mxu0
  %823 = vmatprep.mubr.bf16.mxu0 0
  %824 = vmatmul.mubr.bf16.gmra.mrb[0].mxu0 %v660
  %v825 = vpop.f32.mrb[0].mxu0
  %v826 = vadd.f32 0.0, %v825
  %v827 = vpop.f32.mrb[0].mxu0
  %v828 = vpop.f32.mrb[0].mxu0
  %v829 = vadd.f32 0.0, %v828
  %v830 = vpop.f32.mrb[0].mxu0
  %831 = vmatprep.mubr.bf16.mxu0 0
  %832 = vmatmul.mubr.bf16.gmra.mrb[0].mxu0 %v668
  %v833 = vpop.f32.mrb[0].mxu0
  %v834 = vadd.f32 0.0, %v833
  %v835 = vpop.f32.mrb[0].mxu0
  %v836 = vpop.f32.mrb[0].mxu0
  %v837 = vadd.f32 0.0, %v836
  %v838 = vpop.f32.mrb[0].mxu0
  %839 = vmatprep.mubr.bf16.mxu0 0
  %840 = vmatmul.mubr.bf16.gmra.mrb[0].mxu0 %v676
  %v841 = vpop.f32.mrb[0].mxu0
  %v842 = vadd.f32 0.0, %v841
  %v843 = vpop.f32.mrb[0].mxu0
  %v844 = vpop.f32.mrb[0].mxu0
  %v845 = vadd.f32 0.0, %v844
  %v846 = vpop.f32.mrb[0].mxu0
  %847 = vmatprep.mubr.bf16.mxu0 0
  %848 = vmatmul.mubr.bf16.gmra.mrb[0].mxu0 %v684
  %v849 = vpop.f32.mrb[0].mxu0
  %v850 = vadd.f32 0.0, %v849
  %v851 = vpop.f32.mrb[0].mxu0
  %v852 = vpop.f32.mrb[0].mxu0
  %v853 = vadd.f32 0.0, %v852
  %v854 = vpop.f32.mrb[0].mxu0
  %855 = vmatprep.mubr.bf16.mxu0 0
  %856 = vmatmul.mubr.bf16.gmra.mrb[0].mxu0 %v692
  %v857 = vpop.f32.mrb[0].mxu0
  %v858 = vadd.f32 0.0, %v857
  %v859 = vpop.f32.mrb[0].mxu0
  %v860 = vpop.f32.mrb[0].mxu0
  %v861 = vadd.f32 0.0, %v860
  %v862 = vpop.f32.mrb[0].mxu0
  %863 = vmatprep.mubr.bf16.mxu0 0
  %864 = vmatmul.mubr.bf16.gmra.mrb[0].mxu0 %v700
  %v865 = vpop.f32.mrb[0].mxu0
  %v866 = vadd.f32 0.0, %v865
  %v867 = vpop.f32.mrb[0].mxu0
  %v868 = vpop.f32.mrb[0].mxu0
  %v869 = vadd.f32 0.0, %v868
  %v870 = vpop.f32.mrb[0].mxu0
  %871 = vmatprep.mubr.bf16.mxu0 0
  %872 = vmatmul.mubr.bf16.gmra.mrb[0].mxu0 %v708
  %v873 = vpop.f32.mrb[0].mxu0
  %v874 = vadd.f32 0.0, %v873
  %v875 = vpop.f32.mrb[0].mxu0
  %v876 = vpop.f32.mrb[0].mxu0
  %v877 = vadd.f32 0.0, %v876
  %v878 = vpop.f32.mrb[0].mxu0
  %879 = vdwg.mxu0
  %v880 = vadd.f32 %v455, %v802
  %v881 = vadd.f32 %v458, %v805
  %v882 = vadd.f32 %v463, %v810
  %v883 = vadd.f32 %v466, %v813
  %v884 = vadd.f32 %v471, %v818
  %v885 = vadd.f32 %v474, %v821
  %v886 = vadd.f32 %v479, %v826
  %v887 = vadd.f32 %v482, %v829
  %v888 = vadd.f32 %v487, %v834
  %v889 = vadd.f32 %v490, %v837
  %v890 = vadd.f32 %v495, %v842
  %v891 = vadd.f32 %v498, %v845
  %v892 = vadd.f32 %v503, %v850
  %v893 = vadd.f32 %v506, %v853
  %v894 = vadd.f32 %v511, %v858
  %v895 = vadd.f32 %v514, %v861
  %v896 = vadd.f32 %v519, %v866
  %v897 = vadd.f32 %v522, %v869
  %v898 = vadd.f32 %v527, %v874
  %v899 = vadd.f32 %v530, %v877
  %s900 = scalar_lea.vmem %s0, 176
  %v901 = vld [vmem:[%s900] sm:$0xf]
  %v902 = vld [vmem:[%s900 + $0x4] sm:$0xf]
  %v903 = vld [vmem:[%s900 + $0x8] sm:$0xf]
  %v904 = vld [vmem:[%s900 + $0xc] sm:$0xf]
  %v905 = vld [vmem:[%s900 + $0x10] sm:$0xf]
  %v906 = vld [vmem:[%s900 + $0x14] sm:$0xf]
  %v907 = vld [vmem:[%s900 + $0x18] sm:$0xf]
  %v908 = vld [vmem:[%s900 + $0x1c] sm:$0xf]
  %v909 = vld [vmem:[%s900 + $0x20] sm:$0xf]
  %v910 = vld [vmem:[%s900 + $0x24] sm:$0xf]
  %v911 = vld [vmem:[%s900 + $0x28] sm:$0xf]
  %v912 = vld [vmem:[%s900 + $0x2c] sm:$0xf]
  %v913 = vld [vmem:[%s900 + $0x30] sm:$0xf]
  %v914 = vld [vmem:[%s900 + $0x34] sm:$0xf]
  %v915 = vld [vmem:[%s900 + $0x38] sm:$0xf]
  %v916 = vld [vmem:[%s900 + $0x3c] sm:$0xf]
  %v917 = vld [vmem:[%s900 + $0x40] sm:$0xf]
  %v918 = vld [vmem:[%s900 + $0x44] sm:$0xf]
  %v919 = vld [vmem:[%s900 + $0x48] sm:$0xf]
  %v920 = vld [vmem:[%s900 + $0x4c] sm:$0xf]
  %s921 = scalar_lea.vmem %s1, 192
  %v922 = vld [vmem:[%s921] sm:$0xf]
  %v923 = vld [vmem:[%s921 + $0x4] sm:$0xf]
  %v924 = vld [vmem:[%s921 + $0x8] sm:$0xf]
  %v925 = vld [vmem:[%s921 + $0xc] sm:$0xf]
  %v926 = vld [vmem:[%s921 + $0x10] sm:$0xf]
  %v927 = vld [vmem:[%s921 + $0x14] sm:$0xf]
  %v928 = vld [vmem:[%s921 + $0x18] sm:$0xf]
  %v929 = vld [vmem:[%s921 + $0x1c] sm:$0xf]
  %v930 = vld [vmem:[%s921 + $0x20] sm:$0xf]
  %v931 = vld [vmem:[%s921 + $0x24] sm:$0xf]
  %v932 = vld [vmem:[%s921 + $0x28] sm:$0xf]
  %v933 = vld [vmem:[%s921 + $0x2c] sm:$0xf]
  %v934 = vld [vmem:[%s921 + $0x30] sm:$0xf]
  %v935 = vld [vmem:[%s921 + $0x34] sm:$0xf]
  %v936 = vld [vmem:[%s921 + $0x38] sm:$0xf]
  %v937 = vld [vmem:[%s921 + $0x3c] sm:$0xf]
  %v958 = vunpack.c.l.b16 %v901
  %v959 = vunpack.c.l.b16 %v902
  %v960 = vunpack.c.l.b16 %v903
  %v961 = vunpack.c.l.b16 %v904
  %v962 = vunpack.c.l.b16 %v905
  %v963 = vunpack.c.l.b16 %v906
  %v964 = vunpack.c.l.b16 %v907
  %v965 = vunpack.c.l.b16 %v908
  %v966 = vunpack.c.l.b16 %v909
  %v967 = vunpack.c.l.b16 %v910
  %v968 = vunpack.c.l.b16 %v911
  %v969 = vunpack.c.l.b16 %v912
  %v970 = vunpack.c.l.b16 %v913
  %v971 = vunpack.c.l.b16 %v914
  %v972 = vunpack.c.l.b16 %v915
  %v973 = vunpack.c.l.b16 %v916
  %v974 = vunpack.c.l.b16 %v917
  %v975 = vunpack.c.l.b16 %v918
  %v976 = vunpack.c.l.b16 %v919
  %v977 = vunpack.c.l.b16 %v920
  %v978 = vpack.c.b16 %v959, %v958
  %v979 = vpack.c.b16 %v961, %v960
  %v980 = vpack.c.b16 %v963, %v962
  %v981 = vpack.c.b16 %v965, %v964
  %v982 = vpack.c.b16 %v967, %v966
  %v983 = vpack.c.b16 %v969, %v968
  %v984 = vpack.c.b16 %v971, %v970
  %v985 = vpack.c.b16 %v973, %v972
  %v986 = vpack.c.b16 %v975, %v974
  %v987 = vpack.c.b16 %v977, %v976
  %v1014 = vunpack.c.l.b16 %v922
  %v1015 = vunpack.c.l.b16 %v923
  %v1016 = vunpack.c.l.b16 %v924
  %v1017 = vunpack.c.l.b16 %v925
  %v1018 = vunpack.c.l.b16 %v926
  %v1019 = vunpack.c.l.b16 %v927
  %v1020 = vunpack.c.l.b16 %v928
  %v1021 = vunpack.c.l.b16 %v929
  %v1022 = vunpack.c.l.b16 %v930
  %v1023 = vunpack.c.l.b16 %v931
  %v1024 = vunpack.c.l.b16 %v932
  %v1025 = vunpack.c.l.b16 %v933
  %v1026 = vunpack.c.l.b16 %v934
  %v1027 = vunpack.c.l.b16 %v935
  %v1028 = vunpack.c.l.b16 %v936
  %v1029 = vunpack.c.l.b16 %v937
  %v1030 = vpack.c.b16 %v1015, %v1014
  %v1031 = vpack.c.b16 %v1017, %v1016
  %v1032 = vpack.c.b16 %v1019, %v1018
  %v1033 = vpack.c.b16 %v1021, %v1020
  %v1034 = vpack.c.b16 %v1023, %v1022
  %v1035 = vpack.c.b16 %v1025, %v1024
  %v1036 = vpack.c.b16 %v1027, %v1026
  %v1037 = vpack.c.b16 %v1029, %v1028
  %1046 = vmatprep.subr.bf16.mxu0 0
  %1047 = vmatpush1.bf16.msra.mxu0 %v1030
  %1048 = vmatprep.subr.bf16.mxu0 0
  %1049 = vmatpush1.bf16.msra.mxu0 %v1031
  %1050 = vmatprep.subr.bf16.mxu0 0
  %1051 = vmatpush1.bf16.msra.mxu0 %v1032
  %1052 = vmatprep.subr.bf16.mxu0 0
  %1053 = vmatpush1.bf16.msra.mxu0 %v1033
  %1054 = vmatprep.subr.bf16.mxu0 0
  %1055 = vmatpush1.bf16.msra.mxu0 %v1034
  %1056 = vmatprep.subr.bf16.mxu0 0
  %1057 = vmatpush1.bf16.msra.mxu0 %v1035
  %1058 = vmatprep.subr.bf16.mxu0 0
  %1059 = vmatpush1.bf16.msra.mxu0 %v1036
  %1060 = vmatprep.subr.bf16.mxu0 0
  %1061 = vmatpush1.bf16.msra.mxu0 %v1037
  %1062 = vmatprep.subr.bf16.mxu0 0
  %1063 = vmatpush1.bf16.msra.mxu0 0
  %1064 = vmatprep.subr.bf16.mxu0 0
  %1065 = vmatpush1.bf16.msra.mxu0 0
  %1066 = vmatprep.subr.bf16.mxu0 0
  %1067 = vmatpush1.bf16.msra.mxu0 0
  %1068 = vmatprep.subr.bf16.mxu0 0
  %1069 = vmatpush1.bf16.msra.mxu0 0
  %1070 = vmatprep.subr.bf16.mxu0 0
  %1071 = vmatpush1.bf16.msra.mxu0 0
  %1072 = vmatprep.subr.bf16.mxu0 0
  %1073 = vmatpush1.bf16.msra.mxu0 0
  %1074 = vmatprep.subr.bf16.mxu0 0
  %1075 = vmatpush1.bf16.msra.mxu0 0
  %1076 = vmatprep.subr.bf16.mxu0 0
  %1077 = vmatpush1.bf16.msra.mxu0 0
  %1078 = vmatprep.mubr.bf16.mxu0 0
  %1079 = vmatmul.mubr.bf16.gmra.mrb[0].mxu0 %v978
  %v1080 = vpop.f32.mrb[0].mxu0
  %v1081 = vadd.f32 0.0, %v1080
  %v1082 = vpop.f32.mrb[0].mxu0
  %v1083 = vpop.f32.mrb[0].mxu0
  %v1084 = vadd.f32 0.0, %v1083
  %v1085 = vpop.f32.mrb[0].mxu0
  %1086 = vmatprep.mubr.bf16.mxu0 0
  %1087 = vmatmul.mubr.bf16.gmra.mrb[0].mxu0 %v979
  %v1088 = vpop.f32.mrb[0].mxu0
  %v1089 = vadd.f32 0.0, %v1088
  %v1090 = vpop.f32.mrb[0].mxu0
  %v1091 = vpop.f32.mrb[0].mxu0
  %v1092 = vadd.f32 0.0, %v1091
  %v1093 = vpop.f32.mrb[0].mxu0
  %1094 = vmatprep.mubr.bf16.mxu0 0
  %1095 = vmatmul.mubr.bf16.gmra.mrb[0].mxu0 %v980
  %v1096 = vpop.f32.mrb[0].mxu0
  %v1097 = vadd.f32 0.0, %v1096
  %v1098 = vpop.f32.mrb[0].mxu0
  %v1099 = vpop.f32.mrb[0].mxu0
  %v1100 = vadd.f32 0.0, %v1099
  %v1101 = vpop.f32.mrb[0].mxu0
  %1102 = vmatprep.mubr.bf16.mxu0 0
  %1103 = vmatmul.mubr.bf16.gmra.mrb[0].mxu0 %v981
  %v1104 = vpop.f32.mrb[0].mxu0
  %v1105 = vadd.f32 0.0, %v1104
  %v1106 = vpop.f32.mrb[0].mxu0
  %v1107 = vpop.f32.mrb[0].mxu0
  %v1108 = vadd.f32 0.0, %v1107
  %v1109 = vpop.f32.mrb[0].mxu0
  %1110 = vmatprep.mubr.bf16.mxu0 0
  %1111 = vmatmul.mubr.bf16.gmra.mrb[0].mxu0 %v982
  %v1112 = vpop.f32.mrb[0].mxu0
  %v1113 = vadd.f32 0.0, %v1112
  %v1114 = vpop.f32.mrb[0].mxu0
  %v1115 = vpop.f32.mrb[0].mxu0
  %v1116 = vadd.f32 0.0, %v1115
  %v1117 = vpop.f32.mrb[0].mxu0
  %1118 = vmatprep.mubr.bf16.mxu0 0
  %1119 = vmatmul.mubr.bf16.gmra.mrb[0].mxu0 %v983
  %v1120 = vpop.f32.mrb[0].mxu0
  %v1121 = vadd.f32 0.0, %v1120
  %v1122 = vpop.f32.mrb[0].mxu0
  %v1123 = vpop.f32.mrb[0].mxu0
  %v1124 = vadd.f32 0.0, %v1123
  %v1125 = vpop.f32.mrb[0].mxu0
  %1126 = vmatprep.mubr.bf16.mxu0 0
  %1127 = vmatmul.mubr.bf16.gmra.mrb[0].mxu0 %v984
  %v1128 = vpop.f32.mrb[0].mxu0
  %v1129 = vadd.f32 0.0, %v1128
  %v1130 = vpop.f32.mrb[0].mxu0
  %v1131 = vpop.f32.mrb[0].mxu0
  %v1132 = vadd.f32 0.0, %v1131
  %v1133 = vpop.f32.mrb[0].mxu0
  %1134 = vmatprep.mubr.bf16.mxu0 0
  %1135 = vmatmul.mubr.bf16.gmra.mrb[0].mxu0 %v985
  %v1136 = vpop.f32.mrb[0].mxu0
  %v1137 = vadd.f32 0.0, %v1136
  %v1138 = vpop.f32.mrb[0].mxu0
  %v1139 = vpop.f32.mrb[0].mxu0
  %v1140 = vadd.f32 0.0, %v1139
  %v1141 = vpop.f32.mrb[0].mxu0
  %1142 = vmatprep.mubr.bf16.mxu0 0
  %1143 = vmatmul.mubr.bf16.gmra.mrb[0].mxu0 %v986
  %v1144 = vpop.f32.mrb[0].mxu0
  %v1145 = vadd.f32 0.0, %v1144
  %v1146 = vpop.f32.mrb[0].mxu0
  %v1147 = vpop.f32.mrb[0].mxu0
  %v1148 = vadd.f32 0.0, %v1147
  %v1149 = vpop.f32.mrb[0].mxu0
  %1150 = vmatprep.mubr.bf16.mxu0 0
  %1151 = vmatmul.mubr.bf16.gmra.mrb[0].mxu0 %v987
  %v1152 = vpop.f32.mrb[0].mxu0
  %v1153 = vadd.f32 0.0, %v1152
  %v1154 = vpop.f32.mrb[0].mxu0
  %v1155 = vpop.f32.mrb[0].mxu0
  %v1156 = vadd.f32 0.0, %v1155
  %v1157 = vpop.f32.mrb[0].mxu0
  %1158 = vdwg.mxu0
  %v1159 = vadd.f32 %v880, %v1081
  %v1160 = vadd.f32 %v881, %v1084
  %v1161 = vadd.f32 %v882, %v1089
  %v1162 = vadd.f32 %v883, %v1092
  %v1163 = vadd.f32 %v884, %v1097
  %v1164 = vadd.f32 %v885, %v1100
  %v1165 = vadd.f32 %v886, %v1105
  %v1166 = vadd.f32 %v887, %v1108
  %v1167 = vadd.f32 %v888, %v1113
  %v1168 = vadd.f32 %v889, %v1116
  %v1169 = vadd.f32 %v890, %v1121
  %v1170 = vadd.f32 %v891, %v1124
  %v1171 = vadd.f32 %v892, %v1129
  %v1172 = vadd.f32 %v893, %v1132
  %v1173 = vadd.f32 %v894, %v1137
  %v1174 = vadd.f32 %v895, %v1140
  %v1175 = vadd.f32 %v896, %v1145
  %v1176 = vadd.f32 %v897, %v1148
  %v1177 = vadd.f32 %v898, %v1153
  %v1178 = vadd.f32 %v899, %v1156
  %s1179 = scalar_lea.vmem %s0, 264
  %v1180 = vld [vmem:[%s1179] sm:$0xf]
  %v1181 = vld [vmem:[%s1179 + $0x4] sm:$0xf]
  %v1182 = vld [vmem:[%s1179 + $0x8] sm:$0xf]
  %v1183 = vld [vmem:[%s1179 + $0xc] sm:$0xf]
  %v1184 = vld [vmem:[%s1179 + $0x10] sm:$0xf]
  %v1185 = vld [vmem:[%s1179 + $0x14] sm:$0xf]
  %v1186 = vld [vmem:[%s1179 + $0x18] sm:$0xf]
  %v1187 = vld [vmem:[%s1179 + $0x1c] sm:$0xf]
  %v1188 = vld [vmem:[%s1179 + $0x20] sm:$0xf]
  %v1189 = vld [vmem:[%s1179 + $0x24] sm:$0xf]
  %v1190 = vld [vmem:[%s1179 + $0x28] sm:$0xf]
  %v1191 = vld [vmem:[%s1179 + $0x2c] sm:$0xf]
  %v1192 = vld [vmem:[%s1179 + $0x30] sm:$0xf]
  %v1193 = vld [vmem:[%s1179 + $0x34] sm:$0xf]
  %v1194 = vld [vmem:[%s1179 + $0x38] sm:$0xf]
  %v1195 = vld [vmem:[%s1179 + $0x3c] sm:$0xf]
  %v1196 = vld [vmem:[%s1179 + $0x40] sm:$0xf]
  %v1197 = vld [vmem:[%s1179 + $0x44] sm:$0xf]
  %v1198 = vld [vmem:[%s1179 + $0x48] sm:$0xf]
  %v1199 = vld [vmem:[%s1179 + $0x4c] sm:$0xf]
  %s1200 = scalar_lea.vmem %s1, 256
  %v1201 = vld [vmem:[%s1200] sm:$0xf]
  %v1202 = vld [vmem:[%s1200 + $0x4] sm:$0xf]
  %v1203 = vld [vmem:[%s1200 + $0x8] sm:$0xf]
  %v1204 = vld [vmem:[%s1200 + $0xc] sm:$0xf]
  %v1205 = vld [vmem:[%s1200 + $0x10] sm:$0xf]
  %v1206 = vld [vmem:[%s1200 + $0x14] sm:$0xf]
  %v1207 = vld [vmem:[%s1200 + $0x18] sm:$0xf]
  %v1208 = vld [vmem:[%s1200 + $0x1c] sm:$0xf]
  %v1209 = vld [vmem:[%s1200 + $0x20] sm:$0xf]
  %v1210 = vld [vmem:[%s1200 + $0x24] sm:$0xf]
  %v1211 = vld [vmem:[%s1200 + $0x28] sm:$0xf]
  %v1212 = vld [vmem:[%s1200 + $0x2c] sm:$0xf]
  %v1213 = vld [vmem:[%s1200 + $0x30] sm:$0xf]
  %v1214 = vld [vmem:[%s1200 + $0x34] sm:$0xf]
  %v1215 = vld [vmem:[%s1200 + $0x38] sm:$0xf]
  %v1216 = vld [vmem:[%s1200 + $0x3c] sm:$0xf]
  %v1237 = vunpack.c.l.b16 %v1180
  %v1238 = vunpack.c.l.b16 %v1181
  %v1239 = vunpack.c.l.b16 %v1182
  %v1240 = vunpack.c.l.b16 %v1183
  %v1241 = vunpack.c.l.b16 %v1184
  %v1242 = vunpack.c.l.b16 %v1185
  %v1243 = vunpack.c.l.b16 %v1186
  %v1244 = vunpack.c.l.b16 %v1187
  %v1245 = vunpack.c.l.b16 %v1188
  %v1246 = vunpack.c.l.b16 %v1189
  %v1247 = vunpack.c.l.b16 %v1190
  %v1248 = vunpack.c.l.b16 %v1191
  %v1249 = vunpack.c.l.b16 %v1192
  %v1250 = vunpack.c.l.b16 %v1193
  %v1251 = vunpack.c.l.b16 %v1194
  %v1252 = vunpack.c.l.b16 %v1195
  %v1253 = vunpack.c.l.b16 %v1196
  %v1254 = vunpack.c.l.b16 %v1197
  %v1255 = vunpack.c.l.b16 %v1198
  %v1256 = vunpack.c.l.b16 %v1199
  %v1257 = vpack.c.b16 %v1238, %v1237
  %v1258 = vpack.c.b16 %v1240, %v1239
  %v1259 = vpack.c.b16 %v1242, %v1241
  %v1260 = vpack.c.b16 %v1244, %v1243
  %v1261 = vpack.c.b16 %v1246, %v1245
  %v1262 = vpack.c.b16 %v1248, %v1247
  %v1263 = vpack.c.b16 %v1250, %v1249
  %v1264 = vpack.c.b16 %v1252, %v1251
  %v1265 = vpack.c.b16 %v1254, %v1253
  %v1266 = vpack.c.b16 %v1256, %v1255
  %v1293 = vunpack.c.l.b16 %v1201
  %v1294 = vunpack.c.l.b16 %v1202
  %v1295 = vunpack.c.l.b16 %v1203
  %v1296 = vunpack.c.l.b16 %v1204
  %v1297 = vunpack.c.l.b16 %v1205
  %v1298 = vunpack.c.l.b16 %v1206
  %v1299 = vunpack.c.l.b16 %v1207
  %v1300 = vunpack.c.l.b16 %v1208
  %v1301 = vunpack.c.l.b16 %v1209
  %v1302 = vunpack.c.l.b16 %v1210
  %v1303 = vunpack.c.l.b16 %v1211
  %v1304 = vunpack.c.l.b16 %v1212
  %v1305 = vunpack.c.l.b16 %v1213
  %v1306 = vunpack.c.l.b16 %v1214
  %v1307 = vunpack.c.l.b16 %v1215
  %v1308 = vunpack.c.l.b16 %v1216
  %v1309 = vpack.c.b16 %v1294, %v1293
  %v1310 = vpack.c.b16 %v1296, %v1295
  %v1311 = vpack.c.b16 %v1298, %v1297
  %v1312 = vpack.c.b16 %v1300, %v1299
  %v1313 = vpack.c.b16 %v1302, %v1301
  %v1314 = vpack.c.b16 %v1304, %v1303
  %v1315 = vpack.c.b16 %v1306, %v1305
  %v1316 = vpack.c.b16 %v1308, %v1307
  %1325 = vmatprep.subr.bf16.mxu0 0
  %1326 = vmatpush1.bf16.msra.mxu0 %v1309
  %1327 = vmatprep.subr.bf16.mxu0 0
  %1328 = vmatpush1.bf16.msra.mxu0 %v1310
  %1329 = vmatprep.subr.bf16.mxu0 0
  %1330 = vmatpush1.bf16.msra.mxu0 %v1311
  %1331 = vmatprep.subr.bf16.mxu0 0
  %1332 = vmatpush1.bf16.msra.mxu0 %v1312
  %1333 = vmatprep.subr.bf16.mxu0 0
  %1334 = vmatpush1.bf16.msra.mxu0 %v1313
  %1335 = vmatprep.subr.bf16.mxu0 0
  %1336 = vmatpush1.bf16.msra.mxu0 %v1314
  %1337 = vmatprep.subr.bf16.mxu0 0
  %1338 = vmatpush1.bf16.msra.mxu0 %v1315
  %1339 = vmatprep.subr.bf16.mxu0 0
  %1340 = vmatpush1.bf16.msra.mxu0 %v1316
  %1341 = vmatprep.subr.bf16.mxu0 0
  %1342 = vmatpush1.bf16.msra.mxu0 0
  %1343 = vmatprep.subr.bf16.mxu0 0
  %1344 = vmatpush1.bf16.msra.mxu0 0
  %1345 = vmatprep.subr.bf16.mxu0 0
  %1346 = vmatpush1.bf16.msra.mxu0 0
  %1347 = vmatprep.subr.bf16.mxu0 0
  %1348 = vmatpush1.bf16.msra.mxu0 0
  %1349 = vmatprep.subr.bf16.mxu0 0
  %1350 = vmatpush1.bf16.msra.mxu0 0
  %1351 = vmatprep.subr.bf16.mxu0 0
  %1352 = vmatpush1.bf16.msra.mxu0 0
  %1353 = vmatprep.subr.bf16.mxu0 0
  %1354 = vmatpush1.bf16.msra.mxu0 0
  %1355 = vmatprep.subr.bf16.mxu0 0
  %1356 = vmatpush1.bf16.msra.mxu0 0
  %1357 = vmatprep.mubr.bf16.mxu0 0
  %1358 = vmatmul.mubr.bf16.gmra.mrb[0].mxu0 %v1257
  %v1359 = vpop.f32.mrb[0].mxu0
  %v1360 = vadd.f32 0.0, %v1359
  %v1361 = vpop.f32.mrb[0].mxu0
  %v1362 = vpop.f32.mrb[0].mxu0
  %v1363 = vadd.f32 0.0, %v1362
  %v1364 = vpop.f32.mrb[0].mxu0
  %1365 = vmatprep.mubr.bf16.mxu0 0
  %1366 = vmatmul.mubr.bf16.gmra.mrb[0].mxu0 %v1258
  %v1367 = vpop.f32.mrb[0].mxu0
  %v1368 = vadd.f32 0.0, %v1367
  %v1369 = vpop.f32.mrb[0].mxu0
  %v1370 = vpop.f32.mrb[0].mxu0
  %v1371 = vadd.f32 0.0, %v1370
  %v1372 = vpop.f32.mrb[0].mxu0
  %1373 = vmatprep.mubr.bf16.mxu0 0
  %1374 = vmatmul.mubr.bf16.gmra.mrb[0].mxu0 %v1259
  %v1375 = vpop.f32.mrb[0].mxu0
  %v1376 = vadd.f32 0.0, %v1375
  %v1377 = vpop.f32.mrb[0].mxu0
  %v1378 = vpop.f32.mrb[0].mxu0
  %v1379 = vadd.f32 0.0, %v1378
  %v1380 = vpop.f32.mrb[0].mxu0
  %1381 = vmatprep.mubr.bf16.mxu0 0
  %1382 = vmatmul.mubr.bf16.gmra.mrb[0].mxu0 %v1260
  %v1383 = vpop.f32.mrb[0].mxu0
  %v1384 = vadd.f32 0.0, %v1383
  %v1385 = vpop.f32.mrb[0].mxu0
  %v1386 = vpop.f32.mrb[0].mxu0
  %v1387 = vadd.f32 0.0, %v1386
  %v1388 = vpop.f32.mrb[0].mxu0
  %1389 = vmatprep.mubr.bf16.mxu0 0
  %1390 = vmatmul.mubr.bf16.gmra.mrb[0].mxu0 %v1261
  %v1391 = vpop.f32.mrb[0].mxu0
  %v1392 = vadd.f32 0.0, %v1391
  %v1393 = vpop.f32.mrb[0].mxu0
  %v1394 = vpop.f32.mrb[0].mxu0
  %v1395 = vadd.f32 0.0, %v1394
  %v1396 = vpop.f32.mrb[0].mxu0
  %1397 = vmatprep.mubr.bf16.mxu0 0
  %1398 = vmatmul.mubr.bf16.gmra.mrb[0].mxu0 %v1262
  %v1399 = vpop.f32.mrb[0].mxu0
  %v1400 = vadd.f32 0.0, %v1399
  %v1401 = vpop.f32.mrb[0].mxu0
  %v1402 = vpop.f32.mrb[0].mxu0
  %v1403 = vadd.f32 0.0, %v1402
  %v1404 = vpop.f32.mrb[0].mxu0
  %1405 = vmatprep.mubr.bf16.mxu0 0
  %1406 = vmatmul.mubr.bf16.gmra.mrb[0].mxu0 %v1263
  %v1407 = vpop.f32.mrb[0].mxu0
  %v1408 = vadd.f32 0.0, %v1407
  %v1409 = vpop.f32.mrb[0].mxu0
  %v1410 = vpop.f32.mrb[0].mxu0
  %v1411 = vadd.f32 0.0, %v1410
  %v1412 = vpop.f32.mrb[0].mxu0
  %1413 = vmatprep.mubr.bf16.mxu0 0
  %1414 = vmatmul.mubr.bf16.gmra.mrb[0].mxu0 %v1264
  %v1415 = vpop.f32.mrb[0].mxu0
  %v1416 = vadd.f32 0.0, %v1415
  %v1417 = vpop.f32.mrb[0].mxu0
  %v1418 = vpop.f32.mrb[0].mxu0
  %v1419 = vadd.f32 0.0, %v1418
  %v1420 = vpop.f32.mrb[0].mxu0
  %1421 = vmatprep.mubr.bf16.mxu0 0
  %1422 = vmatmul.mubr.bf16.gmra.mrb[0].mxu0 %v1265
  %v1423 = vpop.f32.mrb[0].mxu0
  %v1424 = vadd.f32 0.0, %v1423
  %v1425 = vpop.f32.mrb[0].mxu0
  %v1426 = vpop.f32.mrb[0].mxu0
  %v1427 = vadd.f32 0.0, %v1426
  %v1428 = vpop.f32.mrb[0].mxu0
  %1429 = vmatprep.mubr.bf16.mxu0 0
  %1430 = vmatmul.mubr.bf16.gmra.mrb[0].mxu0 %v1266
  %v1431 = vpop.f32.mrb[0].mxu0
  %v1432 = vadd.f32 0.0, %v1431
  %v1433 = vpop.f32.mrb[0].mxu0
  %v1434 = vpop.f32.mrb[0].mxu0
  %v1435 = vadd.f32 0.0, %v1434
  %v1436 = vpop.f32.mrb[0].mxu0
  %1437 = vdwg.mxu0
  %v1438 = vadd.f32 %v1159, %v1360
  %v1439 = vadd.f32 %v1160, %v1363
  %v1440 = vadd.f32 %v1161, %v1368
  %v1441 = vadd.f32 %v1162, %v1371
  %v1442 = vadd.f32 %v1163, %v1376
  %v1443 = vadd.f32 %v1164, %v1379
  %v1444 = vadd.f32 %v1165, %v1384
  %v1445 = vadd.f32 %v1166, %v1387
  %v1446 = vadd.f32 %v1167, %v1392
  %v1447 = vadd.f32 %v1168, %v1395
  %v1448 = vadd.f32 %v1169, %v1400
  %v1449 = vadd.f32 %v1170, %v1403
  %v1450 = vadd.f32 %v1171, %v1408
  %v1451 = vadd.f32 %v1172, %v1411
  %v1452 = vadd.f32 %v1173, %v1416
  %v1453 = vadd.f32 %v1174, %v1419
  %v1454 = vadd.f32 %v1175, %v1424
  %v1455 = vadd.f32 %v1176, %v1427
  %v1456 = vadd.f32 %v1177, %v1432
  %v1457 = vadd.f32 %v1178, %v1435
  %v1458 = vld [vmem:[%s900] sm:$0xf]
  %v1459 = vld [vmem:[%s900 + $0x4] sm:$0xf]
  %v1460 = vld [vmem:[%s900 + $0x8] sm:$0xf]
  %v1461 = vld [vmem:[%s900 + $0xc] sm:$0xf]
  %v1462 = vld [vmem:[%s900 + $0x10] sm:$0xf]
  %v1463 = vld [vmem:[%s900 + $0x14] sm:$0xf]
  %v1464 = vld [vmem:[%s900 + $0x18] sm:$0xf]
  %v1465 = vld [vmem:[%s900 + $0x1c] sm:$0xf]
  %v1466 = vld [vmem:[%s900 + $0x20] sm:$0xf]
  %v1467 = vld [vmem:[%s900 + $0x24] sm:$0xf]
  %v1468 = vld [vmem:[%s900 + $0x28] sm:$0xf]
  %v1469 = vld [vmem:[%s900 + $0x2c] sm:$0xf]
  %v1470 = vld [vmem:[%s900 + $0x30] sm:$0xf]
  %v1471 = vld [vmem:[%s900 + $0x34] sm:$0xf]
  %v1472 = vld [vmem:[%s900 + $0x38] sm:$0xf]
  %v1473 = vld [vmem:[%s900 + $0x3c] sm:$0xf]
  %v1474 = vld [vmem:[%s900 + $0x40] sm:$0xf]
  %v1475 = vld [vmem:[%s900 + $0x44] sm:$0xf]
  %v1476 = vld [vmem:[%s900 + $0x48] sm:$0xf]
  %v1477 = vld [vmem:[%s900 + $0x4c] sm:$0xf]
  %v1478 = vld [vmem:[%s900 + $0x50] sm:$0x1]
  %s1479 = scalar_lea.vmem %s1, 320
  %v1480 = vld [vmem:[%s1479] sm:$0xf]
  %v1481 = vld [vmem:[%s1479 + $0x4] sm:$0xf]
  %v1482 = vld [vmem:[%s1479 + $0x8] sm:$0xf]
  %v1483 = vld [vmem:[%s1479 + $0xc] sm:$0xf]
  %v1484 = vld [vmem:[%s1479 + $0x10] sm:$0xf]
  %v1485 = vld [vmem:[%s1479 + $0x14] sm:$0xf]
  %v1486 = vld [vmem:[%s1479 + $0x18] sm:$0xf]
  %v1487 = vld [vmem:[%s1479 + $0x1c] sm:$0xf]
  %v1488 = vld [vmem:[%s1479 + $0x20] sm:$0xf]
  %v1489 = vld [vmem:[%s1479 + $0x24] sm:$0xf]
  %v1490 = vld [vmem:[%s1479 + $0x28] sm:$0xf]
  %v1491 = vld [vmem:[%s1479 + $0x2c] sm:$0xf]
  %v1492 = vld [vmem:[%s1479 + $0x30] sm:$0xf]
  %v1493 = vld [vmem:[%s1479 + $0x34] sm:$0xf]
  %v1494 = vld [vmem:[%s1479 + $0x38] sm:$0xf]
  %v1495 = vld [vmem:[%s1479 + $0x3c] sm:$0xf]
  %v1517 = vunpack.c.l.b16 %v1458
  %v1518 = vunpack.c.l.b16 %v1459
  %v1519 = vunpack.c.l.b16 %v1460
  %v1520 = vunpack.c.l.b16 %v1461
  %v1521 = vunpack.c.l.b16 %v1462
  %v1522 = vunpack.c.l.b16 %v1463
  %v1523 = vunpack.c.l.b16 %v1464
  %v1524 = vunpack.c.l.b16 %v1465
  %v1525 = vunpack.c.l.b16 %v1466
  %v1526 = vunpack.c.l.b16 %v1467
  %v1527 = vunpack.c.l.b16 %v1468
  %v1528 = vunpack.c.l.b16 %v1469
  %v1529 = vunpack.c.l.b16 %v1470
  %v1530 = vunpack.c.l.b16 %v1471
  %v1531 = vunpack.c.l.b16 %v1472
  %v1532 = vunpack.c.l.b16 %v1473
  %v1533 = vunpack.c.l.b16 %v1474
  %v1534 = vunpack.c.l.b16 %v1475
  %v1535 = vunpack.c.l.b16 %v1476
  %v1536 = vunpack.c.l.b16 %v1477
  %v1537 = vunpack.c.l.b16 %v1478
  %v1538 = vpack.c.b16 %v1518, %v1517
  %v1539 = vpack.c.b16 %v1520, %v1519
  %v1540 = vpack.c.b16 %v1522, %v1521
  %v1541 = vpack.c.b16 %v1524, %v1523
  %v1542 = vpack.c.b16 %v1526, %v1525
  %v1543 = vpack.c.b16 %v1528, %v1527
  %v1544 = vpack.c.b16 %v1530, %v1529
  %v1545 = vpack.c.b16 %v1532, %v1531
  %v1546 = vpack.c.b16 %v1534, %v1533
  %v1547 = vpack.c.b16 %v1536, %v1535
  %v1548 = vpack.c.b16 %v1537, %v1537
  %v1550 = vshrl.u32 %v1538, 16
  %v1552 = vshll.u32 %v1538, 16
  %v1554 = vrot.slane %v1552, 1
  %v1555 = vor.u32 %v1550, %v1554
  %v1557 = vshll.u32 %v1539, 16
  %v1559 = vrot.slane %v1557, 1
  %v1560 = vsel %vm624, %v1555, %v1559
  %v1561 = vshrl.u32 %v1539, 16
  %v1563 = vor.u32 %v1561, %v1559
  %v1565 = vshll.u32 %v1540, 16
  %v1567 = vrot.slane %v1565, 1
  %v1568 = vsel %vm624, %v1563, %v1567
  %v1569 = vshrl.u32 %v1540, 16
  %v1571 = vor.u32 %v1569, %v1567
  %v1573 = vshll.u32 %v1541, 16
  %v1575 = vrot.slane %v1573, 1
  %v1576 = vsel %vm624, %v1571, %v1575
  %v1577 = vshrl.u32 %v1541, 16
  %v1579 = vor.u32 %v1577, %v1575
  %v1581 = vshll.u32 %v1542, 16
  %v1583 = vrot.slane %v1581, 1
  %v1584 = vsel %vm624, %v1579, %v1583
  %v1585 = vshrl.u32 %v1542, 16
  %v1587 = vor.u32 %v1585, %v1583
  %v1589 = vshll.u32 %v1543, 16
  %v1591 = vrot.slane %v1589, 1
  %v1592 = vsel %vm624, %v1587, %v1591
  %v1593 = vshrl.u32 %v1543, 16
  %v1595 = vor.u32 %v1593, %v1591
  %v1597 = vshll.u32 %v1544, 16
  %v1599 = vrot.slane %v1597, 1
  %v1600 = vsel %vm624, %v1595, %v1599
  %v1601 = vshrl.u32 %v1544, 16
  %v1603 = vor.u32 %v1601, %v1599
  %v1605 = vshll.u32 %v1545, 16
  %v1607 = vrot.slane %v1605, 1
  %v1608 = vsel %vm624, %v1603, %v1607
  %v1609 = vshrl.u32 %v1545, 16
  %v1611 = vor.u32 %v1609, %v1607
  %v1613 = vshll.u32 %v1546, 16
  %v1615 = vrot.slane %v1613, 1
  %v1616 = vsel %vm624, %v1611, %v1615
  %v1617 = vshrl.u32 %v1546, 16
  %v1619 = vor.u32 %v1617, %v1615
  %v1621 = vshll.u32 %v1547, 16
  %v1623 = vrot.slane %v1621, 1
  %v1624 = vsel %vm624, %v1619, %v1623
  %v1625 = vshrl.u32 %v1547, 16
  %v1627 = vor.u32 %v1625, %v1623
  %v1629 = vshll.u32 %v1548, 16
  %v1631 = vrot.slane %v1629, 1
  %v1632 = vsel %vm624, %v1627, %v1631
  %v1659 = vunpack.c.l.b16 %v1480
  %v1660 = vunpack.c.l.b16 %v1481
  %v1661 = vunpack.c.l.b16 %v1482
  %v1662 = vunpack.c.l.b16 %v1483
  %v1663 = vunpack.c.l.b16 %v1484
  %v1664 = vunpack.c.l.b16 %v1485
  %v1665 = vunpack.c.l.b16 %v1486
  %v1666 = vunpack.c.l.b16 %v1487
  %v1667 = vunpack.c.l.b16 %v1488
  %v1668 = vunpack.c.l.b16 %v1489
  %v1669 = vunpack.c.l.b16 %v1490
  %v1670 = vunpack.c.l.b16 %v1491
  %v1671 = vunpack.c.l.b16 %v1492
  %v1672 = vunpack.c.l.b16 %v1493
  %v1673 = vunpack.c.l.b16 %v1494
  %v1674 = vunpack.c.l.b16 %v1495
  %v1675 = vpack.c.b16 %v1660, %v1659
  %v1676 = vpack.c.b16 %v1662, %v1661
  %v1677 = vpack.c.b16 %v1664, %v1663
  %v1678 = vpack.c.b16 %v1666, %v1665
  %v1679 = vpack.c.b16 %v1668, %v1667
  %v1680 = vpack.c.b16 %v1670, %v1669
  %v1681 = vpack.c.b16 %v1672, %v1671
  %v1682 = vpack.c.b16 %v1674, %v1673
  %1691 = vmatprep.subr.bf16.mxu0 0
  %1692 = vmatpush1.bf16.msra.mxu0 %v1675
  %1693 = vmatprep.subr.bf16.mxu0 0
  %1694 = vmatpush1.bf16.msra.mxu0 %v1676
  %1695 = vmatprep.subr.bf16.mxu0 0
  %1696 = vmatpush1.bf16.msra.mxu0 %v1677
  %1697 = vmatprep.subr.bf16.mxu0 0
  %1698 = vmatpush1.bf16.msra.mxu0 %v1678
  %1699 = vmatprep.subr.bf16.mxu0 0
  %1700 = vmatpush1.bf16.msra.mxu0 %v1679
  %1701 = vmatprep.subr.bf16.mxu0 0
  %1702 = vmatpush1.bf16.msra.mxu0 %v1680
  %1703 = vmatprep.subr.bf16.mxu0 0
  %1704 = vmatpush1.bf16.msra.mxu0 %v1681
  %1705 = vmatprep.subr.bf16.mxu0 0
  %1706 = vmatpush1.bf16.msra.mxu0 %v1682
  %1707 = vmatprep.subr.bf16.mxu0 0
  %1708 = vmatpush1.bf16.msra.mxu0 0
  %1709 = vmatprep.subr.bf16.mxu0 0
  %1710 = vmatpush1.bf16.msra.mxu0 0
  %1711 = vmatprep.subr.bf16.mxu0 0
  %1712 = vmatpush1.bf16.msra.mxu0 0
  %1713 = vmatprep.subr.bf16.mxu0 0
  %1714 = vmatpush1.bf16.msra.mxu0 0
  %1715 = vmatprep.subr.bf16.mxu0 0
  %1716 = vmatpush1.bf16.msra.mxu0 0
  %1717 = vmatprep.subr.bf16.mxu0 0
  %1718 = vmatpush1.bf16.msra.mxu0 0
  %1719 = vmatprep.subr.bf16.mxu0 0
  %1720 = vmatpush1.bf16.msra.mxu0 0
  %1721 = vmatprep.subr.bf16.mxu0 0
  %1722 = vmatpush1.bf16.msra.mxu0 0
  %1723 = vmatprep.mubr.bf16.mxu0 0
  %1724 = vmatmul.mubr.bf16.gmra.mrb[0].mxu0 %v1560
  %v1725 = vpop.f32.mrb[0].mxu0
  %v1726 = vadd.f32 0.0, %v1725
  %v1727 = vpop.f32.mrb[0].mxu0
  %v1728 = vpop.f32.mrb[0].mxu0
  %v1729 = vadd.f32 0.0, %v1728
  %v1730 = vpop.f32.mrb[0].mxu0
  %1731 = vmatprep.mubr.bf16.mxu0 0
  %1732 = vmatmul.mubr.bf16.gmra.mrb[0].mxu0 %v1568
  %v1733 = vpop.f32.mrb[0].mxu0
  %v1734 = vadd.f32 0.0, %v1733
  %v1735 = vpop.f32.mrb[0].mxu0
  %v1736 = vpop.f32.mrb[0].mxu0
  %v1737 = vadd.f32 0.0, %v1736
  %v1738 = vpop.f32.mrb[0].mxu0
  %1739 = vmatprep.mubr.bf16.mxu0 0
  %1740 = vmatmul.mubr.bf16.gmra.mrb[0].mxu0 %v1576
  %v1741 = vpop.f32.mrb[0].mxu0
  %v1742 = vadd.f32 0.0, %v1741
  %v1743 = vpop.f32.mrb[0].mxu0
  %v1744 = vpop.f32.mrb[0].mxu0
  %v1745 = vadd.f32 0.0, %v1744
  %v1746 = vpop.f32.mrb[0].mxu0
  %1747 = vmatprep.mubr.bf16.mxu0 0
  %1748 = vmatmul.mubr.bf16.gmra.mrb[0].mxu0 %v1584
  %v1749 = vpop.f32.mrb[0].mxu0
  %v1750 = vadd.f32 0.0, %v1749
  %v1751 = vpop.f32.mrb[0].mxu0
  %v1752 = vpop.f32.mrb[0].mxu0
  %v1753 = vadd.f32 0.0, %v1752
  %v1754 = vpop.f32.mrb[0].mxu0
  %1755 = vmatprep.mubr.bf16.mxu0 0
  %1756 = vmatmul.mubr.bf16.gmra.mrb[0].mxu0 %v1592
  %v1757 = vpop.f32.mrb[0].mxu0
  %v1758 = vadd.f32 0.0, %v1757
  %v1759 = vpop.f32.mrb[0].mxu0
  %v1760 = vpop.f32.mrb[0].mxu0
  %v1761 = vadd.f32 0.0, %v1760
  %v1762 = vpop.f32.mrb[0].mxu0
  %1763 = vmatprep.mubr.bf16.mxu0 0
  %1764 = vmatmul.mubr.bf16.gmra.mrb[0].mxu0 %v1600
  %v1765 = vpop.f32.mrb[0].mxu0
  %v1766 = vadd.f32 0.0, %v1765
  %v1767 = vpop.f32.mrb[0].mxu0
  %v1768 = vpop.f32.mrb[0].mxu0
  %v1769 = vadd.f32 0.0, %v1768
  %v1770 = vpop.f32.mrb[0].mxu0
  %1771 = vmatprep.mubr.bf16.mxu0 0
  %1772 = vmatmul.mubr.bf16.gmra.mrb[0].mxu0 %v1608
  %v1773 = vpop.f32.mrb[0].mxu0
  %v1774 = vadd.f32 0.0, %v1773
  %v1775 = vpop.f32.mrb[0].mxu0
  %v1776 = vpop.f32.mrb[0].mxu0
  %v1777 = vadd.f32 0.0, %v1776
  %v1778 = vpop.f32.mrb[0].mxu0
  %1779 = vmatprep.mubr.bf16.mxu0 0
  %1780 = vmatmul.mubr.bf16.gmra.mrb[0].mxu0 %v1616
  %v1781 = vpop.f32.mrb[0].mxu0
  %v1782 = vadd.f32 0.0, %v1781
  %v1783 = vpop.f32.mrb[0].mxu0
  %v1784 = vpop.f32.mrb[0].mxu0
  %v1785 = vadd.f32 0.0, %v1784
  %v1786 = vpop.f32.mrb[0].mxu0
  %1787 = vmatprep.mubr.bf16.mxu0 0
  %1788 = vmatmul.mubr.bf16.gmra.mrb[0].mxu0 %v1624
  %v1789 = vpop.f32.mrb[0].mxu0
  %v1790 = vadd.f32 0.0, %v1789
  %v1791 = vpop.f32.mrb[0].mxu0
  %v1792 = vpop.f32.mrb[0].mxu0
  %v1793 = vadd.f32 0.0, %v1792
  %v1794 = vpop.f32.mrb[0].mxu0
  %1795 = vmatprep.mubr.bf16.mxu0 0
  %1796 = vmatmul.mubr.bf16.gmra.mrb[0].mxu0 %v1632
  %v1797 = vpop.f32.mrb[0].mxu0
  %v1798 = vadd.f32 0.0, %v1797
  %v1799 = vpop.f32.mrb[0].mxu0
  %v1800 = vpop.f32.mrb[0].mxu0
  %v1801 = vadd.f32 0.0, %v1800
  %v1802 = vpop.f32.mrb[0].mxu0
  %1803 = vdwg.mxu0
  %v1804 = vadd.f32 %v1438, %v1726
  %v1805 = vadd.f32 %v1439, %v1729
  %v1806 = vadd.f32 %v1440, %v1734
  %v1807 = vadd.f32 %v1441, %v1737
  %v1808 = vadd.f32 %v1442, %v1742
  %v1809 = vadd.f32 %v1443, %v1745
  %v1810 = vadd.f32 %v1444, %v1750
  %v1811 = vadd.f32 %v1445, %v1753
  %v1812 = vadd.f32 %v1446, %v1758
  %v1813 = vadd.f32 %v1447, %v1761
  %v1814 = vadd.f32 %v1448, %v1766
  %v1815 = vadd.f32 %v1449, %v1769
  %v1816 = vadd.f32 %v1450, %v1774
  %v1817 = vadd.f32 %v1451, %v1777
  %v1818 = vadd.f32 %v1452, %v1782
  %v1819 = vadd.f32 %v1453, %v1785
  %v1820 = vadd.f32 %v1454, %v1790
  %v1821 = vadd.f32 %v1455, %v1793
  %v1822 = vadd.f32 %v1456, %v1798
  %v1823 = vadd.f32 %v1457, %v1801
  %v1824 = vld [vmem:[%s0 + $0x4] sm:$0xf]
  %v1825 = vld [vmem:[%s0 + $0x8] sm:$0xf]
  %v1826 = vld [vmem:[%s0 + $0xc] sm:$0xf]
  %v1827 = vld [vmem:[%s0 + $0x10] sm:$0xf]
  %v1828 = vld [vmem:[%s0 + $0x14] sm:$0xf]
  %v1829 = vld [vmem:[%s0 + $0x18] sm:$0xf]
  %v1830 = vld [vmem:[%s0 + $0x1c] sm:$0xf]
  %v1831 = vld [vmem:[%s0 + $0x20] sm:$0xf]
  %v1832 = vld [vmem:[%s0 + $0x24] sm:$0xf]
  %v1833 = vld [vmem:[%s0 + $0x28] sm:$0xf]
  %v1834 = vld [vmem:[%s0 + $0x2c] sm:$0xf]
  %v1835 = vld [vmem:[%s0 + $0x30] sm:$0xf]
  %v1836 = vld [vmem:[%s0 + $0x34] sm:$0xf]
  %v1837 = vld [vmem:[%s0 + $0x38] sm:$0xf]
  %v1838 = vld [vmem:[%s0 + $0x3c] sm:$0xf]
  %v1839 = vld [vmem:[%s0 + $0x40] sm:$0xf]
  %v1840 = vld [vmem:[%s0 + $0x44] sm:$0xf]
  %v1841 = vld [vmem:[%s0 + $0x48] sm:$0xf]
  %v1842 = vld [vmem:[%s0 + $0x4c] sm:$0xf]
  %v1843 = vld [vmem:[%s0 + $0x50] sm:$0xf]
  %v1844 = vld [vmem:[%s0 + $0x54] sm:$0x1]
  %s1845 = scalar_lea.vmem %s1, 384
  %v1846 = vld [vmem:[%s1845] sm:$0xf]
  %v1847 = vld [vmem:[%s1845 + $0x4] sm:$0xf]
  %v1848 = vld [vmem:[%s1845 + $0x8] sm:$0xf]
  %v1849 = vld [vmem:[%s1845 + $0xc] sm:$0xf]
  %v1850 = vld [vmem:[%s1845 + $0x10] sm:$0xf]
  %v1851 = vld [vmem:[%s1845 + $0x14] sm:$0xf]
  %v1852 = vld [vmem:[%s1845 + $0x18] sm:$0xf]
  %v1853 = vld [vmem:[%s1845 + $0x1c] sm:$0xf]
  %v1854 = vld [vmem:[%s1845 + $0x20] sm:$0xf]
  %v1855 = vld [vmem:[%s1845 + $0x24] sm:$0xf]
  %v1856 = vld [vmem:[%s1845 + $0x28] sm:$0xf]
  %v1857 = vld [vmem:[%s1845 + $0x2c] sm:$0xf]
  %v1858 = vld [vmem:[%s1845 + $0x30] sm:$0xf]
  %v1859 = vld [vmem:[%s1845 + $0x34] sm:$0xf]
  %v1860 = vld [vmem:[%s1845 + $0x38] sm:$0xf]
  %v1861 = vld [vmem:[%s1845 + $0x3c] sm:$0xf]
  %v1883 = vunpack.c.l.b16 %v1824
  %v1884 = vunpack.c.l.b16 %v1825
  %v1885 = vunpack.c.l.b16 %v1826
  %v1886 = vunpack.c.l.b16 %v1827
  %v1887 = vunpack.c.l.b16 %v1828
  %v1888 = vunpack.c.l.b16 %v1829
  %v1889 = vunpack.c.l.b16 %v1830
  %v1890 = vunpack.c.l.b16 %v1831
  %v1891 = vunpack.c.l.b16 %v1832
  %v1892 = vunpack.c.l.b16 %v1833
  %v1893 = vunpack.c.l.b16 %v1834
  %v1894 = vunpack.c.l.b16 %v1835
  %v1895 = vunpack.c.l.b16 %v1836
  %v1896 = vunpack.c.l.b16 %v1837
  %v1897 = vunpack.c.l.b16 %v1838
  %v1898 = vunpack.c.l.b16 %v1839
  %v1899 = vunpack.c.l.b16 %v1840
  %v1900 = vunpack.c.l.b16 %v1841
  %v1901 = vunpack.c.l.b16 %v1842
  %v1902 = vunpack.c.l.b16 %v1843
  %v1903 = vunpack.c.l.b16 %v1844
  %v1904 = vpack.c.b16 %v1884, %v1883
  %v1905 = vpack.c.b16 %v1886, %v1885
  %v1906 = vpack.c.b16 %v1888, %v1887
  %v1907 = vpack.c.b16 %v1890, %v1889
  %v1908 = vpack.c.b16 %v1892, %v1891
  %v1909 = vpack.c.b16 %v1894, %v1893
  %v1910 = vpack.c.b16 %v1896, %v1895
  %v1911 = vpack.c.b16 %v1898, %v1897
  %v1912 = vpack.c.b16 %v1900, %v1899
  %v1913 = vpack.c.b16 %v1902, %v1901
  %v1914 = vpack.c.b16 %v1903, %v1903
  %v1916 = vshrl.u32 %v1904, 16
  %v1918 = vshll.u32 %v1904, 16
  %v1920 = vrot.slane %v1918, 1
  %v1921 = vor.u32 %v1916, %v1920
  %v1923 = vshll.u32 %v1905, 16
  %v1925 = vrot.slane %v1923, 1
  %v1926 = vsel %vm624, %v1921, %v1925
  %v1927 = vshrl.u32 %v1905, 16
  %v1929 = vor.u32 %v1927, %v1925
  %v1931 = vshll.u32 %v1906, 16
  %v1933 = vrot.slane %v1931, 1
  %v1934 = vsel %vm624, %v1929, %v1933
  %v1935 = vshrl.u32 %v1906, 16
  %v1937 = vor.u32 %v1935, %v1933
  %v1939 = vshll.u32 %v1907, 16
  %v1941 = vrot.slane %v1939, 1
  %v1942 = vsel %vm624, %v1937, %v1941
  %v1943 = vshrl.u32 %v1907, 16
  %v1945 = vor.u32 %v1943, %v1941
  %v1947 = vshll.u32 %v1908, 16
  %v1949 = vrot.slane %v1947, 1
  %v1950 = vsel %vm624, %v1945, %v1949
  %v1951 = vshrl.u32 %v1908, 16
  %v1953 = vor.u32 %v1951, %v1949
  %v1955 = vshll.u32 %v1909, 16
  %v1957 = vrot.slane %v1955, 1
  %v1958 = vsel %vm624, %v1953, %v1957
  %v1959 = vshrl.u32 %v1909, 16
  %v1961 = vor.u32 %v1959, %v1957
  %v1963 = vshll.u32 %v1910, 16
  %v1965 = vrot.slane %v1963, 1
  %v1966 = vsel %vm624, %v1961, %v1965
  %v1967 = vshrl.u32 %v1910, 16
  %v1969 = vor.u32 %v1967, %v1965
  %v1971 = vshll.u32 %v1911, 16
  %v1973 = vrot.slane %v1971, 1
  %v1974 = vsel %vm624, %v1969, %v1973
  %v1975 = vshrl.u32 %v1911, 16
  %v1977 = vor.u32 %v1975, %v1973
  %v1979 = vshll.u32 %v1912, 16
  %v1981 = vrot.slane %v1979, 1
  %v1982 = vsel %vm624, %v1977, %v1981
  %v1983 = vshrl.u32 %v1912, 16
  %v1985 = vor.u32 %v1983, %v1981
  %v1987 = vshll.u32 %v1913, 16
  %v1989 = vrot.slane %v1987, 1
  %v1990 = vsel %vm624, %v1985, %v1989
  %v1991 = vshrl.u32 %v1913, 16
  %v1993 = vor.u32 %v1991, %v1989
  %v1995 = vshll.u32 %v1914, 16
  %v1997 = vrot.slane %v1995, 1
  %v1998 = vsel %vm624, %v1993, %v1997
  %v2025 = vunpack.c.l.b16 %v1846
  %v2026 = vunpack.c.l.b16 %v1847
  %v2027 = vunpack.c.l.b16 %v1848
  %v2028 = vunpack.c.l.b16 %v1849
  %v2029 = vunpack.c.l.b16 %v1850
  %v2030 = vunpack.c.l.b16 %v1851
  %v2031 = vunpack.c.l.b16 %v1852
  %v2032 = vunpack.c.l.b16 %v1853
  %v2033 = vunpack.c.l.b16 %v1854
  %v2034 = vunpack.c.l.b16 %v1855
  %v2035 = vunpack.c.l.b16 %v1856
  %v2036 = vunpack.c.l.b16 %v1857
  %v2037 = vunpack.c.l.b16 %v1858
  %v2038 = vunpack.c.l.b16 %v1859
  %v2039 = vunpack.c.l.b16 %v1860
  %v2040 = vunpack.c.l.b16 %v1861
  %v2041 = vpack.c.b16 %v2026, %v2025
  %v2042 = vpack.c.b16 %v2028, %v2027
  %v2043 = vpack.c.b16 %v2030, %v2029
  %v2044 = vpack.c.b16 %v2032, %v2031
  %v2045 = vpack.c.b16 %v2034, %v2033
  %v2046 = vpack.c.b16 %v2036, %v2035
  %v2047 = vpack.c.b16 %v2038, %v2037
  %v2048 = vpack.c.b16 %v2040, %v2039
  %2057 = vmatprep.subr.bf16.mxu0 0
  %2058 = vmatpush1.bf16.msra.mxu0 %v2041
  %2059 = vmatprep.subr.bf16.mxu0 0
  %2060 = vmatpush1.bf16.msra.mxu0 %v2042
  %2061 = vmatprep.subr.bf16.mxu0 0
  %2062 = vmatpush1.bf16.msra.mxu0 %v2043
  %2063 = vmatprep.subr.bf16.mxu0 0
  %2064 = vmatpush1.bf16.msra.mxu0 %v2044
  %2065 = vmatprep.subr.bf16.mxu0 0
  %2066 = vmatpush1.bf16.msra.mxu0 %v2045
  %2067 = vmatprep.subr.bf16.mxu0 0
  %2068 = vmatpush1.bf16.msra.mxu0 %v2046
  %2069 = vmatprep.subr.bf16.mxu0 0
  %2070 = vmatpush1.bf16.msra.mxu0 %v2047
  %2071 = vmatprep.subr.bf16.mxu0 0
  %2072 = vmatpush1.bf16.msra.mxu0 %v2048
  %2073 = vmatprep.subr.bf16.mxu0 0
  %2074 = vmatpush1.bf16.msra.mxu0 0
  %2075 = vmatprep.subr.bf16.mxu0 0
  %2076 = vmatpush1.bf16.msra.mxu0 0
  %2077 = vmatprep.subr.bf16.mxu0 0
  %2078 = vmatpush1.bf16.msra.mxu0 0
  %2079 = vmatprep.subr.bf16.mxu0 0
  %2080 = vmatpush1.bf16.msra.mxu0 0
  %2081 = vmatprep.subr.bf16.mxu0 0
  %2082 = vmatpush1.bf16.msra.mxu0 0
  %2083 = vmatprep.subr.bf16.mxu0 0
  %2084 = vmatpush1.bf16.msra.mxu0 0
  %2085 = vmatprep.subr.bf16.mxu0 0
  %2086 = vmatpush1.bf16.msra.mxu0 0
  %2087 = vmatprep.subr.bf16.mxu0 0
  %2088 = vmatpush1.bf16.msra.mxu0 0
  %2089 = vmatprep.mubr.bf16.mxu0 0
  %2090 = vmatmul.mubr.bf16.gmra.mrb[0].mxu0 %v1926
  %v2091 = vpop.f32.mrb[0].mxu0
  %v2092 = vadd.f32 0.0, %v2091
  %v2093 = vpop.f32.mrb[0].mxu0
  %v2094 = vpop.f32.mrb[0].mxu0
  %v2095 = vadd.f32 0.0, %v2094
  %v2096 = vpop.f32.mrb[0].mxu0
  %2097 = vmatprep.mubr.bf16.mxu0 0
  %2098 = vmatmul.mubr.bf16.gmra.mrb[0].mxu0 %v1934
  %v2099 = vpop.f32.mrb[0].mxu0
  %v2100 = vadd.f32 0.0, %v2099
  %v2101 = vpop.f32.mrb[0].mxu0
  %v2102 = vpop.f32.mrb[0].mxu0
  %v2103 = vadd.f32 0.0, %v2102
  %v2104 = vpop.f32.mrb[0].mxu0
  %2105 = vmatprep.mubr.bf16.mxu0 0
  %2106 = vmatmul.mubr.bf16.gmra.mrb[0].mxu0 %v1942
  %v2107 = vpop.f32.mrb[0].mxu0
  %v2108 = vadd.f32 0.0, %v2107
  %v2109 = vpop.f32.mrb[0].mxu0
  %v2110 = vpop.f32.mrb[0].mxu0
  %v2111 = vadd.f32 0.0, %v2110
  %v2112 = vpop.f32.mrb[0].mxu0
  %2113 = vmatprep.mubr.bf16.mxu0 0
  %2114 = vmatmul.mubr.bf16.gmra.mrb[0].mxu0 %v1950
  %v2115 = vpop.f32.mrb[0].mxu0
  %v2116 = vadd.f32 0.0, %v2115
  %v2117 = vpop.f32.mrb[0].mxu0
  %v2118 = vpop.f32.mrb[0].mxu0
  %v2119 = vadd.f32 0.0, %v2118
  %v2120 = vpop.f32.mrb[0].mxu0
  %2121 = vmatprep.mubr.bf16.mxu0 0
  %2122 = vmatmul.mubr.bf16.gmra.mrb[0].mxu0 %v1958
  %v2123 = vpop.f32.mrb[0].mxu0
  %v2124 = vadd.f32 0.0, %v2123
  %v2125 = vpop.f32.mrb[0].mxu0
  %v2126 = vpop.f32.mrb[0].mxu0
  %v2127 = vadd.f32 0.0, %v2126
  %v2128 = vpop.f32.mrb[0].mxu0
  %2129 = vmatprep.mubr.bf16.mxu0 0
  %2130 = vmatmul.mubr.bf16.gmra.mrb[0].mxu0 %v1966
  %v2131 = vpop.f32.mrb[0].mxu0
  %v2132 = vadd.f32 0.0, %v2131
  %v2133 = vpop.f32.mrb[0].mxu0
  %v2134 = vpop.f32.mrb[0].mxu0
  %v2135 = vadd.f32 0.0, %v2134
  %v2136 = vpop.f32.mrb[0].mxu0
  %2137 = vmatprep.mubr.bf16.mxu0 0
  %2138 = vmatmul.mubr.bf16.gmra.mrb[0].mxu0 %v1974
  %v2139 = vpop.f32.mrb[0].mxu0
  %v2140 = vadd.f32 0.0, %v2139
  %v2141 = vpop.f32.mrb[0].mxu0
  %v2142 = vpop.f32.mrb[0].mxu0
  %v2143 = vadd.f32 0.0, %v2142
  %v2144 = vpop.f32.mrb[0].mxu0
  %2145 = vmatprep.mubr.bf16.mxu0 0
  %2146 = vmatmul.mubr.bf16.gmra.mrb[0].mxu0 %v1982
  %v2147 = vpop.f32.mrb[0].mxu0
  %v2148 = vadd.f32 0.0, %v2147
  %v2149 = vpop.f32.mrb[0].mxu0
  %v2150 = vpop.f32.mrb[0].mxu0
  %v2151 = vadd.f32 0.0, %v2150
  %v2152 = vpop.f32.mrb[0].mxu0
  %2153 = vmatprep.mubr.bf16.mxu0 0
  %2154 = vmatmul.mubr.bf16.gmra.mrb[0].mxu0 %v1990
  %v2155 = vpop.f32.mrb[0].mxu0
  %v2156 = vadd.f32 0.0, %v2155
  %v2157 = vpop.f32.mrb[0].mxu0
  %v2158 = vpop.f32.mrb[0].mxu0
  %v2159 = vadd.f32 0.0, %v2158
  %v2160 = vpop.f32.mrb[0].mxu0
  %2161 = vmatprep.mubr.bf16.mxu0 0
  %2162 = vmatmul.mubr.bf16.gmra.mrb[0].mxu0 %v1998
  %v2163 = vpop.f32.mrb[0].mxu0
  %v2164 = vadd.f32 0.0, %v2163
  %v2165 = vpop.f32.mrb[0].mxu0
  %v2166 = vpop.f32.mrb[0].mxu0
  %v2167 = vadd.f32 0.0, %v2166
  %v2168 = vpop.f32.mrb[0].mxu0
  %2169 = vdwg.mxu0
  %v2170 = vadd.f32 %v1804, %v2092
  %v2171 = vadd.f32 %v1805, %v2095
  %v2172 = vadd.f32 %v1806, %v2100
  %v2173 = vadd.f32 %v1807, %v2103
  %v2174 = vadd.f32 %v1808, %v2108
  %v2175 = vadd.f32 %v1809, %v2111
  %v2176 = vadd.f32 %v1810, %v2116
  %v2177 = vadd.f32 %v1811, %v2119
  %v2178 = vadd.f32 %v1812, %v2124
  %v2179 = vadd.f32 %v1813, %v2127
  %v2180 = vadd.f32 %v1814, %v2132
  %v2181 = vadd.f32 %v1815, %v2135
  %v2182 = vadd.f32 %v1816, %v2140
  %v2183 = vadd.f32 %v1817, %v2143
  %v2184 = vadd.f32 %v1818, %v2148
  %v2185 = vadd.f32 %v1819, %v2151
  %v2186 = vadd.f32 %v1820, %v2156
  %v2187 = vadd.f32 %v1821, %v2159
  %v2188 = vadd.f32 %v1822, %v2164
  %v2189 = vadd.f32 %v1823, %v2167
  %v2190 = vld [vmem:[%s53 + $0x4] sm:$0xf]
  %v2191 = vld [vmem:[%s53 + $0x8] sm:$0xf]
  %v2192 = vld [vmem:[%s53 + $0xc] sm:$0xf]
  %v2193 = vld [vmem:[%s53 + $0x10] sm:$0xf]
  %v2194 = vld [vmem:[%s53 + $0x14] sm:$0xf]
  %v2195 = vld [vmem:[%s53 + $0x18] sm:$0xf]
  %v2196 = vld [vmem:[%s53 + $0x1c] sm:$0xf]
  %v2197 = vld [vmem:[%s53 + $0x20] sm:$0xf]
  %v2198 = vld [vmem:[%s53 + $0x24] sm:$0xf]
  %v2199 = vld [vmem:[%s53 + $0x28] sm:$0xf]
  %v2200 = vld [vmem:[%s53 + $0x2c] sm:$0xf]
  %v2201 = vld [vmem:[%s53 + $0x30] sm:$0xf]
  %v2202 = vld [vmem:[%s53 + $0x34] sm:$0xf]
  %v2203 = vld [vmem:[%s53 + $0x38] sm:$0xf]
  %v2204 = vld [vmem:[%s53 + $0x3c] sm:$0xf]
  %v2205 = vld [vmem:[%s53 + $0x40] sm:$0xf]
  %v2206 = vld [vmem:[%s53 + $0x44] sm:$0xf]
  %v2207 = vld [vmem:[%s53 + $0x48] sm:$0xf]
  %v2208 = vld [vmem:[%s53 + $0x4c] sm:$0xf]
  %v2209 = vld [vmem:[%s53 + $0x50] sm:$0xf]
  %v2210 = vld [vmem:[%s53 + $0x54] sm:$0x1]
  %s2211 = scalar_lea.vmem %s1, 448
  %v2212 = vld [vmem:[%s2211] sm:$0xf]
  %v2213 = vld [vmem:[%s2211 + $0x4] sm:$0xf]
  %v2214 = vld [vmem:[%s2211 + $0x8] sm:$0xf]
  %v2215 = vld [vmem:[%s2211 + $0xc] sm:$0xf]
  %v2216 = vld [vmem:[%s2211 + $0x10] sm:$0xf]
  %v2217 = vld [vmem:[%s2211 + $0x14] sm:$0xf]
  %v2218 = vld [vmem:[%s2211 + $0x18] sm:$0xf]
  %v2219 = vld [vmem:[%s2211 + $0x1c] sm:$0xf]
  %v2220 = vld [vmem:[%s2211 + $0x20] sm:$0xf]
  %v2221 = vld [vmem:[%s2211 + $0x24] sm:$0xf]
  %v2222 = vld [vmem:[%s2211 + $0x28] sm:$0xf]
  %v2223 = vld [vmem:[%s2211 + $0x2c] sm:$0xf]
  %v2224 = vld [vmem:[%s2211 + $0x30] sm:$0xf]
  %v2225 = vld [vmem:[%s2211 + $0x34] sm:$0xf]
  %v2226 = vld [vmem:[%s2211 + $0x38] sm:$0xf]
  %v2227 = vld [vmem:[%s2211 + $0x3c] sm:$0xf]
  %v2249 = vunpack.c.l.b16 %v2190
  %v2250 = vunpack.c.l.b16 %v2191
  %v2251 = vunpack.c.l.b16 %v2192
  %v2252 = vunpack.c.l.b16 %v2193
  %v2253 = vunpack.c.l.b16 %v2194
  %v2254 = vunpack.c.l.b16 %v2195
  %v2255 = vunpack.c.l.b16 %v2196
  %v2256 = vunpack.c.l.b16 %v2197
  %v2257 = vunpack.c.l.b16 %v2198
  %v2258 = vunpack.c.l.b16 %v2199
  %v2259 = vunpack.c.l.b16 %v2200
  %v2260 = vunpack.c.l.b16 %v2201
  %v2261 = vunpack.c.l.b16 %v2202
  %v2262 = vunpack.c.l.b16 %v2203
  %v2263 = vunpack.c.l.b16 %v2204
  %v2264 = vunpack.c.l.b16 %v2205
  %v2265 = vunpack.c.l.b16 %v2206
  %v2266 = vunpack.c.l.b16 %v2207
  %v2267 = vunpack.c.l.b16 %v2208
  %v2268 = vunpack.c.l.b16 %v2209
  %v2269 = vunpack.c.l.b16 %v2210
  %v2270 = vpack.c.b16 %v2250, %v2249
  %v2271 = vpack.c.b16 %v2252, %v2251
  %v2272 = vpack.c.b16 %v2254, %v2253
  %v2273 = vpack.c.b16 %v2256, %v2255
  %v2274 = vpack.c.b16 %v2258, %v2257
  %v2275 = vpack.c.b16 %v2260, %v2259
  %v2276 = vpack.c.b16 %v2262, %v2261
  %v2277 = vpack.c.b16 %v2264, %v2263
  %v2278 = vpack.c.b16 %v2266, %v2265
  %v2279 = vpack.c.b16 %v2268, %v2267
  %v2280 = vpack.c.b16 %v2269, %v2269
  %v2282 = vshrl.u32 %v2270, 16
  %v2284 = vshll.u32 %v2270, 16
  %v2286 = vrot.slane %v2284, 1
  %v2287 = vor.u32 %v2282, %v2286
  %v2289 = vshll.u32 %v2271, 16
  %v2291 = vrot.slane %v2289, 1
  %v2292 = vsel %vm624, %v2287, %v2291
  %v2293 = vshrl.u32 %v2271, 16
  %v2295 = vor.u32 %v2293, %v2291
  %v2297 = vshll.u32 %v2272, 16
  %v2299 = vrot.slane %v2297, 1
  %v2300 = vsel %vm624, %v2295, %v2299
  %v2301 = vshrl.u32 %v2272, 16
  %v2303 = vor.u32 %v2301, %v2299
  %v2305 = vshll.u32 %v2273, 16
  %v2307 = vrot.slane %v2305, 1
  %v2308 = vsel %vm624, %v2303, %v2307
  %v2309 = vshrl.u32 %v2273, 16
  %v2311 = vor.u32 %v2309, %v2307
  %v2313 = vshll.u32 %v2274, 16
  %v2315 = vrot.slane %v2313, 1
  %v2316 = vsel %vm624, %v2311, %v2315
  %v2317 = vshrl.u32 %v2274, 16
  %v2319 = vor.u32 %v2317, %v2315
  %v2321 = vshll.u32 %v2275, 16
  %v2323 = vrot.slane %v2321, 1
  %v2324 = vsel %vm624, %v2319, %v2323
  %v2325 = vshrl.u32 %v2275, 16
  %v2327 = vor.u32 %v2325, %v2323
  %v2329 = vshll.u32 %v2276, 16
  %v2331 = vrot.slane %v2329, 1
  %v2332 = vsel %vm624, %v2327, %v2331
  %v2333 = vshrl.u32 %v2276, 16
  %v2335 = vor.u32 %v2333, %v2331
  %v2337 = vshll.u32 %v2277, 16
  %v2339 = vrot.slane %v2337, 1
  %v2340 = vsel %vm624, %v2335, %v2339
  %v2341 = vshrl.u32 %v2277, 16
  %v2343 = vor.u32 %v2341, %v2339
  %v2345 = vshll.u32 %v2278, 16
  %v2347 = vrot.slane %v2345, 1
  %v2348 = vsel %vm624, %v2343, %v2347
  %v2349 = vshrl.u32 %v2278, 16
  %v2351 = vor.u32 %v2349, %v2347
  %v2353 = vshll.u32 %v2279, 16
  %v2355 = vrot.slane %v2353, 1
  %v2356 = vsel %vm624, %v2351, %v2355
  %v2357 = vshrl.u32 %v2279, 16
  %v2359 = vor.u32 %v2357, %v2355
  %v2361 = vshll.u32 %v2280, 16
  %v2363 = vrot.slane %v2361, 1
  %v2364 = vsel %vm624, %v2359, %v2363
  %v2391 = vunpack.c.l.b16 %v2212
  %v2392 = vunpack.c.l.b16 %v2213
  %v2393 = vunpack.c.l.b16 %v2214
  %v2394 = vunpack.c.l.b16 %v2215
  %v2395 = vunpack.c.l.b16 %v2216
  %v2396 = vunpack.c.l.b16 %v2217
  %v2397 = vunpack.c.l.b16 %v2218
  %v2398 = vunpack.c.l.b16 %v2219
  %v2399 = vunpack.c.l.b16 %v2220
  %v2400 = vunpack.c.l.b16 %v2221
  %v2401 = vunpack.c.l.b16 %v2222
  %v2402 = vunpack.c.l.b16 %v2223
  %v2403 = vunpack.c.l.b16 %v2224
  %v2404 = vunpack.c.l.b16 %v2225
  %v2405 = vunpack.c.l.b16 %v2226
  %v2406 = vunpack.c.l.b16 %v2227
  %v2407 = vpack.c.b16 %v2392, %v2391
  %v2408 = vpack.c.b16 %v2394, %v2393
  %v2409 = vpack.c.b16 %v2396, %v2395
  %v2410 = vpack.c.b16 %v2398, %v2397
  %v2411 = vpack.c.b16 %v2400, %v2399
  %v2412 = vpack.c.b16 %v2402, %v2401
  %v2413 = vpack.c.b16 %v2404, %v2403
  %v2414 = vpack.c.b16 %v2406, %v2405
  %2423 = vmatprep.subr.bf16.mxu0 0
  %2424 = vmatpush1.bf16.msra.mxu0 %v2407
  %2425 = vmatprep.subr.bf16.mxu0 0
  %2426 = vmatpush1.bf16.msra.mxu0 %v2408
  %2427 = vmatprep.subr.bf16.mxu0 0
  %2428 = vmatpush1.bf16.msra.mxu0 %v2409
  %2429 = vmatprep.subr.bf16.mxu0 0
  %2430 = vmatpush1.bf16.msra.mxu0 %v2410
  %2431 = vmatprep.subr.bf16.mxu0 0
  %2432 = vmatpush1.bf16.msra.mxu0 %v2411
  %2433 = vmatprep.subr.bf16.mxu0 0
  %2434 = vmatpush1.bf16.msra.mxu0 %v2412
  %2435 = vmatprep.subr.bf16.mxu0 0
  %2436 = vmatpush1.bf16.msra.mxu0 %v2413
  %2437 = vmatprep.subr.bf16.mxu0 0
  %2438 = vmatpush1.bf16.msra.mxu0 %v2414
  %2439 = vmatprep.subr.bf16.mxu0 0
  %2440 = vmatpush1.bf16.msra.mxu0 0
  %2441 = vmatprep.subr.bf16.mxu0 0
  %2442 = vmatpush1.bf16.msra.mxu0 0
  %2443 = vmatprep.subr.bf16.mxu0 0
  %2444 = vmatpush1.bf16.msra.mxu0 0
  %2445 = vmatprep.subr.bf16.mxu0 0
  %2446 = vmatpush1.bf16.msra.mxu0 0
  %2447 = vmatprep.subr.bf16.mxu0 0
  %2448 = vmatpush1.bf16.msra.mxu0 0
  %2449 = vmatprep.subr.bf16.mxu0 0
  %2450 = vmatpush1.bf16.msra.mxu0 0
  %2451 = vmatprep.subr.bf16.mxu0 0
  %2452 = vmatpush1.bf16.msra.mxu0 0
  %2453 = vmatprep.subr.bf16.mxu0 0
  %2454 = vmatpush1.bf16.msra.mxu0 0
  %2455 = vmatprep.mubr.bf16.mxu0 0
  %2456 = vmatmul.mubr.bf16.gmra.mrb[0].mxu0 %v2292
  %v2457 = vpop.f32.mrb[0].mxu0
  %v2458 = vadd.f32 0.0, %v2457
  %v2459 = vpop.f32.mrb[0].mxu0
  %v2460 = vpop.f32.mrb[0].mxu0
  %v2461 = vadd.f32 0.0, %v2460
  %v2462 = vpop.f32.mrb[0].mxu0
  %2463 = vmatprep.mubr.bf16.mxu0 0
  %2464 = vmatmul.mubr.bf16.gmra.mrb[0].mxu0 %v2300
  %v2465 = vpop.f32.mrb[0].mxu0
  %v2466 = vadd.f32 0.0, %v2465
  %v2467 = vpop.f32.mrb[0].mxu0
  %v2468 = vpop.f32.mrb[0].mxu0
  %v2469 = vadd.f32 0.0, %v2468
  %v2470 = vpop.f32.mrb[0].mxu0
  %2471 = vmatprep.mubr.bf16.mxu0 0
  %2472 = vmatmul.mubr.bf16.gmra.mrb[0].mxu0 %v2308
  %v2473 = vpop.f32.mrb[0].mxu0
  %v2474 = vadd.f32 0.0, %v2473
  %v2475 = vpop.f32.mrb[0].mxu0
  %v2476 = vpop.f32.mrb[0].mxu0
  %v2477 = vadd.f32 0.0, %v2476
  %v2478 = vpop.f32.mrb[0].mxu0
  %2479 = vmatprep.mubr.bf16.mxu0 0
  %2480 = vmatmul.mubr.bf16.gmra.mrb[0].mxu0 %v2316
  %v2481 = vpop.f32.mrb[0].mxu0
  %v2482 = vadd.f32 0.0, %v2481
  %v2483 = vpop.f32.mrb[0].mxu0
  %v2484 = vpop.f32.mrb[0].mxu0
  %v2485 = vadd.f32 0.0, %v2484
  %v2486 = vpop.f32.mrb[0].mxu0
  %2487 = vmatprep.mubr.bf16.mxu0 0
  %2488 = vmatmul.mubr.bf16.gmra.mrb[0].mxu0 %v2324
  %v2489 = vpop.f32.mrb[0].mxu0
  %v2490 = vadd.f32 0.0, %v2489
  %v2491 = vpop.f32.mrb[0].mxu0
  %v2492 = vpop.f32.mrb[0].mxu0
  %v2493 = vadd.f32 0.0, %v2492
  %v2494 = vpop.f32.mrb[0].mxu0
  %2495 = vmatprep.mubr.bf16.mxu0 0
  %2496 = vmatmul.mubr.bf16.gmra.mrb[0].mxu0 %v2332
  %v2497 = vpop.f32.mrb[0].mxu0
  %v2498 = vadd.f32 0.0, %v2497
  %v2499 = vpop.f32.mrb[0].mxu0
  %v2500 = vpop.f32.mrb[0].mxu0
  %v2501 = vadd.f32 0.0, %v2500
  %v2502 = vpop.f32.mrb[0].mxu0
  %2503 = vmatprep.mubr.bf16.mxu0 0
  %2504 = vmatmul.mubr.bf16.gmra.mrb[0].mxu0 %v2340
  %v2505 = vpop.f32.mrb[0].mxu0
  %v2506 = vadd.f32 0.0, %v2505
  %v2507 = vpop.f32.mrb[0].mxu0
  %v2508 = vpop.f32.mrb[0].mxu0
  %v2509 = vadd.f32 0.0, %v2508
  %v2510 = vpop.f32.mrb[0].mxu0
  %2511 = vmatprep.mubr.bf16.mxu0 0
  %2512 = vmatmul.mubr.bf16.gmra.mrb[0].mxu0 %v2348
  %v2513 = vpop.f32.mrb[0].mxu0
  %v2514 = vadd.f32 0.0, %v2513
  %v2515 = vpop.f32.mrb[0].mxu0
  %v2516 = vpop.f32.mrb[0].mxu0
  %v2517 = vadd.f32 0.0, %v2516
  %v2518 = vpop.f32.mrb[0].mxu0
  %2519 = vmatprep.mubr.bf16.mxu0 0
  %2520 = vmatmul.mubr.bf16.gmra.mrb[0].mxu0 %v2356
  %v2521 = vpop.f32.mrb[0].mxu0
  %v2522 = vadd.f32 0.0, %v2521
  %v2523 = vpop.f32.mrb[0].mxu0
  %v2524 = vpop.f32.mrb[0].mxu0
  %v2525 = vadd.f32 0.0, %v2524
  %v2526 = vpop.f32.mrb[0].mxu0
  %2527 = vmatprep.mubr.bf16.mxu0 0
  %2528 = vmatmul.mubr.bf16.gmra.mrb[0].mxu0 %v2364
  %v2529 = vpop.f32.mrb[0].mxu0
  %v2530 = vadd.f32 0.0, %v2529
  %v2531 = vpop.f32.mrb[0].mxu0
  %v2532 = vpop.f32.mrb[0].mxu0
  %v2533 = vadd.f32 0.0, %v2532
  %v2534 = vpop.f32.mrb[0].mxu0
  %2535 = vdwg.mxu0
  %v2536 = vadd.f32 %v2170, %v2458
  %v2537 = vadd.f32 %v2171, %v2461
  %v2538 = vadd.f32 %v2172, %v2466
  %v2539 = vadd.f32 %v2173, %v2469
  %v2540 = vadd.f32 %v2174, %v2474
  %v2541 = vadd.f32 %v2175, %v2477
  %v2542 = vadd.f32 %v2176, %v2482
  %v2543 = vadd.f32 %v2177, %v2485
  %v2544 = vadd.f32 %v2178, %v2490
  %v2545 = vadd.f32 %v2179, %v2493
  %v2546 = vadd.f32 %v2180, %v2498
  %v2547 = vadd.f32 %v2181, %v2501
  %v2548 = vadd.f32 %v2182, %v2506
  %v2549 = vadd.f32 %v2183, %v2509
  %v2550 = vadd.f32 %v2184, %v2514
  %v2551 = vadd.f32 %v2185, %v2517
  %v2552 = vadd.f32 %v2186, %v2522
  %v2553 = vadd.f32 %v2187, %v2525
  %v2554 = vadd.f32 %v2188, %v2530
  %v2555 = vadd.f32 %v2189, %v2533
  %v2556 = vld [vmem:[%s0 + $0x4] sm:$0xe]
  %s2557 = scalar_lea.vmem %s1, 512
  %v2558 = vld [vmem:[%s2557] sm:$0xf]
  %v2559 = vld [vmem:[%s2557 + $0x4] sm:$0xf]
  %v2560 = vld [vmem:[%s2557 + $0x8] sm:$0xf]
  %v2561 = vld [vmem:[%s2557 + $0xc] sm:$0xf]
  %v2562 = vld [vmem:[%s2557 + $0x10] sm:$0xf]
  %v2563 = vld [vmem:[%s2557 + $0x14] sm:$0xf]
  %v2564 = vld [vmem:[%s2557 + $0x18] sm:$0xf]
  %v2565 = vld [vmem:[%s2557 + $0x1c] sm:$0xf]
  %v2566 = vld [vmem:[%s2557 + $0x20] sm:$0xf]
  %v2567 = vld [vmem:[%s2557 + $0x24] sm:$0xf]
  %v2568 = vld [vmem:[%s2557 + $0x28] sm:$0xf]
  %v2569 = vld [vmem:[%s2557 + $0x2c] sm:$0xf]
  %v2570 = vld [vmem:[%s2557 + $0x30] sm:$0xf]
  %v2571 = vld [vmem:[%s2557 + $0x34] sm:$0xf]
  %v2572 = vld [vmem:[%s2557 + $0x38] sm:$0xf]
  %v2573 = vld [vmem:[%s2557 + $0x3c] sm:$0xf]
  %v2575 = vunpack.c.l.b16 %v2556
  %v2576 = vpack.c.b16 %v1884, %v2575
  %vm2577 = vcmask 1046528
  %v2578 = vrot.slane %v2576, 1
  %v2579 = vrot.slane %v1905, 1
  %v2580 = vsel %vm2577, %v2578, %v2579
  %v2581 = vrot.slane %v1906, 1
  %v2582 = vsel %vm2577, %v2579, %v2581
  %v2583 = vrot.slane %v1907, 1
  %v2584 = vsel %vm2577, %v2581, %v2583
  %v2585 = vrot.slane %v1908, 1
  %v2586 = vsel %vm2577, %v2583, %v2585
  %v2587 = vrot.slane %v1909, 1
  %v2588 = vsel %vm2577, %v2585, %v2587
  %v2589 = vrot.slane %v1910, 1
  %v2590 = vsel %vm2577, %v2587, %v2589
  %v2591 = vrot.slane %v1911, 1
  %v2592 = vsel %vm2577, %v2589, %v2591
  %v2593 = vrot.slane %v1912, 1
  %v2594 = vsel %vm2577, %v2591, %v2593
  %v2595 = vrot.slane %v1913, 1
  %v2596 = vsel %vm2577, %v2593, %v2595
  %v2597 = vrot.slane %v1914, 1
  %v2598 = vsel %vm2577, %v2595, %v2597
  %v2625 = vunpack.c.l.b16 %v2558
  %v2626 = vunpack.c.l.b16 %v2559
  %v2627 = vunpack.c.l.b16 %v2560
  %v2628 = vunpack.c.l.b16 %v2561
  %v2629 = vunpack.c.l.b16 %v2562
  %v2630 = vunpack.c.l.b16 %v2563
  %v2631 = vunpack.c.l.b16 %v2564
  %v2632 = vunpack.c.l.b16 %v2565
  %v2633 = vunpack.c.l.b16 %v2566
  %v2634 = vunpack.c.l.b16 %v2567
  %v2635 = vunpack.c.l.b16 %v2568
  %v2636 = vunpack.c.l.b16 %v2569
  %v2637 = vunpack.c.l.b16 %v2570
  %v2638 = vunpack.c.l.b16 %v2571
  %v2639 = vunpack.c.l.b16 %v2572
  %v2640 = vunpack.c.l.b16 %v2573
  %v2641 = vpack.c.b16 %v2626, %v2625
  %v2642 = vpack.c.b16 %v2628, %v2627
  %v2643 = vpack.c.b16 %v2630, %v2629
  %v2644 = vpack.c.b16 %v2632, %v2631
  %v2645 = vpack.c.b16 %v2634, %v2633
  %v2646 = vpack.c.b16 %v2636, %v2635
  %v2647 = vpack.c.b16 %v2638, %v2637
  %v2648 = vpack.c.b16 %v2640, %v2639
  %2657 = vmatprep.subr.bf16.mxu0 0
  %2658 = vmatpush1.bf16.msra.mxu0 %v2641
  %2659 = vmatprep.subr.bf16.mxu0 0
  %2660 = vmatpush1.bf16.msra.mxu0 %v2642
  %2661 = vmatprep.subr.bf16.mxu0 0
  %2662 = vmatpush1.bf16.msra.mxu0 %v2643
  %2663 = vmatprep.subr.bf16.mxu0 0
  %2664 = vmatpush1.bf16.msra.mxu0 %v2644
  %2665 = vmatprep.subr.bf16.mxu0 0
  %2666 = vmatpush1.bf16.msra.mxu0 %v2645
  %2667 = vmatprep.subr.bf16.mxu0 0
  %2668 = vmatpush1.bf16.msra.mxu0 %v2646
  %2669 = vmatprep.subr.bf16.mxu0 0
  %2670 = vmatpush1.bf16.msra.mxu0 %v2647
  %2671 = vmatprep.subr.bf16.mxu0 0
  %2672 = vmatpush1.bf16.msra.mxu0 %v2648
  %2673 = vmatprep.subr.bf16.mxu0 0
  %2674 = vmatpush1.bf16.msra.mxu0 0
  %2675 = vmatprep.subr.bf16.mxu0 0
  %2676 = vmatpush1.bf16.msra.mxu0 0
  %2677 = vmatprep.subr.bf16.mxu0 0
  %2678 = vmatpush1.bf16.msra.mxu0 0
  %2679 = vmatprep.subr.bf16.mxu0 0
  %2680 = vmatpush1.bf16.msra.mxu0 0
  %2681 = vmatprep.subr.bf16.mxu0 0
  %2682 = vmatpush1.bf16.msra.mxu0 0
  %2683 = vmatprep.subr.bf16.mxu0 0
  %2684 = vmatpush1.bf16.msra.mxu0 0
  %2685 = vmatprep.subr.bf16.mxu0 0
  %2686 = vmatpush1.bf16.msra.mxu0 0
  %2687 = vmatprep.subr.bf16.mxu0 0
  %2688 = vmatpush1.bf16.msra.mxu0 0
  %2689 = vmatprep.mubr.bf16.mxu0 0
  %2690 = vmatmul.mubr.bf16.gmra.mrb[0].mxu0 %v2580
  %v2691 = vpop.f32.mrb[0].mxu0
  %v2692 = vadd.f32 0.0, %v2691
  %v2693 = vpop.f32.mrb[0].mxu0
  %v2694 = vpop.f32.mrb[0].mxu0
  %v2695 = vadd.f32 0.0, %v2694
  %v2696 = vpop.f32.mrb[0].mxu0
  %2697 = vmatprep.mubr.bf16.mxu0 0
  %2698 = vmatmul.mubr.bf16.gmra.mrb[0].mxu0 %v2582
  %v2699 = vpop.f32.mrb[0].mxu0
  %v2700 = vadd.f32 0.0, %v2699
  %v2701 = vpop.f32.mrb[0].mxu0
  %v2702 = vpop.f32.mrb[0].mxu0
  %v2703 = vadd.f32 0.0, %v2702
  %v2704 = vpop.f32.mrb[0].mxu0
  %2705 = vmatprep.mubr.bf16.mxu0 0
  %2706 = vmatmul.mubr.bf16.gmra.mrb[0].mxu0 %v2584
  %v2707 = vpop.f32.mrb[0].mxu0
  %v2708 = vadd.f32 0.0, %v2707
  %v2709 = vpop.f32.mrb[0].mxu0
  %v2710 = vpop.f32.mrb[0].mxu0
  %v2711 = vadd.f32 0.0, %v2710
  %v2712 = vpop.f32.mrb[0].mxu0
  %2713 = vmatprep.mubr.bf16.mxu0 0
  %2714 = vmatmul.mubr.bf16.gmra.mrb[0].mxu0 %v2586
  %v2715 = vpop.f32.mrb[0].mxu0
  %v2716 = vadd.f32 0.0, %v2715
  %v2717 = vpop.f32.mrb[0].mxu0
  %v2718 = vpop.f32.mrb[0].mxu0
  %v2719 = vadd.f32 0.0, %v2718
  %v2720 = vpop.f32.mrb[0].mxu0
  %2721 = vmatprep.mubr.bf16.mxu0 0
  %2722 = vmatmul.mubr.bf16.gmra.mrb[0].mxu0 %v2588
  %v2723 = vpop.f32.mrb[0].mxu0
  %v2724 = vadd.f32 0.0, %v2723
  %v2725 = vpop.f32.mrb[0].mxu0
  %v2726 = vpop.f32.mrb[0].mxu0
  %v2727 = vadd.f32 0.0, %v2726
  %v2728 = vpop.f32.mrb[0].mxu0
  %2729 = vmatprep.mubr.bf16.mxu0 0
  %2730 = vmatmul.mubr.bf16.gmra.mrb[0].mxu0 %v2590
  %v2731 = vpop.f32.mrb[0].mxu0
  %v2732 = vadd.f32 0.0, %v2731
  %v2733 = vpop.f32.mrb[0].mxu0
  %v2734 = vpop.f32.mrb[0].mxu0
  %v2735 = vadd.f32 0.0, %v2734
  %v2736 = vpop.f32.mrb[0].mxu0
  %2737 = vmatprep.mubr.bf16.mxu0 0
  %2738 = vmatmul.mubr.bf16.gmra.mrb[0].mxu0 %v2592
  %v2739 = vpop.f32.mrb[0].mxu0
  %v2740 = vadd.f32 0.0, %v2739
  %v2741 = vpop.f32.mrb[0].mxu0
  %v2742 = vpop.f32.mrb[0].mxu0
  %v2743 = vadd.f32 0.0, %v2742
  %v2744 = vpop.f32.mrb[0].mxu0
  %2745 = vmatprep.mubr.bf16.mxu0 0
  %2746 = vmatmul.mubr.bf16.gmra.mrb[0].mxu0 %v2594
  %v2747 = vpop.f32.mrb[0].mxu0
  %v2748 = vadd.f32 0.0, %v2747
  %v2749 = vpop.f32.mrb[0].mxu0
  %v2750 = vpop.f32.mrb[0].mxu0
  %v2751 = vadd.f32 0.0, %v2750
  %v2752 = vpop.f32.mrb[0].mxu0
  %2753 = vmatprep.mubr.bf16.mxu0 0
  %2754 = vmatmul.mubr.bf16.gmra.mrb[0].mxu0 %v2596
  %v2755 = vpop.f32.mrb[0].mxu0
  %v2756 = vadd.f32 0.0, %v2755
  %v2757 = vpop.f32.mrb[0].mxu0
  %v2758 = vpop.f32.mrb[0].mxu0
  %v2759 = vadd.f32 0.0, %v2758
  %v2760 = vpop.f32.mrb[0].mxu0
  %2761 = vmatprep.mubr.bf16.mxu0 0
  %2762 = vmatmul.mubr.bf16.gmra.mrb[0].mxu0 %v2598
  %v2763 = vpop.f32.mrb[0].mxu0
  %v2764 = vadd.f32 0.0, %v2763
  %v2765 = vpop.f32.mrb[0].mxu0
  %v2766 = vpop.f32.mrb[0].mxu0
  %v2767 = vadd.f32 0.0, %v2766
  %v2768 = vpop.f32.mrb[0].mxu0
  %2769 = vdwg.mxu0
  %v2770 = vadd.f32 %v2536, %v2692
  %v2771 = vadd.f32 %v2537, %v2695
  %v2772 = vadd.f32 %v2538, %v2700
  %v2773 = vadd.f32 %v2539, %v2703
  %v2774 = vadd.f32 %v2540, %v2708
  %v2775 = vadd.f32 %v2541, %v2711
  %v2776 = vadd.f32 %v2542, %v2716
  %v2777 = vadd.f32 %v2543, %v2719
  %v2778 = vadd.f32 %v2544, %v2724
  %v2779 = vadd.f32 %v2545, %v2727
  %v2780 = vadd.f32 %v2546, %v2732
  %v2781 = vadd.f32 %v2547, %v2735
  %v2782 = vadd.f32 %v2548, %v2740
  %v2783 = vadd.f32 %v2549, %v2743
  %v2784 = vadd.f32 %v2550, %v2748
  %v2785 = vadd.f32 %v2551, %v2751
  %v2786 = vadd.f32 %v2552, %v2756
  %v2787 = vadd.f32 %v2553, %v2759
  %v2788 = vadd.f32 %v2554, %v2764
  %v2789 = vadd.f32 %v2555, %v2767
  %v2790 = vpack.c.bf16 %v2771, %v2770
  %v2791 = vpack.c.bf16 %v2773, %v2772
  %v2792 = vpack.c.bf16 %v2775, %v2774
  %v2793 = vpack.c.bf16 %v2777, %v2776
  %v2794 = vpack.c.bf16 %v2779, %v2778
  %v2795 = vpack.c.bf16 %v2781, %v2780
  %v2796 = vpack.c.bf16 %v2783, %v2782
  %v2797 = vpack.c.bf16 %v2785, %v2784
  %v2798 = vpack.c.bf16 %v2787, %v2786
  %v2799 = vpack.c.bf16 %v2789, %v2788
  %v2810 = vunpack.c.l.b16 %v2790
  %v2811 = vunpack.c.h.b16 %v2790
  %v2812 = vunpack.c.l.b16 %v2791
  %v2813 = vunpack.c.h.b16 %v2791
  %v2814 = vunpack.c.l.b16 %v2792
  %v2815 = vunpack.c.h.b16 %v2792
  %v2816 = vunpack.c.l.b16 %v2793
  %v2817 = vunpack.c.h.b16 %v2793
  %v2818 = vunpack.c.l.b16 %v2794
  %v2819 = vunpack.c.h.b16 %v2794
  %v2820 = vunpack.c.l.b16 %v2795
  %v2821 = vunpack.c.h.b16 %v2795
  %v2822 = vunpack.c.l.b16 %v2796
  %v2823 = vunpack.c.h.b16 %v2796
  %v2824 = vunpack.c.l.b16 %v2797
  %v2825 = vunpack.c.h.b16 %v2797
  %v2826 = vunpack.c.l.b16 %v2798
  %v2827 = vunpack.c.h.b16 %v2798
  %v2828 = vunpack.c.l.b16 %v2799
  %v2829 = vunpack.c.h.b16 %v2799
  %v2830 = vpack.c.b16 %v2810, %v2810
  %v2831 = vpack.c.b16 %v2811, %v2811
  %v2832 = vpack.c.b16 %v2812, %v2812
  %v2833 = vpack.c.b16 %v2813, %v2813
  %v2834 = vpack.c.b16 %v2814, %v2814
  %v2835 = vpack.c.b16 %v2815, %v2815
  %v2836 = vpack.c.b16 %v2816, %v2816
  %v2837 = vpack.c.b16 %v2817, %v2817
  %v2838 = vpack.c.b16 %v2818, %v2818
  %v2839 = vpack.c.b16 %v2819, %v2819
  %v2840 = vpack.c.b16 %v2820, %v2820
  %v2841 = vpack.c.b16 %v2821, %v2821
  %v2842 = vpack.c.b16 %v2822, %v2822
  %v2843 = vpack.c.b16 %v2823, %v2823
  %v2844 = vpack.c.b16 %v2824, %v2824
  %v2845 = vpack.c.b16 %v2825, %v2825
  %v2846 = vpack.c.b16 %v2826, %v2826
  %v2847 = vpack.c.b16 %v2827, %v2827
  %v2848 = vpack.c.b16 %v2828, %v2828
  %v2849 = vpack.c.b16 %v2829, %v2829
  %2870 = vst [vmem:[%s3] sm:$0xf] %v2830
  %2871 = vst [vmem:[%s3 + $0x4] sm:$0xf] %v2831
  %2872 = vst [vmem:[%s3 + $0x8] sm:$0xf] %v2832
  %2873 = vst [vmem:[%s3 + $0xc] sm:$0xf] %v2833
  %2874 = vst [vmem:[%s3 + $0x10] sm:$0xf] %v2834
  %2875 = vst [vmem:[%s3 + $0x14] sm:$0xf] %v2835
  %2876 = vst [vmem:[%s3 + $0x18] sm:$0xf] %v2836
  %2877 = vst [vmem:[%s3 + $0x1c] sm:$0xf] %v2837
  %2878 = vst [vmem:[%s3 + $0x20] sm:$0xf] %v2838
  %2879 = vst [vmem:[%s3 + $0x24] sm:$0xf] %v2839
  %2880 = vst [vmem:[%s3 + $0x28] sm:$0xf] %v2840
  %2881 = vst [vmem:[%s3 + $0x2c] sm:$0xf] %v2841
  %2882 = vst [vmem:[%s3 + $0x30] sm:$0xf] %v2842
  %2883 = vst [vmem:[%s3 + $0x34] sm:$0xf] %v2843
  %2884 = vst [vmem:[%s3 + $0x38] sm:$0xf] %v2844
  %2885 = vst [vmem:[%s3 + $0x3c] sm:$0xf] %v2845
  %2886 = vst [vmem:[%s3 + $0x40] sm:$0xf] %v2846
  %2887 = vst [vmem:[%s3 + $0x44] sm:$0xf] %v2847
  %2888 = vst [vmem:[%s3 + $0x48] sm:$0xf] %v2848
  %2889 = vst [vmem:[%s3 + $0x4c] sm:$0xf] %v2849
  %v2890 = vld [vmem:[%s2] sm:$0xff]
  %v2891 = vld [vmem:[%s2 + $0x8] sm:$0xff]
  %v2892 = vld [vmem:[%s2 + $0x10] sm:$0xff]
  %v2893 = vld [vmem:[%s2 + $0x18] sm:$0xff]
  %v2894 = vld [vmem:[%s2 + $0x20] sm:$0xff]
  %v2895 = vld [vmem:[%s2 + $0x28] sm:$0xff]
  %v2896 = vld [vmem:[%s2 + $0x30] sm:$0xff]
  %v2897 = vld [vmem:[%s2 + $0x38] sm:$0xff]
  %v2898 = vld [vmem:[%s2 + $0x40] sm:$0xff]
  %v2899 = vld [vmem:[%s2 + $0x48] sm:$0xff]
  %v2900 = vld [vmem:[%s2 + $0x50] sm:$0xff]
  %v2901 = vld [vmem:[%s2 + $0x58] sm:$0xff]
  %v2902 = vld [vmem:[%s2 + $0x60] sm:$0xff]
  %v2903 = vld [vmem:[%s2 + $0x68] sm:$0xff]
  %v2904 = vld [vmem:[%s2 + $0x70] sm:$0xff]
  %v2905 = vld [vmem:[%s2 + $0x78] sm:$0xff]
  %v2906 = vld [vmem:[%s2 + $0x80] sm:$0xff]
  %v2907 = vld [vmem:[%s2 + $0x88] sm:$0xff]
  %v2908 = vld [vmem:[%s2 + $0x90] sm:$0xff]
  %v2909 = vld [vmem:[%s2 + $0x98] sm:$0xff]
  %2911 = vset.pattern.permute.xlu0 0
  %2912 = vperm.xlu0 %2911, %v2890
  %v2913 = vpop.permute.xlu0 %2912
  %2916 = vset.pattern.permute.xlu0 0
  %2917 = vperm.xlu0 %2916, %v2891
  %v2918 = vpop.permute.xlu0 %2917
  %2921 = vset.pattern.permute.xlu0 0
  %2922 = vperm.xlu0 %2921, %v2892
  %v2923 = vpop.permute.xlu0 %2922
  %2926 = vset.pattern.permute.xlu0 0
  %2927 = vperm.xlu0 %2926, %v2893
  %v2928 = vpop.permute.xlu0 %2927
  %2931 = vset.pattern.permute.xlu0 0
  %2932 = vperm.xlu0 %2931, %v2894
  %v2933 = vpop.permute.xlu0 %2932
  %2936 = vset.pattern.permute.xlu0 0
  %2937 = vperm.xlu0 %2936, %v2895
  %v2938 = vpop.permute.xlu0 %2937
  %2941 = vset.pattern.permute.xlu0 0
  %2942 = vperm.xlu0 %2941, %v2896
  %v2943 = vpop.permute.xlu0 %2942
  %2946 = vset.pattern.permute.xlu0 0
  %2947 = vperm.xlu0 %2946, %v2897
  %v2948 = vpop.permute.xlu0 %2947
  %2951 = vset.pattern.permute.xlu0 0
  %2952 = vperm.xlu0 %2951, %v2898
  %v2953 = vpop.permute.xlu0 %2952
  %2956 = vset.pattern.permute.xlu0 0
  %2957 = vperm.xlu0 %2956, %v2899
  %v2958 = vpop.permute.xlu0 %2957
  %2961 = vset.pattern.permute.xlu0 0
  %2962 = vperm.xlu0 %2961, %v2900
  %v2963 = vpop.permute.xlu0 %2962
  %2966 = vset.pattern.permute.xlu0 0
  %2967 = vperm.xlu0 %2966, %v2901
  %v2968 = vpop.permute.xlu0 %2967
  %2971 = vset.pattern.permute.xlu0 0
  %2972 = vperm.xlu0 %2971, %v2902
  %v2973 = vpop.permute.xlu0 %2972
  %2976 = vset.pattern.permute.xlu0 0
  %2977 = vperm.xlu0 %2976, %v2903
  %v2978 = vpop.permute.xlu0 %2977
  %2981 = vset.pattern.permute.xlu0 0
  %2982 = vperm.xlu0 %2981, %v2904
  %v2983 = vpop.permute.xlu0 %2982
  %2986 = vset.pattern.permute.xlu0 0
  %2987 = vperm.xlu0 %2986, %v2905
  %v2988 = vpop.permute.xlu0 %2987
  %2991 = vset.pattern.permute.xlu0 0
  %2992 = vperm.xlu0 %2991, %v2906
  %v2993 = vpop.permute.xlu0 %2992
  %2996 = vset.pattern.permute.xlu0 0
  %2997 = vperm.xlu0 %2996, %v2907
  %v2998 = vpop.permute.xlu0 %2997
  %3001 = vset.pattern.permute.xlu0 0
  %3002 = vperm.xlu0 %3001, %v2908
  %v3003 = vpop.permute.xlu0 %3002
  %3006 = vset.pattern.permute.xlu0 0
  %3007 = vperm.xlu0 %3006, %v2909
  %v3008 = vpop.permute.xlu0 %3007
  %v3010 = vmul.f32 %v2770, %v2913
  %v3011 = vmul.f32 %v2771, %v2918
  %v3012 = vmul.f32 %v2772, %v2923
  %v3013 = vmul.f32 %v2773, %v2928
  %v3014 = vmul.f32 %v2774, %v2933
  %v3015 = vmul.f32 %v2775, %v2938
  %v3016 = vmul.f32 %v2776, %v2943
  %v3017 = vmul.f32 %v2777, %v2948
  %v3018 = vmul.f32 %v2778, %v2953
  %v3019 = vmul.f32 %v2779, %v2958
  %v3020 = vmul.f32 %v2780, %v2963
  %v3021 = vmul.f32 %v2781, %v2968
  %v3022 = vmul.f32 %v2782, %v2973
  %v3023 = vmul.f32 %v2783, %v2978
  %v3024 = vmul.f32 %v2784, %v2983
  %v3025 = vmul.f32 %v2785, %v2988
  %v3026 = vmul.f32 %v2786, %v2993
  %v3027 = vmul.f32 %v2787, %v2998
  %v3028 = vmul.f32 %v2788, %v3003
  %v3029 = vmul.f32 %v2789, %v3008
  %v3030 = vadd.f32 %v3010, %v3011
  %v3031 = vadd.f32 %v3030, %v3012
  %v3032 = vadd.f32 %v3031, %v3013
  %v3033 = vadd.f32 %v3032, %v3014
  %v3034 = vadd.f32 %v3033, %v3015
  %v3035 = vadd.f32 %v3034, %v3016
  %v3036 = vadd.f32 %v3035, %v3017
  %v3037 = vadd.f32 %v3036, %v3018
  %v3038 = vadd.f32 %v3037, %v3019
  %v3039 = vadd.f32 %v3038, %v3020
  %v3040 = vadd.f32 %v3039, %v3021
  %v3041 = vadd.f32 %v3040, %v3022
  %v3042 = vadd.f32 %v3041, %v3023
  %v3043 = vadd.f32 %v3042, %v3024
  %v3044 = vadd.f32 %v3043, %v3025
  %v3045 = vadd.f32 %v3044, %v3026
  %v3046 = vadd.f32 %v3045, %v3027
  %v3047 = vadd.f32 %v3046, %v3028
  %v3048 = vadd.f32 %v3047, %v3029
  %v3049 = vrot.slane %v3048, 4
  %v3050 = vadd.f32 %v3048, %v3049
  %v3051 = vrot.slane %v3050, 2
  %v3052 = vadd.f32 %v3050, %v3051
  %v3053 = vrot.slane %v3052, 1
  %v3054 = vadd.f32 %v3052, %v3053
  %v3055 = vmul.f32 %v3010, %v2770
  %v3056 = vmul.f32 %v3011, %v2771
  %v3057 = vmul.f32 %v3012, %v2772
  %v3058 = vmul.f32 %v3013, %v2773
  %v3059 = vmul.f32 %v3014, %v2774
  %v3060 = vmul.f32 %v3015, %v2775
  %v3061 = vmul.f32 %v3016, %v2776
  %v3062 = vmul.f32 %v3017, %v2777
  %v3063 = vmul.f32 %v3018, %v2778
  %v3064 = vmul.f32 %v3019, %v2779
  %v3065 = vmul.f32 %v3020, %v2780
  %v3066 = vmul.f32 %v3021, %v2781
  %v3067 = vmul.f32 %v3022, %v2782
  %v3068 = vmul.f32 %v3023, %v2783
  %v3069 = vmul.f32 %v3024, %v2784
  %v3070 = vmul.f32 %v3025, %v2785
  %v3071 = vmul.f32 %v3026, %v2786
  %v3072 = vmul.f32 %v3027, %v2787
  %v3073 = vmul.f32 %v3028, %v2788
  %v3074 = vmul.f32 %v3029, %v2789
  %v3075 = vadd.f32 %v3055, %v3056
  %v3076 = vadd.f32 %v3075, %v3057
  %v3077 = vadd.f32 %v3076, %v3058
  %v3078 = vadd.f32 %v3077, %v3059
  %v3079 = vadd.f32 %v3078, %v3060
  %v3080 = vadd.f32 %v3079, %v3061
  %v3081 = vadd.f32 %v3080, %v3062
  %v3082 = vadd.f32 %v3081, %v3063
  %v3083 = vadd.f32 %v3082, %v3064
  %v3084 = vadd.f32 %v3083, %v3065
  %v3085 = vadd.f32 %v3084, %v3066
  %v3086 = vadd.f32 %v3085, %v3067
  %v3087 = vadd.f32 %v3086, %v3068
  %v3088 = vadd.f32 %v3087, %v3069
  %v3089 = vadd.f32 %v3088, %v3070
  %v3090 = vadd.f32 %v3089, %v3071
  %v3091 = vadd.f32 %v3090, %v3072
  %v3092 = vadd.f32 %v3091, %v3073
  %v3093 = vadd.f32 %v3092, %v3074
  %v3094 = vrot.slane %v3093, 4
  %v3095 = vadd.f32 %v3093, %v3094
  %v3096 = vrot.slane %v3095, 2
  %v3097 = vadd.f32 %v3095, %v3096
  %v3098 = vrot.slane %v3097, 1
  %v3099 = vadd.f32 %v3097, %v3098
  %vm3100 = vcmask 1040384
  %v3101 = vsel %vm3100, %v3054, %v3099
  %3102 = vst [vmem:[%s4] sm:$0x3] %v3101
  // Predicated region
  $region14: #{inception_v2b_forward.15} parent=0 // pred_check
    _
  $region15: #{inception_v2b_forward.15} parent=0 // pred_check_branch
    %3104 = sbr.rel (0) target = $region17
  $region16: #{inception_v2b_forward.15} parent=0 // pred_region
    _
  $region17: #{inception_v2b_forward.15} parent=0 // pred_fallthru
    _
  // Predicated region
  $region18: #{inception_v2b_forward.15} parent=0 // pred_check
    _
  $region19: #{inception_v2b_forward.15} parent=0 // pred_check_branch
    %3106 = sbr.rel (0) target = $region21
  $region20: #{inception_v2b_forward.15} parent=0 // pred_region
    _
  $region21: #{inception_v2b_forward.15} parent=0 // pred_fallthru
    _
  // Predicated region
  $region22: #{inception_v2b_forward.15} parent=0 // pred_check
    _
  $region23: #{inception_v2b_forward.15} parent=0 // pred_check_branch
    %3108 = sbr.rel (0) target = $region25
  $region24: #{inception_v2b_forward.15} parent=0 // pred_region
    _
  $region25: #{inception_v2b_forward.15} parent=0 // pred_fallthru
    _
  // Predicated region
  $region26: #{inception_v2b_forward.15} parent=0 // pred_check
    _
  $region27: #{inception_v2b_forward.15} parent=0 // pred_check_branch
    %3110 = sbr.rel (0) target = $region29
  $region28: #{inception_v2b_forward.15} parent=0 // pred_region
    _
  $region29: #{inception_v2b_forward.15} parent=0 // pred_fallthru
    _

</llo_original>
